<compile_context>
chip_gen: v5e
topology: v5e:2x2
jax: 0.10.0
libtpu: 0.0.40
codegen_flags: <defaults>
</compile_context>

<pallas_src>
import numpy as np

import jax
import jax.numpy as jnp
from jax.experimental import pallas as pl
from jax.experimental.pallas import tpu as pltpu

CH_IN = 3           # channel_in
CH = 8              # ch (small; module default is 16)
Z = 64              # z
JOINT_IN = 514      # hard-coded in the module
JOINT_OUT = 512
AUX_DIM = JOINT_IN - Z   # 450
AUX_PAD = 512            # aux zero-padded to a lane-aligned width

H1 = 21              # conv1 output side (and conv2 input side)
H2 = 11              # conv2 output side (= conv3 kernel side)
N1 = H1 * H1         # 441
N2 = H2 * H2         # 121
N2P = 128            # conv2 spatial positions padded to one full lane tile
K1 = CH_IN * 8 * 8   # 192 conv1 patch features
TAPS2 = 16           # 4x4 conv2 kernel taps


# ----------------------------------------------------------------------------
# Constant: conv2 im2col as a 0/1 selection matrix (built once with numpy).
# Column t*128 + (oy*11+ox) of S2T selects the conv1 activation that kernel
# tap t = ky*4+kx sees at conv2 output position (oy, ox); taps that land in
# the ZeroPad2d((1,2,1,2)) halo (or padded o >= 121) are all-zero columns.
# ----------------------------------------------------------------------------
def _conv2_selection():
    s = np.zeros((N1, TAPS2 * N2P), np.float32)
    for ky in range(4):
        for kx in range(4):
            t = ky * 4 + kx
            for oy in range(H2):
                for ox in range(H2):
                    y = 2 * oy + ky - 1
                    x = 2 * ox + kx - 1
                    if 0 <= y < H1 and 0 <= x < H1:
                        s[y * H1 + x, t * N2P + oy * H2 + ox] = 1.0
    return s


_S2T = _conv2_selection()


# ----------------------------------------------------------------------------
# The single fused Pallas kernel (one grid step == one batch element).
# ----------------------------------------------------------------------------
def _tbeo_kernel(p1t_ref, aux_ref, w1_ref, b1_ref, s2_ref, w2_ref, b2_ref,
                 w3_ref, b3_ref, wmu_ref, bmu_ref, wjx_ref, wja_ref, bj_ref,
                 o_ref):
    f32 = jnp.float32
    bf16 = jnp.bfloat16

    # conv1 + ReLU, feature-major: (CH,192) @ (192,441) -> (CH,441)
    h1 = jnp.dot(w1_ref[...], p1t_ref[0], preferred_element_type=f32)
    h1 = jnp.maximum(h1 + b1_ref[...], 0.0).astype(bf16)

    # conv2 im2col as one constant 0/1 selection matmul:
    # (CH,441) @ (441, 16*128) -> (CH, 16*128)
    sel = jnp.dot(h1, s2_ref[...], preferred_element_type=f32).astype(bf16)

    # conv2 + ReLU: accumulate the 16 kernel taps: (2CH,CH) @ (CH,128)
    acc2 = jnp.zeros((2 * CH, N2P), f32)
    for t in range(TAPS2):
        acc2 = acc2 + jnp.dot(w2_ref[t], sel[:, t * N2P:(t + 1) * N2P],
                              preferred_element_type=f32)
    h2 = jnp.maximum(acc2 + b2_ref[...], 0.0)            # (2CH, 128) f32

    # conv3 (11x11 over the whole 11x11 map == dense) + ReLU: loop over the
    # 2*CH input channels; padded columns o >= 121 hit zero rows of w3.
    acc3 = jnp.zeros((1, 32 * CH), f32)
    for c in range(2 * CH):
        acc3 = acc3 + jnp.dot(h2[c:c + 1, :].astype(bf16), w3_ref[c],
                              preferred_element_type=f32)
    h3 = jnp.maximum(acc3 + b3_ref[...], 0.0).astype(bf16)   # (1, 32*CH)

    # conv_mu (1x1 conv on a 1x1 map == dense, no activation)
    mu = (jnp.dot(h3, wmu_ref[...], preferred_element_type=f32)
          + bmu_ref[...]).astype(bf16)                        # (1, Z)

    # joint layer on concat([mu, aux]) == mu @ Wx + aux @ Wa + b
    out = (jnp.dot(mu, wjx_ref[...], preferred_element_type=f32)
           + jnp.dot(aux_ref[0], wja_ref[...], preferred_element_type=f32)
           + bj_ref[...])
    o_ref[0] = out.astype(o_ref.dtype)


# ----------------------------------------------------------------------------
# Wrapper-side prep: conv1 patches (transposed), weight reshapes, specs.
# ----------------------------------------------------------------------------
def _conv1_patches_t(x):
    """x: (B,3,84,84) NCHW -> transposed conv1 patch matrix (B, 192, 441), bf16.

    Feature order is (dy, dx, c, ry, rx) with ky = 4*dy+ry, kx = 4*dx+rx,
    matching _build_w_matrices.  Built from 4 block-shifted views (stride 4
    splits the 8x8 kernel into 2x2 blocks of 4x4)."""
    B = x.shape[0]
    x = x.astype(jnp.bfloat16)
    xp = jnp.pad(x, ((0, 0), (0, 0), (2, 2), (2, 2)))        # (B,3,88,88)
    xb = xp.reshape(B, CH_IN, 22, 4, 22, 4)                  # (b,c,by,ry,bx,rx)
    xb = xb.transpose(0, 1, 3, 5, 2, 4)                      # (b,c,ry,rx,by,bx)
    slabs = []
    for dy in range(2):
        for dx in range(2):
            s = xb[:, :, :, :, dy:dy + H1, dx:dx + H1]       # (b,c,ry,rx,21,21)
            slabs.append(s.reshape(B, CH_IN * 16, N1))
    return jnp.concatenate(slabs, axis=1)                    # (B,192,441)


def _build_w_matrices(p):
    """Reorder the PyTorch-layout parameters into the kernel's matrix forms."""
    bf16 = jnp.bfloat16
    f32 = jnp.float32
    # conv1: features ordered (dy, dx, c, ry, rx), ky = 4*dy+ry, kx = 4*dx+rx
    w1r = p['w1'].reshape(CH, CH_IN, 2, 4, 2, 4)             # (co,c,dy,ry,dx,rx)
    w1mt = w1r.transpose(0, 2, 4, 1, 3, 5).reshape(CH, K1).astype(bf16)
    b1 = p['b1'].reshape(CH, 1).astype(f32)
    # conv2: per-tap weights, tap t = ky*4 + kx
    w2t = p['w2'].transpose(2, 3, 0, 1).reshape(TAPS2, 2 * CH, CH).astype(bf16)
    b2 = p['b2'].reshape(2 * CH, 1).astype(f32)
    # conv3: per-input-channel (128, 32*CH) slabs, spatial padded 121 -> 128
    w3g = p['w3'].transpose(1, 2, 3, 0).reshape(2 * CH, N2, 32 * CH)
    w3g = jnp.pad(w3g, ((0, 0), (0, N2P - N2), (0, 0))).astype(bf16)
    b3 = p['b3'].reshape(1, 32 * CH).astype(f32)
    # conv_mu (1x1 conv on a 1x1 map == dense)
    wmum = p['wmu'].reshape(Z, 32 * CH).T.astype(bf16)       # (32*CH, Z)
    bmu = p['bmu'].reshape(1, Z).astype(f32)
    # joint layer split into the mu part and the (zero-padded) aux part
    wjx = p['Wj'][:, :Z].T.astype(bf16)                      # (Z, 512)
    wja = jnp.pad(p['Wj'][:, Z:].T,
                  ((0, AUX_PAD - AUX_DIM), (0, 0))).astype(bf16)   # (512, 512)
    bj = p['bj'].reshape(1, JOINT_OUT).astype(f32)
    return w1mt, b1, w2t, b2, w3g, b3, wmum, bmu, wjx, wja, bj


@jax.jit
def tbeo_encoder_pallas(x, aux, p):
    B = x.shape[0]
    assert x.shape[1:] == (CH_IN, 84, 84), "conv3's 11x11 kernel needs 84x84"
    assert aux.shape == (B, AUX_DIM)

    p1t = _conv1_patches_t(x)                                       # (B,192,441)
    aux_p = jnp.pad(aux.astype(jnp.bfloat16),
                    ((0, 0), (0, AUX_PAD - AUX_DIM))).reshape(B, 1, AUX_PAD)
    s2t = jnp.asarray(_S2T, jnp.bfloat16)                           # (441,2048)
    (w1mt, b1, w2t, b2, w3g, b3, wmum, bmu, wjx, wja, bj) = _build_w_matrices(p)

    const_args = (w1mt, b1, s2t, w2t, b2, w3g, b3, wmum, bmu, wjx, wja, bj)

    def _const_spec(a):
        nd = a.ndim
        return pl.BlockSpec(a.shape, lambda b, _nd=nd: (0,) * _nd)

    in_specs = ([pl.BlockSpec((1, K1, N1), lambda b: (b, 0, 0)),
                 pl.BlockSpec((1, 1, AUX_PAD), lambda b: (b, 0, 0))]
                + [_const_spec(a) for a in const_args])

    out = pl.pallas_call(
        _tbeo_kernel,
        out_shape=jax.ShapeDtypeStruct((B, 1, JOINT_OUT), jnp.float32),
        grid=(B,),
        in_specs=in_specs,
        out_specs=pl.BlockSpec((1, 1, JOINT_OUT), lambda b: (b, 0, 0)),
        compiler_params=pltpu.CompilerParams(
            dimension_semantics=("parallel",)),
    )(p1t, aux_p, *const_args)
    return out.reshape(B, JOINT_OUT)


# ----------------------------------------------------------------------------
# Parameters (deterministic, PyTorch-default-style uniform init)
# ----------------------------------------------------------------------------
def init_params(key):
    def uni(k, shape, fan_in):
        bound = 1.0 / jnp.sqrt(float(fan_in))
        return jax.random.uniform(k, shape, jnp.float32, -bound, bound)

    ks = jax.random.split(key, 10)
    p = {}
    p['w1'] = uni(ks[0], (CH, CH_IN, 8, 8), CH_IN * 8 * 8)
    p['b1'] = uni(ks[1], (CH,), CH_IN * 8 * 8)
    p['w2'] = uni(ks[2], (2 * CH, CH, 4, 4), CH * 4 * 4)
    p['b2'] = uni(ks[3], (2 * CH,), CH * 4 * 4)
    p['w3'] = uni(ks[4], (32 * CH, 2 * CH, 11, 11), 2 * CH * 11 * 11)
    p['b3'] = uni(ks[5], (32 * CH,), 2 * CH * 11 * 11)
    p['wmu'] = uni(ks[6], (Z, 32 * CH, 1, 1), 32 * CH)
    p['bmu'] = uni(ks[7], (Z,), 32 * CH)
    p['Wj'] = uni(ks[8], (JOINT_OUT, JOINT_IN), JOINT_IN)
    p['bj'] = uni(ks[9], (JOINT_OUT,), JOINT_IN)
    return p


# ----------------------------------------------------------------------------
# Pure-JAX reference (mirrors the PyTorch forward exactly, f32)
# ----------------------------------------------------------------------------
def tbeo_encoder_ref(x, aux, p):
    def conv(h, w, b, stride, pad):
        y = jax.lax.conv_general_dilated(
            h, w, window_strides=(stride, stride), padding=pad,
            dimension_numbers=('NCHW', 'OIHW', 'NCHW'))
        return y + b[None, :, None, None]

    h = jax.nn.relu(conv(x, p['w1'], p['b1'], 4, ((2, 2), (2, 2))))
    h = jax.nn.relu(conv(h, p['w2'], p['b2'], 2, ((1, 2), (1, 2))))
    h = jax.nn.relu(conv(h, p['w3'], p['b3'], 1, ((0, 0), (0, 0))))
    h = conv(h, p['wmu'], p['bmu'], 1, ((0, 0), (0, 0)))
    flat = h.reshape(h.shape[0], -1)
    comb = jnp.concatenate([flat, aux], axis=1)
    return comb @ p['Wj'].T + p['bj']


if __name__ == "__main__":
    key = jax.random.PRNGKey(0)
    kx, ka, kp = jax.random.split(key, 3)
    B = 2
    x = jax.random.normal(kx, (B, CH_IN, 84, 84), jnp.float32)
    aux = jax.random.normal(ka, (B, AUX_DIM), jnp.float32)
    params = init_params(kp)

    out = jax.block_until_ready(tbeo_encoder_pallas(x, aux, params))
    ref = tbeo_encoder_ref(x, aux, params)

    assert out.shape == (B, JOINT_OUT), out.shape
    max_err = float(jnp.max(jnp.abs(out - ref)))
    # bf16 GEMM operands (f32 accumulation) -> loosened tolerance vs f32 ref.
    assert jnp.allclose(out, ref, rtol=2e-2, atol=2e-2), max_err
    print("KERNEL_OK")
</pallas_src>

<mosaic_0001>
module attributes {stable_mosaic.version = 11 : i64} {
  func.func @_tbeo_kernel(%arg0: i32, %arg1: memref<1x192x441xbf16, #tpu.memory_space<vmem>>, %arg2: memref<1x1x512xbf16, #tpu.memory_space<vmem>>, %arg3: memref<8x192xbf16, #tpu.memory_space<vmem>>, %arg4: memref<8x1xf32, #tpu.memory_space<vmem>>, %arg5: memref<441x2048xbf16, #tpu.memory_space<vmem>>, %arg6: memref<16x16x8xbf16, #tpu.memory_space<vmem>>, %arg7: memref<16x1xf32, #tpu.memory_space<vmem>>, %arg8: memref<16x128x256xbf16, #tpu.memory_space<vmem>>, %arg9: memref<1x256xf32, #tpu.memory_space<vmem>>, %arg10: memref<256x64xbf16, #tpu.memory_space<vmem>>, %arg11: memref<1x64xf32, #tpu.memory_space<vmem>>, %arg12: memref<64x512xbf16, #tpu.memory_space<vmem>>, %arg13: memref<512x512xbf16, #tpu.memory_space<vmem>>, %arg14: memref<1x512xf32, #tpu.memory_space<vmem>>, %arg15: memref<1x1x512xf32, #tpu.memory_space<vmem>>) attributes {dimension_semantics = [#tpu.dimension_semantics<parallel>], iteration_bounds = array<i64: 2>, scalar_prefetch = 0 : i64, scratch_operands = 0 : i64, tpu.core_type = #tpu.core_type<tc>, window_params = [{transform_indices = @transform_0, window_bounds = array<i64: 1, 192, 441>}, {transform_indices = @transform_1, window_bounds = array<i64: 1, 1, 512>}, {pipeline_mode = #tpu.pipeline_mode<synchronous>, transform_indices = @transform_2, window_bounds = array<i64: 8, 192>}, {pipeline_mode = #tpu.pipeline_mode<synchronous>, transform_indices = @transform_3, window_bounds = array<i64: 8, 1>}, {pipeline_mode = #tpu.pipeline_mode<synchronous>, transform_indices = @transform_4, window_bounds = array<i64: 441, 2048>}, {pipeline_mode = #tpu.pipeline_mode<synchronous>, transform_indices = @transform_5, window_bounds = array<i64: 16, 16, 8>}, {pipeline_mode = #tpu.pipeline_mode<synchronous>, transform_indices = @transform_6, window_bounds = array<i64: 16, 1>}, {pipeline_mode = #tpu.pipeline_mode<synchronous>, transform_indices = @transform_7, window_bounds = array<i64: 16, 128, 256>}, {pipeline_mode = #tpu.pipeline_mode<synchronous>, transform_indices = @transform_8, window_bounds = array<i64: 1, 256>}, {pipeline_mode = #tpu.pipeline_mode<synchronous>, transform_indices = @transform_9, window_bounds = array<i64: 256, 64>}, {pipeline_mode = #tpu.pipeline_mode<synchronous>, transform_indices = @transform_10, window_bounds = array<i64: 1, 64>}, {pipeline_mode = #tpu.pipeline_mode<synchronous>, transform_indices = @transform_11, window_bounds = array<i64: 64, 512>}, {pipeline_mode = #tpu.pipeline_mode<synchronous>, transform_indices = @transform_12, window_bounds = array<i64: 512, 512>}, {pipeline_mode = #tpu.pipeline_mode<synchronous>, transform_indices = @transform_13, window_bounds = array<i64: 1, 512>}, {transform_indices = @transform_14, window_bounds = array<i64: 1, 1, 512>}]} {
    %c0 = arith.constant 0 : index
    %c0_0 = arith.constant 0 : index
    %0 = vector.load %arg3[%c0, %c0_0] : memref<8x192xbf16, #tpu.memory_space<vmem>>, vector<8x192xbf16>
    %c0_1 = arith.constant 0 : index
    %c0_2 = arith.constant 0 : index
    %c0_3 = arith.constant 0 : index
    %1 = vector.load %arg1[%c0_1, %c0_2, %c0_3] : memref<1x192x441xbf16, #tpu.memory_space<vmem>>, vector<1x192x441xbf16>
    %2 = vector.shape_cast %1 : vector<1x192x441xbf16> to vector<192x441xbf16>
    %cst = arith.constant dense<0.000000e+00> : vector<8x441xf32>
    %3 = tpu.matmul %0, %2, %cst {dimension_numbers = #tpu.dot_dimension_numbers<[1], [0], [0], [1], [0, 0, 1, 1], [], []>} : vector<8x192xbf16>, vector<192x441xbf16>, vector<8x441xf32> -> vector<8x441xf32>
    %c0_4 = arith.constant 0 : index
    %c0_5 = arith.constant 0 : index
    %4 = vector.load %arg4[%c0_4, %c0_5] : memref<8x1xf32, #tpu.memory_space<vmem>>, vector<8x1xf32>
    %5 = vector.broadcast %4 : vector<8x1xf32> to vector<8x441xf32>
    %6 = arith.addf %3, %5 : vector<8x441xf32>
    %cst_6 = arith.constant 0.000000e+00 : f32
    %7 = vector.broadcast %cst_6 : f32 to vector<8x441xf32>
    %8 = arith.maximumf %6, %7 : vector<8x441xf32>
    %9 = arith.truncf %8 : vector<8x441xf32> to vector<8x441xbf16>
    %c0_7 = arith.constant 0 : index
    %c0_8 = arith.constant 0 : index
    %10 = vector.load %arg5[%c0_7, %c0_8] : memref<441x2048xbf16, #tpu.memory_space<vmem>>, vector<441x2048xbf16>
    %cst_9 = arith.constant dense<0.000000e+00> : vector<8x2048xf32>
    %11 = tpu.matmul %9, %10, %cst_9 {dimension_numbers = #tpu.dot_dimension_numbers<[1], [0], [0], [1], [0, 0, 1, 1], [], []>} : vector<8x441xbf16>, vector<441x2048xbf16>, vector<8x2048xf32> -> vector<8x2048xf32>
    %12 = arith.truncf %11 : vector<8x2048xf32> to vector<8x2048xbf16>
    %cst_10 = arith.constant 0.000000e+00 : f32
    %13 = vector.broadcast %cst_10 : f32 to vector<16x128xf32>
    %c0_11 = arith.constant 0 : index
    %c0_12 = arith.constant 0 : index
    %c0_13 = arith.constant 0 : index
    %14 = vector.load %arg6[%c0_11, %c0_12, %c0_13] : memref<16x16x8xbf16, #tpu.memory_space<vmem>>, vector<1x16x8xbf16>
    %15 = vector.shape_cast %14 : vector<1x16x8xbf16> to vector<16x8xbf16>
    %16 = vector.extract_strided_slice %12 {offsets = [0, 0], sizes = [8, 128], strides = [1, 1]} : vector<8x2048xbf16> to vector<8x128xbf16>
    %cst_14 = arith.constant dense<0.000000e+00> : vector<16x128xf32>
    %17 = tpu.matmul %15, %16, %cst_14 {dimension_numbers = #tpu.dot_dimension_numbers<[1], [0], [0], [1], [0, 0, 1, 1], [], []>} : vector<16x8xbf16>, vector<8x128xbf16>, vector<16x128xf32> -> vector<16x128xf32>
    %18 = arith.addf %13, %17 : vector<16x128xf32>
    %c1 = arith.constant 1 : index
    %c0_15 = arith.constant 0 : index
    %c0_16 = arith.constant 0 : index
    %19 = vector.load %arg6[%c1, %c0_15, %c0_16] : memref<16x16x8xbf16, #tpu.memory_space<vmem>>, vector<1x16x8xbf16>
    %20 = vector.shape_cast %19 : vector<1x16x8xbf16> to vector<16x8xbf16>
    %21 = vector.extract_strided_slice %12 {offsets = [0, 128], sizes = [8, 128], strides = [1, 1]} : vector<8x2048xbf16> to vector<8x128xbf16>
    %cst_17 = arith.constant dense<0.000000e+00> : vector<16x128xf32>
    %22 = tpu.matmul %20, %21, %cst_17 {dimension_numbers = #tpu.dot_dimension_numbers<[1], [0], [0], [1], [0, 0, 1, 1], [], []>} : vector<16x8xbf16>, vector<8x128xbf16>, vector<16x128xf32> -> vector<16x128xf32>
    %23 = arith.addf %18, %22 : vector<16x128xf32>
    %c2 = arith.constant 2 : index
    %c0_18 = arith.constant 0 : index
    %c0_19 = arith.constant 0 : index
    %24 = vector.load %arg6[%c2, %c0_18, %c0_19] : memref<16x16x8xbf16, #tpu.memory_space<vmem>>, vector<1x16x8xbf16>
    %25 = vector.shape_cast %24 : vector<1x16x8xbf16> to vector<16x8xbf16>
    %26 = vector.extract_strided_slice %12 {offsets = [0, 256], sizes = [8, 128], strides = [1, 1]} : vector<8x2048xbf16> to vector<8x128xbf16>
    %cst_20 = arith.constant dense<0.000000e+00> : vector<16x128xf32>
    %27 = tpu.matmul %25, %26, %cst_20 {dimension_numbers = #tpu.dot_dimension_numbers<[1], [0], [0], [1], [0, 0, 1, 1], [], []>} : vector<16x8xbf16>, vector<8x128xbf16>, vector<16x128xf32> -> vector<16x128xf32>
    %28 = arith.addf %23, %27 : vector<16x128xf32>
    %c3 = arith.constant 3 : index
    %c0_21 = arith.constant 0 : index
    %c0_22 = arith.constant 0 : index
    %29 = vector.load %arg6[%c3, %c0_21, %c0_22] : memref<16x16x8xbf16, #tpu.memory_space<vmem>>, vector<1x16x8xbf16>
    %30 = vector.shape_cast %29 : vector<1x16x8xbf16> to vector<16x8xbf16>
    %31 = vector.extract_strided_slice %12 {offsets = [0, 384], sizes = [8, 128], strides = [1, 1]} : vector<8x2048xbf16> to vector<8x128xbf16>
    %cst_23 = arith.constant dense<0.000000e+00> : vector<16x128xf32>
    %32 = tpu.matmul %30, %31, %cst_23 {dimension_numbers = #tpu.dot_dimension_numbers<[1], [0], [0], [1], [0, 0, 1, 1], [], []>} : vector<16x8xbf16>, vector<8x128xbf16>, vector<16x128xf32> -> vector<16x128xf32>
    %33 = arith.addf %28, %32 : vector<16x128xf32>
    %c4 = arith.constant 4 : index
    %c0_24 = arith.constant 0 : index
    %c0_25 = arith.constant 0 : index
    %34 = vector.load %arg6[%c4, %c0_24, %c0_25] : memref<16x16x8xbf16, #tpu.memory_space<vmem>>, vector<1x16x8xbf16>
    %35 = vector.shape_cast %34 : vector<1x16x8xbf16> to vector<16x8xbf16>
    %36 = vector.extract_strided_slice %12 {offsets = [0, 512], sizes = [8, 128], strides = [1, 1]} : vector<8x2048xbf16> to vector<8x128xbf16>
    %cst_26 = arith.constant dense<0.000000e+00> : vector<16x128xf32>
    %37 = tpu.matmul %35, %36, %cst_26 {dimension_numbers = #tpu.dot_dimension_numbers<[1], [0], [0], [1], [0, 0, 1, 1], [], []>} : vector<16x8xbf16>, vector<8x128xbf16>, vector<16x128xf32> -> vector<16x128xf32>
    %38 = arith.addf %33, %37 : vector<16x128xf32>
    %c5 = arith.constant 5 : index
    %c0_27 = arith.constant 0 : index
    %c0_28 = arith.constant 0 : index
    %39 = vector.load %arg6[%c5, %c0_27, %c0_28] : memref<16x16x8xbf16, #tpu.memory_space<vmem>>, vector<1x16x8xbf16>
    %40 = vector.shape_cast %39 : vector<1x16x8xbf16> to vector<16x8xbf16>
    %41 = vector.extract_strided_slice %12 {offsets = [0, 640], sizes = [8, 128], strides = [1, 1]} : vector<8x2048xbf16> to vector<8x128xbf16>
    %cst_29 = arith.constant dense<0.000000e+00> : vector<16x128xf32>
    %42 = tpu.matmul %40, %41, %cst_29 {dimension_numbers = #tpu.dot_dimension_numbers<[1], [0], [0], [1], [0, 0, 1, 1], [], []>} : vector<16x8xbf16>, vector<8x128xbf16>, vector<16x128xf32> -> vector<16x128xf32>
    %43 = arith.addf %38, %42 : vector<16x128xf32>
    %c6 = arith.constant 6 : index
    %c0_30 = arith.constant 0 : index
    %c0_31 = arith.constant 0 : index
    %44 = vector.load %arg6[%c6, %c0_30, %c0_31] : memref<16x16x8xbf16, #tpu.memory_space<vmem>>, vector<1x16x8xbf16>
    %45 = vector.shape_cast %44 : vector<1x16x8xbf16> to vector<16x8xbf16>
    %46 = vector.extract_strided_slice %12 {offsets = [0, 768], sizes = [8, 128], strides = [1, 1]} : vector<8x2048xbf16> to vector<8x128xbf16>
    %cst_32 = arith.constant dense<0.000000e+00> : vector<16x128xf32>
    %47 = tpu.matmul %45, %46, %cst_32 {dimension_numbers = #tpu.dot_dimension_numbers<[1], [0], [0], [1], [0, 0, 1, 1], [], []>} : vector<16x8xbf16>, vector<8x128xbf16>, vector<16x128xf32> -> vector<16x128xf32>
    %48 = arith.addf %43, %47 : vector<16x128xf32>
    %c7 = arith.constant 7 : index
    %c0_33 = arith.constant 0 : index
    %c0_34 = arith.constant 0 : index
    %49 = vector.load %arg6[%c7, %c0_33, %c0_34] : memref<16x16x8xbf16, #tpu.memory_space<vmem>>, vector<1x16x8xbf16>
    %50 = vector.shape_cast %49 : vector<1x16x8xbf16> to vector<16x8xbf16>
    %51 = vector.extract_strided_slice %12 {offsets = [0, 896], sizes = [8, 128], strides = [1, 1]} : vector<8x2048xbf16> to vector<8x128xbf16>
    %cst_35 = arith.constant dense<0.000000e+00> : vector<16x128xf32>
    %52 = tpu.matmul %50, %51, %cst_35 {dimension_numbers = #tpu.dot_dimension_numbers<[1], [0], [0], [1], [0, 0, 1, 1], [], []>} : vector<16x8xbf16>, vector<8x128xbf16>, vector<16x128xf32> -> vector<16x128xf32>
    %53 = arith.addf %48, %52 : vector<16x128xf32>
    %c8 = arith.constant 8 : index
    %c0_36 = arith.constant 0 : index
    %c0_37 = arith.constant 0 : index
    %54 = vector.load %arg6[%c8, %c0_36, %c0_37] : memref<16x16x8xbf16, #tpu.memory_space<vmem>>, vector<1x16x8xbf16>
    %55 = vector.shape_cast %54 : vector<1x16x8xbf16> to vector<16x8xbf16>
    %56 = vector.extract_strided_slice %12 {offsets = [0, 1024], sizes = [8, 128], strides = [1, 1]} : vector<8x2048xbf16> to vector<8x128xbf16>
    %cst_38 = arith.constant dense<0.000000e+00> : vector<16x128xf32>
    %57 = tpu.matmul %55, %56, %cst_38 {dimension_numbers = #tpu.dot_dimension_numbers<[1], [0], [0], [1], [0, 0, 1, 1], [], []>} : vector<16x8xbf16>, vector<8x128xbf16>, vector<16x128xf32> -> vector<16x128xf32>
    %58 = arith.addf %53, %57 : vector<16x128xf32>
    %c9 = arith.constant 9 : index
    %c0_39 = arith.constant 0 : index
    %c0_40 = arith.constant 0 : index
    %59 = vector.load %arg6[%c9, %c0_39, %c0_40] : memref<16x16x8xbf16, #tpu.memory_space<vmem>>, vector<1x16x8xbf16>
    %60 = vector.shape_cast %59 : vector<1x16x8xbf16> to vector<16x8xbf16>
    %61 = vector.extract_strided_slice %12 {offsets = [0, 1152], sizes = [8, 128], strides = [1, 1]} : vector<8x2048xbf16> to vector<8x128xbf16>
    %cst_41 = arith.constant dense<0.000000e+00> : vector<16x128xf32>
    %62 = tpu.matmul %60, %61, %cst_41 {dimension_numbers = #tpu.dot_dimension_numbers<[1], [0], [0], [1], [0, 0, 1, 1], [], []>} : vector<16x8xbf16>, vector<8x128xbf16>, vector<16x128xf32> -> vector<16x128xf32>
    %63 = arith.addf %58, %62 : vector<16x128xf32>
    %c10 = arith.constant 10 : index
    %c0_42 = arith.constant 0 : index
    %c0_43 = arith.constant 0 : index
    %64 = vector.load %arg6[%c10, %c0_42, %c0_43] : memref<16x16x8xbf16, #tpu.memory_space<vmem>>, vector<1x16x8xbf16>
    %65 = vector.shape_cast %64 : vector<1x16x8xbf16> to vector<16x8xbf16>
    %66 = vector.extract_strided_slice %12 {offsets = [0, 1280], sizes = [8, 128], strides = [1, 1]} : vector<8x2048xbf16> to vector<8x128xbf16>
    %cst_44 = arith.constant dense<0.000000e+00> : vector<16x128xf32>
    %67 = tpu.matmul %65, %66, %cst_44 {dimension_numbers = #tpu.dot_dimension_numbers<[1], [0], [0], [1], [0, 0, 1, 1], [], []>} : vector<16x8xbf16>, vector<8x128xbf16>, vector<16x128xf32> -> vector<16x128xf32>
    %68 = arith.addf %63, %67 : vector<16x128xf32>
    %c11 = arith.constant 11 : index
    %c0_45 = arith.constant 0 : index
    %c0_46 = arith.constant 0 : index
    %69 = vector.load %arg6[%c11, %c0_45, %c0_46] : memref<16x16x8xbf16, #tpu.memory_space<vmem>>, vector<1x16x8xbf16>
    %70 = vector.shape_cast %69 : vector<1x16x8xbf16> to vector<16x8xbf16>
    %71 = vector.extract_strided_slice %12 {offsets = [0, 1408], sizes = [8, 128], strides = [1, 1]} : vector<8x2048xbf16> to vector<8x128xbf16>
    %cst_47 = arith.constant dense<0.000000e+00> : vector<16x128xf32>
    %72 = tpu.matmul %70, %71, %cst_47 {dimension_numbers = #tpu.dot_dimension_numbers<[1], [0], [0], [1], [0, 0, 1, 1], [], []>} : vector<16x8xbf16>, vector<8x128xbf16>, vector<16x128xf32> -> vector<16x128xf32>
    %73 = arith.addf %68, %72 : vector<16x128xf32>
    %c12 = arith.constant 12 : index
    %c0_48 = arith.constant 0 : index
    %c0_49 = arith.constant 0 : index
    %74 = vector.load %arg6[%c12, %c0_48, %c0_49] : memref<16x16x8xbf16, #tpu.memory_space<vmem>>, vector<1x16x8xbf16>
    %75 = vector.shape_cast %74 : vector<1x16x8xbf16> to vector<16x8xbf16>
    %76 = vector.extract_strided_slice %12 {offsets = [0, 1536], sizes = [8, 128], strides = [1, 1]} : vector<8x2048xbf16> to vector<8x128xbf16>
    %cst_50 = arith.constant dense<0.000000e+00> : vector<16x128xf32>
    %77 = tpu.matmul %75, %76, %cst_50 {dimension_numbers = #tpu.dot_dimension_numbers<[1], [0], [0], [1], [0, 0, 1, 1], [], []>} : vector<16x8xbf16>, vector<8x128xbf16>, vector<16x128xf32> -> vector<16x128xf32>
    %78 = arith.addf %73, %77 : vector<16x128xf32>
    %c13 = arith.constant 13 : index
    %c0_51 = arith.constant 0 : index
    %c0_52 = arith.constant 0 : index
    %79 = vector.load %arg6[%c13, %c0_51, %c0_52] : memref<16x16x8xbf16, #tpu.memory_space<vmem>>, vector<1x16x8xbf16>
    %80 = vector.shape_cast %79 : vector<1x16x8xbf16> to vector<16x8xbf16>
    %81 = vector.extract_strided_slice %12 {offsets = [0, 1664], sizes = [8, 128], strides = [1, 1]} : vector<8x2048xbf16> to vector<8x128xbf16>
    %cst_53 = arith.constant dense<0.000000e+00> : vector<16x128xf32>
    %82 = tpu.matmul %80, %81, %cst_53 {dimension_numbers = #tpu.dot_dimension_numbers<[1], [0], [0], [1], [0, 0, 1, 1], [], []>} : vector<16x8xbf16>, vector<8x128xbf16>, vector<16x128xf32> -> vector<16x128xf32>
    %83 = arith.addf %78, %82 : vector<16x128xf32>
    %c14 = arith.constant 14 : index
    %c0_54 = arith.constant 0 : index
    %c0_55 = arith.constant 0 : index
    %84 = vector.load %arg6[%c14, %c0_54, %c0_55] : memref<16x16x8xbf16, #tpu.memory_space<vmem>>, vector<1x16x8xbf16>
    %85 = vector.shape_cast %84 : vector<1x16x8xbf16> to vector<16x8xbf16>
    %86 = vector.extract_strided_slice %12 {offsets = [0, 1792], sizes = [8, 128], strides = [1, 1]} : vector<8x2048xbf16> to vector<8x128xbf16>
    %cst_56 = arith.constant dense<0.000000e+00> : vector<16x128xf32>
    %87 = tpu.matmul %85, %86, %cst_56 {dimension_numbers = #tpu.dot_dimension_numbers<[1], [0], [0], [1], [0, 0, 1, 1], [], []>} : vector<16x8xbf16>, vector<8x128xbf16>, vector<16x128xf32> -> vector<16x128xf32>
    %88 = arith.addf %83, %87 : vector<16x128xf32>
    %c15 = arith.constant 15 : index
    %c0_57 = arith.constant 0 : index
    %c0_58 = arith.constant 0 : index
    %89 = vector.load %arg6[%c15, %c0_57, %c0_58] : memref<16x16x8xbf16, #tpu.memory_space<vmem>>, vector<1x16x8xbf16>
    %90 = vector.shape_cast %89 : vector<1x16x8xbf16> to vector<16x8xbf16>
    %91 = vector.extract_strided_slice %12 {offsets = [0, 1920], sizes = [8, 128], strides = [1, 1]} : vector<8x2048xbf16> to vector<8x128xbf16>
    %cst_59 = arith.constant dense<0.000000e+00> : vector<16x128xf32>
    %92 = tpu.matmul %90, %91, %cst_59 {dimension_numbers = #tpu.dot_dimension_numbers<[1], [0], [0], [1], [0, 0, 1, 1], [], []>} : vector<16x8xbf16>, vector<8x128xbf16>, vector<16x128xf32> -> vector<16x128xf32>
    %93 = arith.addf %88, %92 : vector<16x128xf32>
    %c0_60 = arith.constant 0 : index
    %c0_61 = arith.constant 0 : index
    %94 = vector.load %arg7[%c0_60, %c0_61] : memref<16x1xf32, #tpu.memory_space<vmem>>, vector<16x1xf32>
    %95 = vector.broadcast %94 : vector<16x1xf32> to vector<16x128xf32>
    %96 = arith.addf %93, %95 : vector<16x128xf32>
    %cst_62 = arith.constant 0.000000e+00 : f32
    %97 = vector.broadcast %cst_62 : f32 to vector<16x128xf32>
    %98 = arith.maximumf %96, %97 : vector<16x128xf32>
    %cst_63 = arith.constant 0.000000e+00 : f32
    %99 = vector.broadcast %cst_63 : f32 to vector<1x256xf32>
    %100 = vector.extract_strided_slice %98 {offsets = [0, 0], sizes = [1, 128], strides = [1, 1]} : vector<16x128xf32> to vector<1x128xf32>
    %101 = arith.truncf %100 : vector<1x128xf32> to vector<1x128xbf16>
    %c0_64 = arith.constant 0 : index
    %c0_65 = arith.constant 0 : index
    %c0_66 = arith.constant 0 : index
    %102 = vector.load %arg8[%c0_64, %c0_65, %c0_66] : memref<16x128x256xbf16, #tpu.memory_space<vmem>>, vector<1x128x256xbf16>
    %103 = vector.shape_cast %102 : vector<1x128x256xbf16> to vector<128x256xbf16>
    %cst_67 = arith.constant dense<0.000000e+00> : vector<1x256xf32>
    %104 = tpu.matmul %101, %103, %cst_67 {dimension_numbers = #tpu.dot_dimension_numbers<[1], [0], [0], [1], [0, 0, 1, 1], [], []>} : vector<1x128xbf16>, vector<128x256xbf16>, vector<1x256xf32> -> vector<1x256xf32>
    %105 = arith.addf %99, %104 : vector<1x256xf32>
    %106 = vector.extract_strided_slice %98 {offsets = [1, 0], sizes = [1, 128], strides = [1, 1]} : vector<16x128xf32> to vector<1x128xf32>
    %107 = arith.truncf %106 : vector<1x128xf32> to vector<1x128xbf16>
    %c1_68 = arith.constant 1 : index
    %c0_69 = arith.constant 0 : index
    %c0_70 = arith.constant 0 : index
    %108 = vector.load %arg8[%c1_68, %c0_69, %c0_70] : memref<16x128x256xbf16, #tpu.memory_space<vmem>>, vector<1x128x256xbf16>
    %109 = vector.shape_cast %108 : vector<1x128x256xbf16> to vector<128x256xbf16>
    %cst_71 = arith.constant dense<0.000000e+00> : vector<1x256xf32>
    %110 = tpu.matmul %107, %109, %cst_71 {dimension_numbers = #tpu.dot_dimension_numbers<[1], [0], [0], [1], [0, 0, 1, 1], [], []>} : vector<1x128xbf16>, vector<128x256xbf16>, vector<1x256xf32> -> vector<1x256xf32>
    %111 = arith.addf %105, %110 : vector<1x256xf32>
    %112 = vector.extract_strided_slice %98 {offsets = [2, 0], sizes = [1, 128], strides = [1, 1]} : vector<16x128xf32> to vector<1x128xf32>
    %113 = arith.truncf %112 : vector<1x128xf32> to vector<1x128xbf16>
    %c2_72 = arith.constant 2 : index
    %c0_73 = arith.constant 0 : index
    %c0_74 = arith.constant 0 : index
    %114 = vector.load %arg8[%c2_72, %c0_73, %c0_74] : memref<16x128x256xbf16, #tpu.memory_space<vmem>>, vector<1x128x256xbf16>
    %115 = vector.shape_cast %114 : vector<1x128x256xbf16> to vector<128x256xbf16>
    %cst_75 = arith.constant dense<0.000000e+00> : vector<1x256xf32>
    %116 = tpu.matmul %113, %115, %cst_75 {dimension_numbers = #tpu.dot_dimension_numbers<[1], [0], [0], [1], [0, 0, 1, 1], [], []>} : vector<1x128xbf16>, vector<128x256xbf16>, vector<1x256xf32> -> vector<1x256xf32>
    %117 = arith.addf %111, %116 : vector<1x256xf32>
    %118 = vector.extract_strided_slice %98 {offsets = [3, 0], sizes = [1, 128], strides = [1, 1]} : vector<16x128xf32> to vector<1x128xf32>
    %119 = arith.truncf %118 : vector<1x128xf32> to vector<1x128xbf16>
    %c3_76 = arith.constant 3 : index
    %c0_77 = arith.constant 0 : index
    %c0_78 = arith.constant 0 : index
    %120 = vector.load %arg8[%c3_76, %c0_77, %c0_78] : memref<16x128x256xbf16, #tpu.memory_space<vmem>>, vector<1x128x256xbf16>
    %121 = vector.shape_cast %120 : vector<1x128x256xbf16> to vector<128x256xbf16>
    %cst_79 = arith.constant dense<0.000000e+00> : vector<1x256xf32>
    %122 = tpu.matmul %119, %121, %cst_79 {dimension_numbers = #tpu.dot_dimension_numbers<[1], [0], [0], [1], [0, 0, 1, 1], [], []>} : vector<1x128xbf16>, vector<128x256xbf16>, vector<1x256xf32> -> vector<1x256xf32>
    %123 = arith.addf %117, %122 : vector<1x256xf32>
    %124 = vector.extract_strided_slice %98 {offsets = [4, 0], sizes = [1, 128], strides = [1, 1]} : vector<16x128xf32> to vector<1x128xf32>
    %125 = arith.truncf %124 : vector<1x128xf32> to vector<1x128xbf16>
    %c4_80 = arith.constant 4 : index
    %c0_81 = arith.constant 0 : index
    %c0_82 = arith.constant 0 : index
    %126 = vector.load %arg8[%c4_80, %c0_81, %c0_82] : memref<16x128x256xbf16, #tpu.memory_space<vmem>>, vector<1x128x256xbf16>
    %127 = vector.shape_cast %126 : vector<1x128x256xbf16> to vector<128x256xbf16>
    %cst_83 = arith.constant dense<0.000000e+00> : vector<1x256xf32>
    %128 = tpu.matmul %125, %127, %cst_83 {dimension_numbers = #tpu.dot_dimension_numbers<[1], [0], [0], [1], [0, 0, 1, 1], [], []>} : vector<1x128xbf16>, vector<128x256xbf16>, vector<1x256xf32> -> vector<1x256xf32>
    %129 = arith.addf %123, %128 : vector<1x256xf32>
    %130 = vector.extract_strided_slice %98 {offsets = [5, 0], sizes = [1, 128], strides = [1, 1]} : vector<16x128xf32> to vector<1x128xf32>
    %131 = arith.truncf %130 : vector<1x128xf32> to vector<1x128xbf16>
    %c5_84 = arith.constant 5 : index
    %c0_85 = arith.constant 0 : index
    %c0_86 = arith.constant 0 : index
    %132 = vector.load %arg8[%c5_84, %c0_85, %c0_86] : memref<16x128x256xbf16, #tpu.memory_space<vmem>>, vector<1x128x256xbf16>
    %133 = vector.shape_cast %132 : vector<1x128x256xbf16> to vector<128x256xbf16>
    %cst_87 = arith.constant dense<0.000000e+00> : vector<1x256xf32>
    %134 = tpu.matmul %131, %133, %cst_87 {dimension_numbers = #tpu.dot_dimension_numbers<[1], [0], [0], [1], [0, 0, 1, 1], [], []>} : vector<1x128xbf16>, vector<128x256xbf16>, vector<1x256xf32> -> vector<1x256xf32>
    %135 = arith.addf %129, %134 : vector<1x256xf32>
    %136 = vector.extract_strided_slice %98 {offsets = [6, 0], sizes = [1, 128], strides = [1, 1]} : vector<16x128xf32> to vector<1x128xf32>
    %137 = arith.truncf %136 : vector<1x128xf32> to vector<1x128xbf16>
    %c6_88 = arith.constant 6 : index
    %c0_89 = arith.constant 0 : index
    %c0_90 = arith.constant 0 : index
    %138 = vector.load %arg8[%c6_88, %c0_89, %c0_90] : memref<16x128x256xbf16, #tpu.memory_space<vmem>>, vector<1x128x256xbf16>
    %139 = vector.shape_cast %138 : vector<1x128x256xbf16> to vector<128x256xbf16>
    %cst_91 = arith.constant dense<0.000000e+00> : vector<1x256xf32>
    %140 = tpu.matmul %137, %139, %cst_91 {dimension_numbers = #tpu.dot_dimension_numbers<[1], [0], [0], [1], [0, 0, 1, 1], [], []>} : vector<1x128xbf16>, vector<128x256xbf16>, vector<1x256xf32> -> vector<1x256xf32>
    %141 = arith.addf %135, %140 : vector<1x256xf32>
    %142 = vector.extract_strided_slice %98 {offsets = [7, 0], sizes = [1, 128], strides = [1, 1]} : vector<16x128xf32> to vector<1x128xf32>
    %143 = arith.truncf %142 : vector<1x128xf32> to vector<1x128xbf16>
    %c7_92 = arith.constant 7 : index
    %c0_93 = arith.constant 0 : index
    %c0_94 = arith.constant 0 : index
    %144 = vector.load %arg8[%c7_92, %c0_93, %c0_94] : memref<16x128x256xbf16, #tpu.memory_space<vmem>>, vector<1x128x256xbf16>
    %145 = vector.shape_cast %144 : vector<1x128x256xbf16> to vector<128x256xbf16>
    %cst_95 = arith.constant dense<0.000000e+00> : vector<1x256xf32>
    %146 = tpu.matmul %143, %145, %cst_95 {dimension_numbers = #tpu.dot_dimension_numbers<[1], [0], [0], [1], [0, 0, 1, 1], [], []>} : vector<1x128xbf16>, vector<128x256xbf16>, vector<1x256xf32> -> vector<1x256xf32>
    %147 = arith.addf %141, %146 : vector<1x256xf32>
    %148 = vector.extract_strided_slice %98 {offsets = [8, 0], sizes = [1, 128], strides = [1, 1]} : vector<16x128xf32> to vector<1x128xf32>
    %149 = arith.truncf %148 : vector<1x128xf32> to vector<1x128xbf16>
    %c8_96 = arith.constant 8 : index
    %c0_97 = arith.constant 0 : index
    %c0_98 = arith.constant 0 : index
    %150 = vector.load %arg8[%c8_96, %c0_97, %c0_98] : memref<16x128x256xbf16, #tpu.memory_space<vmem>>, vector<1x128x256xbf16>
    %151 = vector.shape_cast %150 : vector<1x128x256xbf16> to vector<128x256xbf16>
    %cst_99 = arith.constant dense<0.000000e+00> : vector<1x256xf32>
    %152 = tpu.matmul %149, %151, %cst_99 {dimension_numbers = #tpu.dot_dimension_numbers<[1], [0], [0], [1], [0, 0, 1, 1], [], []>} : vector<1x128xbf16>, vector<128x256xbf16>, vector<1x256xf32> -> vector<1x256xf32>
    %153 = arith.addf %147, %152 : vector<1x256xf32>
    %154 = vector.extract_strided_slice %98 {offsets = [9, 0], sizes = [1, 128], strides = [1, 1]} : vector<16x128xf32> to vector<1x128xf32>
    %155 = arith.truncf %154 : vector<1x128xf32> to vector<1x128xbf16>
    %c9_100 = arith.constant 9 : index
    %c0_101 = arith.constant 0 : index
    %c0_102 = arith.constant 0 : index
    %156 = vector.load %arg8[%c9_100, %c0_101, %c0_102] : memref<16x128x256xbf16, #tpu.memory_space<vmem>>, vector<1x128x256xbf16>
    %157 = vector.shape_cast %156 : vector<1x128x256xbf16> to vector<128x256xbf16>
    %cst_103 = arith.constant dense<0.000000e+00> : vector<1x256xf32>
    %158 = tpu.matmul %155, %157, %cst_103 {dimension_numbers = #tpu.dot_dimension_numbers<[1], [0], [0], [1], [0, 0, 1, 1], [], []>} : vector<1x128xbf16>, vector<128x256xbf16>, vector<1x256xf32> -> vector<1x256xf32>
    %159 = arith.addf %153, %158 : vector<1x256xf32>
    %160 = vector.extract_strided_slice %98 {offsets = [10, 0], sizes = [1, 128], strides = [1, 1]} : vector<16x128xf32> to vector<1x128xf32>
    %161 = arith.truncf %160 : vector<1x128xf32> to vector<1x128xbf16>
    %c10_104 = arith.constant 10 : index
    %c0_105 = arith.constant 0 : index
    %c0_106 = arith.constant 0 : index
    %162 = vector.load %arg8[%c10_104, %c0_105, %c0_106] : memref<16x128x256xbf16, #tpu.memory_space<vmem>>, vector<1x128x256xbf16>
    %163 = vector.shape_cast %162 : vector<1x128x256xbf16> to vector<128x256xbf16>
    %cst_107 = arith.constant dense<0.000000e+00> : vector<1x256xf32>
    %164 = tpu.matmul %161, %163, %cst_107 {dimension_numbers = #tpu.dot_dimension_numbers<[1], [0], [0], [1], [0, 0, 1, 1], [], []>} : vector<1x128xbf16>, vector<128x256xbf16>, vector<1x256xf32> -> vector<1x256xf32>
    %165 = arith.addf %159, %164 : vector<1x256xf32>
    %166 = vector.extract_strided_slice %98 {offsets = [11, 0], sizes = [1, 128], strides = [1, 1]} : vector<16x128xf32> to vector<1x128xf32>
    %167 = arith.truncf %166 : vector<1x128xf32> to vector<1x128xbf16>
    %c11_108 = arith.constant 11 : index
    %c0_109 = arith.constant 0 : index
    %c0_110 = arith.constant 0 : index
    %168 = vector.load %arg8[%c11_108, %c0_109, %c0_110] : memref<16x128x256xbf16, #tpu.memory_space<vmem>>, vector<1x128x256xbf16>
    %169 = vector.shape_cast %168 : vector<1x128x256xbf16> to vector<128x256xbf16>
    %cst_111 = arith.constant dense<0.000000e+00> : vector<1x256xf32>
    %170 = tpu.matmul %167, %169, %cst_111 {dimension_numbers = #tpu.dot_dimension_numbers<[1], [0], [0], [1], [0, 0, 1, 1], [], []>} : vector<1x128xbf16>, vector<128x256xbf16>, vector<1x256xf32> -> vector<1x256xf32>
    %171 = arith.addf %165, %170 : vector<1x256xf32>
    %172 = vector.extract_strided_slice %98 {offsets = [12, 0], sizes = [1, 128], strides = [1, 1]} : vector<16x128xf32> to vector<1x128xf32>
    %173 = arith.truncf %172 : vector<1x128xf32> to vector<1x128xbf16>
    %c12_112 = arith.constant 12 : index
    %c0_113 = arith.constant 0 : index
    %c0_114 = arith.constant 0 : index
    %174 = vector.load %arg8[%c12_112, %c0_113, %c0_114] : memref<16x128x256xbf16, #tpu.memory_space<vmem>>, vector<1x128x256xbf16>
    %175 = vector.shape_cast %174 : vector<1x128x256xbf16> to vector<128x256xbf16>
    %cst_115 = arith.constant dense<0.000000e+00> : vector<1x256xf32>
    %176 = tpu.matmul %173, %175, %cst_115 {dimension_numbers = #tpu.dot_dimension_numbers<[1], [0], [0], [1], [0, 0, 1, 1], [], []>} : vector<1x128xbf16>, vector<128x256xbf16>, vector<1x256xf32> -> vector<1x256xf32>
    %177 = arith.addf %171, %176 : vector<1x256xf32>
    %178 = vector.extract_strided_slice %98 {offsets = [13, 0], sizes = [1, 128], strides = [1, 1]} : vector<16x128xf32> to vector<1x128xf32>
    %179 = arith.truncf %178 : vector<1x128xf32> to vector<1x128xbf16>
    %c13_116 = arith.constant 13 : index
    %c0_117 = arith.constant 0 : index
    %c0_118 = arith.constant 0 : index
    %180 = vector.load %arg8[%c13_116, %c0_117, %c0_118] : memref<16x128x256xbf16, #tpu.memory_space<vmem>>, vector<1x128x256xbf16>
    %181 = vector.shape_cast %180 : vector<1x128x256xbf16> to vector<128x256xbf16>
    %cst_119 = arith.constant dense<0.000000e+00> : vector<1x256xf32>
    %182 = tpu.matmul %179, %181, %cst_119 {dimension_numbers = #tpu.dot_dimension_numbers<[1], [0], [0], [1], [0, 0, 1, 1], [], []>} : vector<1x128xbf16>, vector<128x256xbf16>, vector<1x256xf32> -> vector<1x256xf32>
    %183 = arith.addf %177, %182 : vector<1x256xf32>
    %184 = vector.extract_strided_slice %98 {offsets = [14, 0], sizes = [1, 128], strides = [1, 1]} : vector<16x128xf32> to vector<1x128xf32>
    %185 = arith.truncf %184 : vector<1x128xf32> to vector<1x128xbf16>
    %c14_120 = arith.constant 14 : index
    %c0_121 = arith.constant 0 : index
    %c0_122 = arith.constant 0 : index
    %186 = vector.load %arg8[%c14_120, %c0_121, %c0_122] : memref<16x128x256xbf16, #tpu.memory_space<vmem>>, vector<1x128x256xbf16>
    %187 = vector.shape_cast %186 : vector<1x128x256xbf16> to vector<128x256xbf16>
    %cst_123 = arith.constant dense<0.000000e+00> : vector<1x256xf32>
    %188 = tpu.matmul %185, %187, %cst_123 {dimension_numbers = #tpu.dot_dimension_numbers<[1], [0], [0], [1], [0, 0, 1, 1], [], []>} : vector<1x128xbf16>, vector<128x256xbf16>, vector<1x256xf32> -> vector<1x256xf32>
    %189 = arith.addf %183, %188 : vector<1x256xf32>
    %190 = vector.extract_strided_slice %98 {offsets = [15, 0], sizes = [1, 128], strides = [1, 1]} : vector<16x128xf32> to vector<1x128xf32>
    %191 = arith.truncf %190 : vector<1x128xf32> to vector<1x128xbf16>
    %c15_124 = arith.constant 15 : index
    %c0_125 = arith.constant 0 : index
    %c0_126 = arith.constant 0 : index
    %192 = vector.load %arg8[%c15_124, %c0_125, %c0_126] : memref<16x128x256xbf16, #tpu.memory_space<vmem>>, vector<1x128x256xbf16>
    %193 = vector.shape_cast %192 : vector<1x128x256xbf16> to vector<128x256xbf16>
    %cst_127 = arith.constant dense<0.000000e+00> : vector<1x256xf32>
    %194 = tpu.matmul %191, %193, %cst_127 {dimension_numbers = #tpu.dot_dimension_numbers<[1], [0], [0], [1], [0, 0, 1, 1], [], []>} : vector<1x128xbf16>, vector<128x256xbf16>, vector<1x256xf32> -> vector<1x256xf32>
    %195 = arith.addf %189, %194 : vector<1x256xf32>
    %c0_128 = arith.constant 0 : index
    %c0_129 = arith.constant 0 : index
    %196 = vector.load %arg9[%c0_128, %c0_129] : memref<1x256xf32, #tpu.memory_space<vmem>>, vector<1x256xf32>
    %197 = arith.addf %195, %196 : vector<1x256xf32>
    %cst_130 = arith.constant 0.000000e+00 : f32
    %198 = vector.broadcast %cst_130 : f32 to vector<1x256xf32>
    %199 = arith.maximumf %197, %198 : vector<1x256xf32>
    %200 = arith.truncf %199 : vector<1x256xf32> to vector<1x256xbf16>
    %c0_131 = arith.constant 0 : index
    %c0_132 = arith.constant 0 : index
    %201 = vector.load %arg10[%c0_131, %c0_132] : memref<256x64xbf16, #tpu.memory_space<vmem>>, vector<256x64xbf16>
    %cst_133 = arith.constant dense<0.000000e+00> : vector<1x64xf32>
    %202 = tpu.matmul %200, %201, %cst_133 {dimension_numbers = #tpu.dot_dimension_numbers<[1], [0], [0], [1], [0, 0, 1, 1], [], []>} : vector<1x256xbf16>, vector<256x64xbf16>, vector<1x64xf32> -> vector<1x64xf32>
    %c0_134 = arith.constant 0 : index
    %c0_135 = arith.constant 0 : index
    %203 = vector.load %arg11[%c0_134, %c0_135] : memref<1x64xf32, #tpu.memory_space<vmem>>, vector<1x64xf32>
    %204 = arith.addf %202, %203 : vector<1x64xf32>
    %205 = arith.truncf %204 : vector<1x64xf32> to vector<1x64xbf16>
    %c0_136 = arith.constant 0 : index
    %c0_137 = arith.constant 0 : index
    %206 = vector.load %arg12[%c0_136, %c0_137] : memref<64x512xbf16, #tpu.memory_space<vmem>>, vector<64x512xbf16>
    %cst_138 = arith.constant dense<0.000000e+00> : vector<1x512xf32>
    %207 = tpu.matmul %205, %206, %cst_138 {dimension_numbers = #tpu.dot_dimension_numbers<[1], [0], [0], [1], [0, 0, 1, 1], [], []>} : vector<1x64xbf16>, vector<64x512xbf16>, vector<1x512xf32> -> vector<1x512xf32>
    %c0_139 = arith.constant 0 : index
    %c0_140 = arith.constant 0 : index
    %c0_141 = arith.constant 0 : index
    %208 = vector.load %arg2[%c0_139, %c0_140, %c0_141] : memref<1x1x512xbf16, #tpu.memory_space<vmem>>, vector<1x1x512xbf16>
    %209 = vector.shape_cast %208 : vector<1x1x512xbf16> to vector<1x512xbf16>
    %c0_142 = arith.constant 0 : index
    %c0_143 = arith.constant 0 : index
    %210 = vector.load %arg13[%c0_142, %c0_143] : memref<512x512xbf16, #tpu.memory_space<vmem>>, vector<512x512xbf16>
    %cst_144 = arith.constant dense<0.000000e+00> : vector<1x512xf32>
    %211 = tpu.matmul %209, %210, %cst_144 {dimension_numbers = #tpu.dot_dimension_numbers<[1], [0], [0], [1], [0, 0, 1, 1], [], []>} : vector<1x512xbf16>, vector<512x512xbf16>, vector<1x512xf32> -> vector<1x512xf32>
    %212 = arith.addf %207, %211 : vector<1x512xf32>
    %c0_145 = arith.constant 0 : index
    %c0_146 = arith.constant 0 : index
    %213 = vector.load %arg14[%c0_145, %c0_146] : memref<1x512xf32, #tpu.memory_space<vmem>>, vector<1x512xf32>
    %214 = arith.addf %212, %213 : vector<1x512xf32>
    %c0_147 = arith.constant 0 : index
    %c0_148 = arith.constant 0 : index
    %c0_149 = arith.constant 0 : index
    %215 = vector.load %arg15[%c0_147, %c0_148, %c0_149] : memref<1x1x512xf32, #tpu.memory_space<vmem>>, vector<1x1x512xf32>
    %216 = vector.shape_cast %215 : vector<1x1x512xf32> to vector<1x512xf32>
    %217 = vector.shape_cast %214 : vector<1x512xf32> to vector<1x1x512xf32>
    tpu.vector_store %arg15[%c0_147, %c0_148, %c0_149], %217 {strides = array<i32>} : memref<1x1x512xf32, #tpu.memory_space<vmem>>, vector<1x1x512xf32>,
    return
  }
  func.func @transform_0(%arg0: i32) -> (i32, i32, i32) {
    %c0_i32 = arith.constant 0 : i32
    %c0_i32_0 = arith.constant 0 : i32
    %c0_i32_1 = arith.constant 0 : i32
    return %arg0, %c0_i32, %c0_i32_0 : i32, i32, i32
  }
  func.func @transform_1(%arg0: i32) -> (i32, i32, i32) {
    %c0_i32 = arith.constant 0 : i32
    %c0_i32_0 = arith.constant 0 : i32
    %c0_i32_1 = arith.constant 0 : i32
    return %arg0, %c0_i32, %c0_i32_0 : i32, i32, i32
  }
  func.func @transform_2(%arg0: i32) -> (i32, i32) {
    %c0_i32 = arith.constant 0 : i32
    %c0_i32_0 = arith.constant 0 : i32
    %c0_i32_1 = arith.constant 0 : i32
    return %c0_i32, %c0_i32_0 : i32, i32
  }
  func.func @transform_3(%arg0: i32) -> (i32, i32) {
    %c0_i32 = arith.constant 0 : i32
    %c0_i32_0 = arith.constant 0 : i32
    %c0_i32_1 = arith.constant 0 : i32
    return %c0_i32, %c0_i32_0 : i32, i32
  }
  func.func @transform_4(%arg0: i32) -> (i32, i32) {
    %c0_i32 = arith.constant 0 : i32
    %c0_i32_0 = arith.constant 0 : i32
    %c0_i32_1 = arith.constant 0 : i32
    return %c0_i32, %c0_i32_0 : i32, i32
  }
  func.func @transform_5(%arg0: i32) -> (i32, i32, i32) {
    %c0_i32 = arith.constant 0 : i32
    %c0_i32_0 = arith.constant 0 : i32
    %c0_i32_1 = arith.constant 0 : i32
    %c0_i32_2 = arith.constant 0 : i32
    return %c0_i32, %c0_i32_0, %c0_i32_1 : i32, i32, i32
  }
  func.func @transform_6(%arg0: i32) -> (i32, i32) {
    %c0_i32 = arith.constant 0 : i32
    %c0_i32_0 = arith.constant 0 : i32
    %c0_i32_1 = arith.constant 0 : i32
    return %c0_i32, %c0_i32_0 : i32, i32
  }
  func.func @transform_7(%arg0: i32) -> (i32, i32, i32) {
    %c0_i32 = arith.constant 0 : i32
    %c0_i32_0 = arith.constant 0 : i32
    %c0_i32_1 = arith.constant 0 : i32
    %c0_i32_2 = arith.constant 0 : i32
    return %c0_i32, %c0_i32_0, %c0_i32_1 : i32, i32, i32
  }
  func.func @transform_8(%arg0: i32) -> (i32, i32) {
    %c0_i32 = arith.constant 0 : i32
    %c0_i32_0 = arith.constant 0 : i32
    %c0_i32_1 = arith.constant 0 : i32
    return %c0_i32, %c0_i32_0 : i32, i32
  }
  func.func @transform_9(%arg0: i32) -> (i32, i32) {
    %c0_i32 = arith.constant 0 : i32
    %c0_i32_0 = arith.constant 0 : i32
    %c0_i32_1 = arith.constant 0 : i32
    return %c0_i32, %c0_i32_0 : i32, i32
  }
  func.func @transform_10(%arg0: i32) -> (i32, i32) {
    %c0_i32 = arith.constant 0 : i32
    %c0_i32_0 = arith.constant 0 : i32
    %c0_i32_1 = arith.constant 0 : i32
    return %c0_i32, %c0_i32_0 : i32, i32
  }
  func.func @transform_11(%arg0: i32) -> (i32, i32) {
    %c0_i32 = arith.constant 0 : i32
    %c0_i32_0 = arith.constant 0 : i32
    %c0_i32_1 = arith.constant 0 : i32
    return %c0_i32, %c0_i32_0 : i32, i32
  }
  func.func @transform_12(%arg0: i32) -> (i32, i32) {
    %c0_i32 = arith.constant 0 : i32
    %c0_i32_0 = arith.constant 0 : i32
    %c0_i32_1 = arith.constant 0 : i32
    return %c0_i32, %c0_i32_0 : i32, i32
  }
  func.func @transform_13(%arg0: i32) -> (i32, i32) {
    %c0_i32 = arith.constant 0 : i32
    %c0_i32_0 = arith.constant 0 : i32
    %c0_i32_1 = arith.constant 0 : i32
    return %c0_i32, %c0_i32_0 : i32, i32
  }
  func.func @transform_14(%arg0: i32) -> (i32, i32, i32) {
    %c0_i32 = arith.constant 0 : i32
    %c0_i32_0 = arith.constant 0 : i32
    %c0_i32_1 = arith.constant 0 : i32
    return %arg0, %c0_i32, %c0_i32_0 : i32, i32, i32
  }
}

</mosaic_0001>

<llo_original>
// kernel: tbeo_encoder_pallas.1
$region0: #{tbeo_encoder_pallas.1}
  #allocation0 [shape = 'u32[]', space=smem, size = 0x4, offset = 0x4, fixed_abs, tag = 'smem constant byte address 0x4 - core index']
  #allocation1 [shape = 'u32[72,128]{1,0:T(1,128)}', space=vmem, size = 0x9000, scoped, tag = 'internal scratch']
  %s0 = inlined_call_operand.vmem [shape: bf16[2,192,441], index: 0, kind: input, shape index: {}]
  %s1 = inlined_call_operand.vmem [shape: bf16[2,1,512], index: 1, kind: input, shape index: {}]
  %s2 = inlined_call_operand.vmem [shape: bf16[8,192], index: 2, kind: input, shape index: {}]
  %s3 = inlined_call_operand.vmem [shape: f32[8,1], index: 3, kind: input, shape index: {}]
  %s4 = inlined_call_operand.vmem [shape: bf16[441,2048], index: 4, kind: input, shape index: {}]
  %s5 = inlined_call_operand.vmem [shape: bf16[16,16,8], index: 5, kind: input, shape index: {}]
  %s6 = inlined_call_operand.vmem [shape: f32[16,1], index: 6, kind: input, shape index: {}]
  %s7 = inlined_call_operand.vmem [shape: bf16[16,128,256], index: 7, kind: input, shape index: {}]
  %s8 = inlined_call_operand.vmem [shape: f32[1,256], index: 8, kind: input, shape index: {}]
  %s9 = inlined_call_operand.vmem [shape: bf16[256,64], index: 9, kind: input, shape index: {}]
  %s10 = inlined_call_operand.vmem [shape: f32[1,64], index: 10, kind: input, shape index: {}]
  %s11 = inlined_call_operand.vmem [shape: bf16[64,512], index: 11, kind: input, shape index: {}]
  %s12 = inlined_call_operand.vmem [shape: bf16[512,512], index: 12, kind: input, shape index: {}]
  %s13 = inlined_call_operand.vmem [shape: f32[1,512], index: 13, kind: input, shape index: {}]
  %s14 = inlined_call_operand.vmem [shape: f32[2,1,512], index: 14, kind: output, shape index: {}]
  %s15 = sld [smem:[#allocation0]]
  $region89: #{tbeo_encoder_pallas.1} parent=0
    _
  %s17 = ssub.s32 1, %s15
  %s18 = scalar_select 0, %s17, %s15
  loop: start=0, step=1, limit=4
  $region2: #{tbeo_encoder_pallas.1} parent=0 // loop_pre_header
    _
  $region3: #{tbeo_encoder_pallas.1} parent=0 // loop_header
    %s20 = sphi 0, %s24
    %p21 = scmp.ge.s32.totalorder %s20, 4
    %s30 = sphi 0, %s32
    %s33 = sphi 0, %s30
    %s34 = sphi 0, %s33
    %s50 = sphi 0, %s34
    %s56 = sphi 0, %s58
    %s59 = sphi 0, %s56
    %s60 = sphi 0, %s59
    %s76 = sphi 0, %s60
    %s80 = sphi 0, %s80
    %s82 = sphi 0, %s80
    %s83 = sphi 0, %s82
    %s97 = sphi 0, %s83
    %s101 = sphi 0, %s101
    %s103 = sphi 0, %s101
    %s104 = sphi 0, %s103
    %s118 = sphi 0, %s104
    %s122 = sphi 0, %s122
    %s124 = sphi 0, %s122
    %s125 = sphi 0, %s124
    %s139 = sphi 0, %s125
    %s143 = sphi 0, %s143
    %s145 = sphi 0, %s143
    %s146 = sphi 0, %s145
    %s160 = sphi 0, %s146
    %s164 = sphi 0, %s164
    %s166 = sphi 0, %s164
    %s167 = sphi 0, %s166
    %s181 = sphi 0, %s167
    %s185 = sphi 0, %s185
    %s187 = sphi 0, %s185
    %s188 = sphi 0, %s187
    %s202 = sphi 0, %s188
    %s206 = sphi 0, %s206
    %s208 = sphi 0, %s206
    %s209 = sphi 0, %s208
    %s223 = sphi 0, %s209
    %s227 = sphi 0, %s227
    %s229 = sphi 0, %s227
    %s230 = sphi 0, %s229
    %s244 = sphi 0, %s230
    %s248 = sphi 0, %s248
    %s250 = sphi 0, %s248
    %s251 = sphi 0, %s250
    %s265 = sphi 0, %s251
    %s269 = sphi 0, %s269
    %s271 = sphi 0, %s269
    %s272 = sphi 0, %s271
    %s286 = sphi 0, %s272
    %s290 = sphi 0, %s290
    %s292 = sphi 0, %s290
    %s293 = sphi 0, %s292
    %s307 = sphi 0, %s293
    %s311 = sphi 0, %s311
    %s313 = sphi 0, %s311
    %s314 = sphi 0, %s313
    %s328 = sphi 0, %s314
    %s334 = sphi 0, %s336
    %s337 = sphi 0, %s334
    %s338 = sphi 0, %s337
    %s354 = sphi 0, %s338
  $region4: #{tbeo_encoder_pallas.1} parent=0 // loop_header_branch
    %23 = sbr.rel (%p21) target = $region8
  $region5: #{tbeo_encoder_pallas.1} parent=0 // loop_body
    %s25 = ssub.s32 %s20, 1
    %s26 = ssub.s32 %s20, 2
    %s27 = sadd.s32 %s20, 1
    %s28 = ssub.s32 %s20, %s27
    %p29 = scmp.eq.s32.totalorder %s28, 0
    %s31 = sadd.s32 %s30, 1
    %s32 = scalar_select %p29, %s30, %s31
    %p35 = pneg %p29
    %p36 = scmp.eq.s32.totalorder %s20, 1
    %p37 = por %p35, %p36
    %p38 = scmp.ne.s32.totalorder %s30, %s33
    %p39 = scmp.eq.s32.totalorder %s20, 0
    %p40 = por %p38, %p39
    %p41 = scmp.ne.s32.totalorder %s30, %s33
    %p42 = scmp.eq.s32.totalorder %s25, 1
    %p43 = por %p41, %p42
    %p44 = scmp.ne.s32.totalorder %s33, %s34
    %p45 = scmp.eq.s32.totalorder %s25, 0
    %p46 = por %p44, %p45
    %p47 = scmp.ne.s32.totalorder %s33, %s34
    %p48 = scmp.eq.s32.totalorder %s26, 1
    %p49 = por %p47, %p48
    %p51 = scmp.ne.s32.totalorder %s34, %s50
    %p52 = scmp.eq.s32.totalorder %s26, 0
    %p53 = por %p51, %p52
    %s54 = ssub.s32 %s20, %s27
    %p55 = scmp.eq.s32.totalorder %s54, 0
    %s57 = sadd.s32 %s56, 1
    %s58 = scalar_select %p55, %s56, %s57
    %p61 = pneg %p55
    %p62 = scmp.eq.s32.totalorder %s20, 1
    %p63 = por %p61, %p62
    %p64 = scmp.ne.s32.totalorder %s56, %s59
    %p65 = scmp.eq.s32.totalorder %s20, 0
    %p66 = por %p64, %p65
    %p67 = scmp.ne.s32.totalorder %s56, %s59
    %p68 = scmp.eq.s32.totalorder %s25, 1
    %p69 = por %p67, %p68
    %p70 = scmp.ne.s32.totalorder %s59, %s60
    %p71 = scmp.eq.s32.totalorder %s25, 0
    %p72 = por %p70, %p71
    %p73 = scmp.ne.s32.totalorder %s59, %s60
    %p74 = scmp.eq.s32.totalorder %s26, 1
    %p75 = por %p73, %p74
    %p77 = scmp.ne.s32.totalorder %s60, %s76
    %p78 = scmp.eq.s32.totalorder %s26, 0
    %p79 = por %p77, %p78
    %s81 = sadd.s32 %s80, 1
    %p84 = scmp.eq.s32.totalorder %s20, 1
    %p85 = scmp.ne.s32.totalorder %s80, %s82
    %p86 = scmp.eq.s32.totalorder %s20, 0
    %p87 = por %p85, %p86
    %p88 = scmp.ne.s32.totalorder %s80, %s82
    %p89 = scmp.eq.s32.totalorder %s25, 1
    %p90 = por %p88, %p89
    %p91 = scmp.ne.s32.totalorder %s82, %s83
    %p92 = scmp.eq.s32.totalorder %s25, 0
    %p93 = por %p91, %p92
    %p94 = scmp.ne.s32.totalorder %s82, %s83
    %p95 = scmp.eq.s32.totalorder %s26, 1
    %p96 = por %p94, %p95
    %p98 = scmp.ne.s32.totalorder %s83, %s97
    %p99 = scmp.eq.s32.totalorder %s26, 0
    %p100 = por %p98, %p99
    %s102 = sadd.s32 %s101, 1
    %p105 = scmp.eq.s32.totalorder %s20, 1
    %p106 = scmp.ne.s32.totalorder %s101, %s103
    %p107 = scmp.eq.s32.totalorder %s20, 0
    %p108 = por %p106, %p107
    %p109 = scmp.ne.s32.totalorder %s101, %s103
    %p110 = scmp.eq.s32.totalorder %s25, 1
    %p111 = por %p109, %p110
    %p112 = scmp.ne.s32.totalorder %s103, %s104
    %p113 = scmp.eq.s32.totalorder %s25, 0
    %p114 = por %p112, %p113
    %p115 = scmp.ne.s32.totalorder %s103, %s104
    %p116 = scmp.eq.s32.totalorder %s26, 1
    %p117 = por %p115, %p116
    %p119 = scmp.ne.s32.totalorder %s104, %s118
    %p120 = scmp.eq.s32.totalorder %s26, 0
    %p121 = por %p119, %p120
    %s123 = sadd.s32 %s122, 1
    %p126 = scmp.eq.s32.totalorder %s20, 1
    %p127 = scmp.ne.s32.totalorder %s122, %s124
    %p128 = scmp.eq.s32.totalorder %s20, 0
    %p129 = por %p127, %p128
    %p130 = scmp.ne.s32.totalorder %s122, %s124
    %p131 = scmp.eq.s32.totalorder %s25, 1
    %p132 = por %p130, %p131
    %p133 = scmp.ne.s32.totalorder %s124, %s125
    %p134 = scmp.eq.s32.totalorder %s25, 0
    %p135 = por %p133, %p134
    %p136 = scmp.ne.s32.totalorder %s124, %s125
    %p137 = scmp.eq.s32.totalorder %s26, 1
    %p138 = por %p136, %p137
    %p140 = scmp.ne.s32.totalorder %s125, %s139
    %p141 = scmp.eq.s32.totalorder %s26, 0
    %p142 = por %p140, %p141
    %s144 = sadd.s32 %s143, 1
    %p147 = scmp.eq.s32.totalorder %s20, 1
    %p148 = scmp.ne.s32.totalorder %s143, %s145
    %p149 = scmp.eq.s32.totalorder %s20, 0
    %p150 = por %p148, %p149
    %p151 = scmp.ne.s32.totalorder %s143, %s145
    %p152 = scmp.eq.s32.totalorder %s25, 1
    %p153 = por %p151, %p152
    %p154 = scmp.ne.s32.totalorder %s145, %s146
    %p155 = scmp.eq.s32.totalorder %s25, 0
    %p156 = por %p154, %p155
    %p157 = scmp.ne.s32.totalorder %s145, %s146
    %p158 = scmp.eq.s32.totalorder %s26, 1
    %p159 = por %p157, %p158
    %p161 = scmp.ne.s32.totalorder %s146, %s160
    %p162 = scmp.eq.s32.totalorder %s26, 0
    %p163 = por %p161, %p162
    %s165 = sadd.s32 %s164, 1
    %p168 = scmp.eq.s32.totalorder %s20, 1
    %p169 = scmp.ne.s32.totalorder %s164, %s166
    %p170 = scmp.eq.s32.totalorder %s20, 0
    %p171 = por %p169, %p170
    %p172 = scmp.ne.s32.totalorder %s164, %s166
    %p173 = scmp.eq.s32.totalorder %s25, 1
    %p174 = por %p172, %p173
    %p175 = scmp.ne.s32.totalorder %s166, %s167
    %p176 = scmp.eq.s32.totalorder %s25, 0
    %p177 = por %p175, %p176
    %p178 = scmp.ne.s32.totalorder %s166, %s167
    %p179 = scmp.eq.s32.totalorder %s26, 1
    %p180 = por %p178, %p179
    %p182 = scmp.ne.s32.totalorder %s167, %s181
    %p183 = scmp.eq.s32.totalorder %s26, 0
    %p184 = por %p182, %p183
    %s186 = sadd.s32 %s185, 1
    %p189 = scmp.eq.s32.totalorder %s20, 1
    %p190 = scmp.ne.s32.totalorder %s185, %s187
    %p191 = scmp.eq.s32.totalorder %s20, 0
    %p192 = por %p190, %p191
    %p193 = scmp.ne.s32.totalorder %s185, %s187
    %p194 = scmp.eq.s32.totalorder %s25, 1
    %p195 = por %p193, %p194
    %p196 = scmp.ne.s32.totalorder %s187, %s188
    %p197 = scmp.eq.s32.totalorder %s25, 0
    %p198 = por %p196, %p197
    %p199 = scmp.ne.s32.totalorder %s187, %s188
    %p200 = scmp.eq.s32.totalorder %s26, 1
    %p201 = por %p199, %p200
    %p203 = scmp.ne.s32.totalorder %s188, %s202
    %p204 = scmp.eq.s32.totalorder %s26, 0
    %p205 = por %p203, %p204
    %s207 = sadd.s32 %s206, 1
    %p210 = scmp.eq.s32.totalorder %s20, 1
    %p211 = scmp.ne.s32.totalorder %s206, %s208
    %p212 = scmp.eq.s32.totalorder %s20, 0
    %p213 = por %p211, %p212
    %p214 = scmp.ne.s32.totalorder %s206, %s208
    %p215 = scmp.eq.s32.totalorder %s25, 1
    %p216 = por %p214, %p215
    %p217 = scmp.ne.s32.totalorder %s208, %s209
    %p218 = scmp.eq.s32.totalorder %s25, 0
    %p219 = por %p217, %p218
    %p220 = scmp.ne.s32.totalorder %s208, %s209
    %p221 = scmp.eq.s32.totalorder %s26, 1
    %p222 = por %p220, %p221
    %p224 = scmp.ne.s32.totalorder %s209, %s223
    %p225 = scmp.eq.s32.totalorder %s26, 0
    %p226 = por %p224, %p225
    %s228 = sadd.s32 %s227, 1
    %p231 = scmp.eq.s32.totalorder %s20, 1
    %p232 = scmp.ne.s32.totalorder %s227, %s229
    %p233 = scmp.eq.s32.totalorder %s20, 0
    %p234 = por %p232, %p233
    %p235 = scmp.ne.s32.totalorder %s227, %s229
    %p236 = scmp.eq.s32.totalorder %s25, 1
    %p237 = por %p235, %p236
    %p238 = scmp.ne.s32.totalorder %s229, %s230
    %p239 = scmp.eq.s32.totalorder %s25, 0
    %p240 = por %p238, %p239
    %p241 = scmp.ne.s32.totalorder %s229, %s230
    %p242 = scmp.eq.s32.totalorder %s26, 1
    %p243 = por %p241, %p242
    %p245 = scmp.ne.s32.totalorder %s230, %s244
    %p246 = scmp.eq.s32.totalorder %s26, 0
    %p247 = por %p245, %p246
    %s249 = sadd.s32 %s248, 1
    %p252 = scmp.eq.s32.totalorder %s20, 1
    %p253 = scmp.ne.s32.totalorder %s248, %s250
    %p254 = scmp.eq.s32.totalorder %s20, 0
    %p255 = por %p253, %p254
    %p256 = scmp.ne.s32.totalorder %s248, %s250
    %p257 = scmp.eq.s32.totalorder %s25, 1
    %p258 = por %p256, %p257
    %p259 = scmp.ne.s32.totalorder %s250, %s251
    %p260 = scmp.eq.s32.totalorder %s25, 0
    %p261 = por %p259, %p260
    %p262 = scmp.ne.s32.totalorder %s250, %s251
    %p263 = scmp.eq.s32.totalorder %s26, 1
    %p264 = por %p262, %p263
    %p266 = scmp.ne.s32.totalorder %s251, %s265
    %p267 = scmp.eq.s32.totalorder %s26, 0
    %p268 = por %p266, %p267
    %s270 = sadd.s32 %s269, 1
    %p273 = scmp.eq.s32.totalorder %s20, 1
    %p274 = scmp.ne.s32.totalorder %s269, %s271
    %p275 = scmp.eq.s32.totalorder %s20, 0
    %p276 = por %p274, %p275
    %p277 = scmp.ne.s32.totalorder %s269, %s271
    %p278 = scmp.eq.s32.totalorder %s25, 1
    %p279 = por %p277, %p278
    %p280 = scmp.ne.s32.totalorder %s271, %s272
    %p281 = scmp.eq.s32.totalorder %s25, 0
    %p282 = por %p280, %p281
    %p283 = scmp.ne.s32.totalorder %s271, %s272
    %p284 = scmp.eq.s32.totalorder %s26, 1
    %p285 = por %p283, %p284
    %p287 = scmp.ne.s32.totalorder %s272, %s286
    %p288 = scmp.eq.s32.totalorder %s26, 0
    %p289 = por %p287, %p288
    %s291 = sadd.s32 %s290, 1
    %p294 = scmp.eq.s32.totalorder %s20, 1
    %p295 = scmp.ne.s32.totalorder %s290, %s292
    %p296 = scmp.eq.s32.totalorder %s20, 0
    %p297 = por %p295, %p296
    %p298 = scmp.ne.s32.totalorder %s290, %s292
    %p299 = scmp.eq.s32.totalorder %s25, 1
    %p300 = por %p298, %p299
    %p301 = scmp.ne.s32.totalorder %s292, %s293
    %p302 = scmp.eq.s32.totalorder %s25, 0
    %p303 = por %p301, %p302
    %p304 = scmp.ne.s32.totalorder %s292, %s293
    %p305 = scmp.eq.s32.totalorder %s26, 1
    %p306 = por %p304, %p305
    %p308 = scmp.ne.s32.totalorder %s293, %s307
    %p309 = scmp.eq.s32.totalorder %s26, 0
    %p310 = por %p308, %p309
    %s312 = sadd.s32 %s311, 1
    %p315 = scmp.eq.s32.totalorder %s20, 1
    %p316 = scmp.ne.s32.totalorder %s311, %s313
    %p317 = scmp.eq.s32.totalorder %s20, 0
    %p318 = por %p316, %p317
    %p319 = scmp.ne.s32.totalorder %s311, %s313
    %p320 = scmp.eq.s32.totalorder %s25, 1
    %p321 = por %p319, %p320
    %p322 = scmp.ne.s32.totalorder %s313, %s314
    %p323 = scmp.eq.s32.totalorder %s25, 0
    %p324 = por %p322, %p323
    %p325 = scmp.ne.s32.totalorder %s313, %s314
    %p326 = scmp.eq.s32.totalorder %s26, 1
    %p327 = por %p325, %p326
    %p329 = scmp.ne.s32.totalorder %s314, %s328
    %p330 = scmp.eq.s32.totalorder %s26, 0
    %p331 = por %p329, %p330
    %s332 = ssub.s32 %s20, %s27
    %p333 = scmp.eq.s32.totalorder %s332, 0
    %s335 = sadd.s32 %s334, 1
    %s336 = scalar_select %p333, %s334, %s335
    %p339 = pneg %p333
    %p340 = scmp.eq.s32.totalorder %s20, 1
    %p341 = por %p339, %p340
    %p342 = scmp.ne.s32.totalorder %s334, %s337
    %p343 = scmp.eq.s32.totalorder %s20, 0
    %p344 = por %p342, %p343
    %p345 = scmp.ne.s32.totalorder %s334, %s337
    %p346 = scmp.eq.s32.totalorder %s25, 1
    %p347 = por %p345, %p346
    %p348 = scmp.ne.s32.totalorder %s337, %s338
    %p349 = scmp.eq.s32.totalorder %s25, 0
    %p350 = por %p348, %p349
    %p351 = scmp.ne.s32.totalorder %s337, %s338
    %p352 = scmp.eq.s32.totalorder %s26, 1
    %p353 = por %p351, %p352
    %p355 = scmp.ne.s32.totalorder %s338, %s354
    %p356 = scmp.eq.s32.totalorder %s26, 0
    %p357 = por %p355, %p356
    %p358 = scmp.le.s32.totalorder 1, %s20
    %p359 = scmp.lt.s32.totalorder %s20, 3
    %p360 = pnand %p358, %p359
    %p361 = pneg %p360
    // Predicated region
    $region9: #{tbeo_encoder_pallas.1} parent=5 // pred_check
      _
    $region10: #{tbeo_encoder_pallas.1} parent=5 // pred_check_branch
      %363 = sbr.rel (%p360) target = $region12
    $region11: #{tbeo_encoder_pallas.1} parent=5 // pred_region
      %s364 = ssub.s32 %s20, 1
      // Predicated region
      $region13: #{tbeo_encoder_pallas.1} parent=11 // pred_check
        %p365 = pneg %p93
      $region14: #{tbeo_encoder_pallas.1} parent=11 // pred_check_branch
        %367 = sbr.rel (%p365) target = $region16
      $region15: #{tbeo_encoder_pallas.1} parent=11 // pred_region
        _
      $region16: #{tbeo_encoder_pallas.1} parent=11 // pred_fallthru
        _
      // Predicated region
      $region17: #{tbeo_encoder_pallas.1} parent=11 // pred_check
        %p368 = pneg %p114
      $region18: #{tbeo_encoder_pallas.1} parent=11 // pred_check_branch
        %370 = sbr.rel (%p368) target = $region20
      $region19: #{tbeo_encoder_pallas.1} parent=11 // pred_region
        _
      $region20: #{tbeo_encoder_pallas.1} parent=11 // pred_fallthru
        _
      // Predicated region
      $region21: #{tbeo_encoder_pallas.1} parent=11 // pred_check
        %p371 = pneg %p135
      $region22: #{tbeo_encoder_pallas.1} parent=11 // pred_check_branch
        %373 = sbr.rel (%p371) target = $region24
      $region23: #{tbeo_encoder_pallas.1} parent=11 // pred_region
        _
      $region24: #{tbeo_encoder_pallas.1} parent=11 // pred_fallthru
        _
      // Predicated region
      $region25: #{tbeo_encoder_pallas.1} parent=11 // pred_check
        %p374 = pneg %p156
      $region26: #{tbeo_encoder_pallas.1} parent=11 // pred_check_branch
        %376 = sbr.rel (%p374) target = $region28
      $region27: #{tbeo_encoder_pallas.1} parent=11 // pred_region
        _
      $region28: #{tbeo_encoder_pallas.1} parent=11 // pred_fallthru
        _
      // Predicated region
      $region29: #{tbeo_encoder_pallas.1} parent=11 // pred_check
        %p377 = pneg %p177
      $region30: #{tbeo_encoder_pallas.1} parent=11 // pred_check_branch
        %379 = sbr.rel (%p377) target = $region32
      $region31: #{tbeo_encoder_pallas.1} parent=11 // pred_region
        _
      $region32: #{tbeo_encoder_pallas.1} parent=11 // pred_fallthru
        _
      // Predicated region
      $region33: #{tbeo_encoder_pallas.1} parent=11 // pred_check
        %p380 = pneg %p198
      $region34: #{tbeo_encoder_pallas.1} parent=11 // pred_check_branch
        %382 = sbr.rel (%p380) target = $region36
      $region35: #{tbeo_encoder_pallas.1} parent=11 // pred_region
        _
      $region36: #{tbeo_encoder_pallas.1} parent=11 // pred_fallthru
        _
      // Predicated region
      $region37: #{tbeo_encoder_pallas.1} parent=11 // pred_check
        %p383 = pneg %p219
      $region38: #{tbeo_encoder_pallas.1} parent=11 // pred_check_branch
        %385 = sbr.rel (%p383) target = $region40
      $region39: #{tbeo_encoder_pallas.1} parent=11 // pred_region
        _
      $region40: #{tbeo_encoder_pallas.1} parent=11 // pred_fallthru
        _
      // Predicated region
      $region41: #{tbeo_encoder_pallas.1} parent=11 // pred_check
        %p386 = pneg %p240
      $region42: #{tbeo_encoder_pallas.1} parent=11 // pred_check_branch
        %388 = sbr.rel (%p386) target = $region44
      $region43: #{tbeo_encoder_pallas.1} parent=11 // pred_region
        _
      $region44: #{tbeo_encoder_pallas.1} parent=11 // pred_fallthru
        _
      // Predicated region
      $region45: #{tbeo_encoder_pallas.1} parent=11 // pred_check
        %p389 = pneg %p261
      $region46: #{tbeo_encoder_pallas.1} parent=11 // pred_check_branch
        %391 = sbr.rel (%p389) target = $region48
      $region47: #{tbeo_encoder_pallas.1} parent=11 // pred_region
        _
      $region48: #{tbeo_encoder_pallas.1} parent=11 // pred_fallthru
        _
      // Predicated region
      $region49: #{tbeo_encoder_pallas.1} parent=11 // pred_check
        %p392 = pneg %p282
      $region50: #{tbeo_encoder_pallas.1} parent=11 // pred_check_branch
        %394 = sbr.rel (%p392) target = $region52
      $region51: #{tbeo_encoder_pallas.1} parent=11 // pred_region
        _
      $region52: #{tbeo_encoder_pallas.1} parent=11 // pred_fallthru
        _
      // Predicated region
      $region53: #{tbeo_encoder_pallas.1} parent=11 // pred_check
        %p395 = pneg %p303
      $region54: #{tbeo_encoder_pallas.1} parent=11 // pred_check_branch
        %397 = sbr.rel (%p395) target = $region56
      $region55: #{tbeo_encoder_pallas.1} parent=11 // pred_region
        _
      $region56: #{tbeo_encoder_pallas.1} parent=11 // pred_fallthru
        _
      // Predicated region
      $region57: #{tbeo_encoder_pallas.1} parent=11 // pred_check
        %p398 = pneg %p324
      $region58: #{tbeo_encoder_pallas.1} parent=11 // pred_check_branch
        %400 = sbr.rel (%p398) target = $region60
      $region59: #{tbeo_encoder_pallas.1} parent=11 // pred_region
        _
      $region60: #{tbeo_encoder_pallas.1} parent=11 // pred_fallthru
        _
    $region12: #{tbeo_encoder_pallas.1} parent=5 // pred_fallthru
      _
    %p401 = scmp.lt.s32.totalorder %s20, 2
    // Predicated region
    $region61: #{tbeo_encoder_pallas.1} parent=5 // pred_check
      %p402 = pneg %p401
    $region62: #{tbeo_encoder_pallas.1} parent=5 // pred_check_branch
      %404 = sbr.rel (%p402) target = $region64
    $region63: #{tbeo_encoder_pallas.1} parent=5 // pred_region
      // Predicated region
      $region65: #{tbeo_encoder_pallas.1} parent=63 // pred_check
        %p405 = pneg %p40
      $region66: #{tbeo_encoder_pallas.1} parent=63 // pred_check_branch
        %407 = sbr.rel (%p405) target = $region68
      $region67: #{tbeo_encoder_pallas.1} parent=63 // pred_region
        %p408 = scmp.lt.s32.totalorder %s20, 1
        %s409 = scalar_select %p408, %s20, 1
        %s410 = smul.addr %s409, 96
        %s411 = smul.addr %s410, 4
        %s412 = scalar_lea.vmem %s0, %s411
      $region68: #{tbeo_encoder_pallas.1} parent=63 // pred_fallthru
        _
      // Predicated region
      $region69: #{tbeo_encoder_pallas.1} parent=63 // pred_check
        %p413 = pneg %p66
      $region70: #{tbeo_encoder_pallas.1} parent=63 // pred_check_branch
        %415 = sbr.rel (%p413) target = $region72
      $region71: #{tbeo_encoder_pallas.1} parent=63 // pred_region
        %p416 = scmp.lt.s32.totalorder %s20, 1
        %s417 = scalar_select %p416, %s20, 1
        %s418 = smul.addr %s417, 4
        %s419 = scalar_lea.vmem %s1, %s418
      $region72: #{tbeo_encoder_pallas.1} parent=63 // pred_fallthru
        _
    $region64: #{tbeo_encoder_pallas.1} parent=5 // pred_fallthru
      _
    %p420 = scmp.le.s32.totalorder 1, %s20
    %p421 = scmp.lt.s32.totalorder %s20, 3
    %p422 = pnand %p420, %p421
    %p423 = pneg %p422
    // Predicated region
    $region73: #{tbeo_encoder_pallas.1} parent=5 // pred_check
      _
    $region74: #{tbeo_encoder_pallas.1} parent=5 // pred_check_branch
      %425 = sbr.rel (%p422) target = $region76
    $region75: #{tbeo_encoder_pallas.1} parent=5 // pred_region
      %s426 = ssub.s32 %s20, 1
      %p427 = scmp.lt.s32.totalorder %s25, 1
      %s428 = scalar_select %p427, %s25, 1
      %s429 = smul.addr %s428, 96
      %s430 = smul.addr %s429, 4
      %s431 = scalar_lea.vmem %s0, %s430
      %p432 = pneg %p46
      %p433 = pneg %p43
      %p434 = scmp.lt.s32.totalorder %s25, 1
      %s435 = scalar_select %p434, %s25, 1
      %s436 = smul.addr %s435, 4
      %s437 = scalar_lea.vmem %s1, %s436
      %p438 = pneg %p72
      %p439 = pneg %p69
      %p440 = pneg %p93
      %p441 = pneg %p90
      %p442 = pneg %p114
      %p443 = pneg %p111
      %p444 = pneg %p135
      %p445 = pneg %p132
      %p446 = pneg %p156
      %p447 = pneg %p153
      %p448 = pneg %p177
      %p449 = pneg %p174
      %p450 = pneg %p198
      %p451 = pneg %p195
      %p452 = pneg %p219
      %p453 = pneg %p216
      %p454 = pneg %p240
      %p455 = pneg %p237
      %p456 = pneg %p261
      %p457 = pneg %p258
      %p458 = pneg %p282
      %p459 = pneg %p279
      %p460 = pneg %p303
      %p461 = pneg %p300
      %p462 = pneg %p324
      %p463 = pneg %p321
      %p464 = pneg %p350
      %p465 = pneg %p347
      %p466 = scmp.lt.s32.totalorder %s25, 1
      %s467 = scalar_select %p466, %s25, 1
      %s468 = smul.addr %s467, 4
      %s469 = scalar_lea.vmem %s14, %s468
      %p470 = scmp.lt.s32.totalorder %s25, 1
      %s471 = scalar_select %p470, %s25, 1
      %s472 = smul.addr %s471, 96
      %s473 = smul.addr %s472, 4
      %s474 = scalar_lea.vmem %s0, %s473
      %p475 = scmp.lt.s32.totalorder %s25, 1
      %s476 = scalar_select %p475, %s25, 1
      %s477 = smul.addr %s476, 4
      %s478 = scalar_lea.vmem %s1, %s477
      %p479 = scmp.lt.s32.totalorder %s25, 1
      %s480 = scalar_select %p479, %s25, 1
      %s481 = smul.addr %s480, 4
      %s482 = scalar_lea.vmem %s14, %s481
      %v484 = vld [vmem:[%s2] sm:$0xff]
      %v485 = vld [vmem:[%s474] sm:$0xff]
      %v486 = vld [vmem:[%s474 + $0x8] sm:$0xff]
      %v487 = vld [vmem:[%s474 + $0x10] sm:$0xff]
      %v488 = vld [vmem:[%s474 + $0x18] sm:$0xff]
      %v489 = vld [vmem:[%s474 + $0x20] sm:$0xff]
      %v490 = vld [vmem:[%s474 + $0x28] sm:$0xff]
      %v491 = vld [vmem:[%s474 + $0x30] sm:$0xff]
      %v492 = vld [vmem:[%s474 + $0x38] sm:$0xff]
      %v493 = vld [vmem:[%s474 + $0x40] sm:$0xff]
      %v494 = vld [vmem:[%s474 + $0x48] sm:$0xff]
      %v495 = vld [vmem:[%s474 + $0x50] sm:$0xff]
      %v496 = vld [vmem:[%s474 + $0x58] sm:$0xff]
      %v497 = vld [vmem:[%s474 + $0x60] sm:$0xff]
      %v498 = vld [vmem:[%s474 + $0x68] sm:$0xff]
      %v499 = vld [vmem:[%s474 + $0x70] sm:$0xff]
      %v500 = vld [vmem:[%s474 + $0x78] sm:$0xff]
      %v501 = vld [vmem:[%s474 + $0x80] sm:$0xff]
      %v502 = vld [vmem:[%s474 + $0x88] sm:$0xff]
      %v503 = vld [vmem:[%s474 + $0x90] sm:$0xff]
      %v504 = vld [vmem:[%s474 + $0x98] sm:$0xff]
      %v505 = vld [vmem:[%s474 + $0xa0] sm:$0xff]
      %v506 = vld [vmem:[%s474 + $0xa8] sm:$0xff]
      %v507 = vld [vmem:[%s474 + $0xb0] sm:$0xff]
      %v508 = vld [vmem:[%s474 + $0xb8] sm:$0xff]
      %v509 = vld [vmem:[%s474 + $0xc0] sm:$0xff]
      %v510 = vld [vmem:[%s474 + $0xc8] sm:$0xff]
      %v511 = vld [vmem:[%s474 + $0xd0] sm:$0xff]
      %v512 = vld [vmem:[%s474 + $0xd8] sm:$0xff]
      %v513 = vld [vmem:[%s474 + $0xe0] sm:$0xff]
      %v514 = vld [vmem:[%s474 + $0xe8] sm:$0xff]
      %v515 = vld [vmem:[%s474 + $0xf0] sm:$0xff]
      %v516 = vld [vmem:[%s474 + $0xf8] sm:$0xff]
      %v517 = vld [vmem:[%s474 + $0x100] sm:$0xff]
      %v518 = vld [vmem:[%s474 + $0x108] sm:$0xff]
      %v519 = vld [vmem:[%s474 + $0x110] sm:$0xff]
      %v520 = vld [vmem:[%s474 + $0x118] sm:$0xff]
      %v521 = vld [vmem:[%s474 + $0x120] sm:$0xff]
      %v522 = vld [vmem:[%s474 + $0x128] sm:$0xff]
      %v523 = vld [vmem:[%s474 + $0x130] sm:$0xff]
      %v524 = vld [vmem:[%s474 + $0x138] sm:$0xff]
      %v525 = vld [vmem:[%s474 + $0x140] sm:$0xff]
      %v526 = vld [vmem:[%s474 + $0x148] sm:$0xff]
      %v527 = vld [vmem:[%s474 + $0x150] sm:$0xff]
      %v528 = vld [vmem:[%s474 + $0x158] sm:$0xff]
      %v529 = vld [vmem:[%s474 + $0x160] sm:$0xff]
      %v530 = vld [vmem:[%s474 + $0x168] sm:$0xff]
      %v531 = vld [vmem:[%s474 + $0x170] sm:$0xff]
      %v532 = vld [vmem:[%s474 + $0x178] sm:$0xff]
      %v533 = vld [vmem:[%s3] sm:$0xff]
      %535 = vset.pattern.permute.xlu0 0
      %536 = vperm.xlu0 %535, %v533
      %v537 = vpop.permute.xlu0 %536
      %v540 = vunpack.c.l.b16 %v484
      %v541 = vunpack.c.h.b16 %v484
      %v542 = vpack.c.b16 %v540, %v540
      %v543 = vpack.c.b16 %v541, %v541
      %v593 = vunpack.c.l.b16 %v485
      %v594 = vunpack.c.h.b16 %v485
      %v595 = vunpack.c.l.b16 %v486
      %v596 = vunpack.c.h.b16 %v486
      %v597 = vunpack.c.l.b16 %v487
      %v598 = vunpack.c.h.b16 %v487
      %v599 = vunpack.c.l.b16 %v488
      %v600 = vunpack.c.h.b16 %v488
      %v601 = vunpack.c.l.b16 %v489
      %v602 = vunpack.c.h.b16 %v489
      %v603 = vunpack.c.l.b16 %v490
      %v604 = vunpack.c.h.b16 %v490
      %v605 = vunpack.c.l.b16 %v491
      %v606 = vunpack.c.h.b16 %v491
      %v607 = vunpack.c.l.b16 %v492
      %v608 = vunpack.c.h.b16 %v492
      %v609 = vunpack.c.l.b16 %v493
      %v610 = vunpack.c.h.b16 %v493
      %v611 = vunpack.c.l.b16 %v494
      %v612 = vunpack.c.h.b16 %v494
      %v613 = vunpack.c.l.b16 %v495
      %v614 = vunpack.c.h.b16 %v495
      %v615 = vunpack.c.l.b16 %v496
      %v616 = vunpack.c.h.b16 %v496
      %v617 = vunpack.c.l.b16 %v497
      %v618 = vunpack.c.h.b16 %v497
      %v619 = vunpack.c.l.b16 %v498
      %v620 = vunpack.c.h.b16 %v498
      %v621 = vunpack.c.l.b16 %v499
      %v622 = vunpack.c.h.b16 %v499
      %v623 = vunpack.c.l.b16 %v500
      %v624 = vunpack.c.h.b16 %v500
      %v625 = vunpack.c.l.b16 %v501
      %v626 = vunpack.c.h.b16 %v501
      %v627 = vunpack.c.l.b16 %v502
      %v628 = vunpack.c.h.b16 %v502
      %v629 = vunpack.c.l.b16 %v503
      %v630 = vunpack.c.h.b16 %v503
      %v631 = vunpack.c.l.b16 %v504
      %v632 = vunpack.c.h.b16 %v504
      %v633 = vunpack.c.l.b16 %v505
      %v634 = vunpack.c.h.b16 %v505
      %v635 = vunpack.c.l.b16 %v506
      %v636 = vunpack.c.h.b16 %v506
      %v637 = vunpack.c.l.b16 %v507
      %v638 = vunpack.c.h.b16 %v507
      %v639 = vunpack.c.l.b16 %v508
      %v640 = vunpack.c.h.b16 %v508
      %v641 = vunpack.c.l.b16 %v509
      %v642 = vunpack.c.h.b16 %v509
      %v643 = vunpack.c.l.b16 %v510
      %v644 = vunpack.c.h.b16 %v510
      %v645 = vunpack.c.l.b16 %v511
      %v646 = vunpack.c.h.b16 %v511
      %v647 = vunpack.c.l.b16 %v512
      %v648 = vunpack.c.h.b16 %v512
      %v649 = vunpack.c.l.b16 %v513
      %v650 = vunpack.c.h.b16 %v513
      %v651 = vunpack.c.l.b16 %v514
      %v652 = vunpack.c.h.b16 %v514
      %v653 = vunpack.c.l.b16 %v515
      %v654 = vunpack.c.h.b16 %v515
      %v655 = vunpack.c.l.b16 %v516
      %v656 = vunpack.c.h.b16 %v516
      %v657 = vunpack.c.l.b16 %v517
      %v658 = vunpack.c.h.b16 %v517
      %v659 = vunpack.c.l.b16 %v518
      %v660 = vunpack.c.h.b16 %v518
      %v661 = vunpack.c.l.b16 %v519
      %v662 = vunpack.c.h.b16 %v519
      %v663 = vunpack.c.l.b16 %v520
      %v664 = vunpack.c.h.b16 %v520
      %v665 = vunpack.c.l.b16 %v521
      %v666 = vunpack.c.h.b16 %v521
      %v667 = vunpack.c.l.b16 %v522
      %v668 = vunpack.c.h.b16 %v522
      %v669 = vunpack.c.l.b16 %v523
      %v670 = vunpack.c.h.b16 %v523
      %v671 = vunpack.c.l.b16 %v524
      %v672 = vunpack.c.h.b16 %v524
      %v673 = vunpack.c.l.b16 %v525
      %v674 = vunpack.c.h.b16 %v525
      %v675 = vunpack.c.l.b16 %v526
      %v676 = vunpack.c.h.b16 %v526
      %v677 = vunpack.c.l.b16 %v527
      %v678 = vunpack.c.h.b16 %v527
      %v679 = vunpack.c.l.b16 %v528
      %v680 = vunpack.c.h.b16 %v528
      %v681 = vunpack.c.l.b16 %v529
      %v682 = vunpack.c.h.b16 %v529
      %v683 = vunpack.c.l.b16 %v530
      %v684 = vunpack.c.h.b16 %v530
      %v685 = vunpack.c.l.b16 %v531
      %v686 = vunpack.c.h.b16 %v531
      %v687 = vunpack.c.l.b16 %v532
      %v688 = vunpack.c.h.b16 %v532
      %v689 = vpack.c.b16 %v597, %v593
      %v690 = vpack.c.b16 %v598, %v594
      %v691 = vpack.c.b16 %v599, %v595
      %v692 = vpack.c.b16 %v600, %v596
      %v693 = vpack.c.b16 %v605, %v601
      %v694 = vpack.c.b16 %v606, %v602
      %v695 = vpack.c.b16 %v607, %v603
      %v696 = vpack.c.b16 %v608, %v604
      %v697 = vpack.c.b16 %v613, %v609
      %v698 = vpack.c.b16 %v614, %v610
      %v699 = vpack.c.b16 %v615, %v611
      %v700 = vpack.c.b16 %v616, %v612
      %v701 = vpack.c.b16 %v621, %v617
      %v702 = vpack.c.b16 %v622, %v618
      %v703 = vpack.c.b16 %v623, %v619
      %v704 = vpack.c.b16 %v624, %v620
      %v705 = vpack.c.b16 %v629, %v625
      %v706 = vpack.c.b16 %v630, %v626
      %v707 = vpack.c.b16 %v631, %v627
      %v708 = vpack.c.b16 %v632, %v628
      %v709 = vpack.c.b16 %v637, %v633
      %v710 = vpack.c.b16 %v638, %v634
      %v711 = vpack.c.b16 %v639, %v635
      %v712 = vpack.c.b16 %v640, %v636
      %v713 = vpack.c.b16 %v645, %v641
      %v714 = vpack.c.b16 %v646, %v642
      %v715 = vpack.c.b16 %v647, %v643
      %v716 = vpack.c.b16 %v648, %v644
      %v717 = vpack.c.b16 %v653, %v649
      %v718 = vpack.c.b16 %v654, %v650
      %v719 = vpack.c.b16 %v655, %v651
      %v720 = vpack.c.b16 %v656, %v652
      %v721 = vpack.c.b16 %v661, %v657
      %v722 = vpack.c.b16 %v662, %v658
      %v723 = vpack.c.b16 %v663, %v659
      %v724 = vpack.c.b16 %v664, %v660
      %v725 = vpack.c.b16 %v669, %v665
      %v726 = vpack.c.b16 %v670, %v666
      %v727 = vpack.c.b16 %v671, %v667
      %v728 = vpack.c.b16 %v672, %v668
      %v729 = vpack.c.b16 %v677, %v673
      %v730 = vpack.c.b16 %v678, %v674
      %v731 = vpack.c.b16 %v679, %v675
      %v732 = vpack.c.b16 %v680, %v676
      %v733 = vpack.c.b16 %v685, %v681
      %v734 = vpack.c.b16 %v686, %v682
      %v735 = vpack.c.b16 %v687, %v683
      %v736 = vpack.c.b16 %v688, %v684
      %vm785 = vcmask 523264
      %v787 = vsel %vm785, %v543, 0
      %789 = vmatpush.bf16.msra.mxu0 %v717
      %790 = vmatpush.bf16.msra.mxu0 %v713
      %791 = vmatpush.bf16.msra.mxu0 %v709
      %792 = vmatpush.bf16.msra.mxu0 %v705
      %793 = vmatpush.bf16.msra.mxu0 %v701
      %794 = vmatpush.bf16.msra.mxu0 %v697
      %795 = vmatpush.bf16.msra.mxu0 %v693
      %796 = vmatpush.bf16.msra.mxu0 %v689
      %797 = vmatmul.bf16.gmra.mxu0 %v542
      %v798 = vpop.f32.mrf.mxu0
      %v799 = vadd.f32 %v537, %v798
      %v800 = vpop.f32.mrf.mxu0
      %801 = vdwg.mxu0
      %802 = vmatpush.bf16.msra.mxu0 0
      %803 = vmatpush.bf16.msra.mxu0 0
      %804 = vmatpush.bf16.msra.mxu0 0
      %805 = vmatpush.bf16.msra.mxu0 0
      %806 = vmatpush.bf16.msra.mxu0 %v733
      %807 = vmatpush.bf16.msra.mxu0 %v729
      %808 = vmatpush.bf16.msra.mxu0 %v725
      %809 = vmatpush.bf16.msra.mxu0 %v721
      %810 = vmatmul.bf16.gmra.mxu0 %v787
      %v811 = vpop.f32.mrf.mxu0
      %v812 = vadd.f32 %v799, %v811
      %v813 = vpop.f32.mrf.mxu0
      %814 = vdwg.mxu0
      %815 = vmatpush.bf16.msra.mxu0 %v718
      %816 = vmatpush.bf16.msra.mxu0 %v714
      %817 = vmatpush.bf16.msra.mxu0 %v710
      %818 = vmatpush.bf16.msra.mxu0 %v706
      %819 = vmatpush.bf16.msra.mxu0 %v702
      %820 = vmatpush.bf16.msra.mxu0 %v698
      %821 = vmatpush.bf16.msra.mxu0 %v694
      %822 = vmatpush.bf16.msra.mxu0 %v690
      %823 = vmatmul.bf16.gmra.mxu0 %v542
      %v824 = vpop.f32.mrf.mxu0
      %v825 = vadd.f32 %v537, %v824
      %v826 = vpop.f32.mrf.mxu0
      %827 = vdwg.mxu0
      %828 = vmatpush.bf16.msra.mxu0 0
      %829 = vmatpush.bf16.msra.mxu0 0
      %830 = vmatpush.bf16.msra.mxu0 0
      %831 = vmatpush.bf16.msra.mxu0 0
      %832 = vmatpush.bf16.msra.mxu0 %v734
      %833 = vmatpush.bf16.msra.mxu0 %v730
      %834 = vmatpush.bf16.msra.mxu0 %v726
      %835 = vmatpush.bf16.msra.mxu0 %v722
      %836 = vmatmul.bf16.gmra.mxu0 %v787
      %v837 = vpop.f32.mrf.mxu0
      %v838 = vadd.f32 %v825, %v837
      %v839 = vpop.f32.mrf.mxu0
      %840 = vdwg.mxu0
      %841 = vmatpush.bf16.msra.mxu0 %v719
      %842 = vmatpush.bf16.msra.mxu0 %v715
      %843 = vmatpush.bf16.msra.mxu0 %v711
      %844 = vmatpush.bf16.msra.mxu0 %v707
      %845 = vmatpush.bf16.msra.mxu0 %v703
      %846 = vmatpush.bf16.msra.mxu0 %v699
      %847 = vmatpush.bf16.msra.mxu0 %v695
      %848 = vmatpush.bf16.msra.mxu0 %v691
      %849 = vmatmul.bf16.gmra.mxu0 %v542
      %v850 = vpop.f32.mrf.mxu0
      %v851 = vadd.f32 %v537, %v850
      %v852 = vpop.f32.mrf.mxu0
      %853 = vdwg.mxu0
      %854 = vmatpush.bf16.msra.mxu0 0
      %855 = vmatpush.bf16.msra.mxu0 0
      %856 = vmatpush.bf16.msra.mxu0 0
      %857 = vmatpush.bf16.msra.mxu0 0
      %858 = vmatpush.bf16.msra.mxu0 %v735
      %859 = vmatpush.bf16.msra.mxu0 %v731
      %860 = vmatpush.bf16.msra.mxu0 %v727
      %861 = vmatpush.bf16.msra.mxu0 %v723
      %862 = vmatmul.bf16.gmra.mxu0 %v787
      %v863 = vpop.f32.mrf.mxu0
      %v864 = vadd.f32 %v851, %v863
      %v865 = vpop.f32.mrf.mxu0
      %866 = vdwg.mxu0
      %867 = vmatpush.bf16.msra.mxu0 %v720
      %868 = vmatpush.bf16.msra.mxu0 %v716
      %869 = vmatpush.bf16.msra.mxu0 %v712
      %870 = vmatpush.bf16.msra.mxu0 %v708
      %871 = vmatpush.bf16.msra.mxu0 %v704
      %872 = vmatpush.bf16.msra.mxu0 %v700
      %873 = vmatpush.bf16.msra.mxu0 %v696
      %874 = vmatpush.bf16.msra.mxu0 %v692
      %875 = vmatmul.bf16.gmra.mxu0 %v542
      %v876 = vpop.f32.mrf.mxu0
      %v877 = vadd.f32 %v537, %v876
      %v878 = vpop.f32.mrf.mxu0
      %879 = vdwg.mxu0
      %880 = vmatpush.bf16.msra.mxu0 0
      %881 = vmatpush.bf16.msra.mxu0 0
      %882 = vmatpush.bf16.msra.mxu0 0
      %883 = vmatpush.bf16.msra.mxu0 0
      %884 = vmatpush.bf16.msra.mxu0 %v736
      %885 = vmatpush.bf16.msra.mxu0 %v732
      %886 = vmatpush.bf16.msra.mxu0 %v728
      %887 = vmatpush.bf16.msra.mxu0 %v724
      %888 = vmatmul.bf16.gmra.mxu0 %v787
      %v889 = vpop.f32.mrf.mxu0
      %v890 = vadd.f32 %v877, %v889
      %v891 = vpop.f32.mrf.mxu0
      %892 = vdwg.mxu0
      %v893 = vmax.f32 %v812, 0.0
      %v894 = vmax.f32 %v838, 0.0
      %v895 = vmax.f32 %v864, 0.0
      %v896 = vmax.f32 %v890, 0.0
      %v897 = vpack.c.bf16 %v893, %v893
      %v898 = vpack.c.bf16 %v894, %v894
      %v899 = vpack.c.bf16 %v895, %v895
      %v900 = vpack.c.bf16 %v896, %v896
      %v901 = vld [vmem:[%s4] sm:$0xff]
      %v902 = vld [vmem:[%s4 + $0x8] sm:$0xff]
      %v903 = vld [vmem:[%s4 + $0x10] sm:$0xff]
      %v904 = vld [vmem:[%s4 + $0x18] sm:$0xff]
      %v905 = vld [vmem:[%s4 + $0x20] sm:$0xff]
      %v906 = vld [vmem:[%s4 + $0x28] sm:$0xff]
      %v907 = vld [vmem:[%s4 + $0x30] sm:$0xff]
      %v908 = vld [vmem:[%s4 + $0x38] sm:$0xff]
      %v909 = vld [vmem:[%s4 + $0x40] sm:$0xff]
      %v910 = vld [vmem:[%s4 + $0x48] sm:$0xff]
      %v911 = vld [vmem:[%s4 + $0x50] sm:$0xff]
      %v912 = vld [vmem:[%s4 + $0x58] sm:$0xff]
      %v913 = vld [vmem:[%s4 + $0x60] sm:$0xff]
      %v914 = vld [vmem:[%s4 + $0x68] sm:$0xff]
      %v915 = vld [vmem:[%s4 + $0x70] sm:$0xff]
      %v916 = vld [vmem:[%s4 + $0x78] sm:$0xff]
      %v917 = vld [vmem:[%s4 + $0x80] sm:$0xff]
      %v918 = vld [vmem:[%s4 + $0x88] sm:$0xff]
      %v919 = vld [vmem:[%s4 + $0x90] sm:$0xff]
      %v920 = vld [vmem:[%s4 + $0x98] sm:$0xff]
      %v921 = vld [vmem:[%s4 + $0xa0] sm:$0xff]
      %v922 = vld [vmem:[%s4 + $0xa8] sm:$0xff]
      %v923 = vld [vmem:[%s4 + $0xb0] sm:$0xff]
      %v924 = vld [vmem:[%s4 + $0xb8] sm:$0xff]
      %v925 = vld [vmem:[%s4 + $0xc0] sm:$0xff]
      %v926 = vld [vmem:[%s4 + $0xc8] sm:$0xff]
      %v927 = vld [vmem:[%s4 + $0xd0] sm:$0xff]
      %v928 = vld [vmem:[%s4 + $0xd8] sm:$0xff]
      %v929 = vld [vmem:[%s4 + $0xe0] sm:$0xff]
      %v930 = vld [vmem:[%s4 + $0xe8] sm:$0xff]
      %v931 = vld [vmem:[%s4 + $0xf0] sm:$0xff]
      %v932 = vld [vmem:[%s4 + $0xf8] sm:$0xff]
      %v933 = vld [vmem:[%s4 + $0x100] sm:$0xff]
      %v934 = vld [vmem:[%s4 + $0x108] sm:$0xff]
      %v935 = vld [vmem:[%s4 + $0x110] sm:$0xff]
      %v936 = vld [vmem:[%s4 + $0x118] sm:$0xff]
      %v937 = vld [vmem:[%s4 + $0x120] sm:$0xff]
      %v938 = vld [vmem:[%s4 + $0x128] sm:$0xff]
      %v939 = vld [vmem:[%s4 + $0x130] sm:$0xff]
      %v940 = vld [vmem:[%s4 + $0x138] sm:$0xff]
      %v941 = vld [vmem:[%s4 + $0x140] sm:$0xff]
      %v942 = vld [vmem:[%s4 + $0x148] sm:$0xff]
      %v943 = vld [vmem:[%s4 + $0x150] sm:$0xff]
      %v944 = vld [vmem:[%s4 + $0x158] sm:$0xff]
      %v945 = vld [vmem:[%s4 + $0x160] sm:$0xff]
      %v946 = vld [vmem:[%s4 + $0x168] sm:$0xff]
      %v947 = vld [vmem:[%s4 + $0x170] sm:$0xff]
      %v948 = vld [vmem:[%s4 + $0x178] sm:$0xff]
      %v949 = vld [vmem:[%s4 + $0x180] sm:$0xff]
      %v950 = vld [vmem:[%s4 + $0x188] sm:$0xff]
      %v951 = vld [vmem:[%s4 + $0x190] sm:$0xff]
      %v952 = vld [vmem:[%s4 + $0x198] sm:$0xff]
      %v953 = vld [vmem:[%s4 + $0x1a0] sm:$0xff]
      %v954 = vld [vmem:[%s4 + $0x1a8] sm:$0xff]
      %v955 = vld [vmem:[%s4 + $0x1b0] sm:$0xff]
      %v956 = vld [vmem:[%s4 + $0x1b8] sm:$0xff]
      %v957 = vld [vmem:[%s4 + $0x1c0] sm:$0xff]
      %v958 = vld [vmem:[%s4 + $0x1c8] sm:$0xff]
      %v959 = vld [vmem:[%s4 + $0x1d0] sm:$0xff]
      %v960 = vld [vmem:[%s4 + $0x1d8] sm:$0xff]
      %v961 = vld [vmem:[%s4 + $0x1e0] sm:$0xff]
      %v962 = vld [vmem:[%s4 + $0x1e8] sm:$0xff]
      %v963 = vld [vmem:[%s4 + $0x1f0] sm:$0xff]
      %v964 = vld [vmem:[%s4 + $0x1f8] sm:$0xff]
      %v965 = vld [vmem:[%s4 + $0x200] sm:$0xff]
      %v966 = vld [vmem:[%s4 + $0x208] sm:$0xff]
      %v967 = vld [vmem:[%s4 + $0x210] sm:$0xff]
      %v968 = vld [vmem:[%s4 + $0x218] sm:$0xff]
      %v969 = vld [vmem:[%s4 + $0x220] sm:$0xff]
      %v970 = vld [vmem:[%s4 + $0x228] sm:$0xff]
      %v971 = vld [vmem:[%s4 + $0x230] sm:$0xff]
      %v972 = vld [vmem:[%s4 + $0x238] sm:$0xff]
      %v973 = vld [vmem:[%s4 + $0x240] sm:$0xff]
      %v974 = vld [vmem:[%s4 + $0x248] sm:$0xff]
      %v975 = vld [vmem:[%s4 + $0x250] sm:$0xff]
      %v976 = vld [vmem:[%s4 + $0x258] sm:$0xff]
      %v977 = vld [vmem:[%s4 + $0x260] sm:$0xff]
      %v978 = vld [vmem:[%s4 + $0x268] sm:$0xff]
      %v979 = vld [vmem:[%s4 + $0x270] sm:$0xff]
      %v980 = vld [vmem:[%s4 + $0x278] sm:$0xff]
      %v981 = vld [vmem:[%s4 + $0x280] sm:$0xff]
      %v982 = vld [vmem:[%s4 + $0x288] sm:$0xff]
      %v983 = vld [vmem:[%s4 + $0x290] sm:$0xff]
      %v984 = vld [vmem:[%s4 + $0x298] sm:$0xff]
      %v985 = vld [vmem:[%s4 + $0x2a0] sm:$0xff]
      %v986 = vld [vmem:[%s4 + $0x2a8] sm:$0xff]
      %v987 = vld [vmem:[%s4 + $0x2b0] sm:$0xff]
      %v988 = vld [vmem:[%s4 + $0x2b8] sm:$0xff]
      %v989 = vld [vmem:[%s4 + $0x2c0] sm:$0xff]
      %v990 = vld [vmem:[%s4 + $0x2c8] sm:$0xff]
      %v991 = vld [vmem:[%s4 + $0x2d0] sm:$0xff]
      %v992 = vld [vmem:[%s4 + $0x2d8] sm:$0xff]
      %v993 = vld [vmem:[%s4 + $0x2e0] sm:$0xff]
      %v994 = vld [vmem:[%s4 + $0x2e8] sm:$0xff]
      %v995 = vld [vmem:[%s4 + $0x2f0] sm:$0xff]
      %v996 = vld [vmem:[%s4 + $0x2f8] sm:$0xff]
      %v997 = vld [vmem:[%s4 + $0x300] sm:$0xff]
      %v998 = vld [vmem:[%s4 + $0x308] sm:$0xff]
      %v999 = vld [vmem:[%s4 + $0x310] sm:$0xff]
      %v1000 = vld [vmem:[%s4 + $0x318] sm:$0xff]
      %v1001 = vld [vmem:[%s4 + $0x320] sm:$0xff]
      %v1002 = vld [vmem:[%s4 + $0x328] sm:$0xff]
      %v1003 = vld [vmem:[%s4 + $0x330] sm:$0xff]
      %v1004 = vld [vmem:[%s4 + $0x338] sm:$0xff]
      %v1005 = vld [vmem:[%s4 + $0x340] sm:$0xff]
      %v1006 = vld [vmem:[%s4 + $0x348] sm:$0xff]
      %v1007 = vld [vmem:[%s4 + $0x350] sm:$0xff]
      %v1008 = vld [vmem:[%s4 + $0x358] sm:$0xff]
      %v1009 = vld [vmem:[%s4 + $0x360] sm:$0xff]
      %v1010 = vld [vmem:[%s4 + $0x368] sm:$0xff]
      %v1011 = vld [vmem:[%s4 + $0x370] sm:$0xff]
      %v1012 = vld [vmem:[%s4 + $0x378] sm:$0xff]
      %v1013 = vld [vmem:[%s4 + $0x380] sm:$0xff]
      %v1014 = vld [vmem:[%s4 + $0x388] sm:$0xff]
      %v1015 = vld [vmem:[%s4 + $0x390] sm:$0xff]
      %v1016 = vld [vmem:[%s4 + $0x398] sm:$0xff]
      %v1017 = vld [vmem:[%s4 + $0x3a0] sm:$0xff]
      %v1018 = vld [vmem:[%s4 + $0x3a8] sm:$0xff]
      %v1019 = vld [vmem:[%s4 + $0x3b0] sm:$0xff]
      %v1020 = vld [vmem:[%s4 + $0x3b8] sm:$0xff]
      %v1021 = vld [vmem:[%s4 + $0x3c0] sm:$0xff]
      %v1022 = vld [vmem:[%s4 + $0x3c8] sm:$0xff]
      %v1023 = vld [vmem:[%s4 + $0x3d0] sm:$0xff]
      %v1024 = vld [vmem:[%s4 + $0x3d8] sm:$0xff]
      %v1025 = vld [vmem:[%s4 + $0x3e0] sm:$0xff]
      %v1026 = vld [vmem:[%s4 + $0x3e8] sm:$0xff]
      %v1027 = vld [vmem:[%s4 + $0x3f0] sm:$0xff]
      %v1028 = vld [vmem:[%s4 + $0x3f8] sm:$0xff]
      %v1029 = vld [vmem:[%s4 + $0x400] sm:$0xff]
      %v1030 = vld [vmem:[%s4 + $0x408] sm:$0xff]
      %v1031 = vld [vmem:[%s4 + $0x410] sm:$0xff]
      %v1032 = vld [vmem:[%s4 + $0x418] sm:$0xff]
      %v1033 = vld [vmem:[%s4 + $0x420] sm:$0xff]
      %v1034 = vld [vmem:[%s4 + $0x428] sm:$0xff]
      %v1035 = vld [vmem:[%s4 + $0x430] sm:$0xff]
      %v1036 = vld [vmem:[%s4 + $0x438] sm:$0xff]
      %v1037 = vld [vmem:[%s4 + $0x440] sm:$0xff]
      %v1038 = vld [vmem:[%s4 + $0x448] sm:$0xff]
      %v1039 = vld [vmem:[%s4 + $0x450] sm:$0xff]
      %v1040 = vld [vmem:[%s4 + $0x458] sm:$0xff]
      %v1041 = vld [vmem:[%s4 + $0x460] sm:$0xff]
      %v1042 = vld [vmem:[%s4 + $0x468] sm:$0xff]
      %v1043 = vld [vmem:[%s4 + $0x470] sm:$0xff]
      %v1044 = vld [vmem:[%s4 + $0x478] sm:$0xff]
      %v1045 = vld [vmem:[%s4 + $0x480] sm:$0xff]
      %v1046 = vld [vmem:[%s4 + $0x488] sm:$0xff]
      %v1047 = vld [vmem:[%s4 + $0x490] sm:$0xff]
      %v1048 = vld [vmem:[%s4 + $0x498] sm:$0xff]
      %v1049 = vld [vmem:[%s4 + $0x4a0] sm:$0xff]
      %v1050 = vld [vmem:[%s4 + $0x4a8] sm:$0xff]
      %v1051 = vld [vmem:[%s4 + $0x4b0] sm:$0xff]
      %v1052 = vld [vmem:[%s4 + $0x4b8] sm:$0xff]
      %v1053 = vld [vmem:[%s4 + $0x4c0] sm:$0xff]
      %v1054 = vld [vmem:[%s4 + $0x4c8] sm:$0xff]
      %v1055 = vld [vmem:[%s4 + $0x4d0] sm:$0xff]
      %v1056 = vld [vmem:[%s4 + $0x4d8] sm:$0xff]
      %v1057 = vld [vmem:[%s4 + $0x4e0] sm:$0xff]
      %v1058 = vld [vmem:[%s4 + $0x4e8] sm:$0xff]
      %v1059 = vld [vmem:[%s4 + $0x4f0] sm:$0xff]
      %v1060 = vld [vmem:[%s4 + $0x4f8] sm:$0xff]
      %v1061 = vld [vmem:[%s4 + $0x500] sm:$0xff]
      %v1062 = vld [vmem:[%s4 + $0x508] sm:$0xff]
      %v1063 = vld [vmem:[%s4 + $0x510] sm:$0xff]
      %v1064 = vld [vmem:[%s4 + $0x518] sm:$0xff]
      %v1065 = vld [vmem:[%s4 + $0x520] sm:$0xff]
      %v1066 = vld [vmem:[%s4 + $0x528] sm:$0xff]
      %v1067 = vld [vmem:[%s4 + $0x530] sm:$0xff]
      %v1068 = vld [vmem:[%s4 + $0x538] sm:$0xff]
      %v1069 = vld [vmem:[%s4 + $0x540] sm:$0xff]
      %v1070 = vld [vmem:[%s4 + $0x548] sm:$0xff]
      %v1071 = vld [vmem:[%s4 + $0x550] sm:$0xff]
      %v1072 = vld [vmem:[%s4 + $0x558] sm:$0xff]
      %v1073 = vld [vmem:[%s4 + $0x560] sm:$0xff]
      %v1074 = vld [vmem:[%s4 + $0x568] sm:$0xff]
      %v1075 = vld [vmem:[%s4 + $0x570] sm:$0xff]
      %v1076 = vld [vmem:[%s4 + $0x578] sm:$0xff]
      %v1077 = vld [vmem:[%s4 + $0x580] sm:$0xff]
      %v1078 = vld [vmem:[%s4 + $0x588] sm:$0xff]
      %v1079 = vld [vmem:[%s4 + $0x590] sm:$0xff]
      %v1080 = vld [vmem:[%s4 + $0x598] sm:$0xff]
      %v1081 = vld [vmem:[%s4 + $0x5a0] sm:$0xff]
      %v1082 = vld [vmem:[%s4 + $0x5a8] sm:$0xff]
      %v1083 = vld [vmem:[%s4 + $0x5b0] sm:$0xff]
      %v1084 = vld [vmem:[%s4 + $0x5b8] sm:$0xff]
      %v1085 = vld [vmem:[%s4 + $0x5c0] sm:$0xff]
      %v1086 = vld [vmem:[%s4 + $0x5c8] sm:$0xff]
      %v1087 = vld [vmem:[%s4 + $0x5d0] sm:$0xff]
      %v1088 = vld [vmem:[%s4 + $0x5d8] sm:$0xff]
      %v1089 = vld [vmem:[%s4 + $0x5e0] sm:$0xff]
      %v1090 = vld [vmem:[%s4 + $0x5e8] sm:$0xff]
      %v1091 = vld [vmem:[%s4 + $0x5f0] sm:$0xff]
      %v1092 = vld [vmem:[%s4 + $0x5f8] sm:$0xff]
      %v1093 = vld [vmem:[%s4 + $0x600] sm:$0xff]
      %v1094 = vld [vmem:[%s4 + $0x608] sm:$0xff]
      %v1095 = vld [vmem:[%s4 + $0x610] sm:$0xff]
      %v1096 = vld [vmem:[%s4 + $0x618] sm:$0xff]
      %v1097 = vld [vmem:[%s4 + $0x620] sm:$0xff]
      %v1098 = vld [vmem:[%s4 + $0x628] sm:$0xff]
      %v1099 = vld [vmem:[%s4 + $0x630] sm:$0xff]
      %v1100 = vld [vmem:[%s4 + $0x638] sm:$0xff]
      %v1101 = vld [vmem:[%s4 + $0x640] sm:$0xff]
      %v1102 = vld [vmem:[%s4 + $0x648] sm:$0xff]
      %v1103 = vld [vmem:[%s4 + $0x650] sm:$0xff]
      %v1104 = vld [vmem:[%s4 + $0x658] sm:$0xff]
      %v1105 = vld [vmem:[%s4 + $0x660] sm:$0xff]
      %v1106 = vld [vmem:[%s4 + $0x668] sm:$0xff]
      %v1107 = vld [vmem:[%s4 + $0x670] sm:$0xff]
      %v1108 = vld [vmem:[%s4 + $0x678] sm:$0xff]
      %v1109 = vld [vmem:[%s4 + $0x680] sm:$0xff]
      %v1110 = vld [vmem:[%s4 + $0x688] sm:$0xff]
      %v1111 = vld [vmem:[%s4 + $0x690] sm:$0xff]
      %v1112 = vld [vmem:[%s4 + $0x698] sm:$0xff]
      %v1113 = vld [vmem:[%s4 + $0x6a0] sm:$0xff]
      %v1114 = vld [vmem:[%s4 + $0x6a8] sm:$0xff]
      %v1115 = vld [vmem:[%s4 + $0x6b0] sm:$0xff]
      %v1116 = vld [vmem:[%s4 + $0x6b8] sm:$0xff]
      %v1117 = vld [vmem:[%s4 + $0x6c0] sm:$0xff]
      %v1118 = vld [vmem:[%s4 + $0x6c8] sm:$0xff]
      %v1119 = vld [vmem:[%s4 + $0x6d0] sm:$0xff]
      %v1120 = vld [vmem:[%s4 + $0x6d8] sm:$0xff]
      %v1121 = vld [vmem:[%s4 + $0x6e0] sm:$0xff]
      %v1122 = vld [vmem:[%s4 + $0x6e8] sm:$0xff]
      %v1123 = vld [vmem:[%s4 + $0x6f0] sm:$0xff]
      %v1124 = vld [vmem:[%s4 + $0x6f8] sm:$0xff]
      %v1125 = vld [vmem:[%s4 + $0x700] sm:$0xff]
      %v1126 = vld [vmem:[%s4 + $0x708] sm:$0xff]
      %v1127 = vld [vmem:[%s4 + $0x710] sm:$0xff]
      %v1128 = vld [vmem:[%s4 + $0x718] sm:$0xff]
      %v1129 = vld [vmem:[%s4 + $0x720] sm:$0xff]
      %v1130 = vld [vmem:[%s4 + $0x728] sm:$0xff]
      %v1131 = vld [vmem:[%s4 + $0x730] sm:$0xff]
      %v1132 = vld [vmem:[%s4 + $0x738] sm:$0xff]
      %v1133 = vld [vmem:[%s4 + $0x740] sm:$0xff]
      %v1134 = vld [vmem:[%s4 + $0x748] sm:$0xff]
      %v1135 = vld [vmem:[%s4 + $0x750] sm:$0xff]
      %v1136 = vld [vmem:[%s4 + $0x758] sm:$0xff]
      %v1137 = vld [vmem:[%s4 + $0x760] sm:$0xff]
      %v1138 = vld [vmem:[%s4 + $0x768] sm:$0xff]
      %v1139 = vld [vmem:[%s4 + $0x770] sm:$0xff]
      %v1140 = vld [vmem:[%s4 + $0x778] sm:$0xff]
      %v1141 = vld [vmem:[%s4 + $0x780] sm:$0xff]
      %v1142 = vld [vmem:[%s4 + $0x788] sm:$0xff]
      %v1143 = vld [vmem:[%s4 + $0x790] sm:$0xff]
      %v1144 = vld [vmem:[%s4 + $0x798] sm:$0xff]
      %v1145 = vld [vmem:[%s4 + $0x7a0] sm:$0xff]
      %v1146 = vld [vmem:[%s4 + $0x7a8] sm:$0xff]
      %v1147 = vld [vmem:[%s4 + $0x7b0] sm:$0xff]
      %v1148 = vld [vmem:[%s4 + $0x7b8] sm:$0xff]
      %v1149 = vld [vmem:[%s4 + $0x7c0] sm:$0xff]
      %v1150 = vld [vmem:[%s4 + $0x7c8] sm:$0xff]
      %v1151 = vld [vmem:[%s4 + $0x7d0] sm:$0xff]
      %v1152 = vld [vmem:[%s4 + $0x7d8] sm:$0xff]
      %v1153 = vld [vmem:[%s4 + $0x7e0] sm:$0xff]
      %v1154 = vld [vmem:[%s4 + $0x7e8] sm:$0xff]
      %v1155 = vld [vmem:[%s4 + $0x7f0] sm:$0xff]
      %v1156 = vld [vmem:[%s4 + $0x7f8] sm:$0xff]
      %v1157 = vld [vmem:[%s4 + $0x800] sm:$0xff]
      %v1158 = vld [vmem:[%s4 + $0x808] sm:$0xff]
      %v1159 = vld [vmem:[%s4 + $0x810] sm:$0xff]
      %v1160 = vld [vmem:[%s4 + $0x818] sm:$0xff]
      %v1161 = vld [vmem:[%s4 + $0x820] sm:$0xff]
      %v1162 = vld [vmem:[%s4 + $0x828] sm:$0xff]
      %v1163 = vld [vmem:[%s4 + $0x830] sm:$0xff]
      %v1164 = vld [vmem:[%s4 + $0x838] sm:$0xff]
      %v1165 = vld [vmem:[%s4 + $0x840] sm:$0xff]
      %v1166 = vld [vmem:[%s4 + $0x848] sm:$0xff]
      %v1167 = vld [vmem:[%s4 + $0x850] sm:$0xff]
      %v1168 = vld [vmem:[%s4 + $0x858] sm:$0xff]
      %v1169 = vld [vmem:[%s4 + $0x860] sm:$0xff]
      %v1170 = vld [vmem:[%s4 + $0x868] sm:$0xff]
      %v1171 = vld [vmem:[%s4 + $0x870] sm:$0xff]
      %v1172 = vld [vmem:[%s4 + $0x878] sm:$0xff]
      %v1173 = vld [vmem:[%s4 + $0x880] sm:$0xff]
      %v1174 = vld [vmem:[%s4 + $0x888] sm:$0xff]
      %v1175 = vld [vmem:[%s4 + $0x890] sm:$0xff]
      %v1176 = vld [vmem:[%s4 + $0x898] sm:$0xff]
      %v1177 = vld [vmem:[%s4 + $0x8a0] sm:$0xff]
      %v1178 = vld [vmem:[%s4 + $0x8a8] sm:$0xff]
      %v1179 = vld [vmem:[%s4 + $0x8b0] sm:$0xff]
      %v1180 = vld [vmem:[%s4 + $0x8b8] sm:$0xff]
      %v1181 = vld [vmem:[%s4 + $0x8c0] sm:$0xff]
      %v1182 = vld [vmem:[%s4 + $0x8c8] sm:$0xff]
      %v1183 = vld [vmem:[%s4 + $0x8d0] sm:$0xff]
      %v1184 = vld [vmem:[%s4 + $0x8d8] sm:$0xff]
      %v1185 = vld [vmem:[%s4 + $0x8e0] sm:$0xff]
      %v1186 = vld [vmem:[%s4 + $0x8e8] sm:$0xff]
      %v1187 = vld [vmem:[%s4 + $0x8f0] sm:$0xff]
      %v1188 = vld [vmem:[%s4 + $0x8f8] sm:$0xff]
      %v1189 = vld [vmem:[%s4 + $0x900] sm:$0xff]
      %v1190 = vld [vmem:[%s4 + $0x908] sm:$0xff]
      %v1191 = vld [vmem:[%s4 + $0x910] sm:$0xff]
      %v1192 = vld [vmem:[%s4 + $0x918] sm:$0xff]
      %v1193 = vld [vmem:[%s4 + $0x920] sm:$0xff]
      %v1194 = vld [vmem:[%s4 + $0x928] sm:$0xff]
      %v1195 = vld [vmem:[%s4 + $0x930] sm:$0xff]
      %v1196 = vld [vmem:[%s4 + $0x938] sm:$0xff]
      %v1197 = vld [vmem:[%s4 + $0x940] sm:$0xff]
      %v1198 = vld [vmem:[%s4 + $0x948] sm:$0xff]
      %v1199 = vld [vmem:[%s4 + $0x950] sm:$0xff]
      %v1200 = vld [vmem:[%s4 + $0x958] sm:$0xff]
      %v1201 = vld [vmem:[%s4 + $0x960] sm:$0xff]
      %v1202 = vld [vmem:[%s4 + $0x968] sm:$0xff]
      %v1203 = vld [vmem:[%s4 + $0x970] sm:$0xff]
      %v1204 = vld [vmem:[%s4 + $0x978] sm:$0xff]
      %v1205 = vld [vmem:[%s4 + $0x980] sm:$0xff]
      %v1206 = vld [vmem:[%s4 + $0x988] sm:$0xff]
      %v1207 = vld [vmem:[%s4 + $0x990] sm:$0xff]
      %v1208 = vld [vmem:[%s4 + $0x998] sm:$0xff]
      %v1209 = vld [vmem:[%s4 + $0x9a0] sm:$0xff]
      %v1210 = vld [vmem:[%s4 + $0x9a8] sm:$0xff]
      %v1211 = vld [vmem:[%s4 + $0x9b0] sm:$0xff]
      %v1212 = vld [vmem:[%s4 + $0x9b8] sm:$0xff]
      %v1213 = vld [vmem:[%s4 + $0x9c0] sm:$0xff]
      %v1214 = vld [vmem:[%s4 + $0x9c8] sm:$0xff]
      %v1215 = vld [vmem:[%s4 + $0x9d0] sm:$0xff]
      %v1216 = vld [vmem:[%s4 + $0x9d8] sm:$0xff]
      %v1217 = vld [vmem:[%s4 + $0x9e0] sm:$0xff]
      %v1218 = vld [vmem:[%s4 + $0x9e8] sm:$0xff]
      %v1219 = vld [vmem:[%s4 + $0x9f0] sm:$0xff]
      %v1220 = vld [vmem:[%s4 + $0x9f8] sm:$0xff]
      %v1221 = vld [vmem:[%s4 + $0xa00] sm:$0xff]
      %v1222 = vld [vmem:[%s4 + $0xa08] sm:$0xff]
      %v1223 = vld [vmem:[%s4 + $0xa10] sm:$0xff]
      %v1224 = vld [vmem:[%s4 + $0xa18] sm:$0xff]
      %v1225 = vld [vmem:[%s4 + $0xa20] sm:$0xff]
      %v1226 = vld [vmem:[%s4 + $0xa28] sm:$0xff]
      %v1227 = vld [vmem:[%s4 + $0xa30] sm:$0xff]
      %v1228 = vld [vmem:[%s4 + $0xa38] sm:$0xff]
      %v1229 = vld [vmem:[%s4 + $0xa40] sm:$0xff]
      %v1230 = vld [vmem:[%s4 + $0xa48] sm:$0xff]
      %v1231 = vld [vmem:[%s4 + $0xa50] sm:$0xff]
      %v1232 = vld [vmem:[%s4 + $0xa58] sm:$0xff]
      %v1233 = vld [vmem:[%s4 + $0xa60] sm:$0xff]
      %v1234 = vld [vmem:[%s4 + $0xa68] sm:$0xff]
      %v1235 = vld [vmem:[%s4 + $0xa70] sm:$0xff]
      %v1236 = vld [vmem:[%s4 + $0xa78] sm:$0xff]
      %v1237 = vld [vmem:[%s4 + $0xa80] sm:$0xff]
      %v1238 = vld [vmem:[%s4 + $0xa88] sm:$0xff]
      %v1239 = vld [vmem:[%s4 + $0xa90] sm:$0xff]
      %v1240 = vld [vmem:[%s4 + $0xa98] sm:$0xff]
      %v1241 = vld [vmem:[%s4 + $0xaa0] sm:$0xff]
      %v1242 = vld [vmem:[%s4 + $0xaa8] sm:$0xff]
      %v1243 = vld [vmem:[%s4 + $0xab0] sm:$0xff]
      %v1244 = vld [vmem:[%s4 + $0xab8] sm:$0xff]
      %v1245 = vld [vmem:[%s4 + $0xac0] sm:$0xff]
      %v1246 = vld [vmem:[%s4 + $0xac8] sm:$0xff]
      %v1247 = vld [vmem:[%s4 + $0xad0] sm:$0xff]
      %v1248 = vld [vmem:[%s4 + $0xad8] sm:$0xff]
      %v1249 = vld [vmem:[%s4 + $0xae0] sm:$0xff]
      %v1250 = vld [vmem:[%s4 + $0xae8] sm:$0xff]
      %v1251 = vld [vmem:[%s4 + $0xaf0] sm:$0xff]
      %v1252 = vld [vmem:[%s4 + $0xaf8] sm:$0xff]
      %v1253 = vld [vmem:[%s4 + $0xb00] sm:$0xff]
      %v1254 = vld [vmem:[%s4 + $0xb08] sm:$0xff]
      %v1255 = vld [vmem:[%s4 + $0xb10] sm:$0xff]
      %v1256 = vld [vmem:[%s4 + $0xb18] sm:$0xff]
      %v1257 = vld [vmem:[%s4 + $0xb20] sm:$0xff]
      %v1258 = vld [vmem:[%s4 + $0xb28] sm:$0xff]
      %v1259 = vld [vmem:[%s4 + $0xb30] sm:$0xff]
      %v1260 = vld [vmem:[%s4 + $0xb38] sm:$0xff]
      %v1261 = vld [vmem:[%s4 + $0xb40] sm:$0xff]
      %v1262 = vld [vmem:[%s4 + $0xb48] sm:$0xff]
      %v1263 = vld [vmem:[%s4 + $0xb50] sm:$0xff]
      %v1264 = vld [vmem:[%s4 + $0xb58] sm:$0xff]
      %v1265 = vld [vmem:[%s4 + $0xb60] sm:$0xff]
      %v1266 = vld [vmem:[%s4 + $0xb68] sm:$0xff]
      %v1267 = vld [vmem:[%s4 + $0xb70] sm:$0xff]
      %v1268 = vld [vmem:[%s4 + $0xb78] sm:$0xff]
      %v1269 = vld [vmem:[%s4 + $0xb80] sm:$0xff]
      %v1270 = vld [vmem:[%s4 + $0xb88] sm:$0xff]
      %v1271 = vld [vmem:[%s4 + $0xb90] sm:$0xff]
      %v1272 = vld [vmem:[%s4 + $0xb98] sm:$0xff]
      %v1273 = vld [vmem:[%s4 + $0xba0] sm:$0xff]
      %v1274 = vld [vmem:[%s4 + $0xba8] sm:$0xff]
      %v1275 = vld [vmem:[%s4 + $0xbb0] sm:$0xff]
      %v1276 = vld [vmem:[%s4 + $0xbb8] sm:$0xff]
      %v1277 = vld [vmem:[%s4 + $0xbc0] sm:$0xff]
      %v1278 = vld [vmem:[%s4 + $0xbc8] sm:$0xff]
      %v1279 = vld [vmem:[%s4 + $0xbd0] sm:$0xff]
      %v1280 = vld [vmem:[%s4 + $0xbd8] sm:$0xff]
      %v1281 = vld [vmem:[%s4 + $0xbe0] sm:$0xff]
      %v1282 = vld [vmem:[%s4 + $0xbe8] sm:$0xff]
      %v1283 = vld [vmem:[%s4 + $0xbf0] sm:$0xff]
      %v1284 = vld [vmem:[%s4 + $0xbf8] sm:$0xff]
      %v1285 = vld [vmem:[%s4 + $0xc00] sm:$0xff]
      %v1286 = vld [vmem:[%s4 + $0xc08] sm:$0xff]
      %v1287 = vld [vmem:[%s4 + $0xc10] sm:$0xff]
      %v1288 = vld [vmem:[%s4 + $0xc18] sm:$0xff]
      %v1289 = vld [vmem:[%s4 + $0xc20] sm:$0xff]
      %v1290 = vld [vmem:[%s4 + $0xc28] sm:$0xff]
      %v1291 = vld [vmem:[%s4 + $0xc30] sm:$0xff]
      %v1292 = vld [vmem:[%s4 + $0xc38] sm:$0xff]
      %v1293 = vld [vmem:[%s4 + $0xc40] sm:$0xff]
      %v1294 = vld [vmem:[%s4 + $0xc48] sm:$0xff]
      %v1295 = vld [vmem:[%s4 + $0xc50] sm:$0xff]
      %v1296 = vld [vmem:[%s4 + $0xc58] sm:$0xff]
      %v1297 = vld [vmem:[%s4 + $0xc60] sm:$0xff]
      %v1298 = vld [vmem:[%s4 + $0xc68] sm:$0xff]
      %v1299 = vld [vmem:[%s4 + $0xc70] sm:$0xff]
      %v1300 = vld [vmem:[%s4 + $0xc78] sm:$0xff]
      %v1301 = vld [vmem:[%s4 + $0xc80] sm:$0xff]
      %v1302 = vld [vmem:[%s4 + $0xc88] sm:$0xff]
      %v1303 = vld [vmem:[%s4 + $0xc90] sm:$0xff]
      %v1304 = vld [vmem:[%s4 + $0xc98] sm:$0xff]
      %v1305 = vld [vmem:[%s4 + $0xca0] sm:$0xff]
      %v1306 = vld [vmem:[%s4 + $0xca8] sm:$0xff]
      %v1307 = vld [vmem:[%s4 + $0xcb0] sm:$0xff]
      %v1308 = vld [vmem:[%s4 + $0xcb8] sm:$0xff]
      %v1309 = vld [vmem:[%s4 + $0xcc0] sm:$0xff]
      %v1310 = vld [vmem:[%s4 + $0xcc8] sm:$0xff]
      %v1311 = vld [vmem:[%s4 + $0xcd0] sm:$0xff]
      %v1312 = vld [vmem:[%s4 + $0xcd8] sm:$0xff]
      %v1313 = vld [vmem:[%s4 + $0xce0] sm:$0xff]
      %v1314 = vld [vmem:[%s4 + $0xce8] sm:$0xff]
      %v1315 = vld [vmem:[%s4 + $0xcf0] sm:$0xff]
      %v1316 = vld [vmem:[%s4 + $0xcf8] sm:$0xff]
      %v1317 = vld [vmem:[%s4 + $0xd00] sm:$0xff]
      %v1318 = vld [vmem:[%s4 + $0xd08] sm:$0xff]
      %v1319 = vld [vmem:[%s4 + $0xd10] sm:$0xff]
      %v1320 = vld [vmem:[%s4 + $0xd18] sm:$0xff]
      %v1321 = vld [vmem:[%s4 + $0xd20] sm:$0xff]
      %v1322 = vld [vmem:[%s4 + $0xd28] sm:$0xff]
      %v1323 = vld [vmem:[%s4 + $0xd30] sm:$0xff]
      %v1324 = vld [vmem:[%s4 + $0xd38] sm:$0xff]
      %v1325 = vld [vmem:[%s4 + $0xd40] sm:$0xff]
      %v1326 = vld [vmem:[%s4 + $0xd48] sm:$0xff]
      %v1327 = vld [vmem:[%s4 + $0xd50] sm:$0xff]
      %v1328 = vld [vmem:[%s4 + $0xd58] sm:$0xff]
      %v1329 = vld [vmem:[%s4 + $0xd60] sm:$0xff]
      %v1330 = vld [vmem:[%s4 + $0xd68] sm:$0xff]
      %v1331 = vld [vmem:[%s4 + $0xd70] sm:$0xff]
      %v1332 = vld [vmem:[%s4 + $0xd78] sm:$0xff]
      %v1333 = vld [vmem:[%s4 + $0xd80] sm:$0xff]
      %v1334 = vld [vmem:[%s4 + $0xd88] sm:$0xff]
      %v1335 = vld [vmem:[%s4 + $0xd90] sm:$0xff]
      %v1336 = vld [vmem:[%s4 + $0xd98] sm:$0xff]
      %v1337 = vld [vmem:[%s4 + $0xda0] sm:$0xff]
      %v1338 = vld [vmem:[%s4 + $0xda8] sm:$0xff]
      %v1339 = vld [vmem:[%s4 + $0xdb0] sm:$0xff]
      %v1340 = vld [vmem:[%s4 + $0xdb8] sm:$0xff]
      %v1341 = vld [vmem:[%s4 + $0xdc0] sm:$0x11]
      %v1342 = vld [vmem:[%s4 + $0xdc8] sm:$0x11]
      %v1343 = vld [vmem:[%s4 + $0xdd0] sm:$0x11]
      %v1344 = vld [vmem:[%s4 + $0xdd8] sm:$0x11]
      %v1345 = vld [vmem:[%s4 + $0xde0] sm:$0x11]
      %v1346 = vld [vmem:[%s4 + $0xde8] sm:$0x11]
      %v1347 = vld [vmem:[%s4 + $0xdf0] sm:$0x11]
      %v1348 = vld [vmem:[%s4 + $0xdf8] sm:$0x11]
      %v1797 = vunpack.c.l.b16 %v901
      %v1798 = vunpack.c.h.b16 %v901
      %v1799 = vunpack.c.l.b16 %v902
      %v1800 = vunpack.c.h.b16 %v902
      %v1801 = vunpack.c.l.b16 %v903
      %v1802 = vunpack.c.h.b16 %v903
      %v1803 = vunpack.c.l.b16 %v904
      %v1804 = vunpack.c.h.b16 %v904
      %v1805 = vunpack.c.l.b16 %v905
      %v1806 = vunpack.c.h.b16 %v905
      %v1807 = vunpack.c.l.b16 %v906
      %v1808 = vunpack.c.h.b16 %v906
      %v1809 = vunpack.c.l.b16 %v907
      %v1810 = vunpack.c.h.b16 %v907
      %v1811 = vunpack.c.l.b16 %v908
      %v1812 = vunpack.c.h.b16 %v908
      %v1813 = vunpack.c.l.b16 %v909
      %v1814 = vunpack.c.h.b16 %v909
      %v1815 = vunpack.c.l.b16 %v910
      %v1816 = vunpack.c.h.b16 %v910
      %v1817 = vunpack.c.l.b16 %v911
      %v1818 = vunpack.c.h.b16 %v911
      %v1819 = vunpack.c.l.b16 %v912
      %v1820 = vunpack.c.h.b16 %v912
      %v1821 = vunpack.c.l.b16 %v913
      %v1822 = vunpack.c.h.b16 %v913
      %v1823 = vunpack.c.l.b16 %v914
      %v1824 = vunpack.c.h.b16 %v914
      %v1825 = vunpack.c.l.b16 %v915
      %v1826 = vunpack.c.h.b16 %v915
      %v1827 = vunpack.c.l.b16 %v916
      %v1828 = vunpack.c.h.b16 %v916
      %v1829 = vunpack.c.l.b16 %v917
      %v1830 = vunpack.c.h.b16 %v917
      %v1831 = vunpack.c.l.b16 %v918
      %v1832 = vunpack.c.h.b16 %v918
      %v1833 = vunpack.c.l.b16 %v919
      %v1834 = vunpack.c.h.b16 %v919
      %v1835 = vunpack.c.l.b16 %v920
      %v1836 = vunpack.c.h.b16 %v920
      %v1837 = vunpack.c.l.b16 %v921
      %v1838 = vunpack.c.h.b16 %v921
      %v1839 = vunpack.c.l.b16 %v922
      %v1840 = vunpack.c.h.b16 %v922
      %v1841 = vunpack.c.l.b16 %v923
      %v1842 = vunpack.c.h.b16 %v923
      %v1843 = vunpack.c.l.b16 %v924
      %v1844 = vunpack.c.h.b16 %v924
      %v1845 = vunpack.c.l.b16 %v925
      %v1846 = vunpack.c.h.b16 %v925
      %v1847 = vunpack.c.l.b16 %v926
      %v1848 = vunpack.c.h.b16 %v926
      %v1849 = vunpack.c.l.b16 %v927
      %v1850 = vunpack.c.h.b16 %v927
      %v1851 = vunpack.c.l.b16 %v928
      %v1852 = vunpack.c.h.b16 %v928
      %v1853 = vunpack.c.l.b16 %v929
      %v1854 = vunpack.c.h.b16 %v929
      %v1855 = vunpack.c.l.b16 %v930
      %v1856 = vunpack.c.h.b16 %v930
      %v1857 = vunpack.c.l.b16 %v931
      %v1858 = vunpack.c.h.b16 %v931
      %v1859 = vunpack.c.l.b16 %v932
      %v1860 = vunpack.c.h.b16 %v932
      %v1861 = vunpack.c.l.b16 %v933
      %v1862 = vunpack.c.h.b16 %v933
      %v1863 = vunpack.c.l.b16 %v934
      %v1864 = vunpack.c.h.b16 %v934
      %v1865 = vunpack.c.l.b16 %v935
      %v1866 = vunpack.c.h.b16 %v935
      %v1867 = vunpack.c.l.b16 %v936
      %v1868 = vunpack.c.h.b16 %v936
      %v1869 = vunpack.c.l.b16 %v937
      %v1870 = vunpack.c.h.b16 %v937
      %v1871 = vunpack.c.l.b16 %v938
      %v1872 = vunpack.c.h.b16 %v938
      %v1873 = vunpack.c.l.b16 %v939
      %v1874 = vunpack.c.h.b16 %v939
      %v1875 = vunpack.c.l.b16 %v940
      %v1876 = vunpack.c.h.b16 %v940
      %v1877 = vunpack.c.l.b16 %v941
      %v1878 = vunpack.c.h.b16 %v941
      %v1879 = vunpack.c.l.b16 %v942
      %v1880 = vunpack.c.h.b16 %v942
      %v1881 = vunpack.c.l.b16 %v943
      %v1882 = vunpack.c.h.b16 %v943
      %v1883 = vunpack.c.l.b16 %v944
      %v1884 = vunpack.c.h.b16 %v944
      %v1885 = vunpack.c.l.b16 %v945
      %v1886 = vunpack.c.h.b16 %v945
      %v1887 = vunpack.c.l.b16 %v946
      %v1888 = vunpack.c.h.b16 %v946
      %v1889 = vunpack.c.l.b16 %v947
      %v1890 = vunpack.c.h.b16 %v947
      %v1891 = vunpack.c.l.b16 %v948
      %v1892 = vunpack.c.h.b16 %v948
      %v1893 = vunpack.c.l.b16 %v949
      %v1894 = vunpack.c.h.b16 %v949
      %v1895 = vunpack.c.l.b16 %v950
      %v1896 = vunpack.c.h.b16 %v950
      %v1897 = vunpack.c.l.b16 %v951
      %v1898 = vunpack.c.h.b16 %v951
      %v1899 = vunpack.c.l.b16 %v952
      %v1900 = vunpack.c.h.b16 %v952
      %v1901 = vunpack.c.l.b16 %v953
      %v1902 = vunpack.c.h.b16 %v953
      %v1903 = vunpack.c.l.b16 %v954
      %v1904 = vunpack.c.h.b16 %v954
      %v1905 = vunpack.c.l.b16 %v955
      %v1906 = vunpack.c.h.b16 %v955
      %v1907 = vunpack.c.l.b16 %v956
      %v1908 = vunpack.c.h.b16 %v956
      %v1909 = vunpack.c.l.b16 %v957
      %v1910 = vunpack.c.h.b16 %v957
      %v1911 = vunpack.c.l.b16 %v958
      %v1912 = vunpack.c.h.b16 %v958
      %v1913 = vunpack.c.l.b16 %v959
      %v1914 = vunpack.c.h.b16 %v959
      %v1915 = vunpack.c.l.b16 %v960
      %v1916 = vunpack.c.h.b16 %v960
      %v1917 = vunpack.c.l.b16 %v961
      %v1918 = vunpack.c.h.b16 %v961
      %v1919 = vunpack.c.l.b16 %v962
      %v1920 = vunpack.c.h.b16 %v962
      %v1921 = vunpack.c.l.b16 %v963
      %v1922 = vunpack.c.h.b16 %v963
      %v1923 = vunpack.c.l.b16 %v964
      %v1924 = vunpack.c.h.b16 %v964
      %v1925 = vunpack.c.l.b16 %v965
      %v1926 = vunpack.c.h.b16 %v965
      %v1927 = vunpack.c.l.b16 %v966
      %v1928 = vunpack.c.h.b16 %v966
      %v1929 = vunpack.c.l.b16 %v967
      %v1930 = vunpack.c.h.b16 %v967
      %v1931 = vunpack.c.l.b16 %v968
      %v1932 = vunpack.c.h.b16 %v968
      %v1933 = vunpack.c.l.b16 %v969
      %v1934 = vunpack.c.h.b16 %v969
      %v1935 = vunpack.c.l.b16 %v970
      %v1936 = vunpack.c.h.b16 %v970
      %v1937 = vunpack.c.l.b16 %v971
      %v1938 = vunpack.c.h.b16 %v971
      %v1939 = vunpack.c.l.b16 %v972
      %v1940 = vunpack.c.h.b16 %v972
      %v1941 = vunpack.c.l.b16 %v973
      %v1942 = vunpack.c.h.b16 %v973
      %v1943 = vunpack.c.l.b16 %v974
      %v1944 = vunpack.c.h.b16 %v974
      %v1945 = vunpack.c.l.b16 %v975
      %v1946 = vunpack.c.h.b16 %v975
      %v1947 = vunpack.c.l.b16 %v976
      %v1948 = vunpack.c.h.b16 %v976
      %v1949 = vunpack.c.l.b16 %v977
      %v1950 = vunpack.c.h.b16 %v977
      %v1951 = vunpack.c.l.b16 %v978
      %v1952 = vunpack.c.h.b16 %v978
      %v1953 = vunpack.c.l.b16 %v979
      %v1954 = vunpack.c.h.b16 %v979
      %v1955 = vunpack.c.l.b16 %v980
      %v1956 = vunpack.c.h.b16 %v980
      %v1957 = vunpack.c.l.b16 %v981
      %v1958 = vunpack.c.h.b16 %v981
      %v1959 = vunpack.c.l.b16 %v982
      %v1960 = vunpack.c.h.b16 %v982
      %v1961 = vunpack.c.l.b16 %v983
      %v1962 = vunpack.c.h.b16 %v983
      %v1963 = vunpack.c.l.b16 %v984
      %v1964 = vunpack.c.h.b16 %v984
      %v1965 = vunpack.c.l.b16 %v985
      %v1966 = vunpack.c.h.b16 %v985
      %v1967 = vunpack.c.l.b16 %v986
      %v1968 = vunpack.c.h.b16 %v986
      %v1969 = vunpack.c.l.b16 %v987
      %v1970 = vunpack.c.h.b16 %v987
      %v1971 = vunpack.c.l.b16 %v988
      %v1972 = vunpack.c.h.b16 %v988
      %v1973 = vunpack.c.l.b16 %v989
      %v1974 = vunpack.c.h.b16 %v989
      %v1975 = vunpack.c.l.b16 %v990
      %v1976 = vunpack.c.h.b16 %v990
      %v1977 = vunpack.c.l.b16 %v991
      %v1978 = vunpack.c.h.b16 %v991
      %v1979 = vunpack.c.l.b16 %v992
      %v1980 = vunpack.c.h.b16 %v992
      %v1981 = vunpack.c.l.b16 %v993
      %v1982 = vunpack.c.h.b16 %v993
      %v1983 = vunpack.c.l.b16 %v994
      %v1984 = vunpack.c.h.b16 %v994
      %v1985 = vunpack.c.l.b16 %v995
      %v1986 = vunpack.c.h.b16 %v995
      %v1987 = vunpack.c.l.b16 %v996
      %v1988 = vunpack.c.h.b16 %v996
      %v1989 = vunpack.c.l.b16 %v997
      %v1990 = vunpack.c.h.b16 %v997
      %v1991 = vunpack.c.l.b16 %v998
      %v1992 = vunpack.c.h.b16 %v998
      %v1993 = vunpack.c.l.b16 %v999
      %v1994 = vunpack.c.h.b16 %v999
      %v1995 = vunpack.c.l.b16 %v1000
      %v1996 = vunpack.c.h.b16 %v1000
      %v1997 = vunpack.c.l.b16 %v1001
      %v1998 = vunpack.c.h.b16 %v1001
      %v1999 = vunpack.c.l.b16 %v1002
      %v2000 = vunpack.c.h.b16 %v1002
      %v2001 = vunpack.c.l.b16 %v1003
      %v2002 = vunpack.c.h.b16 %v1003
      %v2003 = vunpack.c.l.b16 %v1004
      %v2004 = vunpack.c.h.b16 %v1004
      %v2005 = vunpack.c.l.b16 %v1005
      %v2006 = vunpack.c.h.b16 %v1005
      %v2007 = vunpack.c.l.b16 %v1006
      %v2008 = vunpack.c.h.b16 %v1006
      %v2009 = vunpack.c.l.b16 %v1007
      %v2010 = vunpack.c.h.b16 %v1007
      %v2011 = vunpack.c.l.b16 %v1008
      %v2012 = vunpack.c.h.b16 %v1008
      %v2013 = vunpack.c.l.b16 %v1009
      %v2014 = vunpack.c.h.b16 %v1009
      %v2015 = vunpack.c.l.b16 %v1010
      %v2016 = vunpack.c.h.b16 %v1010
      %v2017 = vunpack.c.l.b16 %v1011
      %v2018 = vunpack.c.h.b16 %v1011
      %v2019 = vunpack.c.l.b16 %v1012
      %v2020 = vunpack.c.h.b16 %v1012
      %v2021 = vunpack.c.l.b16 %v1013
      %v2022 = vunpack.c.h.b16 %v1013
      %v2023 = vunpack.c.l.b16 %v1014
      %v2024 = vunpack.c.h.b16 %v1014
      %v2025 = vunpack.c.l.b16 %v1015
      %v2026 = vunpack.c.h.b16 %v1015
      %v2027 = vunpack.c.l.b16 %v1016
      %v2028 = vunpack.c.h.b16 %v1016
      %v2029 = vunpack.c.l.b16 %v1017
      %v2030 = vunpack.c.h.b16 %v1017
      %v2031 = vunpack.c.l.b16 %v1018
      %v2032 = vunpack.c.h.b16 %v1018
      %v2033 = vunpack.c.l.b16 %v1019
      %v2034 = vunpack.c.h.b16 %v1019
      %v2035 = vunpack.c.l.b16 %v1020
      %v2036 = vunpack.c.h.b16 %v1020
      %v2037 = vunpack.c.l.b16 %v1021
      %v2038 = vunpack.c.h.b16 %v1021
      %v2039 = vunpack.c.l.b16 %v1022
      %v2040 = vunpack.c.h.b16 %v1022
      %v2041 = vunpack.c.l.b16 %v1023
      %v2042 = vunpack.c.h.b16 %v1023
      %v2043 = vunpack.c.l.b16 %v1024
      %v2044 = vunpack.c.h.b16 %v1024
      %v2045 = vunpack.c.l.b16 %v1025
      %v2046 = vunpack.c.h.b16 %v1025
      %v2047 = vunpack.c.l.b16 %v1026
      %v2048 = vunpack.c.h.b16 %v1026
      %v2049 = vunpack.c.l.b16 %v1027
      %v2050 = vunpack.c.h.b16 %v1027
      %v2051 = vunpack.c.l.b16 %v1028
      %v2052 = vunpack.c.h.b16 %v1028
      %v2053 = vunpack.c.l.b16 %v1029
      %v2054 = vunpack.c.h.b16 %v1029
      %v2055 = vunpack.c.l.b16 %v1030
      %v2056 = vunpack.c.h.b16 %v1030
      %v2057 = vunpack.c.l.b16 %v1031
      %v2058 = vunpack.c.h.b16 %v1031
      %v2059 = vunpack.c.l.b16 %v1032
      %v2060 = vunpack.c.h.b16 %v1032
      %v2061 = vunpack.c.l.b16 %v1033
      %v2062 = vunpack.c.h.b16 %v1033
      %v2063 = vunpack.c.l.b16 %v1034
      %v2064 = vunpack.c.h.b16 %v1034
      %v2065 = vunpack.c.l.b16 %v1035
      %v2066 = vunpack.c.h.b16 %v1035
      %v2067 = vunpack.c.l.b16 %v1036
      %v2068 = vunpack.c.h.b16 %v1036
      %v2069 = vunpack.c.l.b16 %v1037
      %v2070 = vunpack.c.h.b16 %v1037
      %v2071 = vunpack.c.l.b16 %v1038
      %v2072 = vunpack.c.h.b16 %v1038
      %v2073 = vunpack.c.l.b16 %v1039
      %v2074 = vunpack.c.h.b16 %v1039
      %v2075 = vunpack.c.l.b16 %v1040
      %v2076 = vunpack.c.h.b16 %v1040
      %v2077 = vunpack.c.l.b16 %v1041
      %v2078 = vunpack.c.h.b16 %v1041
      %v2079 = vunpack.c.l.b16 %v1042
      %v2080 = vunpack.c.h.b16 %v1042
      %v2081 = vunpack.c.l.b16 %v1043
      %v2082 = vunpack.c.h.b16 %v1043
      %v2083 = vunpack.c.l.b16 %v1044
      %v2084 = vunpack.c.h.b16 %v1044
      %v2085 = vunpack.c.l.b16 %v1045
      %v2086 = vunpack.c.h.b16 %v1045
      %v2087 = vunpack.c.l.b16 %v1046
      %v2088 = vunpack.c.h.b16 %v1046
      %v2089 = vunpack.c.l.b16 %v1047
      %v2090 = vunpack.c.h.b16 %v1047
      %v2091 = vunpack.c.l.b16 %v1048
      %v2092 = vunpack.c.h.b16 %v1048
      %v2093 = vunpack.c.l.b16 %v1049
      %v2094 = vunpack.c.h.b16 %v1049
      %v2095 = vunpack.c.l.b16 %v1050
      %v2096 = vunpack.c.h.b16 %v1050
      %v2097 = vunpack.c.l.b16 %v1051
      %v2098 = vunpack.c.h.b16 %v1051
      %v2099 = vunpack.c.l.b16 %v1052
      %v2100 = vunpack.c.h.b16 %v1052
      %v2101 = vunpack.c.l.b16 %v1053
      %v2102 = vunpack.c.h.b16 %v1053
      %v2103 = vunpack.c.l.b16 %v1054
      %v2104 = vunpack.c.h.b16 %v1054
      %v2105 = vunpack.c.l.b16 %v1055
      %v2106 = vunpack.c.h.b16 %v1055
      %v2107 = vunpack.c.l.b16 %v1056
      %v2108 = vunpack.c.h.b16 %v1056
      %v2109 = vunpack.c.l.b16 %v1057
      %v2110 = vunpack.c.h.b16 %v1057
      %v2111 = vunpack.c.l.b16 %v1058
      %v2112 = vunpack.c.h.b16 %v1058
      %v2113 = vunpack.c.l.b16 %v1059
      %v2114 = vunpack.c.h.b16 %v1059
      %v2115 = vunpack.c.l.b16 %v1060
      %v2116 = vunpack.c.h.b16 %v1060
      %v2117 = vunpack.c.l.b16 %v1061
      %v2118 = vunpack.c.h.b16 %v1061
      %v2119 = vunpack.c.l.b16 %v1062
      %v2120 = vunpack.c.h.b16 %v1062
      %v2121 = vunpack.c.l.b16 %v1063
      %v2122 = vunpack.c.h.b16 %v1063
      %v2123 = vunpack.c.l.b16 %v1064
      %v2124 = vunpack.c.h.b16 %v1064
      %v2125 = vunpack.c.l.b16 %v1065
      %v2126 = vunpack.c.h.b16 %v1065
      %v2127 = vunpack.c.l.b16 %v1066
      %v2128 = vunpack.c.h.b16 %v1066
      %v2129 = vunpack.c.l.b16 %v1067
      %v2130 = vunpack.c.h.b16 %v1067
      %v2131 = vunpack.c.l.b16 %v1068
      %v2132 = vunpack.c.h.b16 %v1068
      %v2133 = vunpack.c.l.b16 %v1069
      %v2134 = vunpack.c.h.b16 %v1069
      %v2135 = vunpack.c.l.b16 %v1070
      %v2136 = vunpack.c.h.b16 %v1070
      %v2137 = vunpack.c.l.b16 %v1071
      %v2138 = vunpack.c.h.b16 %v1071
      %v2139 = vunpack.c.l.b16 %v1072
      %v2140 = vunpack.c.h.b16 %v1072
      %v2141 = vunpack.c.l.b16 %v1073
      %v2142 = vunpack.c.h.b16 %v1073
      %v2143 = vunpack.c.l.b16 %v1074
      %v2144 = vunpack.c.h.b16 %v1074
      %v2145 = vunpack.c.l.b16 %v1075
      %v2146 = vunpack.c.h.b16 %v1075
      %v2147 = vunpack.c.l.b16 %v1076
      %v2148 = vunpack.c.h.b16 %v1076
      %v2149 = vunpack.c.l.b16 %v1077
      %v2150 = vunpack.c.h.b16 %v1077
      %v2151 = vunpack.c.l.b16 %v1078
      %v2152 = vunpack.c.h.b16 %v1078
      %v2153 = vunpack.c.l.b16 %v1079
      %v2154 = vunpack.c.h.b16 %v1079
      %v2155 = vunpack.c.l.b16 %v1080
      %v2156 = vunpack.c.h.b16 %v1080
      %v2157 = vunpack.c.l.b16 %v1081
      %v2158 = vunpack.c.h.b16 %v1081
      %v2159 = vunpack.c.l.b16 %v1082
      %v2160 = vunpack.c.h.b16 %v1082
      %v2161 = vunpack.c.l.b16 %v1083
      %v2162 = vunpack.c.h.b16 %v1083
      %v2163 = vunpack.c.l.b16 %v1084
      %v2164 = vunpack.c.h.b16 %v1084
      %v2165 = vunpack.c.l.b16 %v1085
      %v2166 = vunpack.c.h.b16 %v1085
      %v2167 = vunpack.c.l.b16 %v1086
      %v2168 = vunpack.c.h.b16 %v1086
      %v2169 = vunpack.c.l.b16 %v1087
      %v2170 = vunpack.c.h.b16 %v1087
      %v2171 = vunpack.c.l.b16 %v1088
      %v2172 = vunpack.c.h.b16 %v1088
      %v2173 = vunpack.c.l.b16 %v1089
      %v2174 = vunpack.c.h.b16 %v1089
      %v2175 = vunpack.c.l.b16 %v1090
      %v2176 = vunpack.c.h.b16 %v1090
      %v2177 = vunpack.c.l.b16 %v1091
      %v2178 = vunpack.c.h.b16 %v1091
      %v2179 = vunpack.c.l.b16 %v1092
      %v2180 = vunpack.c.h.b16 %v1092
      %v2181 = vunpack.c.l.b16 %v1093
      %v2182 = vunpack.c.h.b16 %v1093
      %v2183 = vunpack.c.l.b16 %v1094
      %v2184 = vunpack.c.h.b16 %v1094
      %v2185 = vunpack.c.l.b16 %v1095
      %v2186 = vunpack.c.h.b16 %v1095
      %v2187 = vunpack.c.l.b16 %v1096
      %v2188 = vunpack.c.h.b16 %v1096
      %v2189 = vunpack.c.l.b16 %v1097
      %v2190 = vunpack.c.h.b16 %v1097
      %v2191 = vunpack.c.l.b16 %v1098
      %v2192 = vunpack.c.h.b16 %v1098
      %v2193 = vunpack.c.l.b16 %v1099
      %v2194 = vunpack.c.h.b16 %v1099
      %v2195 = vunpack.c.l.b16 %v1100
      %v2196 = vunpack.c.h.b16 %v1100
      %v2197 = vunpack.c.l.b16 %v1101
      %v2198 = vunpack.c.h.b16 %v1101
      %v2199 = vunpack.c.l.b16 %v1102
      %v2200 = vunpack.c.h.b16 %v1102
      %v2201 = vunpack.c.l.b16 %v1103
      %v2202 = vunpack.c.h.b16 %v1103
      %v2203 = vunpack.c.l.b16 %v1104
      %v2204 = vunpack.c.h.b16 %v1104
      %v2205 = vunpack.c.l.b16 %v1105
      %v2206 = vunpack.c.h.b16 %v1105
      %v2207 = vunpack.c.l.b16 %v1106
      %v2208 = vunpack.c.h.b16 %v1106
      %v2209 = vunpack.c.l.b16 %v1107
      %v2210 = vunpack.c.h.b16 %v1107
      %v2211 = vunpack.c.l.b16 %v1108
      %v2212 = vunpack.c.h.b16 %v1108
      %v2213 = vunpack.c.l.b16 %v1109
      %v2214 = vunpack.c.h.b16 %v1109
      %v2215 = vunpack.c.l.b16 %v1110
      %v2216 = vunpack.c.h.b16 %v1110
      %v2217 = vunpack.c.l.b16 %v1111
      %v2218 = vunpack.c.h.b16 %v1111
      %v2219 = vunpack.c.l.b16 %v1112
      %v2220 = vunpack.c.h.b16 %v1112
      %v2221 = vunpack.c.l.b16 %v1113
      %v2222 = vunpack.c.h.b16 %v1113
      %v2223 = vunpack.c.l.b16 %v1114
      %v2224 = vunpack.c.h.b16 %v1114
      %v2225 = vunpack.c.l.b16 %v1115
      %v2226 = vunpack.c.h.b16 %v1115
      %v2227 = vunpack.c.l.b16 %v1116
      %v2228 = vunpack.c.h.b16 %v1116
      %v2229 = vunpack.c.l.b16 %v1117
      %v2230 = vunpack.c.h.b16 %v1117
      %v2231 = vunpack.c.l.b16 %v1118
      %v2232 = vunpack.c.h.b16 %v1118
      %v2233 = vunpack.c.l.b16 %v1119
      %v2234 = vunpack.c.h.b16 %v1119
      %v2235 = vunpack.c.l.b16 %v1120
      %v2236 = vunpack.c.h.b16 %v1120
      %v2237 = vunpack.c.l.b16 %v1121
      %v2238 = vunpack.c.h.b16 %v1121
      %v2239 = vunpack.c.l.b16 %v1122
      %v2240 = vunpack.c.h.b16 %v1122
      %v2241 = vunpack.c.l.b16 %v1123
      %v2242 = vunpack.c.h.b16 %v1123
      %v2243 = vunpack.c.l.b16 %v1124
      %v2244 = vunpack.c.h.b16 %v1124
      %v2245 = vunpack.c.l.b16 %v1125
      %v2246 = vunpack.c.h.b16 %v1125
      %v2247 = vunpack.c.l.b16 %v1126
      %v2248 = vunpack.c.h.b16 %v1126
      %v2249 = vunpack.c.l.b16 %v1127
      %v2250 = vunpack.c.h.b16 %v1127
      %v2251 = vunpack.c.l.b16 %v1128
      %v2252 = vunpack.c.h.b16 %v1128
      %v2253 = vunpack.c.l.b16 %v1129
      %v2254 = vunpack.c.h.b16 %v1129
      %v2255 = vunpack.c.l.b16 %v1130
      %v2256 = vunpack.c.h.b16 %v1130
      %v2257 = vunpack.c.l.b16 %v1131
      %v2258 = vunpack.c.h.b16 %v1131
      %v2259 = vunpack.c.l.b16 %v1132
      %v2260 = vunpack.c.h.b16 %v1132
      %v2261 = vunpack.c.l.b16 %v1133
      %v2262 = vunpack.c.h.b16 %v1133
      %v2263 = vunpack.c.l.b16 %v1134
      %v2264 = vunpack.c.h.b16 %v1134
      %v2265 = vunpack.c.l.b16 %v1135
      %v2266 = vunpack.c.h.b16 %v1135
      %v2267 = vunpack.c.l.b16 %v1136
      %v2268 = vunpack.c.h.b16 %v1136
      %v2269 = vunpack.c.l.b16 %v1137
      %v2270 = vunpack.c.h.b16 %v1137
      %v2271 = vunpack.c.l.b16 %v1138
      %v2272 = vunpack.c.h.b16 %v1138
      %v2273 = vunpack.c.l.b16 %v1139
      %v2274 = vunpack.c.h.b16 %v1139
      %v2275 = vunpack.c.l.b16 %v1140
      %v2276 = vunpack.c.h.b16 %v1140
      %v2277 = vunpack.c.l.b16 %v1141
      %v2278 = vunpack.c.h.b16 %v1141
      %v2279 = vunpack.c.l.b16 %v1142
      %v2280 = vunpack.c.h.b16 %v1142
      %v2281 = vunpack.c.l.b16 %v1143
      %v2282 = vunpack.c.h.b16 %v1143
      %v2283 = vunpack.c.l.b16 %v1144
      %v2284 = vunpack.c.h.b16 %v1144
      %v2285 = vunpack.c.l.b16 %v1145
      %v2286 = vunpack.c.h.b16 %v1145
      %v2287 = vunpack.c.l.b16 %v1146
      %v2288 = vunpack.c.h.b16 %v1146
      %v2289 = vunpack.c.l.b16 %v1147
      %v2290 = vunpack.c.h.b16 %v1147
      %v2291 = vunpack.c.l.b16 %v1148
      %v2292 = vunpack.c.h.b16 %v1148
      %v2293 = vunpack.c.l.b16 %v1149
      %v2294 = vunpack.c.h.b16 %v1149
      %v2295 = vunpack.c.l.b16 %v1150
      %v2296 = vunpack.c.h.b16 %v1150
      %v2297 = vunpack.c.l.b16 %v1151
      %v2298 = vunpack.c.h.b16 %v1151
      %v2299 = vunpack.c.l.b16 %v1152
      %v2300 = vunpack.c.h.b16 %v1152
      %v2301 = vunpack.c.l.b16 %v1153
      %v2302 = vunpack.c.h.b16 %v1153
      %v2303 = vunpack.c.l.b16 %v1154
      %v2304 = vunpack.c.h.b16 %v1154
      %v2305 = vunpack.c.l.b16 %v1155
      %v2306 = vunpack.c.h.b16 %v1155
      %v2307 = vunpack.c.l.b16 %v1156
      %v2308 = vunpack.c.h.b16 %v1156
      %v2309 = vunpack.c.l.b16 %v1157
      %v2310 = vunpack.c.h.b16 %v1157
      %v2311 = vunpack.c.l.b16 %v1158
      %v2312 = vunpack.c.h.b16 %v1158
      %v2313 = vunpack.c.l.b16 %v1159
      %v2314 = vunpack.c.h.b16 %v1159
      %v2315 = vunpack.c.l.b16 %v1160
      %v2316 = vunpack.c.h.b16 %v1160
      %v2317 = vunpack.c.l.b16 %v1161
      %v2318 = vunpack.c.h.b16 %v1161
      %v2319 = vunpack.c.l.b16 %v1162
      %v2320 = vunpack.c.h.b16 %v1162
      %v2321 = vunpack.c.l.b16 %v1163
      %v2322 = vunpack.c.h.b16 %v1163
      %v2323 = vunpack.c.l.b16 %v1164
      %v2324 = vunpack.c.h.b16 %v1164
      %v2325 = vunpack.c.l.b16 %v1165
      %v2326 = vunpack.c.h.b16 %v1165
      %v2327 = vunpack.c.l.b16 %v1166
      %v2328 = vunpack.c.h.b16 %v1166
      %v2329 = vunpack.c.l.b16 %v1167
      %v2330 = vunpack.c.h.b16 %v1167
      %v2331 = vunpack.c.l.b16 %v1168
      %v2332 = vunpack.c.h.b16 %v1168
      %v2333 = vunpack.c.l.b16 %v1169
      %v2334 = vunpack.c.h.b16 %v1169
      %v2335 = vunpack.c.l.b16 %v1170
      %v2336 = vunpack.c.h.b16 %v1170
      %v2337 = vunpack.c.l.b16 %v1171
      %v2338 = vunpack.c.h.b16 %v1171
      %v2339 = vunpack.c.l.b16 %v1172
      %v2340 = vunpack.c.h.b16 %v1172
      %v2341 = vunpack.c.l.b16 %v1173
      %v2342 = vunpack.c.h.b16 %v1173
      %v2343 = vunpack.c.l.b16 %v1174
      %v2344 = vunpack.c.h.b16 %v1174
      %v2345 = vunpack.c.l.b16 %v1175
      %v2346 = vunpack.c.h.b16 %v1175
      %v2347 = vunpack.c.l.b16 %v1176
      %v2348 = vunpack.c.h.b16 %v1176
      %v2349 = vunpack.c.l.b16 %v1177
      %v2350 = vunpack.c.h.b16 %v1177
      %v2351 = vunpack.c.l.b16 %v1178
      %v2352 = vunpack.c.h.b16 %v1178
      %v2353 = vunpack.c.l.b16 %v1179
      %v2354 = vunpack.c.h.b16 %v1179
      %v2355 = vunpack.c.l.b16 %v1180
      %v2356 = vunpack.c.h.b16 %v1180
      %v2357 = vunpack.c.l.b16 %v1181
      %v2358 = vunpack.c.h.b16 %v1181
      %v2359 = vunpack.c.l.b16 %v1182
      %v2360 = vunpack.c.h.b16 %v1182
      %v2361 = vunpack.c.l.b16 %v1183
      %v2362 = vunpack.c.h.b16 %v1183
      %v2363 = vunpack.c.l.b16 %v1184
      %v2364 = vunpack.c.h.b16 %v1184
      %v2365 = vunpack.c.l.b16 %v1185
      %v2366 = vunpack.c.h.b16 %v1185
      %v2367 = vunpack.c.l.b16 %v1186
      %v2368 = vunpack.c.h.b16 %v1186
      %v2369 = vunpack.c.l.b16 %v1187
      %v2370 = vunpack.c.h.b16 %v1187
      %v2371 = vunpack.c.l.b16 %v1188
      %v2372 = vunpack.c.h.b16 %v1188
      %v2373 = vunpack.c.l.b16 %v1189
      %v2374 = vunpack.c.h.b16 %v1189
      %v2375 = vunpack.c.l.b16 %v1190
      %v2376 = vunpack.c.h.b16 %v1190
      %v2377 = vunpack.c.l.b16 %v1191
      %v2378 = vunpack.c.h.b16 %v1191
      %v2379 = vunpack.c.l.b16 %v1192
      %v2380 = vunpack.c.h.b16 %v1192
      %v2381 = vunpack.c.l.b16 %v1193
      %v2382 = vunpack.c.h.b16 %v1193
      %v2383 = vunpack.c.l.b16 %v1194
      %v2384 = vunpack.c.h.b16 %v1194
      %v2385 = vunpack.c.l.b16 %v1195
      %v2386 = vunpack.c.h.b16 %v1195
      %v2387 = vunpack.c.l.b16 %v1196
      %v2388 = vunpack.c.h.b16 %v1196
      %v2389 = vunpack.c.l.b16 %v1197
      %v2390 = vunpack.c.h.b16 %v1197
      %v2391 = vunpack.c.l.b16 %v1198
      %v2392 = vunpack.c.h.b16 %v1198
      %v2393 = vunpack.c.l.b16 %v1199
      %v2394 = vunpack.c.h.b16 %v1199
      %v2395 = vunpack.c.l.b16 %v1200
      %v2396 = vunpack.c.h.b16 %v1200
      %v2397 = vunpack.c.l.b16 %v1201
      %v2398 = vunpack.c.h.b16 %v1201
      %v2399 = vunpack.c.l.b16 %v1202
      %v2400 = vunpack.c.h.b16 %v1202
      %v2401 = vunpack.c.l.b16 %v1203
      %v2402 = vunpack.c.h.b16 %v1203
      %v2403 = vunpack.c.l.b16 %v1204
      %v2404 = vunpack.c.h.b16 %v1204
      %v2405 = vunpack.c.l.b16 %v1205
      %v2406 = vunpack.c.h.b16 %v1205
      %v2407 = vunpack.c.l.b16 %v1206
      %v2408 = vunpack.c.h.b16 %v1206
      %v2409 = vunpack.c.l.b16 %v1207
      %v2410 = vunpack.c.h.b16 %v1207
      %v2411 = vunpack.c.l.b16 %v1208
      %v2412 = vunpack.c.h.b16 %v1208
      %v2413 = vunpack.c.l.b16 %v1209
      %v2414 = vunpack.c.h.b16 %v1209
      %v2415 = vunpack.c.l.b16 %v1210
      %v2416 = vunpack.c.h.b16 %v1210
      %v2417 = vunpack.c.l.b16 %v1211
      %v2418 = vunpack.c.h.b16 %v1211
      %v2419 = vunpack.c.l.b16 %v1212
      %v2420 = vunpack.c.h.b16 %v1212
      %v2421 = vunpack.c.l.b16 %v1213
      %v2422 = vunpack.c.h.b16 %v1213
      %v2423 = vunpack.c.l.b16 %v1214
      %v2424 = vunpack.c.h.b16 %v1214
      %v2425 = vunpack.c.l.b16 %v1215
      %v2426 = vunpack.c.h.b16 %v1215
      %v2427 = vunpack.c.l.b16 %v1216
      %v2428 = vunpack.c.h.b16 %v1216
      %v2429 = vunpack.c.l.b16 %v1217
      %v2430 = vunpack.c.h.b16 %v1217
      %v2431 = vunpack.c.l.b16 %v1218
      %v2432 = vunpack.c.h.b16 %v1218
      %v2433 = vunpack.c.l.b16 %v1219
      %v2434 = vunpack.c.h.b16 %v1219
      %v2435 = vunpack.c.l.b16 %v1220
      %v2436 = vunpack.c.h.b16 %v1220
      %v2437 = vunpack.c.l.b16 %v1221
      %v2438 = vunpack.c.h.b16 %v1221
      %v2439 = vunpack.c.l.b16 %v1222
      %v2440 = vunpack.c.h.b16 %v1222
      %v2441 = vunpack.c.l.b16 %v1223
      %v2442 = vunpack.c.h.b16 %v1223
      %v2443 = vunpack.c.l.b16 %v1224
      %v2444 = vunpack.c.h.b16 %v1224
      %v2445 = vunpack.c.l.b16 %v1225
      %v2446 = vunpack.c.h.b16 %v1225
      %v2447 = vunpack.c.l.b16 %v1226
      %v2448 = vunpack.c.h.b16 %v1226
      %v2449 = vunpack.c.l.b16 %v1227
      %v2450 = vunpack.c.h.b16 %v1227
      %v2451 = vunpack.c.l.b16 %v1228
      %v2452 = vunpack.c.h.b16 %v1228
      %v2453 = vunpack.c.l.b16 %v1229
      %v2454 = vunpack.c.h.b16 %v1229
      %v2455 = vunpack.c.l.b16 %v1230
      %v2456 = vunpack.c.h.b16 %v1230
      %v2457 = vunpack.c.l.b16 %v1231
      %v2458 = vunpack.c.h.b16 %v1231
      %v2459 = vunpack.c.l.b16 %v1232
      %v2460 = vunpack.c.h.b16 %v1232
      %v2461 = vunpack.c.l.b16 %v1233
      %v2462 = vunpack.c.h.b16 %v1233
      %v2463 = vunpack.c.l.b16 %v1234
      %v2464 = vunpack.c.h.b16 %v1234
      %v2465 = vunpack.c.l.b16 %v1235
      %v2466 = vunpack.c.h.b16 %v1235
      %v2467 = vunpack.c.l.b16 %v1236
      %v2468 = vunpack.c.h.b16 %v1236
      %v2469 = vunpack.c.l.b16 %v1237
      %v2470 = vunpack.c.h.b16 %v1237
      %v2471 = vunpack.c.l.b16 %v1238
      %v2472 = vunpack.c.h.b16 %v1238
      %v2473 = vunpack.c.l.b16 %v1239
      %v2474 = vunpack.c.h.b16 %v1239
      %v2475 = vunpack.c.l.b16 %v1240
      %v2476 = vunpack.c.h.b16 %v1240
      %v2477 = vunpack.c.l.b16 %v1241
      %v2478 = vunpack.c.h.b16 %v1241
      %v2479 = vunpack.c.l.b16 %v1242
      %v2480 = vunpack.c.h.b16 %v1242
      %v2481 = vunpack.c.l.b16 %v1243
      %v2482 = vunpack.c.h.b16 %v1243
      %v2483 = vunpack.c.l.b16 %v1244
      %v2484 = vunpack.c.h.b16 %v1244
      %v2485 = vunpack.c.l.b16 %v1245
      %v2486 = vunpack.c.h.b16 %v1245
      %v2487 = vunpack.c.l.b16 %v1246
      %v2488 = vunpack.c.h.b16 %v1246
      %v2489 = vunpack.c.l.b16 %v1247
      %v2490 = vunpack.c.h.b16 %v1247
      %v2491 = vunpack.c.l.b16 %v1248
      %v2492 = vunpack.c.h.b16 %v1248
      %v2493 = vunpack.c.l.b16 %v1249
      %v2494 = vunpack.c.h.b16 %v1249
      %v2495 = vunpack.c.l.b16 %v1250
      %v2496 = vunpack.c.h.b16 %v1250
      %v2497 = vunpack.c.l.b16 %v1251
      %v2498 = vunpack.c.h.b16 %v1251
      %v2499 = vunpack.c.l.b16 %v1252
      %v2500 = vunpack.c.h.b16 %v1252
      %v2501 = vunpack.c.l.b16 %v1253
      %v2502 = vunpack.c.h.b16 %v1253
      %v2503 = vunpack.c.l.b16 %v1254
      %v2504 = vunpack.c.h.b16 %v1254
      %v2505 = vunpack.c.l.b16 %v1255
      %v2506 = vunpack.c.h.b16 %v1255
      %v2507 = vunpack.c.l.b16 %v1256
      %v2508 = vunpack.c.h.b16 %v1256
      %v2509 = vunpack.c.l.b16 %v1257
      %v2510 = vunpack.c.h.b16 %v1257
      %v2511 = vunpack.c.l.b16 %v1258
      %v2512 = vunpack.c.h.b16 %v1258
      %v2513 = vunpack.c.l.b16 %v1259
      %v2514 = vunpack.c.h.b16 %v1259
      %v2515 = vunpack.c.l.b16 %v1260
      %v2516 = vunpack.c.h.b16 %v1260
      %v2517 = vunpack.c.l.b16 %v1261
      %v2518 = vunpack.c.h.b16 %v1261
      %v2519 = vunpack.c.l.b16 %v1262
      %v2520 = vunpack.c.h.b16 %v1262
      %v2521 = vunpack.c.l.b16 %v1263
      %v2522 = vunpack.c.h.b16 %v1263
      %v2523 = vunpack.c.l.b16 %v1264
      %v2524 = vunpack.c.h.b16 %v1264
      %v2525 = vunpack.c.l.b16 %v1265
      %v2526 = vunpack.c.h.b16 %v1265
      %v2527 = vunpack.c.l.b16 %v1266
      %v2528 = vunpack.c.h.b16 %v1266
      %v2529 = vunpack.c.l.b16 %v1267
      %v2530 = vunpack.c.h.b16 %v1267
      %v2531 = vunpack.c.l.b16 %v1268
      %v2532 = vunpack.c.h.b16 %v1268
      %v2533 = vunpack.c.l.b16 %v1269
      %v2534 = vunpack.c.h.b16 %v1269
      %v2535 = vunpack.c.l.b16 %v1270
      %v2536 = vunpack.c.h.b16 %v1270
      %v2537 = vunpack.c.l.b16 %v1271
      %v2538 = vunpack.c.h.b16 %v1271
      %v2539 = vunpack.c.l.b16 %v1272
      %v2540 = vunpack.c.h.b16 %v1272
      %v2541 = vunpack.c.l.b16 %v1273
      %v2542 = vunpack.c.h.b16 %v1273
      %v2543 = vunpack.c.l.b16 %v1274
      %v2544 = vunpack.c.h.b16 %v1274
      %v2545 = vunpack.c.l.b16 %v1275
      %v2546 = vunpack.c.h.b16 %v1275
      %v2547 = vunpack.c.l.b16 %v1276
      %v2548 = vunpack.c.h.b16 %v1276
      %v2549 = vunpack.c.l.b16 %v1277
      %v2550 = vunpack.c.h.b16 %v1277
      %v2551 = vunpack.c.l.b16 %v1278
      %v2552 = vunpack.c.h.b16 %v1278
      %v2553 = vunpack.c.l.b16 %v1279
      %v2554 = vunpack.c.h.b16 %v1279
      %v2555 = vunpack.c.l.b16 %v1280
      %v2556 = vunpack.c.h.b16 %v1280
      %v2557 = vunpack.c.l.b16 %v1281
      %v2558 = vunpack.c.h.b16 %v1281
      %v2559 = vunpack.c.l.b16 %v1282
      %v2560 = vunpack.c.h.b16 %v1282
      %v2561 = vunpack.c.l.b16 %v1283
      %v2562 = vunpack.c.h.b16 %v1283
      %v2563 = vunpack.c.l.b16 %v1284
      %v2564 = vunpack.c.h.b16 %v1284
      %v2565 = vunpack.c.l.b16 %v1285
      %v2566 = vunpack.c.h.b16 %v1285
      %v2567 = vunpack.c.l.b16 %v1286
      %v2568 = vunpack.c.h.b16 %v1286
      %v2569 = vunpack.c.l.b16 %v1287
      %v2570 = vunpack.c.h.b16 %v1287
      %v2571 = vunpack.c.l.b16 %v1288
      %v2572 = vunpack.c.h.b16 %v1288
      %v2573 = vunpack.c.l.b16 %v1289
      %v2574 = vunpack.c.h.b16 %v1289
      %v2575 = vunpack.c.l.b16 %v1290
      %v2576 = vunpack.c.h.b16 %v1290
      %v2577 = vunpack.c.l.b16 %v1291
      %v2578 = vunpack.c.h.b16 %v1291
      %v2579 = vunpack.c.l.b16 %v1292
      %v2580 = vunpack.c.h.b16 %v1292
      %v2581 = vunpack.c.l.b16 %v1293
      %v2582 = vunpack.c.h.b16 %v1293
      %v2583 = vunpack.c.l.b16 %v1294
      %v2584 = vunpack.c.h.b16 %v1294
      %v2585 = vunpack.c.l.b16 %v1295
      %v2586 = vunpack.c.h.b16 %v1295
      %v2587 = vunpack.c.l.b16 %v1296
      %v2588 = vunpack.c.h.b16 %v1296
      %v2589 = vunpack.c.l.b16 %v1297
      %v2590 = vunpack.c.h.b16 %v1297
      %v2591 = vunpack.c.l.b16 %v1298
      %v2592 = vunpack.c.h.b16 %v1298
      %v2593 = vunpack.c.l.b16 %v1299
      %v2594 = vunpack.c.h.b16 %v1299
      %v2595 = vunpack.c.l.b16 %v1300
      %v2596 = vunpack.c.h.b16 %v1300
      %v2597 = vunpack.c.l.b16 %v1301
      %v2598 = vunpack.c.h.b16 %v1301
      %v2599 = vunpack.c.l.b16 %v1302
      %v2600 = vunpack.c.h.b16 %v1302
      %v2601 = vunpack.c.l.b16 %v1303
      %v2602 = vunpack.c.h.b16 %v1303
      %v2603 = vunpack.c.l.b16 %v1304
      %v2604 = vunpack.c.h.b16 %v1304
      %v2605 = vunpack.c.l.b16 %v1305
      %v2606 = vunpack.c.h.b16 %v1305
      %v2607 = vunpack.c.l.b16 %v1306
      %v2608 = vunpack.c.h.b16 %v1306
      %v2609 = vunpack.c.l.b16 %v1307
      %v2610 = vunpack.c.h.b16 %v1307
      %v2611 = vunpack.c.l.b16 %v1308
      %v2612 = vunpack.c.h.b16 %v1308
      %v2613 = vunpack.c.l.b16 %v1309
      %v2614 = vunpack.c.h.b16 %v1309
      %v2615 = vunpack.c.l.b16 %v1310
      %v2616 = vunpack.c.h.b16 %v1310
      %v2617 = vunpack.c.l.b16 %v1311
      %v2618 = vunpack.c.h.b16 %v1311
      %v2619 = vunpack.c.l.b16 %v1312
      %v2620 = vunpack.c.h.b16 %v1312
      %v2621 = vunpack.c.l.b16 %v1313
      %v2622 = vunpack.c.h.b16 %v1313
      %v2623 = vunpack.c.l.b16 %v1314
      %v2624 = vunpack.c.h.b16 %v1314
      %v2625 = vunpack.c.l.b16 %v1315
      %v2626 = vunpack.c.h.b16 %v1315
      %v2627 = vunpack.c.l.b16 %v1316
      %v2628 = vunpack.c.h.b16 %v1316
      %v2629 = vunpack.c.l.b16 %v1317
      %v2630 = vunpack.c.h.b16 %v1317
      %v2631 = vunpack.c.l.b16 %v1318
      %v2632 = vunpack.c.h.b16 %v1318
      %v2633 = vunpack.c.l.b16 %v1319
      %v2634 = vunpack.c.h.b16 %v1319
      %v2635 = vunpack.c.l.b16 %v1320
      %v2636 = vunpack.c.h.b16 %v1320
      %v2637 = vunpack.c.l.b16 %v1321
      %v2638 = vunpack.c.h.b16 %v1321
      %v2639 = vunpack.c.l.b16 %v1322
      %v2640 = vunpack.c.h.b16 %v1322
      %v2641 = vunpack.c.l.b16 %v1323
      %v2642 = vunpack.c.h.b16 %v1323
      %v2643 = vunpack.c.l.b16 %v1324
      %v2644 = vunpack.c.h.b16 %v1324
      %v2645 = vunpack.c.l.b16 %v1325
      %v2646 = vunpack.c.h.b16 %v1325
      %v2647 = vunpack.c.l.b16 %v1326
      %v2648 = vunpack.c.h.b16 %v1326
      %v2649 = vunpack.c.l.b16 %v1327
      %v2650 = vunpack.c.h.b16 %v1327
      %v2651 = vunpack.c.l.b16 %v1328
      %v2652 = vunpack.c.h.b16 %v1328
      %v2653 = vunpack.c.l.b16 %v1329
      %v2654 = vunpack.c.h.b16 %v1329
      %v2655 = vunpack.c.l.b16 %v1330
      %v2656 = vunpack.c.h.b16 %v1330
      %v2657 = vunpack.c.l.b16 %v1331
      %v2658 = vunpack.c.h.b16 %v1331
      %v2659 = vunpack.c.l.b16 %v1332
      %v2660 = vunpack.c.h.b16 %v1332
      %v2661 = vunpack.c.l.b16 %v1333
      %v2662 = vunpack.c.h.b16 %v1333
      %v2663 = vunpack.c.l.b16 %v1334
      %v2664 = vunpack.c.h.b16 %v1334
      %v2665 = vunpack.c.l.b16 %v1335
      %v2666 = vunpack.c.h.b16 %v1335
      %v2667 = vunpack.c.l.b16 %v1336
      %v2668 = vunpack.c.h.b16 %v1336
      %v2669 = vunpack.c.l.b16 %v1337
      %v2670 = vunpack.c.h.b16 %v1337
      %v2671 = vunpack.c.l.b16 %v1338
      %v2672 = vunpack.c.h.b16 %v1338
      %v2673 = vunpack.c.l.b16 %v1339
      %v2674 = vunpack.c.h.b16 %v1339
      %v2675 = vunpack.c.l.b16 %v1340
      %v2676 = vunpack.c.h.b16 %v1340
      %v2677 = vunpack.c.l.b16 %v1341
      %v2678 = vunpack.c.h.b16 %v1341
      %v2679 = vunpack.c.l.b16 %v1342
      %v2680 = vunpack.c.h.b16 %v1342
      %v2681 = vunpack.c.l.b16 %v1343
      %v2682 = vunpack.c.h.b16 %v1343
      %v2683 = vunpack.c.l.b16 %v1344
      %v2684 = vunpack.c.h.b16 %v1344
      %v2685 = vunpack.c.l.b16 %v1345
      %v2686 = vunpack.c.h.b16 %v1345
      %v2687 = vunpack.c.l.b16 %v1346
      %v2688 = vunpack.c.h.b16 %v1346
      %v2689 = vunpack.c.l.b16 %v1347
      %v2690 = vunpack.c.h.b16 %v1347
      %v2691 = vunpack.c.l.b16 %v1348
      %v2692 = vunpack.c.h.b16 %v1348
      %v2693 = vpack.c.b16 %v1813, %v1797
      %v2694 = vpack.c.b16 %v1814, %v1798
      %v2695 = vpack.c.b16 %v1815, %v1799
      %v2696 = vpack.c.b16 %v1816, %v1800
      %v2697 = vpack.c.b16 %v1817, %v1801
      %v2698 = vpack.c.b16 %v1818, %v1802
      %v2699 = vpack.c.b16 %v1819, %v1803
      %v2700 = vpack.c.b16 %v1820, %v1804
      %v2701 = vpack.c.b16 %v1821, %v1805
      %v2702 = vpack.c.b16 %v1822, %v1806
      %v2703 = vpack.c.b16 %v1823, %v1807
      %v2704 = vpack.c.b16 %v1824, %v1808
      %v2705 = vpack.c.b16 %v1825, %v1809
      %v2706 = vpack.c.b16 %v1826, %v1810
      %v2707 = vpack.c.b16 %v1827, %v1811
      %v2708 = vpack.c.b16 %v1828, %v1812
      %v2709 = vpack.c.b16 %v1845, %v1829
      %v2710 = vpack.c.b16 %v1846, %v1830
      %v2711 = vpack.c.b16 %v1847, %v1831
      %v2712 = vpack.c.b16 %v1848, %v1832
      %v2713 = vpack.c.b16 %v1849, %v1833
      %v2714 = vpack.c.b16 %v1850, %v1834
      %v2715 = vpack.c.b16 %v1851, %v1835
      %v2716 = vpack.c.b16 %v1852, %v1836
      %v2717 = vpack.c.b16 %v1853, %v1837
      %v2718 = vpack.c.b16 %v1854, %v1838
      %v2719 = vpack.c.b16 %v1855, %v1839
      %v2720 = vpack.c.b16 %v1856, %v1840
      %v2721 = vpack.c.b16 %v1857, %v1841
      %v2722 = vpack.c.b16 %v1858, %v1842
      %v2723 = vpack.c.b16 %v1859, %v1843
      %v2724 = vpack.c.b16 %v1860, %v1844
      %v2725 = vpack.c.b16 %v1877, %v1861
      %v2726 = vpack.c.b16 %v1878, %v1862
      %v2727 = vpack.c.b16 %v1879, %v1863
      %v2728 = vpack.c.b16 %v1880, %v1864
      %v2729 = vpack.c.b16 %v1881, %v1865
      %v2730 = vpack.c.b16 %v1882, %v1866
      %v2731 = vpack.c.b16 %v1883, %v1867
      %v2732 = vpack.c.b16 %v1884, %v1868
      %v2733 = vpack.c.b16 %v1885, %v1869
      %v2734 = vpack.c.b16 %v1886, %v1870
      %v2735 = vpack.c.b16 %v1887, %v1871
      %v2736 = vpack.c.b16 %v1888, %v1872
      %v2737 = vpack.c.b16 %v1889, %v1873
      %v2738 = vpack.c.b16 %v1890, %v1874
      %v2739 = vpack.c.b16 %v1891, %v1875
      %v2740 = vpack.c.b16 %v1892, %v1876
      %v2741 = vpack.c.b16 %v1909, %v1893
      %v2742 = vpack.c.b16 %v1910, %v1894
      %v2743 = vpack.c.b16 %v1911, %v1895
      %v2744 = vpack.c.b16 %v1912, %v1896
      %v2745 = vpack.c.b16 %v1913, %v1897
      %v2746 = vpack.c.b16 %v1914, %v1898
      %v2747 = vpack.c.b16 %v1915, %v1899
      %v2748 = vpack.c.b16 %v1916, %v1900
      %v2749 = vpack.c.b16 %v1917, %v1901
      %v2750 = vpack.c.b16 %v1918, %v1902
      %v2751 = vpack.c.b16 %v1919, %v1903
      %v2752 = vpack.c.b16 %v1920, %v1904
      %v2753 = vpack.c.b16 %v1921, %v1905
      %v2754 = vpack.c.b16 %v1922, %v1906
      %v2755 = vpack.c.b16 %v1923, %v1907
      %v2756 = vpack.c.b16 %v1924, %v1908
      %v2757 = vpack.c.b16 %v1941, %v1925
      %v2758 = vpack.c.b16 %v1942, %v1926
      %v2759 = vpack.c.b16 %v1943, %v1927
      %v2760 = vpack.c.b16 %v1944, %v1928
      %v2761 = vpack.c.b16 %v1945, %v1929
      %v2762 = vpack.c.b16 %v1946, %v1930
      %v2763 = vpack.c.b16 %v1947, %v1931
      %v2764 = vpack.c.b16 %v1948, %v1932
      %v2765 = vpack.c.b16 %v1949, %v1933
      %v2766 = vpack.c.b16 %v1950, %v1934
      %v2767 = vpack.c.b16 %v1951, %v1935
      %v2768 = vpack.c.b16 %v1952, %v1936
      %v2769 = vpack.c.b16 %v1953, %v1937
      %v2770 = vpack.c.b16 %v1954, %v1938
      %v2771 = vpack.c.b16 %v1955, %v1939
      %v2772 = vpack.c.b16 %v1956, %v1940
      %v2773 = vpack.c.b16 %v1973, %v1957
      %v2774 = vpack.c.b16 %v1974, %v1958
      %v2775 = vpack.c.b16 %v1975, %v1959
      %v2776 = vpack.c.b16 %v1976, %v1960
      %v2777 = vpack.c.b16 %v1977, %v1961
      %v2778 = vpack.c.b16 %v1978, %v1962
      %v2779 = vpack.c.b16 %v1979, %v1963
      %v2780 = vpack.c.b16 %v1980, %v1964
      %v2781 = vpack.c.b16 %v1981, %v1965
      %v2782 = vpack.c.b16 %v1982, %v1966
      %v2783 = vpack.c.b16 %v1983, %v1967
      %v2784 = vpack.c.b16 %v1984, %v1968
      %v2785 = vpack.c.b16 %v1985, %v1969
      %v2786 = vpack.c.b16 %v1986, %v1970
      %v2787 = vpack.c.b16 %v1987, %v1971
      %v2788 = vpack.c.b16 %v1988, %v1972
      %v2789 = vpack.c.b16 %v2005, %v1989
      %v2790 = vpack.c.b16 %v2006, %v1990
      %v2791 = vpack.c.b16 %v2007, %v1991
      %v2792 = vpack.c.b16 %v2008, %v1992
      %v2793 = vpack.c.b16 %v2009, %v1993
      %v2794 = vpack.c.b16 %v2010, %v1994
      %v2795 = vpack.c.b16 %v2011, %v1995
      %v2796 = vpack.c.b16 %v2012, %v1996
      %v2797 = vpack.c.b16 %v2013, %v1997
      %v2798 = vpack.c.b16 %v2014, %v1998
      %v2799 = vpack.c.b16 %v2015, %v1999
      %v2800 = vpack.c.b16 %v2016, %v2000
      %v2801 = vpack.c.b16 %v2017, %v2001
      %v2802 = vpack.c.b16 %v2018, %v2002
      %v2803 = vpack.c.b16 %v2019, %v2003
      %v2804 = vpack.c.b16 %v2020, %v2004
      %v2805 = vpack.c.b16 %v2037, %v2021
      %v2806 = vpack.c.b16 %v2038, %v2022
      %v2807 = vpack.c.b16 %v2039, %v2023
      %v2808 = vpack.c.b16 %v2040, %v2024
      %v2809 = vpack.c.b16 %v2041, %v2025
      %v2810 = vpack.c.b16 %v2042, %v2026
      %v2811 = vpack.c.b16 %v2043, %v2027
      %v2812 = vpack.c.b16 %v2044, %v2028
      %v2813 = vpack.c.b16 %v2045, %v2029
      %v2814 = vpack.c.b16 %v2046, %v2030
      %v2815 = vpack.c.b16 %v2047, %v2031
      %v2816 = vpack.c.b16 %v2048, %v2032
      %v2817 = vpack.c.b16 %v2049, %v2033
      %v2818 = vpack.c.b16 %v2050, %v2034
      %v2819 = vpack.c.b16 %v2051, %v2035
      %v2820 = vpack.c.b16 %v2052, %v2036
      %v2821 = vpack.c.b16 %v2069, %v2053
      %v2822 = vpack.c.b16 %v2070, %v2054
      %v2823 = vpack.c.b16 %v2071, %v2055
      %v2824 = vpack.c.b16 %v2072, %v2056
      %v2825 = vpack.c.b16 %v2073, %v2057
      %v2826 = vpack.c.b16 %v2074, %v2058
      %v2827 = vpack.c.b16 %v2075, %v2059
      %v2828 = vpack.c.b16 %v2076, %v2060
      %v2829 = vpack.c.b16 %v2077, %v2061
      %v2830 = vpack.c.b16 %v2078, %v2062
      %v2831 = vpack.c.b16 %v2079, %v2063
      %v2832 = vpack.c.b16 %v2080, %v2064
      %v2833 = vpack.c.b16 %v2081, %v2065
      %v2834 = vpack.c.b16 %v2082, %v2066
      %v2835 = vpack.c.b16 %v2083, %v2067
      %v2836 = vpack.c.b16 %v2084, %v2068
      %v2837 = vpack.c.b16 %v2101, %v2085
      %v2838 = vpack.c.b16 %v2102, %v2086
      %v2839 = vpack.c.b16 %v2103, %v2087
      %v2840 = vpack.c.b16 %v2104, %v2088
      %v2841 = vpack.c.b16 %v2105, %v2089
      %v2842 = vpack.c.b16 %v2106, %v2090
      %v2843 = vpack.c.b16 %v2107, %v2091
      %v2844 = vpack.c.b16 %v2108, %v2092
      %v2845 = vpack.c.b16 %v2109, %v2093
      %v2846 = vpack.c.b16 %v2110, %v2094
      %v2847 = vpack.c.b16 %v2111, %v2095
      %v2848 = vpack.c.b16 %v2112, %v2096
      %v2849 = vpack.c.b16 %v2113, %v2097
      %v2850 = vpack.c.b16 %v2114, %v2098
      %v2851 = vpack.c.b16 %v2115, %v2099
      %v2852 = vpack.c.b16 %v2116, %v2100
      %v2853 = vpack.c.b16 %v2133, %v2117
      %v2854 = vpack.c.b16 %v2134, %v2118
      %v2855 = vpack.c.b16 %v2135, %v2119
      %v2856 = vpack.c.b16 %v2136, %v2120
      %v2857 = vpack.c.b16 %v2137, %v2121
      %v2858 = vpack.c.b16 %v2138, %v2122
      %v2859 = vpack.c.b16 %v2139, %v2123
      %v2860 = vpack.c.b16 %v2140, %v2124
      %v2861 = vpack.c.b16 %v2141, %v2125
      %v2862 = vpack.c.b16 %v2142, %v2126
      %v2863 = vpack.c.b16 %v2143, %v2127
      %v2864 = vpack.c.b16 %v2144, %v2128
      %v2865 = vpack.c.b16 %v2145, %v2129
      %v2866 = vpack.c.b16 %v2146, %v2130
      %v2867 = vpack.c.b16 %v2147, %v2131
      %v2868 = vpack.c.b16 %v2148, %v2132
      %v2869 = vpack.c.b16 %v2165, %v2149
      %v2870 = vpack.c.b16 %v2166, %v2150
      %v2871 = vpack.c.b16 %v2167, %v2151
      %v2872 = vpack.c.b16 %v2168, %v2152
      %v2873 = vpack.c.b16 %v2169, %v2153
      %v2874 = vpack.c.b16 %v2170, %v2154
      %v2875 = vpack.c.b16 %v2171, %v2155
      %v2876 = vpack.c.b16 %v2172, %v2156
      %v2877 = vpack.c.b16 %v2173, %v2157
      %v2878 = vpack.c.b16 %v2174, %v2158
      %v2879 = vpack.c.b16 %v2175, %v2159
      %v2880 = vpack.c.b16 %v2176, %v2160
      %v2881 = vpack.c.b16 %v2177, %v2161
      %v2882 = vpack.c.b16 %v2178, %v2162
      %v2883 = vpack.c.b16 %v2179, %v2163
      %v2884 = vpack.c.b16 %v2180, %v2164
      %v2885 = vpack.c.b16 %v2197, %v2181
      %v2886 = vpack.c.b16 %v2198, %v2182
      %v2887 = vpack.c.b16 %v2199, %v2183
      %v2888 = vpack.c.b16 %v2200, %v2184
      %v2889 = vpack.c.b16 %v2201, %v2185
      %v2890 = vpack.c.b16 %v2202, %v2186
      %v2891 = vpack.c.b16 %v2203, %v2187
      %v2892 = vpack.c.b16 %v2204, %v2188
      %v2893 = vpack.c.b16 %v2205, %v2189
      %v2894 = vpack.c.b16 %v2206, %v2190
      %v2895 = vpack.c.b16 %v2207, %v2191
      %v2896 = vpack.c.b16 %v2208, %v2192
      %v2897 = vpack.c.b16 %v2209, %v2193
      %v2898 = vpack.c.b16 %v2210, %v2194
      %v2899 = vpack.c.b16 %v2211, %v2195
      %v2900 = vpack.c.b16 %v2212, %v2196
      %v2901 = vpack.c.b16 %v2229, %v2213
      %v2902 = vpack.c.b16 %v2230, %v2214
      %v2903 = vpack.c.b16 %v2231, %v2215
      %v2904 = vpack.c.b16 %v2232, %v2216
      %v2905 = vpack.c.b16 %v2233, %v2217
      %v2906 = vpack.c.b16 %v2234, %v2218
      %v2907 = vpack.c.b16 %v2235, %v2219
      %v2908 = vpack.c.b16 %v2236, %v2220
      %v2909 = vpack.c.b16 %v2237, %v2221
      %v2910 = vpack.c.b16 %v2238, %v2222
      %v2911 = vpack.c.b16 %v2239, %v2223
      %v2912 = vpack.c.b16 %v2240, %v2224
      %v2913 = vpack.c.b16 %v2241, %v2225
      %v2914 = vpack.c.b16 %v2242, %v2226
      %v2915 = vpack.c.b16 %v2243, %v2227
      %v2916 = vpack.c.b16 %v2244, %v2228
      %v2917 = vpack.c.b16 %v2261, %v2245
      %v2918 = vpack.c.b16 %v2262, %v2246
      %v2919 = vpack.c.b16 %v2263, %v2247
      %v2920 = vpack.c.b16 %v2264, %v2248
      %v2921 = vpack.c.b16 %v2265, %v2249
      %v2922 = vpack.c.b16 %v2266, %v2250
      %v2923 = vpack.c.b16 %v2267, %v2251
      %v2924 = vpack.c.b16 %v2268, %v2252
      %v2925 = vpack.c.b16 %v2269, %v2253
      %v2926 = vpack.c.b16 %v2270, %v2254
      %v2927 = vpack.c.b16 %v2271, %v2255
      %v2928 = vpack.c.b16 %v2272, %v2256
      %v2929 = vpack.c.b16 %v2273, %v2257
      %v2930 = vpack.c.b16 %v2274, %v2258
      %v2931 = vpack.c.b16 %v2275, %v2259
      %v2932 = vpack.c.b16 %v2276, %v2260
      %v2933 = vpack.c.b16 %v2293, %v2277
      %v2934 = vpack.c.b16 %v2294, %v2278
      %v2935 = vpack.c.b16 %v2295, %v2279
      %v2936 = vpack.c.b16 %v2296, %v2280
      %v2937 = vpack.c.b16 %v2297, %v2281
      %v2938 = vpack.c.b16 %v2298, %v2282
      %v2939 = vpack.c.b16 %v2299, %v2283
      %v2940 = vpack.c.b16 %v2300, %v2284
      %v2941 = vpack.c.b16 %v2301, %v2285
      %v2942 = vpack.c.b16 %v2302, %v2286
      %v2943 = vpack.c.b16 %v2303, %v2287
      %v2944 = vpack.c.b16 %v2304, %v2288
      %v2945 = vpack.c.b16 %v2305, %v2289
      %v2946 = vpack.c.b16 %v2306, %v2290
      %v2947 = vpack.c.b16 %v2307, %v2291
      %v2948 = vpack.c.b16 %v2308, %v2292
      %v2949 = vpack.c.b16 %v2325, %v2309
      %v2950 = vpack.c.b16 %v2326, %v2310
      %v2951 = vpack.c.b16 %v2327, %v2311
      %v2952 = vpack.c.b16 %v2328, %v2312
      %v2953 = vpack.c.b16 %v2329, %v2313
      %v2954 = vpack.c.b16 %v2330, %v2314
      %v2955 = vpack.c.b16 %v2331, %v2315
      %v2956 = vpack.c.b16 %v2332, %v2316
      %v2957 = vpack.c.b16 %v2333, %v2317
      %v2958 = vpack.c.b16 %v2334, %v2318
      %v2959 = vpack.c.b16 %v2335, %v2319
      %v2960 = vpack.c.b16 %v2336, %v2320
      %v2961 = vpack.c.b16 %v2337, %v2321
      %v2962 = vpack.c.b16 %v2338, %v2322
      %v2963 = vpack.c.b16 %v2339, %v2323
      %v2964 = vpack.c.b16 %v2340, %v2324
      %v2965 = vpack.c.b16 %v2357, %v2341
      %v2966 = vpack.c.b16 %v2358, %v2342
      %v2967 = vpack.c.b16 %v2359, %v2343
      %v2968 = vpack.c.b16 %v2360, %v2344
      %v2969 = vpack.c.b16 %v2361, %v2345
      %v2970 = vpack.c.b16 %v2362, %v2346
      %v2971 = vpack.c.b16 %v2363, %v2347
      %v2972 = vpack.c.b16 %v2364, %v2348
      %v2973 = vpack.c.b16 %v2365, %v2349
      %v2974 = vpack.c.b16 %v2366, %v2350
      %v2975 = vpack.c.b16 %v2367, %v2351
      %v2976 = vpack.c.b16 %v2368, %v2352
      %v2977 = vpack.c.b16 %v2369, %v2353
      %v2978 = vpack.c.b16 %v2370, %v2354
      %v2979 = vpack.c.b16 %v2371, %v2355
      %v2980 = vpack.c.b16 %v2372, %v2356
      %v2981 = vpack.c.b16 %v2389, %v2373
      %v2982 = vpack.c.b16 %v2390, %v2374
      %v2983 = vpack.c.b16 %v2391, %v2375
      %v2984 = vpack.c.b16 %v2392, %v2376
      %v2985 = vpack.c.b16 %v2393, %v2377
      %v2986 = vpack.c.b16 %v2394, %v2378
      %v2987 = vpack.c.b16 %v2395, %v2379
      %v2988 = vpack.c.b16 %v2396, %v2380
      %v2989 = vpack.c.b16 %v2397, %v2381
      %v2990 = vpack.c.b16 %v2398, %v2382
      %v2991 = vpack.c.b16 %v2399, %v2383
      %v2992 = vpack.c.b16 %v2400, %v2384
      %v2993 = vpack.c.b16 %v2401, %v2385
      %v2994 = vpack.c.b16 %v2402, %v2386
      %v2995 = vpack.c.b16 %v2403, %v2387
      %v2996 = vpack.c.b16 %v2404, %v2388
      %v2997 = vpack.c.b16 %v2421, %v2405
      %v2998 = vpack.c.b16 %v2422, %v2406
      %v2999 = vpack.c.b16 %v2423, %v2407
      %v3000 = vpack.c.b16 %v2424, %v2408
      %v3001 = vpack.c.b16 %v2425, %v2409
      %v3002 = vpack.c.b16 %v2426, %v2410
      %v3003 = vpack.c.b16 %v2427, %v2411
      %v3004 = vpack.c.b16 %v2428, %v2412
      %v3005 = vpack.c.b16 %v2429, %v2413
      %v3006 = vpack.c.b16 %v2430, %v2414
      %v3007 = vpack.c.b16 %v2431, %v2415
      %v3008 = vpack.c.b16 %v2432, %v2416
      %v3009 = vpack.c.b16 %v2433, %v2417
      %v3010 = vpack.c.b16 %v2434, %v2418
      %v3011 = vpack.c.b16 %v2435, %v2419
      %v3012 = vpack.c.b16 %v2436, %v2420
      %v3013 = vpack.c.b16 %v2453, %v2437
      %v3014 = vpack.c.b16 %v2454, %v2438
      %v3015 = vpack.c.b16 %v2455, %v2439
      %v3016 = vpack.c.b16 %v2456, %v2440
      %v3017 = vpack.c.b16 %v2457, %v2441
      %v3018 = vpack.c.b16 %v2458, %v2442
      %v3019 = vpack.c.b16 %v2459, %v2443
      %v3020 = vpack.c.b16 %v2460, %v2444
      %v3021 = vpack.c.b16 %v2461, %v2445
      %v3022 = vpack.c.b16 %v2462, %v2446
      %v3023 = vpack.c.b16 %v2463, %v2447
      %v3024 = vpack.c.b16 %v2464, %v2448
      %v3025 = vpack.c.b16 %v2465, %v2449
      %v3026 = vpack.c.b16 %v2466, %v2450
      %v3027 = vpack.c.b16 %v2467, %v2451
      %v3028 = vpack.c.b16 %v2468, %v2452
      %v3029 = vpack.c.b16 %v2485, %v2469
      %v3030 = vpack.c.b16 %v2486, %v2470
      %v3031 = vpack.c.b16 %v2487, %v2471
      %v3032 = vpack.c.b16 %v2488, %v2472
      %v3033 = vpack.c.b16 %v2489, %v2473
      %v3034 = vpack.c.b16 %v2490, %v2474
      %v3035 = vpack.c.b16 %v2491, %v2475
      %v3036 = vpack.c.b16 %v2492, %v2476
      %v3037 = vpack.c.b16 %v2493, %v2477
      %v3038 = vpack.c.b16 %v2494, %v2478
      %v3039 = vpack.c.b16 %v2495, %v2479
      %v3040 = vpack.c.b16 %v2496, %v2480
      %v3041 = vpack.c.b16 %v2497, %v2481
      %v3042 = vpack.c.b16 %v2498, %v2482
      %v3043 = vpack.c.b16 %v2499, %v2483
      %v3044 = vpack.c.b16 %v2500, %v2484
      %v3045 = vpack.c.b16 %v2517, %v2501
      %v3046 = vpack.c.b16 %v2518, %v2502
      %v3047 = vpack.c.b16 %v2519, %v2503
      %v3048 = vpack.c.b16 %v2520, %v2504
      %v3049 = vpack.c.b16 %v2521, %v2505
      %v3050 = vpack.c.b16 %v2522, %v2506
      %v3051 = vpack.c.b16 %v2523, %v2507
      %v3052 = vpack.c.b16 %v2524, %v2508
      %v3053 = vpack.c.b16 %v2525, %v2509
      %v3054 = vpack.c.b16 %v2526, %v2510
      %v3055 = vpack.c.b16 %v2527, %v2511
      %v3056 = vpack.c.b16 %v2528, %v2512
      %v3057 = vpack.c.b16 %v2529, %v2513
      %v3058 = vpack.c.b16 %v2530, %v2514
      %v3059 = vpack.c.b16 %v2531, %v2515
      %v3060 = vpack.c.b16 %v2532, %v2516
      %v3061 = vpack.c.b16 %v2549, %v2533
      %v3062 = vpack.c.b16 %v2550, %v2534
      %v3063 = vpack.c.b16 %v2551, %v2535
      %v3064 = vpack.c.b16 %v2552, %v2536
      %v3065 = vpack.c.b16 %v2553, %v2537
      %v3066 = vpack.c.b16 %v2554, %v2538
      %v3067 = vpack.c.b16 %v2555, %v2539
      %v3068 = vpack.c.b16 %v2556, %v2540
      %v3069 = vpack.c.b16 %v2557, %v2541
      %v3070 = vpack.c.b16 %v2558, %v2542
      %v3071 = vpack.c.b16 %v2559, %v2543
      %v3072 = vpack.c.b16 %v2560, %v2544
      %v3073 = vpack.c.b16 %v2561, %v2545
      %v3074 = vpack.c.b16 %v2562, %v2546
      %v3075 = vpack.c.b16 %v2563, %v2547
      %v3076 = vpack.c.b16 %v2564, %v2548
      %v3077 = vpack.c.b16 %v2581, %v2565
      %v3078 = vpack.c.b16 %v2582, %v2566
      %v3079 = vpack.c.b16 %v2583, %v2567
      %v3080 = vpack.c.b16 %v2584, %v2568
      %v3081 = vpack.c.b16 %v2585, %v2569
      %v3082 = vpack.c.b16 %v2586, %v2570
      %v3083 = vpack.c.b16 %v2587, %v2571
      %v3084 = vpack.c.b16 %v2588, %v2572
      %v3085 = vpack.c.b16 %v2589, %v2573
      %v3086 = vpack.c.b16 %v2590, %v2574
      %v3087 = vpack.c.b16 %v2591, %v2575
      %v3088 = vpack.c.b16 %v2592, %v2576
      %v3089 = vpack.c.b16 %v2593, %v2577
      %v3090 = vpack.c.b16 %v2594, %v2578
      %v3091 = vpack.c.b16 %v2595, %v2579
      %v3092 = vpack.c.b16 %v2596, %v2580
      %v3093 = vpack.c.b16 %v2613, %v2597
      %v3094 = vpack.c.b16 %v2614, %v2598
      %v3095 = vpack.c.b16 %v2615, %v2599
      %v3096 = vpack.c.b16 %v2616, %v2600
      %v3097 = vpack.c.b16 %v2617, %v2601
      %v3098 = vpack.c.b16 %v2618, %v2602
      %v3099 = vpack.c.b16 %v2619, %v2603
      %v3100 = vpack.c.b16 %v2620, %v2604
      %v3101 = vpack.c.b16 %v2621, %v2605
      %v3102 = vpack.c.b16 %v2622, %v2606
      %v3103 = vpack.c.b16 %v2623, %v2607
      %v3104 = vpack.c.b16 %v2624, %v2608
      %v3105 = vpack.c.b16 %v2625, %v2609
      %v3106 = vpack.c.b16 %v2626, %v2610
      %v3107 = vpack.c.b16 %v2627, %v2611
      %v3108 = vpack.c.b16 %v2628, %v2612
      %v3109 = vpack.c.b16 %v2645, %v2629
      %v3110 = vpack.c.b16 %v2646, %v2630
      %v3111 = vpack.c.b16 %v2647, %v2631
      %v3112 = vpack.c.b16 %v2648, %v2632
      %v3113 = vpack.c.b16 %v2649, %v2633
      %v3114 = vpack.c.b16 %v2650, %v2634
      %v3115 = vpack.c.b16 %v2651, %v2635
      %v3116 = vpack.c.b16 %v2652, %v2636
      %v3117 = vpack.c.b16 %v2653, %v2637
      %v3118 = vpack.c.b16 %v2654, %v2638
      %v3119 = vpack.c.b16 %v2655, %v2639
      %v3120 = vpack.c.b16 %v2656, %v2640
      %v3121 = vpack.c.b16 %v2657, %v2641
      %v3122 = vpack.c.b16 %v2658, %v2642
      %v3123 = vpack.c.b16 %v2659, %v2643
      %v3124 = vpack.c.b16 %v2660, %v2644
      %v3125 = vpack.c.b16 %v2677, %v2661
      %v3126 = vpack.c.b16 %v2678, %v2662
      %v3127 = vpack.c.b16 %v2679, %v2663
      %v3128 = vpack.c.b16 %v2680, %v2664
      %v3129 = vpack.c.b16 %v2681, %v2665
      %v3130 = vpack.c.b16 %v2682, %v2666
      %v3131 = vpack.c.b16 %v2683, %v2667
      %v3132 = vpack.c.b16 %v2684, %v2668
      %v3133 = vpack.c.b16 %v2685, %v2669
      %v3134 = vpack.c.b16 %v2686, %v2670
      %v3135 = vpack.c.b16 %v2687, %v2671
      %v3136 = vpack.c.b16 %v2688, %v2672
      %v3137 = vpack.c.b16 %v2689, %v2673
      %v3138 = vpack.c.b16 %v2690, %v2674
      %v3139 = vpack.c.b16 %v2691, %v2675
      %v3140 = vpack.c.b16 %v2692, %v2676
      %vm3573 = vcmask 465920
      %v3575 = vsel %vm3573, %v900, 0
      %vm3577 = vcmask 1043456
      %vm3578 = vcmask 1044480
      %v3579 = vsel %vm3577, 4294967295, 65535
      %v3580 = vsel %vm3578, %v3579, 0
      %v3582 = vand.u32 %v3125, %v3580
      %v3585 = vand.u32 %v3126, %v3580
      %v3588 = vand.u32 %v3127, %v3580
      %v3591 = vand.u32 %v3128, %v3580
      %v3594 = vand.u32 %v3129, %v3580
      %v3597 = vand.u32 %v3130, %v3580
      %v3600 = vand.u32 %v3131, %v3580
      %v3603 = vand.u32 %v3132, %v3580
      %v3606 = vand.u32 %v3133, %v3580
      %v3609 = vand.u32 %v3134, %v3580
      %v3612 = vand.u32 %v3135, %v3580
      %v3615 = vand.u32 %v3136, %v3580
      %v3618 = vand.u32 %v3137, %v3580
      %v3621 = vand.u32 %v3138, %v3580
      %v3624 = vand.u32 %v3139, %v3580
      %v3627 = vand.u32 %v3140, %v3580
      %3629 = vmatpush.bf16.msra.mxu0 %v2805
      %3630 = vmatpush.bf16.msra.mxu0 %v2789
      %3631 = vmatpush.bf16.msra.mxu0 %v2773
      %3632 = vmatpush.bf16.msra.mxu0 %v2757
      %3633 = vmatpush.bf16.msra.mxu0 %v2741
      %3634 = vmatpush.bf16.msra.mxu0 %v2725
      %3635 = vmatpush.bf16.msra.mxu0 %v2709
      %3636 = vmatpush.bf16.msra.mxu0 %v2693
      %3637 = vmatmul.bf16.gmra.mxu0 %v897
      %v3638 = vpop.f32.mrf.mxu0
      %v3639 = vadd.f32 0.0, %v3638
      %v3640 = vpop.f32.mrf.mxu0
      %3641 = vdwg.mxu0
      %3642 = vmatpush.bf16.msra.mxu0 %v2933
      %3643 = vmatpush.bf16.msra.mxu0 %v2917
      %3644 = vmatpush.bf16.msra.mxu0 %v2901
      %3645 = vmatpush.bf16.msra.mxu0 %v2885
      %3646 = vmatpush.bf16.msra.mxu0 %v2869
      %3647 = vmatpush.bf16.msra.mxu0 %v2853
      %3648 = vmatpush.bf16.msra.mxu0 %v2837
      %3649 = vmatpush.bf16.msra.mxu0 %v2821
      %3650 = vmatmul.bf16.gmra.mxu0 %v898
      %v3651 = vpop.f32.mrf.mxu0
      %v3652 = vadd.f32 %v3639, %v3651
      %v3653 = vpop.f32.mrf.mxu0
      %3654 = vdwg.mxu0
      %3655 = vmatpush.bf16.msra.mxu0 %v3061
      %3656 = vmatpush.bf16.msra.mxu0 %v3045
      %3657 = vmatpush.bf16.msra.mxu0 %v3029
      %3658 = vmatpush.bf16.msra.mxu0 %v3013
      %3659 = vmatpush.bf16.msra.mxu0 %v2997
      %3660 = vmatpush.bf16.msra.mxu0 %v2981
      %3661 = vmatpush.bf16.msra.mxu0 %v2965
      %3662 = vmatpush.bf16.msra.mxu0 %v2949
      %3663 = vmatmul.bf16.gmra.mxu0 %v899
      %v3664 = vpop.f32.mrf.mxu0
      %v3665 = vadd.f32 %v3652, %v3664
      %v3666 = vpop.f32.mrf.mxu0
      %3667 = vdwg.mxu0
      %3668 = vmatpush.bf16.msra.mxu0 0
      %3669 = vmatpush.bf16.msra.mxu0 0
      %3670 = vmatpush.bf16.msra.mxu0 0
      %3671 = vmatpush.bf16.msra.mxu0 0
      %3672 = vmatpush.bf16.msra.mxu0 %v3582
      %3673 = vmatpush.bf16.msra.mxu0 %v3109
      %3674 = vmatpush.bf16.msra.mxu0 %v3093
      %3675 = vmatpush.bf16.msra.mxu0 %v3077
      %3676 = vmatmul.bf16.gmra.mxu0 %v3575
      %v3677 = vpop.f32.mrf.mxu0
      %v3678 = vadd.f32 %v3665, %v3677
      %v3679 = vpop.f32.mrf.mxu0
      %3680 = vdwg.mxu0
      %3681 = vmatpush.bf16.msra.mxu0 %v2806
      %3682 = vmatpush.bf16.msra.mxu0 %v2790
      %3683 = vmatpush.bf16.msra.mxu0 %v2774
      %3684 = vmatpush.bf16.msra.mxu0 %v2758
      %3685 = vmatpush.bf16.msra.mxu0 %v2742
      %3686 = vmatpush.bf16.msra.mxu0 %v2726
      %3687 = vmatpush.bf16.msra.mxu0 %v2710
      %3688 = vmatpush.bf16.msra.mxu0 %v2694
      %3689 = vmatmul.bf16.gmra.mxu0 %v897
      %v3690 = vpop.f32.mrf.mxu0
      %v3691 = vadd.f32 0.0, %v3690
      %v3692 = vpop.f32.mrf.mxu0
      %3693 = vdwg.mxu0
      %3694 = vmatpush.bf16.msra.mxu0 %v2934
      %3695 = vmatpush.bf16.msra.mxu0 %v2918
      %3696 = vmatpush.bf16.msra.mxu0 %v2902
      %3697 = vmatpush.bf16.msra.mxu0 %v2886
      %3698 = vmatpush.bf16.msra.mxu0 %v2870
      %3699 = vmatpush.bf16.msra.mxu0 %v2854
      %3700 = vmatpush.bf16.msra.mxu0 %v2838
      %3701 = vmatpush.bf16.msra.mxu0 %v2822
      %3702 = vmatmul.bf16.gmra.mxu0 %v898
      %v3703 = vpop.f32.mrf.mxu0
      %v3704 = vadd.f32 %v3691, %v3703
      %v3705 = vpop.f32.mrf.mxu0
      %3706 = vdwg.mxu0
      %3707 = vmatpush.bf16.msra.mxu0 %v3062
      %3708 = vmatpush.bf16.msra.mxu0 %v3046
      %3709 = vmatpush.bf16.msra.mxu0 %v3030
      %3710 = vmatpush.bf16.msra.mxu0 %v3014
      %3711 = vmatpush.bf16.msra.mxu0 %v2998
      %3712 = vmatpush.bf16.msra.mxu0 %v2982
      %3713 = vmatpush.bf16.msra.mxu0 %v2966
      %3714 = vmatpush.bf16.msra.mxu0 %v2950
      %3715 = vmatmul.bf16.gmra.mxu0 %v899
      %v3716 = vpop.f32.mrf.mxu0
      %v3717 = vadd.f32 %v3704, %v3716
      %v3718 = vpop.f32.mrf.mxu0
      %3719 = vdwg.mxu0
      %3720 = vmatpush.bf16.msra.mxu0 0
      %3721 = vmatpush.bf16.msra.mxu0 0
      %3722 = vmatpush.bf16.msra.mxu0 0
      %3723 = vmatpush.bf16.msra.mxu0 0
      %3724 = vmatpush.bf16.msra.mxu0 %v3585
      %3725 = vmatpush.bf16.msra.mxu0 %v3110
      %3726 = vmatpush.bf16.msra.mxu0 %v3094
      %3727 = vmatpush.bf16.msra.mxu0 %v3078
      %3728 = vmatmul.bf16.gmra.mxu0 %v3575
      %v3729 = vpop.f32.mrf.mxu0
      %v3730 = vadd.f32 %v3717, %v3729
      %v3731 = vpop.f32.mrf.mxu0
      %3732 = vdwg.mxu0
      %3733 = vmatpush.bf16.msra.mxu0 %v2807
      %3734 = vmatpush.bf16.msra.mxu0 %v2791
      %3735 = vmatpush.bf16.msra.mxu0 %v2775
      %3736 = vmatpush.bf16.msra.mxu0 %v2759
      %3737 = vmatpush.bf16.msra.mxu0 %v2743
      %3738 = vmatpush.bf16.msra.mxu0 %v2727
      %3739 = vmatpush.bf16.msra.mxu0 %v2711
      %3740 = vmatpush.bf16.msra.mxu0 %v2695
      %3741 = vmatmul.bf16.gmra.mxu0 %v897
      %v3742 = vpop.f32.mrf.mxu0
      %v3743 = vadd.f32 0.0, %v3742
      %v3744 = vpop.f32.mrf.mxu0
      %3745 = vdwg.mxu0
      %3746 = vmatpush.bf16.msra.mxu0 %v2935
      %3747 = vmatpush.bf16.msra.mxu0 %v2919
      %3748 = vmatpush.bf16.msra.mxu0 %v2903
      %3749 = vmatpush.bf16.msra.mxu0 %v2887
      %3750 = vmatpush.bf16.msra.mxu0 %v2871
      %3751 = vmatpush.bf16.msra.mxu0 %v2855
      %3752 = vmatpush.bf16.msra.mxu0 %v2839
      %3753 = vmatpush.bf16.msra.mxu0 %v2823
      %3754 = vmatmul.bf16.gmra.mxu0 %v898
      %v3755 = vpop.f32.mrf.mxu0
      %v3756 = vadd.f32 %v3743, %v3755
      %v3757 = vpop.f32.mrf.mxu0
      %3758 = vdwg.mxu0
      %3759 = vmatpush.bf16.msra.mxu0 %v3063
      %3760 = vmatpush.bf16.msra.mxu0 %v3047
      %3761 = vmatpush.bf16.msra.mxu0 %v3031
      %3762 = vmatpush.bf16.msra.mxu0 %v3015
      %3763 = vmatpush.bf16.msra.mxu0 %v2999
      %3764 = vmatpush.bf16.msra.mxu0 %v2983
      %3765 = vmatpush.bf16.msra.mxu0 %v2967
      %3766 = vmatpush.bf16.msra.mxu0 %v2951
      %3767 = vmatmul.bf16.gmra.mxu0 %v899
      %v3768 = vpop.f32.mrf.mxu0
      %v3769 = vadd.f32 %v3756, %v3768
      %v3770 = vpop.f32.mrf.mxu0
      %3771 = vdwg.mxu0
      %3772 = vmatpush.bf16.msra.mxu0 0
      %3773 = vmatpush.bf16.msra.mxu0 0
      %3774 = vmatpush.bf16.msra.mxu0 0
      %3775 = vmatpush.bf16.msra.mxu0 0
      %3776 = vmatpush.bf16.msra.mxu0 %v3588
      %3777 = vmatpush.bf16.msra.mxu0 %v3111
      %3778 = vmatpush.bf16.msra.mxu0 %v3095
      %3779 = vmatpush.bf16.msra.mxu0 %v3079
      %3780 = vmatmul.bf16.gmra.mxu0 %v3575
      %v3781 = vpop.f32.mrf.mxu0
      %v3782 = vadd.f32 %v3769, %v3781
      %v3783 = vpop.f32.mrf.mxu0
      %3784 = vdwg.mxu0
      %3785 = vmatpush.bf16.msra.mxu0 %v2808
      %3786 = vmatpush.bf16.msra.mxu0 %v2792
      %3787 = vmatpush.bf16.msra.mxu0 %v2776
      %3788 = vmatpush.bf16.msra.mxu0 %v2760
      %3789 = vmatpush.bf16.msra.mxu0 %v2744
      %3790 = vmatpush.bf16.msra.mxu0 %v2728
      %3791 = vmatpush.bf16.msra.mxu0 %v2712
      %3792 = vmatpush.bf16.msra.mxu0 %v2696
      %3793 = vmatmul.bf16.gmra.mxu0 %v897
      %v3794 = vpop.f32.mrf.mxu0
      %v3795 = vadd.f32 0.0, %v3794
      %v3796 = vpop.f32.mrf.mxu0
      %3797 = vdwg.mxu0
      %3798 = vmatpush.bf16.msra.mxu0 %v2936
      %3799 = vmatpush.bf16.msra.mxu0 %v2920
      %3800 = vmatpush.bf16.msra.mxu0 %v2904
      %3801 = vmatpush.bf16.msra.mxu0 %v2888
      %3802 = vmatpush.bf16.msra.mxu0 %v2872
      %3803 = vmatpush.bf16.msra.mxu0 %v2856
      %3804 = vmatpush.bf16.msra.mxu0 %v2840
      %3805 = vmatpush.bf16.msra.mxu0 %v2824
      %3806 = vmatmul.bf16.gmra.mxu0 %v898
      %v3807 = vpop.f32.mrf.mxu0
      %v3808 = vadd.f32 %v3795, %v3807
      %v3809 = vpop.f32.mrf.mxu0
      %3810 = vdwg.mxu0
      %3811 = vmatpush.bf16.msra.mxu0 %v3064
      %3812 = vmatpush.bf16.msra.mxu0 %v3048
      %3813 = vmatpush.bf16.msra.mxu0 %v3032
      %3814 = vmatpush.bf16.msra.mxu0 %v3016
      %3815 = vmatpush.bf16.msra.mxu0 %v3000
      %3816 = vmatpush.bf16.msra.mxu0 %v2984
      %3817 = vmatpush.bf16.msra.mxu0 %v2968
      %3818 = vmatpush.bf16.msra.mxu0 %v2952
      %3819 = vmatmul.bf16.gmra.mxu0 %v899
      %v3820 = vpop.f32.mrf.mxu0
      %v3821 = vadd.f32 %v3808, %v3820
      %v3822 = vpop.f32.mrf.mxu0
      %3823 = vdwg.mxu0
      %3824 = vmatpush.bf16.msra.mxu0 0
      %3825 = vmatpush.bf16.msra.mxu0 0
      %3826 = vmatpush.bf16.msra.mxu0 0
      %3827 = vmatpush.bf16.msra.mxu0 0
      %3828 = vmatpush.bf16.msra.mxu0 %v3591
      %3829 = vmatpush.bf16.msra.mxu0 %v3112
      %3830 = vmatpush.bf16.msra.mxu0 %v3096
      %3831 = vmatpush.bf16.msra.mxu0 %v3080
      %3832 = vmatmul.bf16.gmra.mxu0 %v3575
      %v3833 = vpop.f32.mrf.mxu0
      %v3834 = vadd.f32 %v3821, %v3833
      %v3835 = vpop.f32.mrf.mxu0
      %3836 = vdwg.mxu0
      %3837 = vmatpush.bf16.msra.mxu0 %v2809
      %3838 = vmatpush.bf16.msra.mxu0 %v2793
      %3839 = vmatpush.bf16.msra.mxu0 %v2777
      %3840 = vmatpush.bf16.msra.mxu0 %v2761
      %3841 = vmatpush.bf16.msra.mxu0 %v2745
      %3842 = vmatpush.bf16.msra.mxu0 %v2729
      %3843 = vmatpush.bf16.msra.mxu0 %v2713
      %3844 = vmatpush.bf16.msra.mxu0 %v2697
      %3845 = vmatmul.bf16.gmra.mxu0 %v897
      %v3846 = vpop.f32.mrf.mxu0
      %v3847 = vadd.f32 0.0, %v3846
      %v3848 = vpop.f32.mrf.mxu0
      %3849 = vdwg.mxu0
      %3850 = vmatpush.bf16.msra.mxu0 %v2937
      %3851 = vmatpush.bf16.msra.mxu0 %v2921
      %3852 = vmatpush.bf16.msra.mxu0 %v2905
      %3853 = vmatpush.bf16.msra.mxu0 %v2889
      %3854 = vmatpush.bf16.msra.mxu0 %v2873
      %3855 = vmatpush.bf16.msra.mxu0 %v2857
      %3856 = vmatpush.bf16.msra.mxu0 %v2841
      %3857 = vmatpush.bf16.msra.mxu0 %v2825
      %3858 = vmatmul.bf16.gmra.mxu0 %v898
      %v3859 = vpop.f32.mrf.mxu0
      %v3860 = vadd.f32 %v3847, %v3859
      %v3861 = vpop.f32.mrf.mxu0
      %3862 = vdwg.mxu0
      %3863 = vmatpush.bf16.msra.mxu0 %v3065
      %3864 = vmatpush.bf16.msra.mxu0 %v3049
      %3865 = vmatpush.bf16.msra.mxu0 %v3033
      %3866 = vmatpush.bf16.msra.mxu0 %v3017
      %3867 = vmatpush.bf16.msra.mxu0 %v3001
      %3868 = vmatpush.bf16.msra.mxu0 %v2985
      %3869 = vmatpush.bf16.msra.mxu0 %v2969
      %3870 = vmatpush.bf16.msra.mxu0 %v2953
      %3871 = vmatmul.bf16.gmra.mxu0 %v899
      %v3872 = vpop.f32.mrf.mxu0
      %v3873 = vadd.f32 %v3860, %v3872
      %v3874 = vpop.f32.mrf.mxu0
      %3875 = vdwg.mxu0
      %3876 = vmatpush.bf16.msra.mxu0 0
      %3877 = vmatpush.bf16.msra.mxu0 0
      %3878 = vmatpush.bf16.msra.mxu0 0
      %3879 = vmatpush.bf16.msra.mxu0 0
      %3880 = vmatpush.bf16.msra.mxu0 %v3594
      %3881 = vmatpush.bf16.msra.mxu0 %v3113
      %3882 = vmatpush.bf16.msra.mxu0 %v3097
      %3883 = vmatpush.bf16.msra.mxu0 %v3081
      %3884 = vmatmul.bf16.gmra.mxu0 %v3575
      %v3885 = vpop.f32.mrf.mxu0
      %v3886 = vadd.f32 %v3873, %v3885
      %v3887 = vpop.f32.mrf.mxu0
      %3888 = vdwg.mxu0
      %3889 = vmatpush.bf16.msra.mxu0 %v2810
      %3890 = vmatpush.bf16.msra.mxu0 %v2794
      %3891 = vmatpush.bf16.msra.mxu0 %v2778
      %3892 = vmatpush.bf16.msra.mxu0 %v2762
      %3893 = vmatpush.bf16.msra.mxu0 %v2746
      %3894 = vmatpush.bf16.msra.mxu0 %v2730
      %3895 = vmatpush.bf16.msra.mxu0 %v2714
      %3896 = vmatpush.bf16.msra.mxu0 %v2698
      %3897 = vmatmul.bf16.gmra.mxu0 %v897
      %v3898 = vpop.f32.mrf.mxu0
      %v3899 = vadd.f32 0.0, %v3898
      %v3900 = vpop.f32.mrf.mxu0
      %3901 = vdwg.mxu0
      %3902 = vmatpush.bf16.msra.mxu0 %v2938
      %3903 = vmatpush.bf16.msra.mxu0 %v2922
      %3904 = vmatpush.bf16.msra.mxu0 %v2906
      %3905 = vmatpush.bf16.msra.mxu0 %v2890
      %3906 = vmatpush.bf16.msra.mxu0 %v2874
      %3907 = vmatpush.bf16.msra.mxu0 %v2858
      %3908 = vmatpush.bf16.msra.mxu0 %v2842
      %3909 = vmatpush.bf16.msra.mxu0 %v2826
      %3910 = vmatmul.bf16.gmra.mxu0 %v898
      %v3911 = vpop.f32.mrf.mxu0
      %v3912 = vadd.f32 %v3899, %v3911
      %v3913 = vpop.f32.mrf.mxu0
      %3914 = vdwg.mxu0
      %3915 = vmatpush.bf16.msra.mxu0 %v3066
      %3916 = vmatpush.bf16.msra.mxu0 %v3050
      %3917 = vmatpush.bf16.msra.mxu0 %v3034
      %3918 = vmatpush.bf16.msra.mxu0 %v3018
      %3919 = vmatpush.bf16.msra.mxu0 %v3002
      %3920 = vmatpush.bf16.msra.mxu0 %v2986
      %3921 = vmatpush.bf16.msra.mxu0 %v2970
      %3922 = vmatpush.bf16.msra.mxu0 %v2954
      %3923 = vmatmul.bf16.gmra.mxu0 %v899
      %v3924 = vpop.f32.mrf.mxu0
      %v3925 = vadd.f32 %v3912, %v3924
      %v3926 = vpop.f32.mrf.mxu0
      %3927 = vdwg.mxu0
      %3928 = vmatpush.bf16.msra.mxu0 0
      %3929 = vmatpush.bf16.msra.mxu0 0
      %3930 = vmatpush.bf16.msra.mxu0 0
      %3931 = vmatpush.bf16.msra.mxu0 0
      %3932 = vmatpush.bf16.msra.mxu0 %v3597
      %3933 = vmatpush.bf16.msra.mxu0 %v3114
      %3934 = vmatpush.bf16.msra.mxu0 %v3098
      %3935 = vmatpush.bf16.msra.mxu0 %v3082
      %3936 = vmatmul.bf16.gmra.mxu0 %v3575
      %v3937 = vpop.f32.mrf.mxu0
      %v3938 = vadd.f32 %v3925, %v3937
      %v3939 = vpop.f32.mrf.mxu0
      %3940 = vdwg.mxu0
      %3941 = vmatpush.bf16.msra.mxu0 %v2811
      %3942 = vmatpush.bf16.msra.mxu0 %v2795
      %3943 = vmatpush.bf16.msra.mxu0 %v2779
      %3944 = vmatpush.bf16.msra.mxu0 %v2763
      %3945 = vmatpush.bf16.msra.mxu0 %v2747
      %3946 = vmatpush.bf16.msra.mxu0 %v2731
      %3947 = vmatpush.bf16.msra.mxu0 %v2715
      %3948 = vmatpush.bf16.msra.mxu0 %v2699
      %3949 = vmatmul.bf16.gmra.mxu0 %v897
      %v3950 = vpop.f32.mrf.mxu0
      %v3951 = vadd.f32 0.0, %v3950
      %v3952 = vpop.f32.mrf.mxu0
      %3953 = vdwg.mxu0
      %3954 = vmatpush.bf16.msra.mxu0 %v2939
      %3955 = vmatpush.bf16.msra.mxu0 %v2923
      %3956 = vmatpush.bf16.msra.mxu0 %v2907
      %3957 = vmatpush.bf16.msra.mxu0 %v2891
      %3958 = vmatpush.bf16.msra.mxu0 %v2875
      %3959 = vmatpush.bf16.msra.mxu0 %v2859
      %3960 = vmatpush.bf16.msra.mxu0 %v2843
      %3961 = vmatpush.bf16.msra.mxu0 %v2827
      %3962 = vmatmul.bf16.gmra.mxu0 %v898
      %v3963 = vpop.f32.mrf.mxu0
      %v3964 = vadd.f32 %v3951, %v3963
      %v3965 = vpop.f32.mrf.mxu0
      %3966 = vdwg.mxu0
      %3967 = vmatpush.bf16.msra.mxu0 %v3067
      %3968 = vmatpush.bf16.msra.mxu0 %v3051
      %3969 = vmatpush.bf16.msra.mxu0 %v3035
      %3970 = vmatpush.bf16.msra.mxu0 %v3019
      %3971 = vmatpush.bf16.msra.mxu0 %v3003
      %3972 = vmatpush.bf16.msra.mxu0 %v2987
      %3973 = vmatpush.bf16.msra.mxu0 %v2971
      %3974 = vmatpush.bf16.msra.mxu0 %v2955
      %3975 = vmatmul.bf16.gmra.mxu0 %v899
      %v3976 = vpop.f32.mrf.mxu0
      %v3977 = vadd.f32 %v3964, %v3976
      %v3978 = vpop.f32.mrf.mxu0
      %3979 = vdwg.mxu0
      %3980 = vmatpush.bf16.msra.mxu0 0
      %3981 = vmatpush.bf16.msra.mxu0 0
      %3982 = vmatpush.bf16.msra.mxu0 0
      %3983 = vmatpush.bf16.msra.mxu0 0
      %3984 = vmatpush.bf16.msra.mxu0 %v3600
      %3985 = vmatpush.bf16.msra.mxu0 %v3115
      %3986 = vmatpush.bf16.msra.mxu0 %v3099
      %3987 = vmatpush.bf16.msra.mxu0 %v3083
      %3988 = vmatmul.bf16.gmra.mxu0 %v3575
      %v3989 = vpop.f32.mrf.mxu0
      %v3990 = vadd.f32 %v3977, %v3989
      %v3991 = vpop.f32.mrf.mxu0
      %3992 = vdwg.mxu0
      %3993 = vmatpush.bf16.msra.mxu0 %v2812
      %3994 = vmatpush.bf16.msra.mxu0 %v2796
      %3995 = vmatpush.bf16.msra.mxu0 %v2780
      %3996 = vmatpush.bf16.msra.mxu0 %v2764
      %3997 = vmatpush.bf16.msra.mxu0 %v2748
      %3998 = vmatpush.bf16.msra.mxu0 %v2732
      %3999 = vmatpush.bf16.msra.mxu0 %v2716
      %4000 = vmatpush.bf16.msra.mxu0 %v2700
      %4001 = vmatmul.bf16.gmra.mxu0 %v897
      %v4002 = vpop.f32.mrf.mxu0
      %v4003 = vadd.f32 0.0, %v4002
      %v4004 = vpop.f32.mrf.mxu0
      %4005 = vdwg.mxu0
      %4006 = vmatpush.bf16.msra.mxu0 %v2940
      %4007 = vmatpush.bf16.msra.mxu0 %v2924
      %4008 = vmatpush.bf16.msra.mxu0 %v2908
      %4009 = vmatpush.bf16.msra.mxu0 %v2892
      %4010 = vmatpush.bf16.msra.mxu0 %v2876
      %4011 = vmatpush.bf16.msra.mxu0 %v2860
      %4012 = vmatpush.bf16.msra.mxu0 %v2844
      %4013 = vmatpush.bf16.msra.mxu0 %v2828
      %4014 = vmatmul.bf16.gmra.mxu0 %v898
      %v4015 = vpop.f32.mrf.mxu0
      %v4016 = vadd.f32 %v4003, %v4015
      %v4017 = vpop.f32.mrf.mxu0
      %4018 = vdwg.mxu0
      %4019 = vmatpush.bf16.msra.mxu0 %v3068
      %4020 = vmatpush.bf16.msra.mxu0 %v3052
      %4021 = vmatpush.bf16.msra.mxu0 %v3036
      %4022 = vmatpush.bf16.msra.mxu0 %v3020
      %4023 = vmatpush.bf16.msra.mxu0 %v3004
      %4024 = vmatpush.bf16.msra.mxu0 %v2988
      %4025 = vmatpush.bf16.msra.mxu0 %v2972
      %4026 = vmatpush.bf16.msra.mxu0 %v2956
      %4027 = vmatmul.bf16.gmra.mxu0 %v899
      %v4028 = vpop.f32.mrf.mxu0
      %v4029 = vadd.f32 %v4016, %v4028
      %v4030 = vpop.f32.mrf.mxu0
      %4031 = vdwg.mxu0
      %4032 = vmatpush.bf16.msra.mxu0 0
      %4033 = vmatpush.bf16.msra.mxu0 0
      %4034 = vmatpush.bf16.msra.mxu0 0
      %4035 = vmatpush.bf16.msra.mxu0 0
      %4036 = vmatpush.bf16.msra.mxu0 %v3603
      %4037 = vmatpush.bf16.msra.mxu0 %v3116
      %4038 = vmatpush.bf16.msra.mxu0 %v3100
      %4039 = vmatpush.bf16.msra.mxu0 %v3084
      %4040 = vmatmul.bf16.gmra.mxu0 %v3575
      %v4041 = vpop.f32.mrf.mxu0
      %v4042 = vadd.f32 %v4029, %v4041
      %v4043 = vpop.f32.mrf.mxu0
      %4044 = vdwg.mxu0
      %4045 = vmatpush.bf16.msra.mxu0 %v2813
      %4046 = vmatpush.bf16.msra.mxu0 %v2797
      %4047 = vmatpush.bf16.msra.mxu0 %v2781
      %4048 = vmatpush.bf16.msra.mxu0 %v2765
      %4049 = vmatpush.bf16.msra.mxu0 %v2749
      %4050 = vmatpush.bf16.msra.mxu0 %v2733
      %4051 = vmatpush.bf16.msra.mxu0 %v2717
      %4052 = vmatpush.bf16.msra.mxu0 %v2701
      %4053 = vmatmul.bf16.gmra.mxu0 %v897
      %v4054 = vpop.f32.mrf.mxu0
      %v4055 = vadd.f32 0.0, %v4054
      %v4056 = vpop.f32.mrf.mxu0
      %4057 = vdwg.mxu0
      %4058 = vmatpush.bf16.msra.mxu0 %v2941
      %4059 = vmatpush.bf16.msra.mxu0 %v2925
      %4060 = vmatpush.bf16.msra.mxu0 %v2909
      %4061 = vmatpush.bf16.msra.mxu0 %v2893
      %4062 = vmatpush.bf16.msra.mxu0 %v2877
      %4063 = vmatpush.bf16.msra.mxu0 %v2861
      %4064 = vmatpush.bf16.msra.mxu0 %v2845
      %4065 = vmatpush.bf16.msra.mxu0 %v2829
      %4066 = vmatmul.bf16.gmra.mxu0 %v898
      %v4067 = vpop.f32.mrf.mxu0
      %v4068 = vadd.f32 %v4055, %v4067
      %v4069 = vpop.f32.mrf.mxu0
      %4070 = vdwg.mxu0
      %4071 = vmatpush.bf16.msra.mxu0 %v3069
      %4072 = vmatpush.bf16.msra.mxu0 %v3053
      %4073 = vmatpush.bf16.msra.mxu0 %v3037
      %4074 = vmatpush.bf16.msra.mxu0 %v3021
      %4075 = vmatpush.bf16.msra.mxu0 %v3005
      %4076 = vmatpush.bf16.msra.mxu0 %v2989
      %4077 = vmatpush.bf16.msra.mxu0 %v2973
      %4078 = vmatpush.bf16.msra.mxu0 %v2957
      %4079 = vmatmul.bf16.gmra.mxu0 %v899
      %v4080 = vpop.f32.mrf.mxu0
      %v4081 = vadd.f32 %v4068, %v4080
      %v4082 = vpop.f32.mrf.mxu0
      %4083 = vdwg.mxu0
      %4084 = vmatpush.bf16.msra.mxu0 0
      %4085 = vmatpush.bf16.msra.mxu0 0
      %4086 = vmatpush.bf16.msra.mxu0 0
      %4087 = vmatpush.bf16.msra.mxu0 0
      %4088 = vmatpush.bf16.msra.mxu0 %v3606
      %4089 = vmatpush.bf16.msra.mxu0 %v3117
      %4090 = vmatpush.bf16.msra.mxu0 %v3101
      %4091 = vmatpush.bf16.msra.mxu0 %v3085
      %4092 = vmatmul.bf16.gmra.mxu0 %v3575
      %v4093 = vpop.f32.mrf.mxu0
      %v4094 = vadd.f32 %v4081, %v4093
      %v4095 = vpop.f32.mrf.mxu0
      %4096 = vdwg.mxu0
      %4097 = vmatpush.bf16.msra.mxu0 %v2814
      %4098 = vmatpush.bf16.msra.mxu0 %v2798
      %4099 = vmatpush.bf16.msra.mxu0 %v2782
      %4100 = vmatpush.bf16.msra.mxu0 %v2766
      %4101 = vmatpush.bf16.msra.mxu0 %v2750
      %4102 = vmatpush.bf16.msra.mxu0 %v2734
      %4103 = vmatpush.bf16.msra.mxu0 %v2718
      %4104 = vmatpush.bf16.msra.mxu0 %v2702
      %4105 = vmatmul.bf16.gmra.mxu0 %v897
      %v4106 = vpop.f32.mrf.mxu0
      %v4107 = vadd.f32 0.0, %v4106
      %v4108 = vpop.f32.mrf.mxu0
      %4109 = vdwg.mxu0
      %4110 = vmatpush.bf16.msra.mxu0 %v2942
      %4111 = vmatpush.bf16.msra.mxu0 %v2926
      %4112 = vmatpush.bf16.msra.mxu0 %v2910
      %4113 = vmatpush.bf16.msra.mxu0 %v2894
      %4114 = vmatpush.bf16.msra.mxu0 %v2878
      %4115 = vmatpush.bf16.msra.mxu0 %v2862
      %4116 = vmatpush.bf16.msra.mxu0 %v2846
      %4117 = vmatpush.bf16.msra.mxu0 %v2830
      %4118 = vmatmul.bf16.gmra.mxu0 %v898
      %v4119 = vpop.f32.mrf.mxu0
      %v4120 = vadd.f32 %v4107, %v4119
      %v4121 = vpop.f32.mrf.mxu0
      %4122 = vdwg.mxu0
      %4123 = vmatpush.bf16.msra.mxu0 %v3070
      %4124 = vmatpush.bf16.msra.mxu0 %v3054
      %4125 = vmatpush.bf16.msra.mxu0 %v3038
      %4126 = vmatpush.bf16.msra.mxu0 %v3022
      %4127 = vmatpush.bf16.msra.mxu0 %v3006
      %4128 = vmatpush.bf16.msra.mxu0 %v2990
      %4129 = vmatpush.bf16.msra.mxu0 %v2974
      %4130 = vmatpush.bf16.msra.mxu0 %v2958
      %4131 = vmatmul.bf16.gmra.mxu0 %v899
      %v4132 = vpop.f32.mrf.mxu0
      %v4133 = vadd.f32 %v4120, %v4132
      %v4134 = vpop.f32.mrf.mxu0
      %4135 = vdwg.mxu0
      %4136 = vmatpush.bf16.msra.mxu0 0
      %4137 = vmatpush.bf16.msra.mxu0 0
      %4138 = vmatpush.bf16.msra.mxu0 0
      %4139 = vmatpush.bf16.msra.mxu0 0
      %4140 = vmatpush.bf16.msra.mxu0 %v3609
      %4141 = vmatpush.bf16.msra.mxu0 %v3118
      %4142 = vmatpush.bf16.msra.mxu0 %v3102
      %4143 = vmatpush.bf16.msra.mxu0 %v3086
      %4144 = vmatmul.bf16.gmra.mxu0 %v3575
      %v4145 = vpop.f32.mrf.mxu0
      %v4146 = vadd.f32 %v4133, %v4145
      %v4147 = vpop.f32.mrf.mxu0
      %4148 = vdwg.mxu0
      %4149 = vmatpush.bf16.msra.mxu0 %v2815
      %4150 = vmatpush.bf16.msra.mxu0 %v2799
      %4151 = vmatpush.bf16.msra.mxu0 %v2783
      %4152 = vmatpush.bf16.msra.mxu0 %v2767
      %4153 = vmatpush.bf16.msra.mxu0 %v2751
      %4154 = vmatpush.bf16.msra.mxu0 %v2735
      %4155 = vmatpush.bf16.msra.mxu0 %v2719
      %4156 = vmatpush.bf16.msra.mxu0 %v2703
      %4157 = vmatmul.bf16.gmra.mxu0 %v897
      %v4158 = vpop.f32.mrf.mxu0
      %v4159 = vadd.f32 0.0, %v4158
      %v4160 = vpop.f32.mrf.mxu0
      %4161 = vdwg.mxu0
      %4162 = vmatpush.bf16.msra.mxu0 %v2943
      %4163 = vmatpush.bf16.msra.mxu0 %v2927
      %4164 = vmatpush.bf16.msra.mxu0 %v2911
      %4165 = vmatpush.bf16.msra.mxu0 %v2895
      %4166 = vmatpush.bf16.msra.mxu0 %v2879
      %4167 = vmatpush.bf16.msra.mxu0 %v2863
      %4168 = vmatpush.bf16.msra.mxu0 %v2847
      %4169 = vmatpush.bf16.msra.mxu0 %v2831
      %4170 = vmatmul.bf16.gmra.mxu0 %v898
      %v4171 = vpop.f32.mrf.mxu0
      %v4172 = vadd.f32 %v4159, %v4171
      %v4173 = vpop.f32.mrf.mxu0
      %4174 = vdwg.mxu0
      %4175 = vmatpush.bf16.msra.mxu0 %v3071
      %4176 = vmatpush.bf16.msra.mxu0 %v3055
      %4177 = vmatpush.bf16.msra.mxu0 %v3039
      %4178 = vmatpush.bf16.msra.mxu0 %v3023
      %4179 = vmatpush.bf16.msra.mxu0 %v3007
      %4180 = vmatpush.bf16.msra.mxu0 %v2991
      %4181 = vmatpush.bf16.msra.mxu0 %v2975
      %4182 = vmatpush.bf16.msra.mxu0 %v2959
      %4183 = vmatmul.bf16.gmra.mxu0 %v899
      %v4184 = vpop.f32.mrf.mxu0
      %v4185 = vadd.f32 %v4172, %v4184
      %v4186 = vpop.f32.mrf.mxu0
      %4187 = vdwg.mxu0
      %4188 = vmatpush.bf16.msra.mxu0 0
      %4189 = vmatpush.bf16.msra.mxu0 0
      %4190 = vmatpush.bf16.msra.mxu0 0
      %4191 = vmatpush.bf16.msra.mxu0 0
      %4192 = vmatpush.bf16.msra.mxu0 %v3612
      %4193 = vmatpush.bf16.msra.mxu0 %v3119
      %4194 = vmatpush.bf16.msra.mxu0 %v3103
      %4195 = vmatpush.bf16.msra.mxu0 %v3087
      %4196 = vmatmul.bf16.gmra.mxu0 %v3575
      %v4197 = vpop.f32.mrf.mxu0
      %v4198 = vadd.f32 %v4185, %v4197
      %v4199 = vpop.f32.mrf.mxu0
      %4200 = vdwg.mxu0
      %4201 = vmatpush.bf16.msra.mxu0 %v2816
      %4202 = vmatpush.bf16.msra.mxu0 %v2800
      %4203 = vmatpush.bf16.msra.mxu0 %v2784
      %4204 = vmatpush.bf16.msra.mxu0 %v2768
      %4205 = vmatpush.bf16.msra.mxu0 %v2752
      %4206 = vmatpush.bf16.msra.mxu0 %v2736
      %4207 = vmatpush.bf16.msra.mxu0 %v2720
      %4208 = vmatpush.bf16.msra.mxu0 %v2704
      %4209 = vmatmul.bf16.gmra.mxu0 %v897
      %v4210 = vpop.f32.mrf.mxu0
      %v4211 = vadd.f32 0.0, %v4210
      %v4212 = vpop.f32.mrf.mxu0
      %4213 = vdwg.mxu0
      %4214 = vmatpush.bf16.msra.mxu0 %v2944
      %4215 = vmatpush.bf16.msra.mxu0 %v2928
      %4216 = vmatpush.bf16.msra.mxu0 %v2912
      %4217 = vmatpush.bf16.msra.mxu0 %v2896
      %4218 = vmatpush.bf16.msra.mxu0 %v2880
      %4219 = vmatpush.bf16.msra.mxu0 %v2864
      %4220 = vmatpush.bf16.msra.mxu0 %v2848
      %4221 = vmatpush.bf16.msra.mxu0 %v2832
      %4222 = vmatmul.bf16.gmra.mxu0 %v898
      %v4223 = vpop.f32.mrf.mxu0
      %v4224 = vadd.f32 %v4211, %v4223
      %v4225 = vpop.f32.mrf.mxu0
      %4226 = vdwg.mxu0
      %4227 = vmatpush.bf16.msra.mxu0 %v3072
      %4228 = vmatpush.bf16.msra.mxu0 %v3056
      %4229 = vmatpush.bf16.msra.mxu0 %v3040
      %4230 = vmatpush.bf16.msra.mxu0 %v3024
      %4231 = vmatpush.bf16.msra.mxu0 %v3008
      %4232 = vmatpush.bf16.msra.mxu0 %v2992
      %4233 = vmatpush.bf16.msra.mxu0 %v2976
      %4234 = vmatpush.bf16.msra.mxu0 %v2960
      %4235 = vmatmul.bf16.gmra.mxu0 %v899
      %v4236 = vpop.f32.mrf.mxu0
      %v4237 = vadd.f32 %v4224, %v4236
      %v4238 = vpop.f32.mrf.mxu0
      %4239 = vdwg.mxu0
      %4240 = vmatpush.bf16.msra.mxu0 0
      %4241 = vmatpush.bf16.msra.mxu0 0
      %4242 = vmatpush.bf16.msra.mxu0 0
      %4243 = vmatpush.bf16.msra.mxu0 0
      %4244 = vmatpush.bf16.msra.mxu0 %v3615
      %4245 = vmatpush.bf16.msra.mxu0 %v3120
      %4246 = vmatpush.bf16.msra.mxu0 %v3104
      %4247 = vmatpush.bf16.msra.mxu0 %v3088
      %4248 = vmatmul.bf16.gmra.mxu0 %v3575
      %v4249 = vpop.f32.mrf.mxu0
      %v4250 = vadd.f32 %v4237, %v4249
      %v4251 = vpop.f32.mrf.mxu0
      %4252 = vdwg.mxu0
      %4253 = vmatpush.bf16.msra.mxu0 %v2817
      %4254 = vmatpush.bf16.msra.mxu0 %v2801
      %4255 = vmatpush.bf16.msra.mxu0 %v2785
      %4256 = vmatpush.bf16.msra.mxu0 %v2769
      %4257 = vmatpush.bf16.msra.mxu0 %v2753
      %4258 = vmatpush.bf16.msra.mxu0 %v2737
      %4259 = vmatpush.bf16.msra.mxu0 %v2721
      %4260 = vmatpush.bf16.msra.mxu0 %v2705
      %4261 = vmatmul.bf16.gmra.mxu0 %v897
      %v4262 = vpop.f32.mrf.mxu0
      %v4263 = vadd.f32 0.0, %v4262
      %v4264 = vpop.f32.mrf.mxu0
      %4265 = vdwg.mxu0
      %4266 = vmatpush.bf16.msra.mxu0 %v2945
      %4267 = vmatpush.bf16.msra.mxu0 %v2929
      %4268 = vmatpush.bf16.msra.mxu0 %v2913
      %4269 = vmatpush.bf16.msra.mxu0 %v2897
      %4270 = vmatpush.bf16.msra.mxu0 %v2881
      %4271 = vmatpush.bf16.msra.mxu0 %v2865
      %4272 = vmatpush.bf16.msra.mxu0 %v2849
      %4273 = vmatpush.bf16.msra.mxu0 %v2833
      %4274 = vmatmul.bf16.gmra.mxu0 %v898
      %v4275 = vpop.f32.mrf.mxu0
      %v4276 = vadd.f32 %v4263, %v4275
      %v4277 = vpop.f32.mrf.mxu0
      %4278 = vdwg.mxu0
      %4279 = vmatpush.bf16.msra.mxu0 %v3073
      %4280 = vmatpush.bf16.msra.mxu0 %v3057
      %4281 = vmatpush.bf16.msra.mxu0 %v3041
      %4282 = vmatpush.bf16.msra.mxu0 %v3025
      %4283 = vmatpush.bf16.msra.mxu0 %v3009
      %4284 = vmatpush.bf16.msra.mxu0 %v2993
      %4285 = vmatpush.bf16.msra.mxu0 %v2977
      %4286 = vmatpush.bf16.msra.mxu0 %v2961
      %4287 = vmatmul.bf16.gmra.mxu0 %v899
      %v4288 = vpop.f32.mrf.mxu0
      %v4289 = vadd.f32 %v4276, %v4288
      %v4290 = vpop.f32.mrf.mxu0
      %4291 = vdwg.mxu0
      %4292 = vmatpush.bf16.msra.mxu0 0
      %4293 = vmatpush.bf16.msra.mxu0 0
      %4294 = vmatpush.bf16.msra.mxu0 0
      %4295 = vmatpush.bf16.msra.mxu0 0
      %4296 = vmatpush.bf16.msra.mxu0 %v3618
      %4297 = vmatpush.bf16.msra.mxu0 %v3121
      %4298 = vmatpush.bf16.msra.mxu0 %v3105
      %4299 = vmatpush.bf16.msra.mxu0 %v3089
      %4300 = vmatmul.bf16.gmra.mxu0 %v3575
      %v4301 = vpop.f32.mrf.mxu0
      %v4302 = vadd.f32 %v4289, %v4301
      %v4303 = vpop.f32.mrf.mxu0
      %4304 = vdwg.mxu0
      %4305 = vmatpush.bf16.msra.mxu0 %v2818
      %4306 = vmatpush.bf16.msra.mxu0 %v2802
      %4307 = vmatpush.bf16.msra.mxu0 %v2786
      %4308 = vmatpush.bf16.msra.mxu0 %v2770
      %4309 = vmatpush.bf16.msra.mxu0 %v2754
      %4310 = vmatpush.bf16.msra.mxu0 %v2738
      %4311 = vmatpush.bf16.msra.mxu0 %v2722
      %4312 = vmatpush.bf16.msra.mxu0 %v2706
      %4313 = vmatmul.bf16.gmra.mxu0 %v897
      %v4314 = vpop.f32.mrf.mxu0
      %v4315 = vadd.f32 0.0, %v4314
      %v4316 = vpop.f32.mrf.mxu0
      %4317 = vdwg.mxu0
      %4318 = vmatpush.bf16.msra.mxu0 %v2946
      %4319 = vmatpush.bf16.msra.mxu0 %v2930
      %4320 = vmatpush.bf16.msra.mxu0 %v2914
      %4321 = vmatpush.bf16.msra.mxu0 %v2898
      %4322 = vmatpush.bf16.msra.mxu0 %v2882
      %4323 = vmatpush.bf16.msra.mxu0 %v2866
      %4324 = vmatpush.bf16.msra.mxu0 %v2850
      %4325 = vmatpush.bf16.msra.mxu0 %v2834
      %4326 = vmatmul.bf16.gmra.mxu0 %v898
      %v4327 = vpop.f32.mrf.mxu0
      %v4328 = vadd.f32 %v4315, %v4327
      %v4329 = vpop.f32.mrf.mxu0
      %4330 = vdwg.mxu0
      %4331 = vmatpush.bf16.msra.mxu0 %v3074
      %4332 = vmatpush.bf16.msra.mxu0 %v3058
      %4333 = vmatpush.bf16.msra.mxu0 %v3042
      %4334 = vmatpush.bf16.msra.mxu0 %v3026
      %4335 = vmatpush.bf16.msra.mxu0 %v3010
      %4336 = vmatpush.bf16.msra.mxu0 %v2994
      %4337 = vmatpush.bf16.msra.mxu0 %v2978
      %4338 = vmatpush.bf16.msra.mxu0 %v2962
      %4339 = vmatmul.bf16.gmra.mxu0 %v899
      %v4340 = vpop.f32.mrf.mxu0
      %v4341 = vadd.f32 %v4328, %v4340
      %v4342 = vpop.f32.mrf.mxu0
      %4343 = vdwg.mxu0
      %4344 = vmatpush.bf16.msra.mxu0 0
      %4345 = vmatpush.bf16.msra.mxu0 0
      %4346 = vmatpush.bf16.msra.mxu0 0
      %4347 = vmatpush.bf16.msra.mxu0 0
      %4348 = vmatpush.bf16.msra.mxu0 %v3621
      %4349 = vmatpush.bf16.msra.mxu0 %v3122
      %4350 = vmatpush.bf16.msra.mxu0 %v3106
      %4351 = vmatpush.bf16.msra.mxu0 %v3090
      %4352 = vmatmul.bf16.gmra.mxu0 %v3575
      %v4353 = vpop.f32.mrf.mxu0
      %v4354 = vadd.f32 %v4341, %v4353
      %v4355 = vpop.f32.mrf.mxu0
      %4356 = vdwg.mxu0
      %4357 = vmatpush.bf16.msra.mxu0 %v2819
      %4358 = vmatpush.bf16.msra.mxu0 %v2803
      %4359 = vmatpush.bf16.msra.mxu0 %v2787
      %4360 = vmatpush.bf16.msra.mxu0 %v2771
      %4361 = vmatpush.bf16.msra.mxu0 %v2755
      %4362 = vmatpush.bf16.msra.mxu0 %v2739
      %4363 = vmatpush.bf16.msra.mxu0 %v2723
      %4364 = vmatpush.bf16.msra.mxu0 %v2707
      %4365 = vmatmul.bf16.gmra.mxu0 %v897
      %v4366 = vpop.f32.mrf.mxu0
      %v4367 = vadd.f32 0.0, %v4366
      %v4368 = vpop.f32.mrf.mxu0
      %4369 = vdwg.mxu0
      %4370 = vmatpush.bf16.msra.mxu0 %v2947
      %4371 = vmatpush.bf16.msra.mxu0 %v2931
      %4372 = vmatpush.bf16.msra.mxu0 %v2915
      %4373 = vmatpush.bf16.msra.mxu0 %v2899
      %4374 = vmatpush.bf16.msra.mxu0 %v2883
      %4375 = vmatpush.bf16.msra.mxu0 %v2867
      %4376 = vmatpush.bf16.msra.mxu0 %v2851
      %4377 = vmatpush.bf16.msra.mxu0 %v2835
      %4378 = vmatmul.bf16.gmra.mxu0 %v898
      %v4379 = vpop.f32.mrf.mxu0
      %v4380 = vadd.f32 %v4367, %v4379
      %v4381 = vpop.f32.mrf.mxu0
      %4382 = vdwg.mxu0
      %4383 = vmatpush.bf16.msra.mxu0 %v3075
      %4384 = vmatpush.bf16.msra.mxu0 %v3059
      %4385 = vmatpush.bf16.msra.mxu0 %v3043
      %4386 = vmatpush.bf16.msra.mxu0 %v3027
      %4387 = vmatpush.bf16.msra.mxu0 %v3011
      %4388 = vmatpush.bf16.msra.mxu0 %v2995
      %4389 = vmatpush.bf16.msra.mxu0 %v2979
      %4390 = vmatpush.bf16.msra.mxu0 %v2963
      %4391 = vmatmul.bf16.gmra.mxu0 %v899
      %v4392 = vpop.f32.mrf.mxu0
      %v4393 = vadd.f32 %v4380, %v4392
      %v4394 = vpop.f32.mrf.mxu0
      %4395 = vdwg.mxu0
      %4396 = vmatpush.bf16.msra.mxu0 0
      %4397 = vmatpush.bf16.msra.mxu0 0
      %4398 = vmatpush.bf16.msra.mxu0 0
      %4399 = vmatpush.bf16.msra.mxu0 0
      %4400 = vmatpush.bf16.msra.mxu0 %v3624
      %4401 = vmatpush.bf16.msra.mxu0 %v3123
      %4402 = vmatpush.bf16.msra.mxu0 %v3107
      %4403 = vmatpush.bf16.msra.mxu0 %v3091
      %4404 = vmatmul.bf16.gmra.mxu0 %v3575
      %v4405 = vpop.f32.mrf.mxu0
      %v4406 = vadd.f32 %v4393, %v4405
      %v4407 = vpop.f32.mrf.mxu0
      %4408 = vdwg.mxu0
      %4409 = vmatpush.bf16.msra.mxu0 %v2820
      %4410 = vmatpush.bf16.msra.mxu0 %v2804
      %4411 = vmatpush.bf16.msra.mxu0 %v2788
      %4412 = vmatpush.bf16.msra.mxu0 %v2772
      %4413 = vmatpush.bf16.msra.mxu0 %v2756
      %4414 = vmatpush.bf16.msra.mxu0 %v2740
      %4415 = vmatpush.bf16.msra.mxu0 %v2724
      %4416 = vmatpush.bf16.msra.mxu0 %v2708
      %4417 = vmatmul.bf16.gmra.mxu0 %v897
      %v4418 = vpop.f32.mrf.mxu0
      %v4419 = vadd.f32 0.0, %v4418
      %v4420 = vpop.f32.mrf.mxu0
      %4421 = vdwg.mxu0
      %4422 = vmatpush.bf16.msra.mxu0 %v2948
      %4423 = vmatpush.bf16.msra.mxu0 %v2932
      %4424 = vmatpush.bf16.msra.mxu0 %v2916
      %4425 = vmatpush.bf16.msra.mxu0 %v2900
      %4426 = vmatpush.bf16.msra.mxu0 %v2884
      %4427 = vmatpush.bf16.msra.mxu0 %v2868
      %4428 = vmatpush.bf16.msra.mxu0 %v2852
      %4429 = vmatpush.bf16.msra.mxu0 %v2836
      %4430 = vmatmul.bf16.gmra.mxu0 %v898
      %v4431 = vpop.f32.mrf.mxu0
      %v4432 = vadd.f32 %v4419, %v4431
      %v4433 = vpop.f32.mrf.mxu0
      %4434 = vdwg.mxu0
      %4435 = vmatpush.bf16.msra.mxu0 %v3076
      %4436 = vmatpush.bf16.msra.mxu0 %v3060
      %4437 = vmatpush.bf16.msra.mxu0 %v3044
      %4438 = vmatpush.bf16.msra.mxu0 %v3028
      %4439 = vmatpush.bf16.msra.mxu0 %v3012
      %4440 = vmatpush.bf16.msra.mxu0 %v2996
      %4441 = vmatpush.bf16.msra.mxu0 %v2980
      %4442 = vmatpush.bf16.msra.mxu0 %v2964
      %4443 = vmatmul.bf16.gmra.mxu0 %v899
      %v4444 = vpop.f32.mrf.mxu0
      %v4445 = vadd.f32 %v4432, %v4444
      %v4446 = vpop.f32.mrf.mxu0
      %4447 = vdwg.mxu0
      %4448 = vmatpush.bf16.msra.mxu0 0
      %4449 = vmatpush.bf16.msra.mxu0 0
      %4450 = vmatpush.bf16.msra.mxu0 0
      %4451 = vmatpush.bf16.msra.mxu0 0
      %4452 = vmatpush.bf16.msra.mxu0 %v3627
      %4453 = vmatpush.bf16.msra.mxu0 %v3124
      %4454 = vmatpush.bf16.msra.mxu0 %v3108
      %4455 = vmatpush.bf16.msra.mxu0 %v3092
      %4456 = vmatmul.bf16.gmra.mxu0 %v3575
      %v4457 = vpop.f32.mrf.mxu0
      %v4458 = vadd.f32 %v4445, %v4457
      %v4459 = vpop.f32.mrf.mxu0
      %4460 = vdwg.mxu0
      %v4461 = vpack.c.bf16 %v3730, %v3678
      %v4462 = vpack.c.bf16 %v3834, %v3782
      %v4463 = vpack.c.bf16 %v3938, %v3886
      %v4464 = vpack.c.bf16 %v4042, %v3990
      %v4465 = vpack.c.bf16 %v4146, %v4094
      %v4466 = vpack.c.bf16 %v4250, %v4198
      %v4467 = vpack.c.bf16 %v4354, %v4302
      %v4468 = vpack.c.bf16 %v4458, %v4406
      %v4469 = vld [vmem:[%s5] sm:$0xf]
      %v4470 = vld [vmem:[%s5 + $0x4] sm:$0xf]
      %s4471 = scalar_lea.vmem %s5, 8
      %v4472 = vld [vmem:[%s4471] sm:$0xf]
      %v4473 = vld [vmem:[%s4471 + $0x4] sm:$0xf]
      %v4476 = vunpack.c.l.b16 %v4472
      %v4477 = vunpack.c.l.b16 %v4473
      %v4478 = vpack.c.b16 %v4477, %v4476
      %v4480 = vunpack.c.h.b16 %v4461
      %v4481 = vpack.c.b16 %v4480, %v4480
      %vm4482 = vcmask 64512
      %v4484 = vsel %vm4482, %v4478, 0
      %v4487 = vsel %vm3577, %v4481, 0
      %4489 = vmatpush.bf16.msra.mxu0 0
      %4490 = vmatpush.bf16.msra.mxu0 0
      %4491 = vmatpush.bf16.msra.mxu0 0
      %4492 = vmatpush.bf16.msra.mxu0 0
      %4493 = vmatpush.bf16.msra.mxu0 0
      %4494 = vmatpush.bf16.msra.mxu0 0
      %4495 = vmatpush.bf16.msra.mxu0 0
      %4496 = vmatpush.bf16.msra.mxu0 %v4487
      %4497 = vmatmul.bf16.gmra.mxu0 %v4484
      %v4498 = vpop.f32.mrf.mxu0
      %v4499 = vadd.f32 0.0, %v4498
      %v4500 = vpop.f32.mrf.mxu0
      %v4501 = vadd.f32 0.0, %v4500
      %4502 = vdwg.mxu0
      %v4505 = vunpack.c.l.b16 %v4469
      %v4506 = vunpack.c.l.b16 %v4470
      %v4507 = vpack.c.b16 %v4506, %v4505
      %v4509 = vsel %vm4482, %v4507, 0
      %v4512 = vsel %vm3577, %v4461, 0
      %4514 = vmatpush.bf16.msra.mxu0 0
      %4515 = vmatpush.bf16.msra.mxu0 0
      %4516 = vmatpush.bf16.msra.mxu0 0
      %4517 = vmatpush.bf16.msra.mxu0 0
      %4518 = vmatpush.bf16.msra.mxu0 0
      %4519 = vmatpush.bf16.msra.mxu0 0
      %4520 = vmatpush.bf16.msra.mxu0 0
      %4521 = vmatpush.bf16.msra.mxu0 %v4512
      %4522 = vmatmul.bf16.gmra.mxu0 %v4509
      %v4523 = vpop.f32.mrf.mxu0
      %v4524 = vadd.f32 %v4499, %v4523
      %v4525 = vpop.f32.mrf.mxu0
      %v4526 = vadd.f32 %v4501, %v4525
      %4527 = vdwg.mxu0
      %s4528 = scalar_lea.vmem %s5, 16
      %v4529 = vld [vmem:[%s4528] sm:$0xf]
      %v4530 = vld [vmem:[%s4528 + $0x4] sm:$0xf]
      %v4533 = vunpack.c.l.b16 %v4529
      %v4534 = vunpack.c.l.b16 %v4530
      %v4535 = vpack.c.b16 %v4534, %v4533
      %v4537 = vsel %vm4482, %v4535, 0
      %v4540 = vsel %vm3577, %v4462, 0
      %4542 = vmatpush.bf16.msra.mxu0 0
      %4543 = vmatpush.bf16.msra.mxu0 0
      %4544 = vmatpush.bf16.msra.mxu0 0
      %4545 = vmatpush.bf16.msra.mxu0 0
      %4546 = vmatpush.bf16.msra.mxu0 0
      %4547 = vmatpush.bf16.msra.mxu0 0
      %4548 = vmatpush.bf16.msra.mxu0 0
      %4549 = vmatpush.bf16.msra.mxu0 %v4540
      %4550 = vmatmul.bf16.gmra.mxu0 %v4537
      %v4551 = vpop.f32.mrf.mxu0
      %v4552 = vadd.f32 0.0, %v4551
      %v4553 = vpop.f32.mrf.mxu0
      %v4554 = vadd.f32 0.0, %v4553
      %4555 = vdwg.mxu0
      %v4556 = vadd.f32 %v4524, %v4552
      %v4557 = vadd.f32 %v4526, %v4554
      %s4558 = scalar_lea.vmem %s5, 24
      %v4559 = vld [vmem:[%s4558] sm:$0xf]
      %v4560 = vld [vmem:[%s4558 + $0x4] sm:$0xf]
      %v4563 = vunpack.c.l.b16 %v4559
      %v4564 = vunpack.c.l.b16 %v4560
      %v4565 = vpack.c.b16 %v4564, %v4563
      %v4567 = vunpack.c.h.b16 %v4462
      %v4568 = vpack.c.b16 %v4567, %v4567
      %v4570 = vsel %vm4482, %v4565, 0
      %v4573 = vsel %vm3577, %v4568, 0
      %4575 = vmatpush.bf16.msra.mxu0 0
      %4576 = vmatpush.bf16.msra.mxu0 0
      %4577 = vmatpush.bf16.msra.mxu0 0
      %4578 = vmatpush.bf16.msra.mxu0 0
      %4579 = vmatpush.bf16.msra.mxu0 0
      %4580 = vmatpush.bf16.msra.mxu0 0
      %4581 = vmatpush.bf16.msra.mxu0 0
      %4582 = vmatpush.bf16.msra.mxu0 %v4573
      %4583 = vmatmul.bf16.gmra.mxu0 %v4570
      %v4584 = vpop.f32.mrf.mxu0
      %v4585 = vadd.f32 0.0, %v4584
      %v4586 = vpop.f32.mrf.mxu0
      %v4587 = vadd.f32 0.0, %v4586
      %4588 = vdwg.mxu0
      %v4589 = vadd.f32 %v4556, %v4585
      %v4590 = vadd.f32 %v4557, %v4587
      %s4591 = scalar_lea.vmem %s5, 32
      %v4592 = vld [vmem:[%s4591] sm:$0xf]
      %v4593 = vld [vmem:[%s4591 + $0x4] sm:$0xf]
      %v4596 = vunpack.c.l.b16 %v4592
      %v4597 = vunpack.c.l.b16 %v4593
      %v4598 = vpack.c.b16 %v4597, %v4596
      %v4600 = vsel %vm4482, %v4598, 0
      %v4603 = vsel %vm3577, %v4463, 0
      %4605 = vmatpush.bf16.msra.mxu0 0
      %4606 = vmatpush.bf16.msra.mxu0 0
      %4607 = vmatpush.bf16.msra.mxu0 0
      %4608 = vmatpush.bf16.msra.mxu0 0
      %4609 = vmatpush.bf16.msra.mxu0 0
      %4610 = vmatpush.bf16.msra.mxu0 0
      %4611 = vmatpush.bf16.msra.mxu0 0
      %4612 = vmatpush.bf16.msra.mxu0 %v4603
      %4613 = vmatmul.bf16.gmra.mxu0 %v4600
      %v4614 = vpop.f32.mrf.mxu0
      %v4615 = vadd.f32 0.0, %v4614
      %v4616 = vpop.f32.mrf.mxu0
      %v4617 = vadd.f32 0.0, %v4616
      %4618 = vdwg.mxu0
      %v4619 = vadd.f32 %v4589, %v4615
      %v4620 = vadd.f32 %v4590, %v4617
      %s4621 = scalar_lea.vmem %s5, 40
      %v4622 = vld [vmem:[%s4621] sm:$0xf]
      %v4623 = vld [vmem:[%s4621 + $0x4] sm:$0xf]
      %v4626 = vunpack.c.l.b16 %v4622
      %v4627 = vunpack.c.l.b16 %v4623
      %v4628 = vpack.c.b16 %v4627, %v4626
      %v4630 = vunpack.c.h.b16 %v4463
      %v4631 = vpack.c.b16 %v4630, %v4630
      %v4633 = vsel %vm4482, %v4628, 0
      %v4636 = vsel %vm3577, %v4631, 0
      %4638 = vmatpush.bf16.msra.mxu0 0
      %4639 = vmatpush.bf16.msra.mxu0 0
      %4640 = vmatpush.bf16.msra.mxu0 0
      %4641 = vmatpush.bf16.msra.mxu0 0
      %4642 = vmatpush.bf16.msra.mxu0 0
      %4643 = vmatpush.bf16.msra.mxu0 0
      %4644 = vmatpush.bf16.msra.mxu0 0
      %4645 = vmatpush.bf16.msra.mxu0 %v4636
      %4646 = vmatmul.bf16.gmra.mxu0 %v4633
      %v4647 = vpop.f32.mrf.mxu0
      %v4648 = vadd.f32 0.0, %v4647
      %v4649 = vpop.f32.mrf.mxu0
      %v4650 = vadd.f32 0.0, %v4649
      %4651 = vdwg.mxu0
      %v4652 = vadd.f32 %v4619, %v4648
      %v4653 = vadd.f32 %v4620, %v4650
      %s4654 = scalar_lea.vmem %s5, 48
      %v4655 = vld [vmem:[%s4654] sm:$0xf]
      %v4656 = vld [vmem:[%s4654 + $0x4] sm:$0xf]
      %v4659 = vunpack.c.l.b16 %v4655
      %v4660 = vunpack.c.l.b16 %v4656
      %v4661 = vpack.c.b16 %v4660, %v4659
      %v4663 = vsel %vm4482, %v4661, 0
      %v4666 = vsel %vm3577, %v4464, 0
      %4668 = vmatpush.bf16.msra.mxu0 0
      %4669 = vmatpush.bf16.msra.mxu0 0
      %4670 = vmatpush.bf16.msra.mxu0 0
      %4671 = vmatpush.bf16.msra.mxu0 0
      %4672 = vmatpush.bf16.msra.mxu0 0
      %4673 = vmatpush.bf16.msra.mxu0 0
      %4674 = vmatpush.bf16.msra.mxu0 0
      %4675 = vmatpush.bf16.msra.mxu0 %v4666
      %4676 = vmatmul.bf16.gmra.mxu0 %v4663
      %v4677 = vpop.f32.mrf.mxu0
      %v4678 = vadd.f32 0.0, %v4677
      %v4679 = vpop.f32.mrf.mxu0
      %v4680 = vadd.f32 0.0, %v4679
      %4681 = vdwg.mxu0
      %v4682 = vadd.f32 %v4652, %v4678
      %v4683 = vadd.f32 %v4653, %v4680
      %s4684 = scalar_lea.vmem %s5, 56
      %v4685 = vld [vmem:[%s4684] sm:$0xf]
      %v4686 = vld [vmem:[%s4684 + $0x4] sm:$0xf]
      %v4689 = vunpack.c.l.b16 %v4685
      %v4690 = vunpack.c.l.b16 %v4686
      %v4691 = vpack.c.b16 %v4690, %v4689
      %v4693 = vunpack.c.h.b16 %v4464
      %v4694 = vpack.c.b16 %v4693, %v4693
      %v4696 = vsel %vm4482, %v4691, 0
      %v4699 = vsel %vm3577, %v4694, 0
      %4701 = vmatpush.bf16.msra.mxu0 0
      %4702 = vmatpush.bf16.msra.mxu0 0
      %4703 = vmatpush.bf16.msra.mxu0 0
      %4704 = vmatpush.bf16.msra.mxu0 0
      %4705 = vmatpush.bf16.msra.mxu0 0
      %4706 = vmatpush.bf16.msra.mxu0 0
      %4707 = vmatpush.bf16.msra.mxu0 0
      %4708 = vmatpush.bf16.msra.mxu0 %v4699
      %4709 = vmatmul.bf16.gmra.mxu0 %v4696
      %v4710 = vpop.f32.mrf.mxu0
      %v4711 = vadd.f32 0.0, %v4710
      %v4712 = vpop.f32.mrf.mxu0
      %v4713 = vadd.f32 0.0, %v4712
      %4714 = vdwg.mxu0
      %v4715 = vadd.f32 %v4682, %v4711
      %v4716 = vadd.f32 %v4683, %v4713
      %s4717 = scalar_lea.vmem %s5, 64
      %v4718 = vld [vmem:[%s4717] sm:$0xf]
      %v4719 = vld [vmem:[%s4717 + $0x4] sm:$0xf]
      %v4722 = vunpack.c.l.b16 %v4718
      %v4723 = vunpack.c.l.b16 %v4719
      %v4724 = vpack.c.b16 %v4723, %v4722
      %v4726 = vsel %vm4482, %v4724, 0
      %v4729 = vsel %vm3577, %v4465, 0
      %4731 = vmatpush.bf16.msra.mxu0 0
      %4732 = vmatpush.bf16.msra.mxu0 0
      %4733 = vmatpush.bf16.msra.mxu0 0
      %4734 = vmatpush.bf16.msra.mxu0 0
      %4735 = vmatpush.bf16.msra.mxu0 0
      %4736 = vmatpush.bf16.msra.mxu0 0
      %4737 = vmatpush.bf16.msra.mxu0 0
      %4738 = vmatpush.bf16.msra.mxu0 %v4729
      %4739 = vmatmul.bf16.gmra.mxu0 %v4726
      %v4740 = vpop.f32.mrf.mxu0
      %v4741 = vadd.f32 0.0, %v4740
      %v4742 = vpop.f32.mrf.mxu0
      %v4743 = vadd.f32 0.0, %v4742
      %4744 = vdwg.mxu0
      %v4745 = vadd.f32 %v4715, %v4741
      %v4746 = vadd.f32 %v4716, %v4743
      %s4747 = scalar_lea.vmem %s5, 72
      %v4748 = vld [vmem:[%s4747] sm:$0xf]
      %v4749 = vld [vmem:[%s4747 + $0x4] sm:$0xf]
      %v4752 = vunpack.c.l.b16 %v4748
      %v4753 = vunpack.c.l.b16 %v4749
      %v4754 = vpack.c.b16 %v4753, %v4752
      %v4756 = vunpack.c.h.b16 %v4465
      %v4757 = vpack.c.b16 %v4756, %v4756
      %v4759 = vsel %vm4482, %v4754, 0
      %v4762 = vsel %vm3577, %v4757, 0
      %4764 = vmatpush.bf16.msra.mxu0 0
      %4765 = vmatpush.bf16.msra.mxu0 0
      %4766 = vmatpush.bf16.msra.mxu0 0
      %4767 = vmatpush.bf16.msra.mxu0 0
      %4768 = vmatpush.bf16.msra.mxu0 0
      %4769 = vmatpush.bf16.msra.mxu0 0
      %4770 = vmatpush.bf16.msra.mxu0 0
      %4771 = vmatpush.bf16.msra.mxu0 %v4762
      %4772 = vmatmul.bf16.gmra.mxu0 %v4759
      %v4773 = vpop.f32.mrf.mxu0
      %v4774 = vadd.f32 0.0, %v4773
      %v4775 = vpop.f32.mrf.mxu0
      %v4776 = vadd.f32 0.0, %v4775
      %4777 = vdwg.mxu0
      %v4778 = vadd.f32 %v4745, %v4774
      %v4779 = vadd.f32 %v4746, %v4776
      %s4780 = scalar_lea.vmem %s5, 80
      %v4781 = vld [vmem:[%s4780] sm:$0xf]
      %v4782 = vld [vmem:[%s4780 + $0x4] sm:$0xf]
      %v4785 = vunpack.c.l.b16 %v4781
      %v4786 = vunpack.c.l.b16 %v4782
      %v4787 = vpack.c.b16 %v4786, %v4785
      %v4789 = vsel %vm4482, %v4787, 0
      %v4792 = vsel %vm3577, %v4466, 0
      %4794 = vmatpush.bf16.msra.mxu0 0
      %4795 = vmatpush.bf16.msra.mxu0 0
      %4796 = vmatpush.bf16.msra.mxu0 0
      %4797 = vmatpush.bf16.msra.mxu0 0
      %4798 = vmatpush.bf16.msra.mxu0 0
      %4799 = vmatpush.bf16.msra.mxu0 0
      %4800 = vmatpush.bf16.msra.mxu0 0
      %4801 = vmatpush.bf16.msra.mxu0 %v4792
      %4802 = vmatmul.bf16.gmra.mxu0 %v4789
      %v4803 = vpop.f32.mrf.mxu0
      %v4804 = vadd.f32 0.0, %v4803
      %v4805 = vpop.f32.mrf.mxu0
      %v4806 = vadd.f32 0.0, %v4805
      %4807 = vdwg.mxu0
      %v4808 = vadd.f32 %v4778, %v4804
      %v4809 = vadd.f32 %v4779, %v4806
      %s4810 = scalar_lea.vmem %s5, 88
      %v4811 = vld [vmem:[%s4810] sm:$0xf]
      %v4812 = vld [vmem:[%s4810 + $0x4] sm:$0xf]
      %v4815 = vunpack.c.l.b16 %v4811
      %v4816 = vunpack.c.l.b16 %v4812
      %v4817 = vpack.c.b16 %v4816, %v4815
      %v4819 = vunpack.c.h.b16 %v4466
      %v4820 = vpack.c.b16 %v4819, %v4819
      %v4822 = vsel %vm4482, %v4817, 0
      %v4825 = vsel %vm3577, %v4820, 0
      %4827 = vmatpush.bf16.msra.mxu0 0
      %4828 = vmatpush.bf16.msra.mxu0 0
      %4829 = vmatpush.bf16.msra.mxu0 0
      %4830 = vmatpush.bf16.msra.mxu0 0
      %4831 = vmatpush.bf16.msra.mxu0 0
      %4832 = vmatpush.bf16.msra.mxu0 0
      %4833 = vmatpush.bf16.msra.mxu0 0
      %4834 = vmatpush.bf16.msra.mxu0 %v4825
      %4835 = vmatmul.bf16.gmra.mxu0 %v4822
      %v4836 = vpop.f32.mrf.mxu0
      %v4837 = vadd.f32 0.0, %v4836
      %v4838 = vpop.f32.mrf.mxu0
      %v4839 = vadd.f32 0.0, %v4838
      %4840 = vdwg.mxu0
      %v4841 = vadd.f32 %v4808, %v4837
      %v4842 = vadd.f32 %v4809, %v4839
      %s4843 = scalar_lea.vmem %s5, 96
      %v4844 = vld [vmem:[%s4843] sm:$0xf]
      %v4845 = vld [vmem:[%s4843 + $0x4] sm:$0xf]
      %v4848 = vunpack.c.l.b16 %v4844
      %v4849 = vunpack.c.l.b16 %v4845
      %v4850 = vpack.c.b16 %v4849, %v4848
      %v4852 = vsel %vm4482, %v4850, 0
      %v4855 = vsel %vm3577, %v4467, 0
      %4857 = vmatpush.bf16.msra.mxu0 0
      %4858 = vmatpush.bf16.msra.mxu0 0
      %4859 = vmatpush.bf16.msra.mxu0 0
      %4860 = vmatpush.bf16.msra.mxu0 0
      %4861 = vmatpush.bf16.msra.mxu0 0
      %4862 = vmatpush.bf16.msra.mxu0 0
      %4863 = vmatpush.bf16.msra.mxu0 0
      %4864 = vmatpush.bf16.msra.mxu0 %v4855
      %4865 = vmatmul.bf16.gmra.mxu0 %v4852
      %v4866 = vpop.f32.mrf.mxu0
      %v4867 = vadd.f32 0.0, %v4866
      %v4868 = vpop.f32.mrf.mxu0
      %v4869 = vadd.f32 0.0, %v4868
      %4870 = vdwg.mxu0
      %v4871 = vadd.f32 %v4841, %v4867
      %v4872 = vadd.f32 %v4842, %v4869
      %s4873 = scalar_lea.vmem %s5, 104
      %v4874 = vld [vmem:[%s4873] sm:$0xf]
      %v4875 = vld [vmem:[%s4873 + $0x4] sm:$0xf]
      %v4878 = vunpack.c.l.b16 %v4874
      %v4879 = vunpack.c.l.b16 %v4875
      %v4880 = vpack.c.b16 %v4879, %v4878
      %v4882 = vunpack.c.h.b16 %v4467
      %v4883 = vpack.c.b16 %v4882, %v4882
      %v4885 = vsel %vm4482, %v4880, 0
      %v4888 = vsel %vm3577, %v4883, 0
      %4890 = vmatpush.bf16.msra.mxu0 0
      %4891 = vmatpush.bf16.msra.mxu0 0
      %4892 = vmatpush.bf16.msra.mxu0 0
      %4893 = vmatpush.bf16.msra.mxu0 0
      %4894 = vmatpush.bf16.msra.mxu0 0
      %4895 = vmatpush.bf16.msra.mxu0 0
      %4896 = vmatpush.bf16.msra.mxu0 0
      %4897 = vmatpush.bf16.msra.mxu0 %v4888
      %4898 = vmatmul.bf16.gmra.mxu0 %v4885
      %v4899 = vpop.f32.mrf.mxu0
      %v4900 = vadd.f32 0.0, %v4899
      %v4901 = vpop.f32.mrf.mxu0
      %v4902 = vadd.f32 0.0, %v4901
      %4903 = vdwg.mxu0
      %v4904 = vadd.f32 %v4871, %v4900
      %v4905 = vadd.f32 %v4872, %v4902
      %s4906 = scalar_lea.vmem %s5, 112
      %v4907 = vld [vmem:[%s4906] sm:$0xf]
      %v4908 = vld [vmem:[%s4906 + $0x4] sm:$0xf]
      %v4911 = vunpack.c.l.b16 %v4907
      %v4912 = vunpack.c.l.b16 %v4908
      %v4913 = vpack.c.b16 %v4912, %v4911
      %v4915 = vsel %vm4482, %v4913, 0
      %v4918 = vsel %vm3577, %v4468, 0
      %4920 = vmatpush.bf16.msra.mxu0 0
      %4921 = vmatpush.bf16.msra.mxu0 0
      %4922 = vmatpush.bf16.msra.mxu0 0
      %4923 = vmatpush.bf16.msra.mxu0 0
      %4924 = vmatpush.bf16.msra.mxu0 0
      %4925 = vmatpush.bf16.msra.mxu0 0
      %4926 = vmatpush.bf16.msra.mxu0 0
      %4927 = vmatpush.bf16.msra.mxu0 %v4918
      %4928 = vmatmul.bf16.gmra.mxu0 %v4915
      %v4929 = vpop.f32.mrf.mxu0
      %v4930 = vadd.f32 0.0, %v4929
      %v4931 = vpop.f32.mrf.mxu0
      %v4932 = vadd.f32 0.0, %v4931
      %4933 = vdwg.mxu0
      %v4934 = vadd.f32 %v4904, %v4930
      %v4935 = vadd.f32 %v4905, %v4932
      %s4936 = scalar_lea.vmem %s5, 120
      %v4937 = vld [vmem:[%s4936] sm:$0xf]
      %v4938 = vld [vmem:[%s4936 + $0x4] sm:$0xf]
      %v4941 = vunpack.c.l.b16 %v4937
      %v4942 = vunpack.c.l.b16 %v4938
      %v4943 = vpack.c.b16 %v4942, %v4941
      %v4945 = vunpack.c.h.b16 %v4468
      %v4946 = vpack.c.b16 %v4945, %v4945
      %v4948 = vsel %vm4482, %v4943, 0
      %v4951 = vsel %vm3577, %v4946, 0
      %4953 = vmatpush.bf16.msra.mxu0 0
      %4954 = vmatpush.bf16.msra.mxu0 0
      %4955 = vmatpush.bf16.msra.mxu0 0
      %4956 = vmatpush.bf16.msra.mxu0 0
      %4957 = vmatpush.bf16.msra.mxu0 0
      %4958 = vmatpush.bf16.msra.mxu0 0
      %4959 = vmatpush.bf16.msra.mxu0 0
      %4960 = vmatpush.bf16.msra.mxu0 %v4951
      %4961 = vmatmul.bf16.gmra.mxu0 %v4948
      %v4962 = vpop.f32.mrf.mxu0
      %v4963 = vadd.f32 0.0, %v4962
      %v4964 = vpop.f32.mrf.mxu0
      %v4965 = vadd.f32 0.0, %v4964
      %4966 = vdwg.mxu0
      %v4967 = vadd.f32 %v4934, %v4963
      %v4968 = vadd.f32 %v4935, %v4965
      %v4969 = vld [vmem:[%s6] sm:$0xff]
      %v4970 = vld [vmem:[%s6 + $0x8] sm:$0xff]
      %4972 = vset.pattern.permute.xlu0 0
      %4973 = vperm.xlu0 %4972, %v4969
      %v4974 = vpop.permute.xlu0 %4973
      %4977 = vset.pattern.permute.xlu0 0
      %4978 = vperm.xlu0 %4977, %v4970
      %v4979 = vpop.permute.xlu0 %4978
      %v4981 = vadd.f32 %v4967, %v4974
      %v4982 = vadd.f32 %v4968, %v4979
      %v4983 = vmax.f32 %v4981, 0.0
      %v4984 = vmax.f32 %v4982, 0.0
      %v4985 = vpack.c.bf16 %v4983, %v4983
      %v4986 = vld [vmem:[%s7] sm:$0xff]
      %v4987 = vld [vmem:[%s7 + $0x8] sm:$0xff]
      %v4988 = vld [vmem:[%s7 + $0x10] sm:$0xff]
      %v4989 = vld [vmem:[%s7 + $0x18] sm:$0xff]
      %v4990 = vld [vmem:[%s7 + $0x20] sm:$0xff]
      %v4991 = vld [vmem:[%s7 + $0x28] sm:$0xff]
      %v4992 = vld [vmem:[%s7 + $0x30] sm:$0xff]
      %v4993 = vld [vmem:[%s7 + $0x38] sm:$0xff]
      %v4994 = vld [vmem:[%s7 + $0x40] sm:$0xff]
      %v4995 = vld [vmem:[%s7 + $0x48] sm:$0xff]
      %v4996 = vld [vmem:[%s7 + $0x50] sm:$0xff]
      %v4997 = vld [vmem:[%s7 + $0x58] sm:$0xff]
      %v4998 = vld [vmem:[%s7 + $0x60] sm:$0xff]
      %v4999 = vld [vmem:[%s7 + $0x68] sm:$0xff]
      %v5000 = vld [vmem:[%s7 + $0x70] sm:$0xff]
      %v5001 = vld [vmem:[%s7 + $0x78] sm:$0xff]
      %s5002 = scalar_lea.vmem %s7, 128
      %v5003 = vld [vmem:[%s5002] sm:$0xff]
      %v5004 = vld [vmem:[%s5002 + $0x8] sm:$0xff]
      %v5005 = vld [vmem:[%s5002 + $0x10] sm:$0xff]
      %v5006 = vld [vmem:[%s5002 + $0x18] sm:$0xff]
      %v5007 = vld [vmem:[%s5002 + $0x20] sm:$0xff]
      %v5008 = vld [vmem:[%s5002 + $0x28] sm:$0xff]
      %v5009 = vld [vmem:[%s5002 + $0x30] sm:$0xff]
      %v5010 = vld [vmem:[%s5002 + $0x38] sm:$0xff]
      %v5011 = vld [vmem:[%s5002 + $0x40] sm:$0xff]
      %v5012 = vld [vmem:[%s5002 + $0x48] sm:$0xff]
      %v5013 = vld [vmem:[%s5002 + $0x50] sm:$0xff]
      %v5014 = vld [vmem:[%s5002 + $0x58] sm:$0xff]
      %v5015 = vld [vmem:[%s5002 + $0x60] sm:$0xff]
      %v5016 = vld [vmem:[%s5002 + $0x68] sm:$0xff]
      %v5017 = vld [vmem:[%s5002 + $0x70] sm:$0xff]
      %v5018 = vld [vmem:[%s5002 + $0x78] sm:$0xff]
      %v5020 = vshrl.u32 %v4985, 16
      %v5039 = vunpack.c.l.b16 %v5003
      %v5040 = vunpack.c.h.b16 %v5003
      %v5041 = vunpack.c.l.b16 %v5004
      %v5042 = vunpack.c.h.b16 %v5004
      %v5043 = vunpack.c.l.b16 %v5005
      %v5044 = vunpack.c.h.b16 %v5005
      %v5045 = vunpack.c.l.b16 %v5006
      %v5046 = vunpack.c.h.b16 %v5006
      %v5047 = vunpack.c.l.b16 %v5007
      %v5048 = vunpack.c.h.b16 %v5007
      %v5049 = vunpack.c.l.b16 %v5008
      %v5050 = vunpack.c.h.b16 %v5008
      %v5051 = vunpack.c.l.b16 %v5009
      %v5052 = vunpack.c.h.b16 %v5009
      %v5053 = vunpack.c.l.b16 %v5010
      %v5054 = vunpack.c.h.b16 %v5010
      %v5055 = vunpack.c.l.b16 %v5011
      %v5056 = vunpack.c.h.b16 %v5011
      %v5057 = vunpack.c.l.b16 %v5012
      %v5058 = vunpack.c.h.b16 %v5012
      %v5059 = vunpack.c.l.b16 %v5013
      %v5060 = vunpack.c.h.b16 %v5013
      %v5061 = vunpack.c.l.b16 %v5014
      %v5062 = vunpack.c.h.b16 %v5014
      %v5063 = vunpack.c.l.b16 %v5015
      %v5064 = vunpack.c.h.b16 %v5015
      %v5065 = vunpack.c.l.b16 %v5016
      %v5066 = vunpack.c.h.b16 %v5016
      %v5067 = vunpack.c.l.b16 %v5017
      %v5068 = vunpack.c.h.b16 %v5017
      %v5069 = vunpack.c.l.b16 %v5018
      %v5070 = vunpack.c.h.b16 %v5018
      %v5071 = vpack.c.b16 %v5041, %v5039
      %v5072 = vpack.c.b16 %v5042, %v5040
      %v5073 = vpack.c.b16 %v5045, %v5043
      %v5074 = vpack.c.b16 %v5046, %v5044
      %v5075 = vpack.c.b16 %v5049, %v5047
      %v5076 = vpack.c.b16 %v5050, %v5048
      %v5077 = vpack.c.b16 %v5053, %v5051
      %v5078 = vpack.c.b16 %v5054, %v5052
      %v5079 = vpack.c.b16 %v5057, %v5055
      %v5080 = vpack.c.b16 %v5058, %v5056
      %v5081 = vpack.c.b16 %v5061, %v5059
      %v5082 = vpack.c.b16 %v5062, %v5060
      %v5083 = vpack.c.b16 %v5065, %v5063
      %v5084 = vpack.c.b16 %v5066, %v5064
      %v5085 = vpack.c.b16 %v5069, %v5067
      %v5086 = vpack.c.b16 %v5070, %v5068
      %5103 = vmatpush.bf16.msra.mxu0 %v5085
      %5104 = vmatpush.bf16.msra.mxu0 %v5083
      %5105 = vmatpush.bf16.msra.mxu0 %v5081
      %5106 = vmatpush.bf16.msra.mxu0 %v5079
      %5107 = vmatpush.bf16.msra.mxu0 %v5077
      %5108 = vmatpush.bf16.msra.mxu0 %v5075
      %5109 = vmatpush.bf16.msra.mxu0 %v5073
      %5110 = vmatpush.bf16.msra.mxu0 %v5071
      %5111 = vmatmul.bf16.gmra.mxu0 %v5020
      %v5112 = vpop.f32.mrf.mxu0
      %v5113 = vadd.f32 0.0, %v5112
      %v5114 = vpop.f32.mrf.mxu0
      %5115 = vdwg.mxu0
      %5116 = vmatpush.bf16.msra.mxu0 %v5086
      %5117 = vmatpush.bf16.msra.mxu0 %v5084
      %5118 = vmatpush.bf16.msra.mxu0 %v5082
      %5119 = vmatpush.bf16.msra.mxu0 %v5080
      %5120 = vmatpush.bf16.msra.mxu0 %v5078
      %5121 = vmatpush.bf16.msra.mxu0 %v5076
      %5122 = vmatpush.bf16.msra.mxu0 %v5074
      %5123 = vmatpush.bf16.msra.mxu0 %v5072
      %5124 = vmatmul.bf16.gmra.mxu0 %v5020
      %v5125 = vpop.f32.mrf.mxu0
      %v5126 = vadd.f32 0.0, %v5125
      %v5127 = vpop.f32.mrf.mxu0
      %5128 = vdwg.mxu0
      %v5145 = vunpack.c.l.b16 %v4986
      %v5146 = vunpack.c.h.b16 %v4986
      %v5147 = vunpack.c.l.b16 %v4987
      %v5148 = vunpack.c.h.b16 %v4987
      %v5149 = vunpack.c.l.b16 %v4988
      %v5150 = vunpack.c.h.b16 %v4988
      %v5151 = vunpack.c.l.b16 %v4989
      %v5152 = vunpack.c.h.b16 %v4989
      %v5153 = vunpack.c.l.b16 %v4990
      %v5154 = vunpack.c.h.b16 %v4990
      %v5155 = vunpack.c.l.b16 %v4991
      %v5156 = vunpack.c.h.b16 %v4991
      %v5157 = vunpack.c.l.b16 %v4992
      %v5158 = vunpack.c.h.b16 %v4992
      %v5159 = vunpack.c.l.b16 %v4993
      %v5160 = vunpack.c.h.b16 %v4993
      %v5161 = vunpack.c.l.b16 %v4994
      %v5162 = vunpack.c.h.b16 %v4994
      %v5163 = vunpack.c.l.b16 %v4995
      %v5164 = vunpack.c.h.b16 %v4995
      %v5165 = vunpack.c.l.b16 %v4996
      %v5166 = vunpack.c.h.b16 %v4996
      %v5167 = vunpack.c.l.b16 %v4997
      %v5168 = vunpack.c.h.b16 %v4997
      %v5169 = vunpack.c.l.b16 %v4998
      %v5170 = vunpack.c.h.b16 %v4998
      %v5171 = vunpack.c.l.b16 %v4999
      %v5172 = vunpack.c.h.b16 %v4999
      %v5173 = vunpack.c.l.b16 %v5000
      %v5174 = vunpack.c.h.b16 %v5000
      %v5175 = vunpack.c.l.b16 %v5001
      %v5176 = vunpack.c.h.b16 %v5001
      %v5177 = vpack.c.b16 %v5147, %v5145
      %v5178 = vpack.c.b16 %v5148, %v5146
      %v5179 = vpack.c.b16 %v5151, %v5149
      %v5180 = vpack.c.b16 %v5152, %v5150
      %v5181 = vpack.c.b16 %v5155, %v5153
      %v5182 = vpack.c.b16 %v5156, %v5154
      %v5183 = vpack.c.b16 %v5159, %v5157
      %v5184 = vpack.c.b16 %v5160, %v5158
      %v5185 = vpack.c.b16 %v5163, %v5161
      %v5186 = vpack.c.b16 %v5164, %v5162
      %v5187 = vpack.c.b16 %v5167, %v5165
      %v5188 = vpack.c.b16 %v5168, %v5166
      %v5189 = vpack.c.b16 %v5171, %v5169
      %v5190 = vpack.c.b16 %v5172, %v5170
      %v5191 = vpack.c.b16 %v5175, %v5173
      %v5192 = vpack.c.b16 %v5176, %v5174
      %5209 = vmatpush.bf16.msra.mxu0 %v5191
      %5210 = vmatpush.bf16.msra.mxu0 %v5189
      %5211 = vmatpush.bf16.msra.mxu0 %v5187
      %5212 = vmatpush.bf16.msra.mxu0 %v5185
      %5213 = vmatpush.bf16.msra.mxu0 %v5183
      %5214 = vmatpush.bf16.msra.mxu0 %v5181
      %5215 = vmatpush.bf16.msra.mxu0 %v5179
      %5216 = vmatpush.bf16.msra.mxu0 %v5177
      %5217 = vmatmul.bf16.gmra.mxu0 %v4985
      %v5218 = vpop.f32.mrf.mxu0
      %v5219 = vadd.f32 %v5113, %v5218
      %v5220 = vpop.f32.mrf.mxu0
      %5221 = vdwg.mxu0
      %5222 = vmatpush.bf16.msra.mxu0 %v5192
      %5223 = vmatpush.bf16.msra.mxu0 %v5190
      %5224 = vmatpush.bf16.msra.mxu0 %v5188
      %5225 = vmatpush.bf16.msra.mxu0 %v5186
      %5226 = vmatpush.bf16.msra.mxu0 %v5184
      %5227 = vmatpush.bf16.msra.mxu0 %v5182
      %5228 = vmatpush.bf16.msra.mxu0 %v5180
      %5229 = vmatpush.bf16.msra.mxu0 %v5178
      %5230 = vmatmul.bf16.gmra.mxu0 %v4985
      %v5231 = vpop.f32.mrf.mxu0
      %v5232 = vadd.f32 %v5126, %v5231
      %v5233 = vpop.f32.mrf.mxu0
      %5234 = vdwg.mxu0
      %s5235 = scalar_lea.vmem %s7, 256
      %v5236 = vld [vmem:[%s5235] sm:$0xff]
      %v5237 = vld [vmem:[%s5235 + $0x8] sm:$0xff]
      %v5238 = vld [vmem:[%s5235 + $0x10] sm:$0xff]
      %v5239 = vld [vmem:[%s5235 + $0x18] sm:$0xff]
      %v5240 = vld [vmem:[%s5235 + $0x20] sm:$0xff]
      %v5241 = vld [vmem:[%s5235 + $0x28] sm:$0xff]
      %v5242 = vld [vmem:[%s5235 + $0x30] sm:$0xff]
      %v5243 = vld [vmem:[%s5235 + $0x38] sm:$0xff]
      %v5244 = vld [vmem:[%s5235 + $0x40] sm:$0xff]
      %v5245 = vld [vmem:[%s5235 + $0x48] sm:$0xff]
      %v5246 = vld [vmem:[%s5235 + $0x50] sm:$0xff]
      %v5247 = vld [vmem:[%s5235 + $0x58] sm:$0xff]
      %v5248 = vld [vmem:[%s5235 + $0x60] sm:$0xff]
      %v5249 = vld [vmem:[%s5235 + $0x68] sm:$0xff]
      %v5250 = vld [vmem:[%s5235 + $0x70] sm:$0xff]
      %v5251 = vld [vmem:[%s5235 + $0x78] sm:$0xff]
      %v5253 = vrot.slane %v4985, 1
      %v5271 = vunpack.c.l.b16 %v5236
      %v5272 = vunpack.c.h.b16 %v5236
      %v5273 = vunpack.c.l.b16 %v5237
      %v5274 = vunpack.c.h.b16 %v5237
      %v5275 = vunpack.c.l.b16 %v5238
      %v5276 = vunpack.c.h.b16 %v5238
      %v5277 = vunpack.c.l.b16 %v5239
      %v5278 = vunpack.c.h.b16 %v5239
      %v5279 = vunpack.c.l.b16 %v5240
      %v5280 = vunpack.c.h.b16 %v5240
      %v5281 = vunpack.c.l.b16 %v5241
      %v5282 = vunpack.c.h.b16 %v5241
      %v5283 = vunpack.c.l.b16 %v5242
      %v5284 = vunpack.c.h.b16 %v5242
      %v5285 = vunpack.c.l.b16 %v5243
      %v5286 = vunpack.c.h.b16 %v5243
      %v5287 = vunpack.c.l.b16 %v5244
      %v5288 = vunpack.c.h.b16 %v5244
      %v5289 = vunpack.c.l.b16 %v5245
      %v5290 = vunpack.c.h.b16 %v5245
      %v5291 = vunpack.c.l.b16 %v5246
      %v5292 = vunpack.c.h.b16 %v5246
      %v5293 = vunpack.c.l.b16 %v5247
      %v5294 = vunpack.c.h.b16 %v5247
      %v5295 = vunpack.c.l.b16 %v5248
      %v5296 = vunpack.c.h.b16 %v5248
      %v5297 = vunpack.c.l.b16 %v5249
      %v5298 = vunpack.c.h.b16 %v5249
      %v5299 = vunpack.c.l.b16 %v5250
      %v5300 = vunpack.c.h.b16 %v5250
      %v5301 = vunpack.c.l.b16 %v5251
      %v5302 = vunpack.c.h.b16 %v5251
      %v5303 = vpack.c.b16 %v5273, %v5271
      %v5304 = vpack.c.b16 %v5274, %v5272
      %v5305 = vpack.c.b16 %v5277, %v5275
      %v5306 = vpack.c.b16 %v5278, %v5276
      %v5307 = vpack.c.b16 %v5281, %v5279
      %v5308 = vpack.c.b16 %v5282, %v5280
      %v5309 = vpack.c.b16 %v5285, %v5283
      %v5310 = vpack.c.b16 %v5286, %v5284
      %v5311 = vpack.c.b16 %v5289, %v5287
      %v5312 = vpack.c.b16 %v5290, %v5288
      %v5313 = vpack.c.b16 %v5293, %v5291
      %v5314 = vpack.c.b16 %v5294, %v5292
      %v5315 = vpack.c.b16 %v5297, %v5295
      %v5316 = vpack.c.b16 %v5298, %v5296
      %v5317 = vpack.c.b16 %v5301, %v5299
      %v5318 = vpack.c.b16 %v5302, %v5300
      %5335 = vmatpush.bf16.msra.mxu0 %v5317
      %5336 = vmatpush.bf16.msra.mxu0 %v5315
      %5337 = vmatpush.bf16.msra.mxu0 %v5313
      %5338 = vmatpush.bf16.msra.mxu0 %v5311
      %5339 = vmatpush.bf16.msra.mxu0 %v5309
      %5340 = vmatpush.bf16.msra.mxu0 %v5307
      %5341 = vmatpush.bf16.msra.mxu0 %v5305
      %5342 = vmatpush.bf16.msra.mxu0 %v5303
      %5343 = vmatmul.bf16.gmra.mxu0 %v5253
      %v5344 = vpop.f32.mrf.mxu0
      %v5345 = vadd.f32 0.0, %v5344
      %v5346 = vpop.f32.mrf.mxu0
      %5347 = vdwg.mxu0
      %5348 = vmatpush.bf16.msra.mxu0 %v5318
      %5349 = vmatpush.bf16.msra.mxu0 %v5316
      %5350 = vmatpush.bf16.msra.mxu0 %v5314
      %5351 = vmatpush.bf16.msra.mxu0 %v5312
      %5352 = vmatpush.bf16.msra.mxu0 %v5310
      %5353 = vmatpush.bf16.msra.mxu0 %v5308
      %5354 = vmatpush.bf16.msra.mxu0 %v5306
      %5355 = vmatpush.bf16.msra.mxu0 %v5304
      %5356 = vmatmul.bf16.gmra.mxu0 %v5253
      %v5357 = vpop.f32.mrf.mxu0
      %v5358 = vadd.f32 0.0, %v5357
      %v5359 = vpop.f32.mrf.mxu0
      %5360 = vdwg.mxu0
      %v5361 = vadd.f32 %v5219, %v5345
      %v5362 = vadd.f32 %v5232, %v5358
      %s5363 = scalar_lea.vmem %s7, 384
      %v5364 = vld [vmem:[%s5363] sm:$0xff]
      %v5365 = vld [vmem:[%s5363 + $0x8] sm:$0xff]
      %v5366 = vld [vmem:[%s5363 + $0x10] sm:$0xff]
      %v5367 = vld [vmem:[%s5363 + $0x18] sm:$0xff]
      %v5368 = vld [vmem:[%s5363 + $0x20] sm:$0xff]
      %v5369 = vld [vmem:[%s5363 + $0x28] sm:$0xff]
      %v5370 = vld [vmem:[%s5363 + $0x30] sm:$0xff]
      %v5371 = vld [vmem:[%s5363 + $0x38] sm:$0xff]
      %v5372 = vld [vmem:[%s5363 + $0x40] sm:$0xff]
      %v5373 = vld [vmem:[%s5363 + $0x48] sm:$0xff]
      %v5374 = vld [vmem:[%s5363 + $0x50] sm:$0xff]
      %v5375 = vld [vmem:[%s5363 + $0x58] sm:$0xff]
      %v5376 = vld [vmem:[%s5363 + $0x60] sm:$0xff]
      %v5377 = vld [vmem:[%s5363 + $0x68] sm:$0xff]
      %v5378 = vld [vmem:[%s5363 + $0x70] sm:$0xff]
      %v5379 = vld [vmem:[%s5363 + $0x78] sm:$0xff]
      %v5380 = vrot.slane %v5020, 1
      %v5398 = vunpack.c.l.b16 %v5364
      %v5399 = vunpack.c.h.b16 %v5364
      %v5400 = vunpack.c.l.b16 %v5365
      %v5401 = vunpack.c.h.b16 %v5365
      %v5402 = vunpack.c.l.b16 %v5366
      %v5403 = vunpack.c.h.b16 %v5366
      %v5404 = vunpack.c.l.b16 %v5367
      %v5405 = vunpack.c.h.b16 %v5367
      %v5406 = vunpack.c.l.b16 %v5368
      %v5407 = vunpack.c.h.b16 %v5368
      %v5408 = vunpack.c.l.b16 %v5369
      %v5409 = vunpack.c.h.b16 %v5369
      %v5410 = vunpack.c.l.b16 %v5370
      %v5411 = vunpack.c.h.b16 %v5370
      %v5412 = vunpack.c.l.b16 %v5371
      %v5413 = vunpack.c.h.b16 %v5371
      %v5414 = vunpack.c.l.b16 %v5372
      %v5415 = vunpack.c.h.b16 %v5372
      %v5416 = vunpack.c.l.b16 %v5373
      %v5417 = vunpack.c.h.b16 %v5373
      %v5418 = vunpack.c.l.b16 %v5374
      %v5419 = vunpack.c.h.b16 %v5374
      %v5420 = vunpack.c.l.b16 %v5375
      %v5421 = vunpack.c.h.b16 %v5375
      %v5422 = vunpack.c.l.b16 %v5376
      %v5423 = vunpack.c.h.b16 %v5376
      %v5424 = vunpack.c.l.b16 %v5377
      %v5425 = vunpack.c.h.b16 %v5377
      %v5426 = vunpack.c.l.b16 %v5378
      %v5427 = vunpack.c.h.b16 %v5378
      %v5428 = vunpack.c.l.b16 %v5379
      %v5429 = vunpack.c.h.b16 %v5379
      %v5430 = vpack.c.b16 %v5400, %v5398
      %v5431 = vpack.c.b16 %v5401, %v5399
      %v5432 = vpack.c.b16 %v5404, %v5402
      %v5433 = vpack.c.b16 %v5405, %v5403
      %v5434 = vpack.c.b16 %v5408, %v5406
      %v5435 = vpack.c.b16 %v5409, %v5407
      %v5436 = vpack.c.b16 %v5412, %v5410
      %v5437 = vpack.c.b16 %v5413, %v5411
      %v5438 = vpack.c.b16 %v5416, %v5414
      %v5439 = vpack.c.b16 %v5417, %v5415
      %v5440 = vpack.c.b16 %v5420, %v5418
      %v5441 = vpack.c.b16 %v5421, %v5419
      %v5442 = vpack.c.b16 %v5424, %v5422
      %v5443 = vpack.c.b16 %v5425, %v5423
      %v5444 = vpack.c.b16 %v5428, %v5426
      %v5445 = vpack.c.b16 %v5429, %v5427
      %5462 = vmatpush.bf16.msra.mxu0 %v5444
      %5463 = vmatpush.bf16.msra.mxu0 %v5442
      %5464 = vmatpush.bf16.msra.mxu0 %v5440
      %5465 = vmatpush.bf16.msra.mxu0 %v5438
      %5466 = vmatpush.bf16.msra.mxu0 %v5436
      %5467 = vmatpush.bf16.msra.mxu0 %v5434
      %5468 = vmatpush.bf16.msra.mxu0 %v5432
      %5469 = vmatpush.bf16.msra.mxu0 %v5430
      %5470 = vmatmul.bf16.gmra.mxu0 %v5380
      %v5471 = vpop.f32.mrf.mxu0
      %v5472 = vadd.f32 0.0, %v5471
      %v5473 = vpop.f32.mrf.mxu0
      %5474 = vdwg.mxu0
      %5475 = vmatpush.bf16.msra.mxu0 %v5445
      %5476 = vmatpush.bf16.msra.mxu0 %v5443
      %5477 = vmatpush.bf16.msra.mxu0 %v5441
      %5478 = vmatpush.bf16.msra.mxu0 %v5439
      %5479 = vmatpush.bf16.msra.mxu0 %v5437
      %5480 = vmatpush.bf16.msra.mxu0 %v5435
      %5481 = vmatpush.bf16.msra.mxu0 %v5433
      %5482 = vmatpush.bf16.msra.mxu0 %v5431
      %5483 = vmatmul.bf16.gmra.mxu0 %v5380
      %v5484 = vpop.f32.mrf.mxu0
      %v5485 = vadd.f32 0.0, %v5484
      %v5486 = vpop.f32.mrf.mxu0
      %5487 = vdwg.mxu0
      %v5488 = vadd.f32 %v5361, %v5472
      %v5489 = vadd.f32 %v5362, %v5485
      %s5490 = scalar_lea.vmem %s7, 512
      %v5491 = vld [vmem:[%s5490] sm:$0xff]
      %v5492 = vld [vmem:[%s5490 + $0x8] sm:$0xff]
      %v5493 = vld [vmem:[%s5490 + $0x10] sm:$0xff]
      %v5494 = vld [vmem:[%s5490 + $0x18] sm:$0xff]
      %v5495 = vld [vmem:[%s5490 + $0x20] sm:$0xff]
      %v5496 = vld [vmem:[%s5490 + $0x28] sm:$0xff]
      %v5497 = vld [vmem:[%s5490 + $0x30] sm:$0xff]
      %v5498 = vld [vmem:[%s5490 + $0x38] sm:$0xff]
      %v5499 = vld [vmem:[%s5490 + $0x40] sm:$0xff]
      %v5500 = vld [vmem:[%s5490 + $0x48] sm:$0xff]
      %v5501 = vld [vmem:[%s5490 + $0x50] sm:$0xff]
      %v5502 = vld [vmem:[%s5490 + $0x58] sm:$0xff]
      %v5503 = vld [vmem:[%s5490 + $0x60] sm:$0xff]
      %v5504 = vld [vmem:[%s5490 + $0x68] sm:$0xff]
      %v5505 = vld [vmem:[%s5490 + $0x70] sm:$0xff]
      %v5506 = vld [vmem:[%s5490 + $0x78] sm:$0xff]
      %v5507 = vrot.slane %v4985, 2
      %v5525 = vunpack.c.l.b16 %v5491
      %v5526 = vunpack.c.h.b16 %v5491
      %v5527 = vunpack.c.l.b16 %v5492
      %v5528 = vunpack.c.h.b16 %v5492
      %v5529 = vunpack.c.l.b16 %v5493
      %v5530 = vunpack.c.h.b16 %v5493
      %v5531 = vunpack.c.l.b16 %v5494
      %v5532 = vunpack.c.h.b16 %v5494
      %v5533 = vunpack.c.l.b16 %v5495
      %v5534 = vunpack.c.h.b16 %v5495
      %v5535 = vunpack.c.l.b16 %v5496
      %v5536 = vunpack.c.h.b16 %v5496
      %v5537 = vunpack.c.l.b16 %v5497
      %v5538 = vunpack.c.h.b16 %v5497
      %v5539 = vunpack.c.l.b16 %v5498
      %v5540 = vunpack.c.h.b16 %v5498
      %v5541 = vunpack.c.l.b16 %v5499
      %v5542 = vunpack.c.h.b16 %v5499
      %v5543 = vunpack.c.l.b16 %v5500
      %v5544 = vunpack.c.h.b16 %v5500
      %v5545 = vunpack.c.l.b16 %v5501
      %v5546 = vunpack.c.h.b16 %v5501
      %v5547 = vunpack.c.l.b16 %v5502
      %v5548 = vunpack.c.h.b16 %v5502
      %v5549 = vunpack.c.l.b16 %v5503
      %v5550 = vunpack.c.h.b16 %v5503
      %v5551 = vunpack.c.l.b16 %v5504
      %v5552 = vunpack.c.h.b16 %v5504
      %v5553 = vunpack.c.l.b16 %v5505
      %v5554 = vunpack.c.h.b16 %v5505
      %v5555 = vunpack.c.l.b16 %v5506
      %v5556 = vunpack.c.h.b16 %v5506
      %v5557 = vpack.c.b16 %v5527, %v5525
      %v5558 = vpack.c.b16 %v5528, %v5526
      %v5559 = vpack.c.b16 %v5531, %v5529
      %v5560 = vpack.c.b16 %v5532, %v5530
      %v5561 = vpack.c.b16 %v5535, %v5533
      %v5562 = vpack.c.b16 %v5536, %v5534
      %v5563 = vpack.c.b16 %v5539, %v5537
      %v5564 = vpack.c.b16 %v5540, %v5538
      %v5565 = vpack.c.b16 %v5543, %v5541
      %v5566 = vpack.c.b16 %v5544, %v5542
      %v5567 = vpack.c.b16 %v5547, %v5545
      %v5568 = vpack.c.b16 %v5548, %v5546
      %v5569 = vpack.c.b16 %v5551, %v5549
      %v5570 = vpack.c.b16 %v5552, %v5550
      %v5571 = vpack.c.b16 %v5555, %v5553
      %v5572 = vpack.c.b16 %v5556, %v5554
      %5589 = vmatpush.bf16.msra.mxu0 %v5571
      %5590 = vmatpush.bf16.msra.mxu0 %v5569
      %5591 = vmatpush.bf16.msra.mxu0 %v5567
      %5592 = vmatpush.bf16.msra.mxu0 %v5565
      %5593 = vmatpush.bf16.msra.mxu0 %v5563
      %5594 = vmatpush.bf16.msra.mxu0 %v5561
      %5595 = vmatpush.bf16.msra.mxu0 %v5559
      %5596 = vmatpush.bf16.msra.mxu0 %v5557
      %5597 = vmatmul.bf16.gmra.mxu0 %v5507
      %v5598 = vpop.f32.mrf.mxu0
      %v5599 = vadd.f32 0.0, %v5598
      %v5600 = vpop.f32.mrf.mxu0
      %5601 = vdwg.mxu0
      %5602 = vmatpush.bf16.msra.mxu0 %v5572
      %5603 = vmatpush.bf16.msra.mxu0 %v5570
      %5604 = vmatpush.bf16.msra.mxu0 %v5568
      %5605 = vmatpush.bf16.msra.mxu0 %v5566
      %5606 = vmatpush.bf16.msra.mxu0 %v5564
      %5607 = vmatpush.bf16.msra.mxu0 %v5562
      %5608 = vmatpush.bf16.msra.mxu0 %v5560
      %5609 = vmatpush.bf16.msra.mxu0 %v5558
      %5610 = vmatmul.bf16.gmra.mxu0 %v5507
      %v5611 = vpop.f32.mrf.mxu0
      %v5612 = vadd.f32 0.0, %v5611
      %v5613 = vpop.f32.mrf.mxu0
      %5614 = vdwg.mxu0
      %v5615 = vadd.f32 %v5488, %v5599
      %v5616 = vadd.f32 %v5489, %v5612
      %s5617 = scalar_lea.vmem %s7, 640
      %v5618 = vld [vmem:[%s5617] sm:$0xff]
      %v5619 = vld [vmem:[%s5617 + $0x8] sm:$0xff]
      %v5620 = vld [vmem:[%s5617 + $0x10] sm:$0xff]
      %v5621 = vld [vmem:[%s5617 + $0x18] sm:$0xff]
      %v5622 = vld [vmem:[%s5617 + $0x20] sm:$0xff]
      %v5623 = vld [vmem:[%s5617 + $0x28] sm:$0xff]
      %v5624 = vld [vmem:[%s5617 + $0x30] sm:$0xff]
      %v5625 = vld [vmem:[%s5617 + $0x38] sm:$0xff]
      %v5626 = vld [vmem:[%s5617 + $0x40] sm:$0xff]
      %v5627 = vld [vmem:[%s5617 + $0x48] sm:$0xff]
      %v5628 = vld [vmem:[%s5617 + $0x50] sm:$0xff]
      %v5629 = vld [vmem:[%s5617 + $0x58] sm:$0xff]
      %v5630 = vld [vmem:[%s5617 + $0x60] sm:$0xff]
      %v5631 = vld [vmem:[%s5617 + $0x68] sm:$0xff]
      %v5632 = vld [vmem:[%s5617 + $0x70] sm:$0xff]
      %v5633 = vld [vmem:[%s5617 + $0x78] sm:$0xff]
      %v5634 = vrot.slane %v5020, 2
      %v5652 = vunpack.c.l.b16 %v5618
      %v5653 = vunpack.c.h.b16 %v5618
      %v5654 = vunpack.c.l.b16 %v5619
      %v5655 = vunpack.c.h.b16 %v5619
      %v5656 = vunpack.c.l.b16 %v5620
      %v5657 = vunpack.c.h.b16 %v5620
      %v5658 = vunpack.c.l.b16 %v5621
      %v5659 = vunpack.c.h.b16 %v5621
      %v5660 = vunpack.c.l.b16 %v5622
      %v5661 = vunpack.c.h.b16 %v5622
      %v5662 = vunpack.c.l.b16 %v5623
      %v5663 = vunpack.c.h.b16 %v5623
      %v5664 = vunpack.c.l.b16 %v5624
      %v5665 = vunpack.c.h.b16 %v5624
      %v5666 = vunpack.c.l.b16 %v5625
      %v5667 = vunpack.c.h.b16 %v5625
      %v5668 = vunpack.c.l.b16 %v5626
      %v5669 = vunpack.c.h.b16 %v5626
      %v5670 = vunpack.c.l.b16 %v5627
      %v5671 = vunpack.c.h.b16 %v5627
      %v5672 = vunpack.c.l.b16 %v5628
      %v5673 = vunpack.c.h.b16 %v5628
      %v5674 = vunpack.c.l.b16 %v5629
      %v5675 = vunpack.c.h.b16 %v5629
      %v5676 = vunpack.c.l.b16 %v5630
      %v5677 = vunpack.c.h.b16 %v5630
      %v5678 = vunpack.c.l.b16 %v5631
      %v5679 = vunpack.c.h.b16 %v5631
      %v5680 = vunpack.c.l.b16 %v5632
      %v5681 = vunpack.c.h.b16 %v5632
      %v5682 = vunpack.c.l.b16 %v5633
      %v5683 = vunpack.c.h.b16 %v5633
      %v5684 = vpack.c.b16 %v5654, %v5652
      %v5685 = vpack.c.b16 %v5655, %v5653
      %v5686 = vpack.c.b16 %v5658, %v5656
      %v5687 = vpack.c.b16 %v5659, %v5657
      %v5688 = vpack.c.b16 %v5662, %v5660
      %v5689 = vpack.c.b16 %v5663, %v5661
      %v5690 = vpack.c.b16 %v5666, %v5664
      %v5691 = vpack.c.b16 %v5667, %v5665
      %v5692 = vpack.c.b16 %v5670, %v5668
      %v5693 = vpack.c.b16 %v5671, %v5669
      %v5694 = vpack.c.b16 %v5674, %v5672
      %v5695 = vpack.c.b16 %v5675, %v5673
      %v5696 = vpack.c.b16 %v5678, %v5676
      %v5697 = vpack.c.b16 %v5679, %v5677
      %v5698 = vpack.c.b16 %v5682, %v5680
      %v5699 = vpack.c.b16 %v5683, %v5681
      %5716 = vmatpush.bf16.msra.mxu0 %v5698
      %5717 = vmatpush.bf16.msra.mxu0 %v5696
      %5718 = vmatpush.bf16.msra.mxu0 %v5694
      %5719 = vmatpush.bf16.msra.mxu0 %v5692
      %5720 = vmatpush.bf16.msra.mxu0 %v5690
      %5721 = vmatpush.bf16.msra.mxu0 %v5688
      %5722 = vmatpush.bf16.msra.mxu0 %v5686
      %5723 = vmatpush.bf16.msra.mxu0 %v5684
      %5724 = vmatmul.bf16.gmra.mxu0 %v5634
      %v5725 = vpop.f32.mrf.mxu0
      %v5726 = vadd.f32 0.0, %v5725
      %v5727 = vpop.f32.mrf.mxu0
      %5728 = vdwg.mxu0
      %5729 = vmatpush.bf16.msra.mxu0 %v5699
      %5730 = vmatpush.bf16.msra.mxu0 %v5697
      %5731 = vmatpush.bf16.msra.mxu0 %v5695
      %5732 = vmatpush.bf16.msra.mxu0 %v5693
      %5733 = vmatpush.bf16.msra.mxu0 %v5691
      %5734 = vmatpush.bf16.msra.mxu0 %v5689
      %5735 = vmatpush.bf16.msra.mxu0 %v5687
      %5736 = vmatpush.bf16.msra.mxu0 %v5685
      %5737 = vmatmul.bf16.gmra.mxu0 %v5634
      %v5738 = vpop.f32.mrf.mxu0
      %v5739 = vadd.f32 0.0, %v5738
      %v5740 = vpop.f32.mrf.mxu0
      %5741 = vdwg.mxu0
      %v5742 = vadd.f32 %v5615, %v5726
      %v5743 = vadd.f32 %v5616, %v5739
      %s5744 = scalar_lea.vmem %s7, 768
      %v5745 = vld [vmem:[%s5744] sm:$0xff]
      %v5746 = vld [vmem:[%s5744 + $0x8] sm:$0xff]
      %v5747 = vld [vmem:[%s5744 + $0x10] sm:$0xff]
      %v5748 = vld [vmem:[%s5744 + $0x18] sm:$0xff]
      %v5749 = vld [vmem:[%s5744 + $0x20] sm:$0xff]
      %v5750 = vld [vmem:[%s5744 + $0x28] sm:$0xff]
      %v5751 = vld [vmem:[%s5744 + $0x30] sm:$0xff]
      %v5752 = vld [vmem:[%s5744 + $0x38] sm:$0xff]
      %v5753 = vld [vmem:[%s5744 + $0x40] sm:$0xff]
      %v5754 = vld [vmem:[%s5744 + $0x48] sm:$0xff]
      %v5755 = vld [vmem:[%s5744 + $0x50] sm:$0xff]
      %v5756 = vld [vmem:[%s5744 + $0x58] sm:$0xff]
      %v5757 = vld [vmem:[%s5744 + $0x60] sm:$0xff]
      %v5758 = vld [vmem:[%s5744 + $0x68] sm:$0xff]
      %v5759 = vld [vmem:[%s5744 + $0x70] sm:$0xff]
      %v5760 = vld [vmem:[%s5744 + $0x78] sm:$0xff]
      %v5761 = vrot.slane %v4985, 3
      %v5779 = vunpack.c.l.b16 %v5745
      %v5780 = vunpack.c.h.b16 %v5745
      %v5781 = vunpack.c.l.b16 %v5746
      %v5782 = vunpack.c.h.b16 %v5746
      %v5783 = vunpack.c.l.b16 %v5747
      %v5784 = vunpack.c.h.b16 %v5747
      %v5785 = vunpack.c.l.b16 %v5748
      %v5786 = vunpack.c.h.b16 %v5748
      %v5787 = vunpack.c.l.b16 %v5749
      %v5788 = vunpack.c.h.b16 %v5749
      %v5789 = vunpack.c.l.b16 %v5750
      %v5790 = vunpack.c.h.b16 %v5750
      %v5791 = vunpack.c.l.b16 %v5751
      %v5792 = vunpack.c.h.b16 %v5751
      %v5793 = vunpack.c.l.b16 %v5752
      %v5794 = vunpack.c.h.b16 %v5752
      %v5795 = vunpack.c.l.b16 %v5753
      %v5796 = vunpack.c.h.b16 %v5753
      %v5797 = vunpack.c.l.b16 %v5754
      %v5798 = vunpack.c.h.b16 %v5754
      %v5799 = vunpack.c.l.b16 %v5755
      %v5800 = vunpack.c.h.b16 %v5755
      %v5801 = vunpack.c.l.b16 %v5756
      %v5802 = vunpack.c.h.b16 %v5756
      %v5803 = vunpack.c.l.b16 %v5757
      %v5804 = vunpack.c.h.b16 %v5757
      %v5805 = vunpack.c.l.b16 %v5758
      %v5806 = vunpack.c.h.b16 %v5758
      %v5807 = vunpack.c.l.b16 %v5759
      %v5808 = vunpack.c.h.b16 %v5759
      %v5809 = vunpack.c.l.b16 %v5760
      %v5810 = vunpack.c.h.b16 %v5760
      %v5811 = vpack.c.b16 %v5781, %v5779
      %v5812 = vpack.c.b16 %v5782, %v5780
      %v5813 = vpack.c.b16 %v5785, %v5783
      %v5814 = vpack.c.b16 %v5786, %v5784
      %v5815 = vpack.c.b16 %v5789, %v5787
      %v5816 = vpack.c.b16 %v5790, %v5788
      %v5817 = vpack.c.b16 %v5793, %v5791
      %v5818 = vpack.c.b16 %v5794, %v5792
      %v5819 = vpack.c.b16 %v5797, %v5795
      %v5820 = vpack.c.b16 %v5798, %v5796
      %v5821 = vpack.c.b16 %v5801, %v5799
      %v5822 = vpack.c.b16 %v5802, %v5800
      %v5823 = vpack.c.b16 %v5805, %v5803
      %v5824 = vpack.c.b16 %v5806, %v5804
      %v5825 = vpack.c.b16 %v5809, %v5807
      %v5826 = vpack.c.b16 %v5810, %v5808
      %5843 = vmatpush.bf16.msra.mxu0 %v5825
      %5844 = vmatpush.bf16.msra.mxu0 %v5823
      %5845 = vmatpush.bf16.msra.mxu0 %v5821
      %5846 = vmatpush.bf16.msra.mxu0 %v5819
      %5847 = vmatpush.bf16.msra.mxu0 %v5817
      %5848 = vmatpush.bf16.msra.mxu0 %v5815
      %5849 = vmatpush.bf16.msra.mxu0 %v5813
      %5850 = vmatpush.bf16.msra.mxu0 %v5811
      %5851 = vmatmul.bf16.gmra.mxu0 %v5761
      %v5852 = vpop.f32.mrf.mxu0
      %v5853 = vadd.f32 0.0, %v5852
      %v5854 = vpop.f32.mrf.mxu0
      %5855 = vdwg.mxu0
      %5856 = vmatpush.bf16.msra.mxu0 %v5826
      %5857 = vmatpush.bf16.msra.mxu0 %v5824
      %5858 = vmatpush.bf16.msra.mxu0 %v5822
      %5859 = vmatpush.bf16.msra.mxu0 %v5820
      %5860 = vmatpush.bf16.msra.mxu0 %v5818
      %5861 = vmatpush.bf16.msra.mxu0 %v5816
      %5862 = vmatpush.bf16.msra.mxu0 %v5814
      %5863 = vmatpush.bf16.msra.mxu0 %v5812
      %5864 = vmatmul.bf16.gmra.mxu0 %v5761
      %v5865 = vpop.f32.mrf.mxu0
      %v5866 = vadd.f32 0.0, %v5865
      %v5867 = vpop.f32.mrf.mxu0
      %5868 = vdwg.mxu0
      %v5869 = vadd.f32 %v5742, %v5853
      %v5870 = vadd.f32 %v5743, %v5866
      %s5871 = scalar_lea.vmem %s7, 896
      %v5872 = vld [vmem:[%s5871] sm:$0xff]
      %v5873 = vld [vmem:[%s5871 + $0x8] sm:$0xff]
      %v5874 = vld [vmem:[%s5871 + $0x10] sm:$0xff]
      %v5875 = vld [vmem:[%s5871 + $0x18] sm:$0xff]
      %v5876 = vld [vmem:[%s5871 + $0x20] sm:$0xff]
      %v5877 = vld [vmem:[%s5871 + $0x28] sm:$0xff]
      %v5878 = vld [vmem:[%s5871 + $0x30] sm:$0xff]
      %v5879 = vld [vmem:[%s5871 + $0x38] sm:$0xff]
      %v5880 = vld [vmem:[%s5871 + $0x40] sm:$0xff]
      %v5881 = vld [vmem:[%s5871 + $0x48] sm:$0xff]
      %v5882 = vld [vmem:[%s5871 + $0x50] sm:$0xff]
      %v5883 = vld [vmem:[%s5871 + $0x58] sm:$0xff]
      %v5884 = vld [vmem:[%s5871 + $0x60] sm:$0xff]
      %v5885 = vld [vmem:[%s5871 + $0x68] sm:$0xff]
      %v5886 = vld [vmem:[%s5871 + $0x70] sm:$0xff]
      %v5887 = vld [vmem:[%s5871 + $0x78] sm:$0xff]
      %v5888 = vrot.slane %v5020, 3
      %v5906 = vunpack.c.l.b16 %v5872
      %v5907 = vunpack.c.h.b16 %v5872
      %v5908 = vunpack.c.l.b16 %v5873
      %v5909 = vunpack.c.h.b16 %v5873
      %v5910 = vunpack.c.l.b16 %v5874
      %v5911 = vunpack.c.h.b16 %v5874
      %v5912 = vunpack.c.l.b16 %v5875
      %v5913 = vunpack.c.h.b16 %v5875
      %v5914 = vunpack.c.l.b16 %v5876
      %v5915 = vunpack.c.h.b16 %v5876
      %v5916 = vunpack.c.l.b16 %v5877
      %v5917 = vunpack.c.h.b16 %v5877
      %v5918 = vunpack.c.l.b16 %v5878
      %v5919 = vunpack.c.h.b16 %v5878
      %v5920 = vunpack.c.l.b16 %v5879
      %v5921 = vunpack.c.h.b16 %v5879
      %v5922 = vunpack.c.l.b16 %v5880
      %v5923 = vunpack.c.h.b16 %v5880
      %v5924 = vunpack.c.l.b16 %v5881
      %v5925 = vunpack.c.h.b16 %v5881
      %v5926 = vunpack.c.l.b16 %v5882
      %v5927 = vunpack.c.h.b16 %v5882
      %v5928 = vunpack.c.l.b16 %v5883
      %v5929 = vunpack.c.h.b16 %v5883
      %v5930 = vunpack.c.l.b16 %v5884
      %v5931 = vunpack.c.h.b16 %v5884
      %v5932 = vunpack.c.l.b16 %v5885
      %v5933 = vunpack.c.h.b16 %v5885
      %v5934 = vunpack.c.l.b16 %v5886
      %v5935 = vunpack.c.h.b16 %v5886
      %v5936 = vunpack.c.l.b16 %v5887
      %v5937 = vunpack.c.h.b16 %v5887
      %v5938 = vpack.c.b16 %v5908, %v5906
      %v5939 = vpack.c.b16 %v5909, %v5907
      %v5940 = vpack.c.b16 %v5912, %v5910
      %v5941 = vpack.c.b16 %v5913, %v5911
      %v5942 = vpack.c.b16 %v5916, %v5914
      %v5943 = vpack.c.b16 %v5917, %v5915
      %v5944 = vpack.c.b16 %v5920, %v5918
      %v5945 = vpack.c.b16 %v5921, %v5919
      %v5946 = vpack.c.b16 %v5924, %v5922
      %v5947 = vpack.c.b16 %v5925, %v5923
      %v5948 = vpack.c.b16 %v5928, %v5926
      %v5949 = vpack.c.b16 %v5929, %v5927
      %v5950 = vpack.c.b16 %v5932, %v5930
      %v5951 = vpack.c.b16 %v5933, %v5931
      %v5952 = vpack.c.b16 %v5936, %v5934
      %v5953 = vpack.c.b16 %v5937, %v5935
      %5970 = vmatpush.bf16.msra.mxu0 %v5952
      %5971 = vmatpush.bf16.msra.mxu0 %v5950
      %5972 = vmatpush.bf16.msra.mxu0 %v5948
      %5973 = vmatpush.bf16.msra.mxu0 %v5946
      %5974 = vmatpush.bf16.msra.mxu0 %v5944
      %5975 = vmatpush.bf16.msra.mxu0 %v5942
      %5976 = vmatpush.bf16.msra.mxu0 %v5940
      %5977 = vmatpush.bf16.msra.mxu0 %v5938
      %5978 = vmatmul.bf16.gmra.mxu0 %v5888
      %v5979 = vpop.f32.mrf.mxu0
      %v5980 = vadd.f32 0.0, %v5979
      %v5981 = vpop.f32.mrf.mxu0
      %5982 = vdwg.mxu0
      %5983 = vmatpush.bf16.msra.mxu0 %v5953
      %5984 = vmatpush.bf16.msra.mxu0 %v5951
      %5985 = vmatpush.bf16.msra.mxu0 %v5949
      %5986 = vmatpush.bf16.msra.mxu0 %v5947
      %5987 = vmatpush.bf16.msra.mxu0 %v5945
      %5988 = vmatpush.bf16.msra.mxu0 %v5943
      %5989 = vmatpush.bf16.msra.mxu0 %v5941
      %5990 = vmatpush.bf16.msra.mxu0 %v5939
      %5991 = vmatmul.bf16.gmra.mxu0 %v5888
      %v5992 = vpop.f32.mrf.mxu0
      %v5993 = vadd.f32 0.0, %v5992
      %v5994 = vpop.f32.mrf.mxu0
      %5995 = vdwg.mxu0
      %v5996 = vadd.f32 %v5869, %v5980
      %v5997 = vadd.f32 %v5870, %v5993
      %v5998 = vpack.c.bf16 %v4984, %v4984
      %s5999 = scalar_lea.vmem %s7, 1024
      %v6000 = vld [vmem:[%s5999] sm:$0xff]
      %v6001 = vld [vmem:[%s5999 + $0x8] sm:$0xff]
      %v6002 = vld [vmem:[%s5999 + $0x10] sm:$0xff]
      %v6003 = vld [vmem:[%s5999 + $0x18] sm:$0xff]
      %v6004 = vld [vmem:[%s5999 + $0x20] sm:$0xff]
      %v6005 = vld [vmem:[%s5999 + $0x28] sm:$0xff]
      %v6006 = vld [vmem:[%s5999 + $0x30] sm:$0xff]
      %v6007 = vld [vmem:[%s5999 + $0x38] sm:$0xff]
      %v6008 = vld [vmem:[%s5999 + $0x40] sm:$0xff]
      %v6009 = vld [vmem:[%s5999 + $0x48] sm:$0xff]
      %v6010 = vld [vmem:[%s5999 + $0x50] sm:$0xff]
      %v6011 = vld [vmem:[%s5999 + $0x58] sm:$0xff]
      %v6012 = vld [vmem:[%s5999 + $0x60] sm:$0xff]
      %v6013 = vld [vmem:[%s5999 + $0x68] sm:$0xff]
      %v6014 = vld [vmem:[%s5999 + $0x70] sm:$0xff]
      %v6015 = vld [vmem:[%s5999 + $0x78] sm:$0xff]
      %v6032 = vunpack.c.l.b16 %v6000
      %v6033 = vunpack.c.h.b16 %v6000
      %v6034 = vunpack.c.l.b16 %v6001
      %v6035 = vunpack.c.h.b16 %v6001
      %v6036 = vunpack.c.l.b16 %v6002
      %v6037 = vunpack.c.h.b16 %v6002
      %v6038 = vunpack.c.l.b16 %v6003
      %v6039 = vunpack.c.h.b16 %v6003
      %v6040 = vunpack.c.l.b16 %v6004
      %v6041 = vunpack.c.h.b16 %v6004
      %v6042 = vunpack.c.l.b16 %v6005
      %v6043 = vunpack.c.h.b16 %v6005
      %v6044 = vunpack.c.l.b16 %v6006
      %v6045 = vunpack.c.h.b16 %v6006
      %v6046 = vunpack.c.l.b16 %v6007
      %v6047 = vunpack.c.h.b16 %v6007
      %v6048 = vunpack.c.l.b16 %v6008
      %v6049 = vunpack.c.h.b16 %v6008
      %v6050 = vunpack.c.l.b16 %v6009
      %v6051 = vunpack.c.h.b16 %v6009
      %v6052 = vunpack.c.l.b16 %v6010
      %v6053 = vunpack.c.h.b16 %v6010
      %v6054 = vunpack.c.l.b16 %v6011
      %v6055 = vunpack.c.h.b16 %v6011
      %v6056 = vunpack.c.l.b16 %v6012
      %v6057 = vunpack.c.h.b16 %v6012
      %v6058 = vunpack.c.l.b16 %v6013
      %v6059 = vunpack.c.h.b16 %v6013
      %v6060 = vunpack.c.l.b16 %v6014
      %v6061 = vunpack.c.h.b16 %v6014
      %v6062 = vunpack.c.l.b16 %v6015
      %v6063 = vunpack.c.h.b16 %v6015
      %v6064 = vpack.c.b16 %v6034, %v6032
      %v6065 = vpack.c.b16 %v6035, %v6033
      %v6066 = vpack.c.b16 %v6038, %v6036
      %v6067 = vpack.c.b16 %v6039, %v6037
      %v6068 = vpack.c.b16 %v6042, %v6040
      %v6069 = vpack.c.b16 %v6043, %v6041
      %v6070 = vpack.c.b16 %v6046, %v6044
      %v6071 = vpack.c.b16 %v6047, %v6045
      %v6072 = vpack.c.b16 %v6050, %v6048
      %v6073 = vpack.c.b16 %v6051, %v6049
      %v6074 = vpack.c.b16 %v6054, %v6052
      %v6075 = vpack.c.b16 %v6055, %v6053
      %v6076 = vpack.c.b16 %v6058, %v6056
      %v6077 = vpack.c.b16 %v6059, %v6057
      %v6078 = vpack.c.b16 %v6062, %v6060
      %v6079 = vpack.c.b16 %v6063, %v6061
      %6096 = vmatpush.bf16.msra.mxu0 %v6078
      %6097 = vmatpush.bf16.msra.mxu0 %v6076
      %6098 = vmatpush.bf16.msra.mxu0 %v6074
      %6099 = vmatpush.bf16.msra.mxu0 %v6072
      %6100 = vmatpush.bf16.msra.mxu0 %v6070
      %6101 = vmatpush.bf16.msra.mxu0 %v6068
      %6102 = vmatpush.bf16.msra.mxu0 %v6066
      %6103 = vmatpush.bf16.msra.mxu0 %v6064
      %6104 = vmatmul.bf16.gmra.mxu0 %v5998
      %v6105 = vpop.f32.mrf.mxu0
      %v6106 = vadd.f32 0.0, %v6105
      %v6107 = vpop.f32.mrf.mxu0
      %6108 = vdwg.mxu0
      %6109 = vmatpush.bf16.msra.mxu0 %v6079
      %6110 = vmatpush.bf16.msra.mxu0 %v6077
      %6111 = vmatpush.bf16.msra.mxu0 %v6075
      %6112 = vmatpush.bf16.msra.mxu0 %v6073
      %6113 = vmatpush.bf16.msra.mxu0 %v6071
      %6114 = vmatpush.bf16.msra.mxu0 %v6069
      %6115 = vmatpush.bf16.msra.mxu0 %v6067
      %6116 = vmatpush.bf16.msra.mxu0 %v6065
      %6117 = vmatmul.bf16.gmra.mxu0 %v5998
      %v6118 = vpop.f32.mrf.mxu0
      %v6119 = vadd.f32 0.0, %v6118
      %v6120 = vpop.f32.mrf.mxu0
      %6121 = vdwg.mxu0
      %v6122 = vadd.f32 %v5996, %v6106
      %v6123 = vadd.f32 %v5997, %v6119
      %s6124 = scalar_lea.vmem %s7, 1152
      %v6125 = vld [vmem:[%s6124] sm:$0xff]
      %v6126 = vld [vmem:[%s6124 + $0x8] sm:$0xff]
      %v6127 = vld [vmem:[%s6124 + $0x10] sm:$0xff]
      %v6128 = vld [vmem:[%s6124 + $0x18] sm:$0xff]
      %v6129 = vld [vmem:[%s6124 + $0x20] sm:$0xff]
      %v6130 = vld [vmem:[%s6124 + $0x28] sm:$0xff]
      %v6131 = vld [vmem:[%s6124 + $0x30] sm:$0xff]
      %v6132 = vld [vmem:[%s6124 + $0x38] sm:$0xff]
      %v6133 = vld [vmem:[%s6124 + $0x40] sm:$0xff]
      %v6134 = vld [vmem:[%s6124 + $0x48] sm:$0xff]
      %v6135 = vld [vmem:[%s6124 + $0x50] sm:$0xff]
      %v6136 = vld [vmem:[%s6124 + $0x58] sm:$0xff]
      %v6137 = vld [vmem:[%s6124 + $0x60] sm:$0xff]
      %v6138 = vld [vmem:[%s6124 + $0x68] sm:$0xff]
      %v6139 = vld [vmem:[%s6124 + $0x70] sm:$0xff]
      %v6140 = vld [vmem:[%s6124 + $0x78] sm:$0xff]
      %v6142 = vshrl.u32 %v5998, 16
      %v6161 = vunpack.c.l.b16 %v6125
      %v6162 = vunpack.c.h.b16 %v6125
      %v6163 = vunpack.c.l.b16 %v6126
      %v6164 = vunpack.c.h.b16 %v6126
      %v6165 = vunpack.c.l.b16 %v6127
      %v6166 = vunpack.c.h.b16 %v6127
      %v6167 = vunpack.c.l.b16 %v6128
      %v6168 = vunpack.c.h.b16 %v6128
      %v6169 = vunpack.c.l.b16 %v6129
      %v6170 = vunpack.c.h.b16 %v6129
      %v6171 = vunpack.c.l.b16 %v6130
      %v6172 = vunpack.c.h.b16 %v6130
      %v6173 = vunpack.c.l.b16 %v6131
      %v6174 = vunpack.c.h.b16 %v6131
      %v6175 = vunpack.c.l.b16 %v6132
      %v6176 = vunpack.c.h.b16 %v6132
      %v6177 = vunpack.c.l.b16 %v6133
      %v6178 = vunpack.c.h.b16 %v6133
      %v6179 = vunpack.c.l.b16 %v6134
      %v6180 = vunpack.c.h.b16 %v6134
      %v6181 = vunpack.c.l.b16 %v6135
      %v6182 = vunpack.c.h.b16 %v6135
      %v6183 = vunpack.c.l.b16 %v6136
      %v6184 = vunpack.c.h.b16 %v6136
      %v6185 = vunpack.c.l.b16 %v6137
      %v6186 = vunpack.c.h.b16 %v6137
      %v6187 = vunpack.c.l.b16 %v6138
      %v6188 = vunpack.c.h.b16 %v6138
      %v6189 = vunpack.c.l.b16 %v6139
      %v6190 = vunpack.c.h.b16 %v6139
      %v6191 = vunpack.c.l.b16 %v6140
      %v6192 = vunpack.c.h.b16 %v6140
      %v6193 = vpack.c.b16 %v6163, %v6161
      %v6194 = vpack.c.b16 %v6164, %v6162
      %v6195 = vpack.c.b16 %v6167, %v6165
      %v6196 = vpack.c.b16 %v6168, %v6166
      %v6197 = vpack.c.b16 %v6171, %v6169
      %v6198 = vpack.c.b16 %v6172, %v6170
      %v6199 = vpack.c.b16 %v6175, %v6173
      %v6200 = vpack.c.b16 %v6176, %v6174
      %v6201 = vpack.c.b16 %v6179, %v6177
      %v6202 = vpack.c.b16 %v6180, %v6178
      %v6203 = vpack.c.b16 %v6183, %v6181
      %v6204 = vpack.c.b16 %v6184, %v6182
      %v6205 = vpack.c.b16 %v6187, %v6185
      %v6206 = vpack.c.b16 %v6188, %v6186
      %v6207 = vpack.c.b16 %v6191, %v6189
      %v6208 = vpack.c.b16 %v6192, %v6190
      %6225 = vmatpush.bf16.msra.mxu0 %v6207
      %6226 = vmatpush.bf16.msra.mxu0 %v6205
      %6227 = vmatpush.bf16.msra.mxu0 %v6203
      %6228 = vmatpush.bf16.msra.mxu0 %v6201
      %6229 = vmatpush.bf16.msra.mxu0 %v6199
      %6230 = vmatpush.bf16.msra.mxu0 %v6197
      %6231 = vmatpush.bf16.msra.mxu0 %v6195
      %6232 = vmatpush.bf16.msra.mxu0 %v6193
      %6233 = vmatmul.bf16.gmra.mxu0 %v6142
      %v6234 = vpop.f32.mrf.mxu0
      %v6235 = vadd.f32 0.0, %v6234
      %v6236 = vpop.f32.mrf.mxu0
      %6237 = vdwg.mxu0
      %6238 = vmatpush.bf16.msra.mxu0 %v6208
      %6239 = vmatpush.bf16.msra.mxu0 %v6206
      %6240 = vmatpush.bf16.msra.mxu0 %v6204
      %6241 = vmatpush.bf16.msra.mxu0 %v6202
      %6242 = vmatpush.bf16.msra.mxu0 %v6200
      %6243 = vmatpush.bf16.msra.mxu0 %v6198
      %6244 = vmatpush.bf16.msra.mxu0 %v6196
      %6245 = vmatpush.bf16.msra.mxu0 %v6194
      %6246 = vmatmul.bf16.gmra.mxu0 %v6142
      %v6247 = vpop.f32.mrf.mxu0
      %v6248 = vadd.f32 0.0, %v6247
      %v6249 = vpop.f32.mrf.mxu0
      %6250 = vdwg.mxu0
      %v6251 = vadd.f32 %v6122, %v6235
      %v6252 = vadd.f32 %v6123, %v6248
      %s6253 = scalar_lea.vmem %s7, 1280
      %v6254 = vld [vmem:[%s6253] sm:$0xff]
      %v6255 = vld [vmem:[%s6253 + $0x8] sm:$0xff]
      %v6256 = vld [vmem:[%s6253 + $0x10] sm:$0xff]
      %v6257 = vld [vmem:[%s6253 + $0x18] sm:$0xff]
      %v6258 = vld [vmem:[%s6253 + $0x20] sm:$0xff]
      %v6259 = vld [vmem:[%s6253 + $0x28] sm:$0xff]
      %v6260 = vld [vmem:[%s6253 + $0x30] sm:$0xff]
      %v6261 = vld [vmem:[%s6253 + $0x38] sm:$0xff]
      %v6262 = vld [vmem:[%s6253 + $0x40] sm:$0xff]
      %v6263 = vld [vmem:[%s6253 + $0x48] sm:$0xff]
      %v6264 = vld [vmem:[%s6253 + $0x50] sm:$0xff]
      %v6265 = vld [vmem:[%s6253 + $0x58] sm:$0xff]
      %v6266 = vld [vmem:[%s6253 + $0x60] sm:$0xff]
      %v6267 = vld [vmem:[%s6253 + $0x68] sm:$0xff]
      %v6268 = vld [vmem:[%s6253 + $0x70] sm:$0xff]
      %v6269 = vld [vmem:[%s6253 + $0x78] sm:$0xff]
      %v6271 = vrot.slane %v5998, 1
      %v6289 = vunpack.c.l.b16 %v6254
      %v6290 = vunpack.c.h.b16 %v6254
      %v6291 = vunpack.c.l.b16 %v6255
      %v6292 = vunpack.c.h.b16 %v6255
      %v6293 = vunpack.c.l.b16 %v6256
      %v6294 = vunpack.c.h.b16 %v6256
      %v6295 = vunpack.c.l.b16 %v6257
      %v6296 = vunpack.c.h.b16 %v6257
      %v6297 = vunpack.c.l.b16 %v6258
      %v6298 = vunpack.c.h.b16 %v6258
      %v6299 = vunpack.c.l.b16 %v6259
      %v6300 = vunpack.c.h.b16 %v6259
      %v6301 = vunpack.c.l.b16 %v6260
      %v6302 = vunpack.c.h.b16 %v6260
      %v6303 = vunpack.c.l.b16 %v6261
      %v6304 = vunpack.c.h.b16 %v6261
      %v6305 = vunpack.c.l.b16 %v6262
      %v6306 = vunpack.c.h.b16 %v6262
      %v6307 = vunpack.c.l.b16 %v6263
      %v6308 = vunpack.c.h.b16 %v6263
      %v6309 = vunpack.c.l.b16 %v6264
      %v6310 = vunpack.c.h.b16 %v6264
      %v6311 = vunpack.c.l.b16 %v6265
      %v6312 = vunpack.c.h.b16 %v6265
      %v6313 = vunpack.c.l.b16 %v6266
      %v6314 = vunpack.c.h.b16 %v6266
      %v6315 = vunpack.c.l.b16 %v6267
      %v6316 = vunpack.c.h.b16 %v6267
      %v6317 = vunpack.c.l.b16 %v6268
      %v6318 = vunpack.c.h.b16 %v6268
      %v6319 = vunpack.c.l.b16 %v6269
      %v6320 = vunpack.c.h.b16 %v6269
      %v6321 = vpack.c.b16 %v6291, %v6289
      %v6322 = vpack.c.b16 %v6292, %v6290
      %v6323 = vpack.c.b16 %v6295, %v6293
      %v6324 = vpack.c.b16 %v6296, %v6294
      %v6325 = vpack.c.b16 %v6299, %v6297
      %v6326 = vpack.c.b16 %v6300, %v6298
      %v6327 = vpack.c.b16 %v6303, %v6301
      %v6328 = vpack.c.b16 %v6304, %v6302
      %v6329 = vpack.c.b16 %v6307, %v6305
      %v6330 = vpack.c.b16 %v6308, %v6306
      %v6331 = vpack.c.b16 %v6311, %v6309
      %v6332 = vpack.c.b16 %v6312, %v6310
      %v6333 = vpack.c.b16 %v6315, %v6313
      %v6334 = vpack.c.b16 %v6316, %v6314
      %v6335 = vpack.c.b16 %v6319, %v6317
      %v6336 = vpack.c.b16 %v6320, %v6318
      %6353 = vmatpush.bf16.msra.mxu0 %v6335
      %6354 = vmatpush.bf16.msra.mxu0 %v6333
      %6355 = vmatpush.bf16.msra.mxu0 %v6331
      %6356 = vmatpush.bf16.msra.mxu0 %v6329
      %6357 = vmatpush.bf16.msra.mxu0 %v6327
      %6358 = vmatpush.bf16.msra.mxu0 %v6325
      %6359 = vmatpush.bf16.msra.mxu0 %v6323
      %6360 = vmatpush.bf16.msra.mxu0 %v6321
      %6361 = vmatmul.bf16.gmra.mxu0 %v6271
      %v6362 = vpop.f32.mrf.mxu0
      %v6363 = vadd.f32 0.0, %v6362
      %v6364 = vpop.f32.mrf.mxu0
      %6365 = vdwg.mxu0
      %6366 = vmatpush.bf16.msra.mxu0 %v6336
      %6367 = vmatpush.bf16.msra.mxu0 %v6334
      %6368 = vmatpush.bf16.msra.mxu0 %v6332
      %6369 = vmatpush.bf16.msra.mxu0 %v6330
      %6370 = vmatpush.bf16.msra.mxu0 %v6328
      %6371 = vmatpush.bf16.msra.mxu0 %v6326
      %6372 = vmatpush.bf16.msra.mxu0 %v6324
      %6373 = vmatpush.bf16.msra.mxu0 %v6322
      %6374 = vmatmul.bf16.gmra.mxu0 %v6271
      %v6375 = vpop.f32.mrf.mxu0
      %v6376 = vadd.f32 0.0, %v6375
      %v6377 = vpop.f32.mrf.mxu0
      %6378 = vdwg.mxu0
      %v6379 = vadd.f32 %v6251, %v6363
      %v6380 = vadd.f32 %v6252, %v6376
      %s6381 = scalar_lea.vmem %s7, 1408
      %v6382 = vld [vmem:[%s6381] sm:$0xff]
      %v6383 = vld [vmem:[%s6381 + $0x8] sm:$0xff]
      %v6384 = vld [vmem:[%s6381 + $0x10] sm:$0xff]
      %v6385 = vld [vmem:[%s6381 + $0x18] sm:$0xff]
      %v6386 = vld [vmem:[%s6381 + $0x20] sm:$0xff]
      %v6387 = vld [vmem:[%s6381 + $0x28] sm:$0xff]
      %v6388 = vld [vmem:[%s6381 + $0x30] sm:$0xff]
      %v6389 = vld [vmem:[%s6381 + $0x38] sm:$0xff]
      %v6390 = vld [vmem:[%s6381 + $0x40] sm:$0xff]
      %v6391 = vld [vmem:[%s6381 + $0x48] sm:$0xff]
      %v6392 = vld [vmem:[%s6381 + $0x50] sm:$0xff]
      %v6393 = vld [vmem:[%s6381 + $0x58] sm:$0xff]
      %v6394 = vld [vmem:[%s6381 + $0x60] sm:$0xff]
      %v6395 = vld [vmem:[%s6381 + $0x68] sm:$0xff]
      %v6396 = vld [vmem:[%s6381 + $0x70] sm:$0xff]
      %v6397 = vld [vmem:[%s6381 + $0x78] sm:$0xff]
      %v6398 = vrot.slane %v6142, 1
      %v6416 = vunpack.c.l.b16 %v6382
      %v6417 = vunpack.c.h.b16 %v6382
      %v6418 = vunpack.c.l.b16 %v6383
      %v6419 = vunpack.c.h.b16 %v6383
      %v6420 = vunpack.c.l.b16 %v6384
      %v6421 = vunpack.c.h.b16 %v6384
      %v6422 = vunpack.c.l.b16 %v6385
      %v6423 = vunpack.c.h.b16 %v6385
      %v6424 = vunpack.c.l.b16 %v6386
      %v6425 = vunpack.c.h.b16 %v6386
      %v6426 = vunpack.c.l.b16 %v6387
      %v6427 = vunpack.c.h.b16 %v6387
      %v6428 = vunpack.c.l.b16 %v6388
      %v6429 = vunpack.c.h.b16 %v6388
      %v6430 = vunpack.c.l.b16 %v6389
      %v6431 = vunpack.c.h.b16 %v6389
      %v6432 = vunpack.c.l.b16 %v6390
      %v6433 = vunpack.c.h.b16 %v6390
      %v6434 = vunpack.c.l.b16 %v6391
      %v6435 = vunpack.c.h.b16 %v6391
      %v6436 = vunpack.c.l.b16 %v6392
      %v6437 = vunpack.c.h.b16 %v6392
      %v6438 = vunpack.c.l.b16 %v6393
      %v6439 = vunpack.c.h.b16 %v6393
      %v6440 = vunpack.c.l.b16 %v6394
      %v6441 = vunpack.c.h.b16 %v6394
      %v6442 = vunpack.c.l.b16 %v6395
      %v6443 = vunpack.c.h.b16 %v6395
      %v6444 = vunpack.c.l.b16 %v6396
      %v6445 = vunpack.c.h.b16 %v6396
      %v6446 = vunpack.c.l.b16 %v6397
      %v6447 = vunpack.c.h.b16 %v6397
      %v6448 = vpack.c.b16 %v6418, %v6416
      %v6449 = vpack.c.b16 %v6419, %v6417
      %v6450 = vpack.c.b16 %v6422, %v6420
      %v6451 = vpack.c.b16 %v6423, %v6421
      %v6452 = vpack.c.b16 %v6426, %v6424
      %v6453 = vpack.c.b16 %v6427, %v6425
      %v6454 = vpack.c.b16 %v6430, %v6428
      %v6455 = vpack.c.b16 %v6431, %v6429
      %v6456 = vpack.c.b16 %v6434, %v6432
      %v6457 = vpack.c.b16 %v6435, %v6433
      %v6458 = vpack.c.b16 %v6438, %v6436
      %v6459 = vpack.c.b16 %v6439, %v6437
      %v6460 = vpack.c.b16 %v6442, %v6440
      %v6461 = vpack.c.b16 %v6443, %v6441
      %v6462 = vpack.c.b16 %v6446, %v6444
      %v6463 = vpack.c.b16 %v6447, %v6445
      %6480 = vmatpush.bf16.msra.mxu0 %v6462
      %6481 = vmatpush.bf16.msra.mxu0 %v6460
      %6482 = vmatpush.bf16.msra.mxu0 %v6458
      %6483 = vmatpush.bf16.msra.mxu0 %v6456
      %6484 = vmatpush.bf16.msra.mxu0 %v6454
      %6485 = vmatpush.bf16.msra.mxu0 %v6452
      %6486 = vmatpush.bf16.msra.mxu0 %v6450
      %6487 = vmatpush.bf16.msra.mxu0 %v6448
      %6488 = vmatmul.bf16.gmra.mxu0 %v6398
      %v6489 = vpop.f32.mrf.mxu0
      %v6490 = vadd.f32 0.0, %v6489
      %v6491 = vpop.f32.mrf.mxu0
      %6492 = vdwg.mxu0
      %6493 = vmatpush.bf16.msra.mxu0 %v6463
      %6494 = vmatpush.bf16.msra.mxu0 %v6461
      %6495 = vmatpush.bf16.msra.mxu0 %v6459
      %6496 = vmatpush.bf16.msra.mxu0 %v6457
      %6497 = vmatpush.bf16.msra.mxu0 %v6455
      %6498 = vmatpush.bf16.msra.mxu0 %v6453
      %6499 = vmatpush.bf16.msra.mxu0 %v6451
      %6500 = vmatpush.bf16.msra.mxu0 %v6449
      %6501 = vmatmul.bf16.gmra.mxu0 %v6398
      %v6502 = vpop.f32.mrf.mxu0
      %v6503 = vadd.f32 0.0, %v6502
      %v6504 = vpop.f32.mrf.mxu0
      %6505 = vdwg.mxu0
      %v6506 = vadd.f32 %v6379, %v6490
      %v6507 = vadd.f32 %v6380, %v6503
      %s6508 = scalar_lea.vmem %s7, 1536
      %v6509 = vld [vmem:[%s6508] sm:$0xff]
      %v6510 = vld [vmem:[%s6508 + $0x8] sm:$0xff]
      %v6511 = vld [vmem:[%s6508 + $0x10] sm:$0xff]
      %v6512 = vld [vmem:[%s6508 + $0x18] sm:$0xff]
      %v6513 = vld [vmem:[%s6508 + $0x20] sm:$0xff]
      %v6514 = vld [vmem:[%s6508 + $0x28] sm:$0xff]
      %v6515 = vld [vmem:[%s6508 + $0x30] sm:$0xff]
      %v6516 = vld [vmem:[%s6508 + $0x38] sm:$0xff]
      %v6517 = vld [vmem:[%s6508 + $0x40] sm:$0xff]
      %v6518 = vld [vmem:[%s6508 + $0x48] sm:$0xff]
      %v6519 = vld [vmem:[%s6508 + $0x50] sm:$0xff]
      %v6520 = vld [vmem:[%s6508 + $0x58] sm:$0xff]
      %v6521 = vld [vmem:[%s6508 + $0x60] sm:$0xff]
      %v6522 = vld [vmem:[%s6508 + $0x68] sm:$0xff]
      %v6523 = vld [vmem:[%s6508 + $0x70] sm:$0xff]
      %v6524 = vld [vmem:[%s6508 + $0x78] sm:$0xff]
      %v6525 = vrot.slane %v5998, 2
      %v6543 = vunpack.c.l.b16 %v6509
      %v6544 = vunpack.c.h.b16 %v6509
      %v6545 = vunpack.c.l.b16 %v6510
      %v6546 = vunpack.c.h.b16 %v6510
      %v6547 = vunpack.c.l.b16 %v6511
      %v6548 = vunpack.c.h.b16 %v6511
      %v6549 = vunpack.c.l.b16 %v6512
      %v6550 = vunpack.c.h.b16 %v6512
      %v6551 = vunpack.c.l.b16 %v6513
      %v6552 = vunpack.c.h.b16 %v6513
      %v6553 = vunpack.c.l.b16 %v6514
      %v6554 = vunpack.c.h.b16 %v6514
      %v6555 = vunpack.c.l.b16 %v6515
      %v6556 = vunpack.c.h.b16 %v6515
      %v6557 = vunpack.c.l.b16 %v6516
      %v6558 = vunpack.c.h.b16 %v6516
      %v6559 = vunpack.c.l.b16 %v6517
      %v6560 = vunpack.c.h.b16 %v6517
      %v6561 = vunpack.c.l.b16 %v6518
      %v6562 = vunpack.c.h.b16 %v6518
      %v6563 = vunpack.c.l.b16 %v6519
      %v6564 = vunpack.c.h.b16 %v6519
      %v6565 = vunpack.c.l.b16 %v6520
      %v6566 = vunpack.c.h.b16 %v6520
      %v6567 = vunpack.c.l.b16 %v6521
      %v6568 = vunpack.c.h.b16 %v6521
      %v6569 = vunpack.c.l.b16 %v6522
      %v6570 = vunpack.c.h.b16 %v6522
      %v6571 = vunpack.c.l.b16 %v6523
      %v6572 = vunpack.c.h.b16 %v6523
      %v6573 = vunpack.c.l.b16 %v6524
      %v6574 = vunpack.c.h.b16 %v6524
      %v6575 = vpack.c.b16 %v6545, %v6543
      %v6576 = vpack.c.b16 %v6546, %v6544
      %v6577 = vpack.c.b16 %v6549, %v6547
      %v6578 = vpack.c.b16 %v6550, %v6548
      %v6579 = vpack.c.b16 %v6553, %v6551
      %v6580 = vpack.c.b16 %v6554, %v6552
      %v6581 = vpack.c.b16 %v6557, %v6555
      %v6582 = vpack.c.b16 %v6558, %v6556
      %v6583 = vpack.c.b16 %v6561, %v6559
      %v6584 = vpack.c.b16 %v6562, %v6560
      %v6585 = vpack.c.b16 %v6565, %v6563
      %v6586 = vpack.c.b16 %v6566, %v6564
      %v6587 = vpack.c.b16 %v6569, %v6567
      %v6588 = vpack.c.b16 %v6570, %v6568
      %v6589 = vpack.c.b16 %v6573, %v6571
      %v6590 = vpack.c.b16 %v6574, %v6572
      %6607 = vmatpush.bf16.msra.mxu0 %v6589
      %6608 = vmatpush.bf16.msra.mxu0 %v6587
      %6609 = vmatpush.bf16.msra.mxu0 %v6585
      %6610 = vmatpush.bf16.msra.mxu0 %v6583
      %6611 = vmatpush.bf16.msra.mxu0 %v6581
      %6612 = vmatpush.bf16.msra.mxu0 %v6579
      %6613 = vmatpush.bf16.msra.mxu0 %v6577
      %6614 = vmatpush.bf16.msra.mxu0 %v6575
      %6615 = vmatmul.bf16.gmra.mxu0 %v6525
      %v6616 = vpop.f32.mrf.mxu0
      %v6617 = vadd.f32 0.0, %v6616
      %v6618 = vpop.f32.mrf.mxu0
      %6619 = vdwg.mxu0
      %6620 = vmatpush.bf16.msra.mxu0 %v6590
      %6621 = vmatpush.bf16.msra.mxu0 %v6588
      %6622 = vmatpush.bf16.msra.mxu0 %v6586
      %6623 = vmatpush.bf16.msra.mxu0 %v6584
      %6624 = vmatpush.bf16.msra.mxu0 %v6582
      %6625 = vmatpush.bf16.msra.mxu0 %v6580
      %6626 = vmatpush.bf16.msra.mxu0 %v6578
      %6627 = vmatpush.bf16.msra.mxu0 %v6576
      %6628 = vmatmul.bf16.gmra.mxu0 %v6525
      %v6629 = vpop.f32.mrf.mxu0
      %v6630 = vadd.f32 0.0, %v6629
      %v6631 = vpop.f32.mrf.mxu0
      %6632 = vdwg.mxu0
      %v6633 = vadd.f32 %v6506, %v6617
      %v6634 = vadd.f32 %v6507, %v6630
      %s6635 = scalar_lea.vmem %s7, 1664
      %v6636 = vld [vmem:[%s6635] sm:$0xff]
      %v6637 = vld [vmem:[%s6635 + $0x8] sm:$0xff]
      %v6638 = vld [vmem:[%s6635 + $0x10] sm:$0xff]
      %v6639 = vld [vmem:[%s6635 + $0x18] sm:$0xff]
      %v6640 = vld [vmem:[%s6635 + $0x20] sm:$0xff]
      %v6641 = vld [vmem:[%s6635 + $0x28] sm:$0xff]
      %v6642 = vld [vmem:[%s6635 + $0x30] sm:$0xff]
      %v6643 = vld [vmem:[%s6635 + $0x38] sm:$0xff]
      %v6644 = vld [vmem:[%s6635 + $0x40] sm:$0xff]
      %v6645 = vld [vmem:[%s6635 + $0x48] sm:$0xff]
      %v6646 = vld [vmem:[%s6635 + $0x50] sm:$0xff]
      %v6647 = vld [vmem:[%s6635 + $0x58] sm:$0xff]
      %v6648 = vld [vmem:[%s6635 + $0x60] sm:$0xff]
      %v6649 = vld [vmem:[%s6635 + $0x68] sm:$0xff]
      %v6650 = vld [vmem:[%s6635 + $0x70] sm:$0xff]
      %v6651 = vld [vmem:[%s6635 + $0x78] sm:$0xff]
      %v6652 = vrot.slane %v6142, 2
      %v6670 = vunpack.c.l.b16 %v6636
      %v6671 = vunpack.c.h.b16 %v6636
      %v6672 = vunpack.c.l.b16 %v6637
      %v6673 = vunpack.c.h.b16 %v6637
      %v6674 = vunpack.c.l.b16 %v6638
      %v6675 = vunpack.c.h.b16 %v6638
      %v6676 = vunpack.c.l.b16 %v6639
      %v6677 = vunpack.c.h.b16 %v6639
      %v6678 = vunpack.c.l.b16 %v6640
      %v6679 = vunpack.c.h.b16 %v6640
      %v6680 = vunpack.c.l.b16 %v6641
      %v6681 = vunpack.c.h.b16 %v6641
      %v6682 = vunpack.c.l.b16 %v6642
      %v6683 = vunpack.c.h.b16 %v6642
      %v6684 = vunpack.c.l.b16 %v6643
      %v6685 = vunpack.c.h.b16 %v6643
      %v6686 = vunpack.c.l.b16 %v6644
      %v6687 = vunpack.c.h.b16 %v6644
      %v6688 = vunpack.c.l.b16 %v6645
      %v6689 = vunpack.c.h.b16 %v6645
      %v6690 = vunpack.c.l.b16 %v6646
      %v6691 = vunpack.c.h.b16 %v6646
      %v6692 = vunpack.c.l.b16 %v6647
      %v6693 = vunpack.c.h.b16 %v6647
      %v6694 = vunpack.c.l.b16 %v6648
      %v6695 = vunpack.c.h.b16 %v6648
      %v6696 = vunpack.c.l.b16 %v6649
      %v6697 = vunpack.c.h.b16 %v6649
      %v6698 = vunpack.c.l.b16 %v6650
      %v6699 = vunpack.c.h.b16 %v6650
      %v6700 = vunpack.c.l.b16 %v6651
      %v6701 = vunpack.c.h.b16 %v6651
      %v6702 = vpack.c.b16 %v6672, %v6670
      %v6703 = vpack.c.b16 %v6673, %v6671
      %v6704 = vpack.c.b16 %v6676, %v6674
      %v6705 = vpack.c.b16 %v6677, %v6675
      %v6706 = vpack.c.b16 %v6680, %v6678
      %v6707 = vpack.c.b16 %v6681, %v6679
      %v6708 = vpack.c.b16 %v6684, %v6682
      %v6709 = vpack.c.b16 %v6685, %v6683
      %v6710 = vpack.c.b16 %v6688, %v6686
      %v6711 = vpack.c.b16 %v6689, %v6687
      %v6712 = vpack.c.b16 %v6692, %v6690
      %v6713 = vpack.c.b16 %v6693, %v6691
      %v6714 = vpack.c.b16 %v6696, %v6694
      %v6715 = vpack.c.b16 %v6697, %v6695
      %v6716 = vpack.c.b16 %v6700, %v6698
      %v6717 = vpack.c.b16 %v6701, %v6699
      %6734 = vmatpush.bf16.msra.mxu0 %v6716
      %6735 = vmatpush.bf16.msra.mxu0 %v6714
      %6736 = vmatpush.bf16.msra.mxu0 %v6712
      %6737 = vmatpush.bf16.msra.mxu0 %v6710
      %6738 = vmatpush.bf16.msra.mxu0 %v6708
      %6739 = vmatpush.bf16.msra.mxu0 %v6706
      %6740 = vmatpush.bf16.msra.mxu0 %v6704
      %6741 = vmatpush.bf16.msra.mxu0 %v6702
      %6742 = vmatmul.bf16.gmra.mxu0 %v6652
      %v6743 = vpop.f32.mrf.mxu0
      %v6744 = vadd.f32 0.0, %v6743
      %v6745 = vpop.f32.mrf.mxu0
      %6746 = vdwg.mxu0
      %6747 = vmatpush.bf16.msra.mxu0 %v6717
      %6748 = vmatpush.bf16.msra.mxu0 %v6715
      %6749 = vmatpush.bf16.msra.mxu0 %v6713
      %6750 = vmatpush.bf16.msra.mxu0 %v6711
      %6751 = vmatpush.bf16.msra.mxu0 %v6709
      %6752 = vmatpush.bf16.msra.mxu0 %v6707
      %6753 = vmatpush.bf16.msra.mxu0 %v6705
      %6754 = vmatpush.bf16.msra.mxu0 %v6703
      %6755 = vmatmul.bf16.gmra.mxu0 %v6652
      %v6756 = vpop.f32.mrf.mxu0
      %v6757 = vadd.f32 0.0, %v6756
      %v6758 = vpop.f32.mrf.mxu0
      %6759 = vdwg.mxu0
      %v6760 = vadd.f32 %v6633, %v6744
      %v6761 = vadd.f32 %v6634, %v6757
      %s6762 = scalar_lea.vmem %s7, 1792
      %v6763 = vld [vmem:[%s6762] sm:$0xff]
      %v6764 = vld [vmem:[%s6762 + $0x8] sm:$0xff]
      %v6765 = vld [vmem:[%s6762 + $0x10] sm:$0xff]
      %v6766 = vld [vmem:[%s6762 + $0x18] sm:$0xff]
      %v6767 = vld [vmem:[%s6762 + $0x20] sm:$0xff]
      %v6768 = vld [vmem:[%s6762 + $0x28] sm:$0xff]
      %v6769 = vld [vmem:[%s6762 + $0x30] sm:$0xff]
      %v6770 = vld [vmem:[%s6762 + $0x38] sm:$0xff]
      %v6771 = vld [vmem:[%s6762 + $0x40] sm:$0xff]
      %v6772 = vld [vmem:[%s6762 + $0x48] sm:$0xff]
      %v6773 = vld [vmem:[%s6762 + $0x50] sm:$0xff]
      %v6774 = vld [vmem:[%s6762 + $0x58] sm:$0xff]
      %v6775 = vld [vmem:[%s6762 + $0x60] sm:$0xff]
      %v6776 = vld [vmem:[%s6762 + $0x68] sm:$0xff]
      %v6777 = vld [vmem:[%s6762 + $0x70] sm:$0xff]
      %v6778 = vld [vmem:[%s6762 + $0x78] sm:$0xff]
      %v6779 = vrot.slane %v5998, 3
      %v6797 = vunpack.c.l.b16 %v6763
      %v6798 = vunpack.c.h.b16 %v6763
      %v6799 = vunpack.c.l.b16 %v6764
      %v6800 = vunpack.c.h.b16 %v6764
      %v6801 = vunpack.c.l.b16 %v6765
      %v6802 = vunpack.c.h.b16 %v6765
      %v6803 = vunpack.c.l.b16 %v6766
      %v6804 = vunpack.c.h.b16 %v6766
      %v6805 = vunpack.c.l.b16 %v6767
      %v6806 = vunpack.c.h.b16 %v6767
      %v6807 = vunpack.c.l.b16 %v6768
      %v6808 = vunpack.c.h.b16 %v6768
      %v6809 = vunpack.c.l.b16 %v6769
      %v6810 = vunpack.c.h.b16 %v6769
      %v6811 = vunpack.c.l.b16 %v6770
      %v6812 = vunpack.c.h.b16 %v6770
      %v6813 = vunpack.c.l.b16 %v6771
      %v6814 = vunpack.c.h.b16 %v6771
      %v6815 = vunpack.c.l.b16 %v6772
      %v6816 = vunpack.c.h.b16 %v6772
      %v6817 = vunpack.c.l.b16 %v6773
      %v6818 = vunpack.c.h.b16 %v6773
      %v6819 = vunpack.c.l.b16 %v6774
      %v6820 = vunpack.c.h.b16 %v6774
      %v6821 = vunpack.c.l.b16 %v6775
      %v6822 = vunpack.c.h.b16 %v6775
      %v6823 = vunpack.c.l.b16 %v6776
      %v6824 = vunpack.c.h.b16 %v6776
      %v6825 = vunpack.c.l.b16 %v6777
      %v6826 = vunpack.c.h.b16 %v6777
      %v6827 = vunpack.c.l.b16 %v6778
      %v6828 = vunpack.c.h.b16 %v6778
      %v6829 = vpack.c.b16 %v6799, %v6797
      %v6830 = vpack.c.b16 %v6800, %v6798
      %v6831 = vpack.c.b16 %v6803, %v6801
      %v6832 = vpack.c.b16 %v6804, %v6802
      %v6833 = vpack.c.b16 %v6807, %v6805
      %v6834 = vpack.c.b16 %v6808, %v6806
      %v6835 = vpack.c.b16 %v6811, %v6809
      %v6836 = vpack.c.b16 %v6812, %v6810
      %v6837 = vpack.c.b16 %v6815, %v6813
      %v6838 = vpack.c.b16 %v6816, %v6814
      %v6839 = vpack.c.b16 %v6819, %v6817
      %v6840 = vpack.c.b16 %v6820, %v6818
      %v6841 = vpack.c.b16 %v6823, %v6821
      %v6842 = vpack.c.b16 %v6824, %v6822
      %v6843 = vpack.c.b16 %v6827, %v6825
      %v6844 = vpack.c.b16 %v6828, %v6826
      %6861 = vmatpush.bf16.msra.mxu0 %v6843
      %6862 = vmatpush.bf16.msra.mxu0 %v6841
      %6863 = vmatpush.bf16.msra.mxu0 %v6839
      %6864 = vmatpush.bf16.msra.mxu0 %v6837
      %6865 = vmatpush.bf16.msra.mxu0 %v6835
      %6866 = vmatpush.bf16.msra.mxu0 %v6833
      %6867 = vmatpush.bf16.msra.mxu0 %v6831
      %6868 = vmatpush.bf16.msra.mxu0 %v6829
      %6869 = vmatmul.bf16.gmra.mxu0 %v6779
      %v6870 = vpop.f32.mrf.mxu0
      %v6871 = vadd.f32 0.0, %v6870
      %v6872 = vpop.f32.mrf.mxu0
      %6873 = vdwg.mxu0
      %6874 = vmatpush.bf16.msra.mxu0 %v6844
      %6875 = vmatpush.bf16.msra.mxu0 %v6842
      %6876 = vmatpush.bf16.msra.mxu0 %v6840
      %6877 = vmatpush.bf16.msra.mxu0 %v6838
      %6878 = vmatpush.bf16.msra.mxu0 %v6836
      %6879 = vmatpush.bf16.msra.mxu0 %v6834
      %6880 = vmatpush.bf16.msra.mxu0 %v6832
      %6881 = vmatpush.bf16.msra.mxu0 %v6830
      %6882 = vmatmul.bf16.gmra.mxu0 %v6779
      %v6883 = vpop.f32.mrf.mxu0
      %v6884 = vadd.f32 0.0, %v6883
      %v6885 = vpop.f32.mrf.mxu0
      %6886 = vdwg.mxu0
      %v6887 = vadd.f32 %v6760, %v6871
      %v6888 = vadd.f32 %v6761, %v6884
      %s6889 = scalar_lea.vmem %s7, 1920
      %v6890 = vld [vmem:[%s6889] sm:$0xff]
      %v6891 = vld [vmem:[%s6889 + $0x8] sm:$0xff]
      %v6892 = vld [vmem:[%s6889 + $0x10] sm:$0xff]
      %v6893 = vld [vmem:[%s6889 + $0x18] sm:$0xff]
      %v6894 = vld [vmem:[%s6889 + $0x20] sm:$0xff]
      %v6895 = vld [vmem:[%s6889 + $0x28] sm:$0xff]
      %v6896 = vld [vmem:[%s6889 + $0x30] sm:$0xff]
      %v6897 = vld [vmem:[%s6889 + $0x38] sm:$0xff]
      %v6898 = vld [vmem:[%s6889 + $0x40] sm:$0xff]
      %v6899 = vld [vmem:[%s6889 + $0x48] sm:$0xff]
      %v6900 = vld [vmem:[%s6889 + $0x50] sm:$0xff]
      %v6901 = vld [vmem:[%s6889 + $0x58] sm:$0xff]
      %v6902 = vld [vmem:[%s6889 + $0x60] sm:$0xff]
      %v6903 = vld [vmem:[%s6889 + $0x68] sm:$0xff]
      %v6904 = vld [vmem:[%s6889 + $0x70] sm:$0xff]
      %v6905 = vld [vmem:[%s6889 + $0x78] sm:$0xff]
      %v6906 = vrot.slane %v6142, 3
      %v6924 = vunpack.c.l.b16 %v6890
      %v6925 = vunpack.c.h.b16 %v6890
      %v6926 = vunpack.c.l.b16 %v6891
      %v6927 = vunpack.c.h.b16 %v6891
      %v6928 = vunpack.c.l.b16 %v6892
      %v6929 = vunpack.c.h.b16 %v6892
      %v6930 = vunpack.c.l.b16 %v6893
      %v6931 = vunpack.c.h.b16 %v6893
      %v6932 = vunpack.c.l.b16 %v6894
      %v6933 = vunpack.c.h.b16 %v6894
      %v6934 = vunpack.c.l.b16 %v6895
      %v6935 = vunpack.c.h.b16 %v6895
      %v6936 = vunpack.c.l.b16 %v6896
      %v6937 = vunpack.c.h.b16 %v6896
      %v6938 = vunpack.c.l.b16 %v6897
      %v6939 = vunpack.c.h.b16 %v6897
      %v6940 = vunpack.c.l.b16 %v6898
      %v6941 = vunpack.c.h.b16 %v6898
      %v6942 = vunpack.c.l.b16 %v6899
      %v6943 = vunpack.c.h.b16 %v6899
      %v6944 = vunpack.c.l.b16 %v6900
      %v6945 = vunpack.c.h.b16 %v6900
      %v6946 = vunpack.c.l.b16 %v6901
      %v6947 = vunpack.c.h.b16 %v6901
      %v6948 = vunpack.c.l.b16 %v6902
      %v6949 = vunpack.c.h.b16 %v6902
      %v6950 = vunpack.c.l.b16 %v6903
      %v6951 = vunpack.c.h.b16 %v6903
      %v6952 = vunpack.c.l.b16 %v6904
      %v6953 = vunpack.c.h.b16 %v6904
      %v6954 = vunpack.c.l.b16 %v6905
      %v6955 = vunpack.c.h.b16 %v6905
      %v6956 = vpack.c.b16 %v6926, %v6924
      %v6957 = vpack.c.b16 %v6927, %v6925
      %v6958 = vpack.c.b16 %v6930, %v6928
      %v6959 = vpack.c.b16 %v6931, %v6929
      %v6960 = vpack.c.b16 %v6934, %v6932
      %v6961 = vpack.c.b16 %v6935, %v6933
      %v6962 = vpack.c.b16 %v6938, %v6936
      %v6963 = vpack.c.b16 %v6939, %v6937
      %v6964 = vpack.c.b16 %v6942, %v6940
      %v6965 = vpack.c.b16 %v6943, %v6941
      %v6966 = vpack.c.b16 %v6946, %v6944
      %v6967 = vpack.c.b16 %v6947, %v6945
      %v6968 = vpack.c.b16 %v6950, %v6948
      %v6969 = vpack.c.b16 %v6951, %v6949
      %v6970 = vpack.c.b16 %v6954, %v6952
      %v6971 = vpack.c.b16 %v6955, %v6953
      %6988 = vmatpush.bf16.msra.mxu0 %v6970
      %6989 = vmatpush.bf16.msra.mxu0 %v6968
      %6990 = vmatpush.bf16.msra.mxu0 %v6966
      %6991 = vmatpush.bf16.msra.mxu0 %v6964
      %6992 = vmatpush.bf16.msra.mxu0 %v6962
      %6993 = vmatpush.bf16.msra.mxu0 %v6960
      %6994 = vmatpush.bf16.msra.mxu0 %v6958
      %6995 = vmatpush.bf16.msra.mxu0 %v6956
      %6996 = vmatmul.bf16.gmra.mxu0 %v6906
      %v6997 = vpop.f32.mrf.mxu0
      %v6998 = vadd.f32 0.0, %v6997
      %v6999 = vpop.f32.mrf.mxu0
      %7000 = vdwg.mxu0
      %7001 = vmatpush.bf16.msra.mxu0 %v6971
      %7002 = vmatpush.bf16.msra.mxu0 %v6969
      %7003 = vmatpush.bf16.msra.mxu0 %v6967
      %7004 = vmatpush.bf16.msra.mxu0 %v6965
      %7005 = vmatpush.bf16.msra.mxu0 %v6963
      %7006 = vmatpush.bf16.msra.mxu0 %v6961
      %7007 = vmatpush.bf16.msra.mxu0 %v6959
      %7008 = vmatpush.bf16.msra.mxu0 %v6957
      %7009 = vmatmul.bf16.gmra.mxu0 %v6906
      %v7010 = vpop.f32.mrf.mxu0
      %v7011 = vadd.f32 0.0, %v7010
      %v7012 = vpop.f32.mrf.mxu0
      %7013 = vdwg.mxu0
      %v7014 = vadd.f32 %v6887, %v6998
      %v7015 = vadd.f32 %v6888, %v7011
      %v7016 = vld [vmem:[%s8] sm:$0x3]
      %v7018 = vperm.slane %v7016, 0
      %v7019 = vperm.slane %v7016, 1
      %v7022 = vadd.f32 %v7014, %v7018
      %v7023 = vadd.f32 %v7015, %v7019
      %v7024 = vmax.f32 %v7022, 0.0
      %v7025 = vmax.f32 %v7023, 0.0
      %v7026 = vpack.c.bf16 %v7024, %v7024
      %v7027 = vpack.c.bf16 %v7025, %v7025
      %v7028 = vld [vmem:[%s9] sm:$0xf]
      %v7029 = vld [vmem:[%s9 + $0x4] sm:$0xf]
      %v7030 = vld [vmem:[%s9 + $0x8] sm:$0xf]
      %v7031 = vld [vmem:[%s9 + $0xc] sm:$0xf]
      %v7032 = vld [vmem:[%s9 + $0x10] sm:$0xf]
      %v7033 = vld [vmem:[%s9 + $0x14] sm:$0xf]
      %v7034 = vld [vmem:[%s9 + $0x18] sm:$0xf]
      %v7035 = vld [vmem:[%s9 + $0x1c] sm:$0xf]
      %v7036 = vld [vmem:[%s9 + $0x20] sm:$0xf]
      %v7037 = vld [vmem:[%s9 + $0x24] sm:$0xf]
      %v7038 = vld [vmem:[%s9 + $0x28] sm:$0xf]
      %v7039 = vld [vmem:[%s9 + $0x2c] sm:$0xf]
      %v7040 = vld [vmem:[%s9 + $0x30] sm:$0xf]
      %v7041 = vld [vmem:[%s9 + $0x34] sm:$0xf]
      %v7042 = vld [vmem:[%s9 + $0x38] sm:$0xf]
      %v7043 = vld [vmem:[%s9 + $0x3c] sm:$0xf]
      %v7044 = vld [vmem:[%s9 + $0x40] sm:$0xf]
      %v7045 = vld [vmem:[%s9 + $0x44] sm:$0xf]
      %v7046 = vld [vmem:[%s9 + $0x48] sm:$0xf]
      %v7047 = vld [vmem:[%s9 + $0x4c] sm:$0xf]
      %v7048 = vld [vmem:[%s9 + $0x50] sm:$0xf]
      %v7049 = vld [vmem:[%s9 + $0x54] sm:$0xf]
      %v7050 = vld [vmem:[%s9 + $0x58] sm:$0xf]
      %v7051 = vld [vmem:[%s9 + $0x5c] sm:$0xf]
      %v7052 = vld [vmem:[%s9 + $0x60] sm:$0xf]
      %v7053 = vld [vmem:[%s9 + $0x64] sm:$0xf]
      %v7054 = vld [vmem:[%s9 + $0x68] sm:$0xf]
      %v7055 = vld [vmem:[%s9 + $0x6c] sm:$0xf]
      %v7056 = vld [vmem:[%s9 + $0x70] sm:$0xf]
      %v7057 = vld [vmem:[%s9 + $0x74] sm:$0xf]
      %v7058 = vld [vmem:[%s9 + $0x78] sm:$0xf]
      %v7059 = vld [vmem:[%s9 + $0x7c] sm:$0xf]
      %v7060 = vld [vmem:[%s10] sm:$0x1]
      %v7093 = vunpack.c.l.b16 %v7028
      %v7094 = vunpack.c.l.b16 %v7029
      %v7095 = vunpack.c.l.b16 %v7030
      %v7096 = vunpack.c.l.b16 %v7031
      %v7097 = vunpack.c.l.b16 %v7032
      %v7098 = vunpack.c.l.b16 %v7033
      %v7099 = vunpack.c.l.b16 %v7034
      %v7100 = vunpack.c.l.b16 %v7035
      %v7101 = vunpack.c.l.b16 %v7036
      %v7102 = vunpack.c.l.b16 %v7037
      %v7103 = vunpack.c.l.b16 %v7038
      %v7104 = vunpack.c.l.b16 %v7039
      %v7105 = vunpack.c.l.b16 %v7040
      %v7106 = vunpack.c.l.b16 %v7041
      %v7107 = vunpack.c.l.b16 %v7042
      %v7108 = vunpack.c.l.b16 %v7043
      %v7109 = vunpack.c.l.b16 %v7044
      %v7110 = vunpack.c.l.b16 %v7045
      %v7111 = vunpack.c.l.b16 %v7046
      %v7112 = vunpack.c.l.b16 %v7047
      %v7113 = vunpack.c.l.b16 %v7048
      %v7114 = vunpack.c.l.b16 %v7049
      %v7115 = vunpack.c.l.b16 %v7050
      %v7116 = vunpack.c.l.b16 %v7051
      %v7117 = vunpack.c.l.b16 %v7052
      %v7118 = vunpack.c.l.b16 %v7053
      %v7119 = vunpack.c.l.b16 %v7054
      %v7120 = vunpack.c.l.b16 %v7055
      %v7121 = vunpack.c.l.b16 %v7056
      %v7122 = vunpack.c.l.b16 %v7057
      %v7123 = vunpack.c.l.b16 %v7058
      %v7124 = vunpack.c.l.b16 %v7059
      %v7125 = vpack.c.b16 %v7094, %v7093
      %v7126 = vpack.c.b16 %v7096, %v7095
      %v7127 = vpack.c.b16 %v7098, %v7097
      %v7128 = vpack.c.b16 %v7100, %v7099
      %v7129 = vpack.c.b16 %v7102, %v7101
      %v7130 = vpack.c.b16 %v7104, %v7103
      %v7131 = vpack.c.b16 %v7106, %v7105
      %v7132 = vpack.c.b16 %v7108, %v7107
      %v7133 = vpack.c.b16 %v7110, %v7109
      %v7134 = vpack.c.b16 %v7112, %v7111
      %v7135 = vpack.c.b16 %v7114, %v7113
      %v7136 = vpack.c.b16 %v7116, %v7115
      %v7137 = vpack.c.b16 %v7118, %v7117
      %v7138 = vpack.c.b16 %v7120, %v7119
      %v7139 = vpack.c.b16 %v7122, %v7121
      %v7140 = vpack.c.b16 %v7124, %v7123
      %7157 = vmatpush.bf16.msra.mxu0 %v7132
      %7158 = vmatpush.bf16.msra.mxu0 %v7131
      %7159 = vmatpush.bf16.msra.mxu0 %v7130
      %7160 = vmatpush.bf16.msra.mxu0 %v7129
      %7161 = vmatpush.bf16.msra.mxu0 %v7128
      %7162 = vmatpush.bf16.msra.mxu0 %v7127
      %7163 = vmatpush.bf16.msra.mxu0 %v7126
      %7164 = vmatpush.bf16.msra.mxu0 %v7125
      %7165 = vmatmul.bf16.gmra.mxu0 %v7026
      %v7166 = vpop.f32.mrf.mxu0
      %v7167 = vadd.f32 %v7060, %v7166
      %v7168 = vpop.f32.mrf.mxu0
      %7169 = vdwg.mxu0
      %7170 = vmatpush.bf16.msra.mxu0 %v7140
      %7171 = vmatpush.bf16.msra.mxu0 %v7139
      %7172 = vmatpush.bf16.msra.mxu0 %v7138
      %7173 = vmatpush.bf16.msra.mxu0 %v7137
      %7174 = vmatpush.bf16.msra.mxu0 %v7136
      %7175 = vmatpush.bf16.msra.mxu0 %v7135
      %7176 = vmatpush.bf16.msra.mxu0 %v7134
      %7177 = vmatpush.bf16.msra.mxu0 %v7133
      %7178 = vmatmul.bf16.gmra.mxu0 %v7027
      %v7179 = vpop.f32.mrf.mxu0
      %v7180 = vadd.f32 %v7167, %v7179
      %v7181 = vpop.f32.mrf.mxu0
      %7182 = vdwg.mxu0
      %v7183 = vpack.c.bf16 %v7180, %v7180
      %v7184 = vld [vmem:[%s11] sm:$0xff]
      %v7185 = vld [vmem:[%s11 + $0x8] sm:$0xff]
      %v7186 = vld [vmem:[%s11 + $0x10] sm:$0xff]
      %v7187 = vld [vmem:[%s11 + $0x18] sm:$0xff]
      %v7188 = vld [vmem:[%s11 + $0x20] sm:$0xff]
      %v7189 = vld [vmem:[%s11 + $0x28] sm:$0xff]
      %v7190 = vld [vmem:[%s11 + $0x30] sm:$0xff]
      %v7191 = vld [vmem:[%s11 + $0x38] sm:$0xff]
      %v7192 = vld [vmem:[%s11 + $0x40] sm:$0xff]
      %v7193 = vld [vmem:[%s11 + $0x48] sm:$0xff]
      %v7194 = vld [vmem:[%s11 + $0x50] sm:$0xff]
      %v7195 = vld [vmem:[%s11 + $0x58] sm:$0xff]
      %v7196 = vld [vmem:[%s11 + $0x60] sm:$0xff]
      %v7197 = vld [vmem:[%s11 + $0x68] sm:$0xff]
      %v7198 = vld [vmem:[%s11 + $0x70] sm:$0xff]
      %v7199 = vld [vmem:[%s11 + $0x78] sm:$0xff]
      %v7200 = vld [vmem:[%s478] sm:$0xf]
      %v7201 = vld [vmem:[%s12] sm:$0xff]
      %v7202 = vld [vmem:[%s12 + $0x8] sm:$0xff]
      %v7203 = vld [vmem:[%s12 + $0x10] sm:$0xff]
      %v7204 = vld [vmem:[%s12 + $0x18] sm:$0xff]
      %v7205 = vld [vmem:[%s12 + $0x20] sm:$0xff]
      %v7206 = vld [vmem:[%s12 + $0x28] sm:$0xff]
      %v7207 = vld [vmem:[%s12 + $0x30] sm:$0xff]
      %v7208 = vld [vmem:[%s12 + $0x38] sm:$0xff]
      %v7209 = vld [vmem:[%s12 + $0x40] sm:$0xff]
      %v7210 = vld [vmem:[%s12 + $0x48] sm:$0xff]
      %v7211 = vld [vmem:[%s12 + $0x50] sm:$0xff]
      %v7212 = vld [vmem:[%s12 + $0x58] sm:$0xff]
      %v7213 = vld [vmem:[%s12 + $0x60] sm:$0xff]
      %v7214 = vld [vmem:[%s12 + $0x68] sm:$0xff]
      %v7215 = vld [vmem:[%s12 + $0x70] sm:$0xff]
      %v7216 = vld [vmem:[%s12 + $0x78] sm:$0xff]
      %v7217 = vld [vmem:[%s12 + $0x80] sm:$0xff]
      %v7218 = vld [vmem:[%s12 + $0x88] sm:$0xff]
      %v7219 = vld [vmem:[%s12 + $0x90] sm:$0xff]
      %v7220 = vld [vmem:[%s12 + $0x98] sm:$0xff]
      %v7221 = vld [vmem:[%s12 + $0xa0] sm:$0xff]
      %v7222 = vld [vmem:[%s12 + $0xa8] sm:$0xff]
      %v7223 = vld [vmem:[%s12 + $0xb0] sm:$0xff]
      %v7224 = vld [vmem:[%s12 + $0xb8] sm:$0xff]
      %v7225 = vld [vmem:[%s12 + $0xc0] sm:$0xff]
      %v7226 = vld [vmem:[%s12 + $0xc8] sm:$0xff]
      %v7227 = vld [vmem:[%s12 + $0xd0] sm:$0xff]
      %v7228 = vld [vmem:[%s12 + $0xd8] sm:$0xff]
      %v7229 = vld [vmem:[%s12 + $0xe0] sm:$0xff]
      %v7230 = vld [vmem:[%s12 + $0xe8] sm:$0xff]
      %v7231 = vld [vmem:[%s12 + $0xf0] sm:$0xff]
      %v7232 = vld [vmem:[%s12 + $0xf8] sm:$0xff]
      %v7233 = vld [vmem:[%s12 + $0x100] sm:$0xff]
      %v7234 = vld [vmem:[%s12 + $0x108] sm:$0xff]
      %v7235 = vld [vmem:[%s12 + $0x110] sm:$0xff]
      %v7236 = vld [vmem:[%s12 + $0x118] sm:$0xff]
      %v7237 = vld [vmem:[%s12 + $0x120] sm:$0xff]
      %v7238 = vld [vmem:[%s12 + $0x128] sm:$0xff]
      %v7239 = vld [vmem:[%s12 + $0x130] sm:$0xff]
      %v7240 = vld [vmem:[%s12 + $0x138] sm:$0xff]
      %v7241 = vld [vmem:[%s12 + $0x140] sm:$0xff]
      %v7242 = vld [vmem:[%s12 + $0x148] sm:$0xff]
      %v7243 = vld [vmem:[%s12 + $0x150] sm:$0xff]
      %v7244 = vld [vmem:[%s12 + $0x158] sm:$0xff]
      %v7245 = vld [vmem:[%s12 + $0x160] sm:$0xff]
      %v7246 = vld [vmem:[%s12 + $0x168] sm:$0xff]
      %v7247 = vld [vmem:[%s12 + $0x170] sm:$0xff]
      %v7248 = vld [vmem:[%s12 + $0x178] sm:$0xff]
      %v7249 = vld [vmem:[%s12 + $0x180] sm:$0xff]
      %v7250 = vld [vmem:[%s12 + $0x188] sm:$0xff]
      %v7251 = vld [vmem:[%s12 + $0x190] sm:$0xff]
      %v7252 = vld [vmem:[%s12 + $0x198] sm:$0xff]
      %v7253 = vld [vmem:[%s12 + $0x1a0] sm:$0xff]
      %v7254 = vld [vmem:[%s12 + $0x1a8] sm:$0xff]
      %v7255 = vld [vmem:[%s12 + $0x1b0] sm:$0xff]
      %v7256 = vld [vmem:[%s12 + $0x1b8] sm:$0xff]
      %v7257 = vld [vmem:[%s12 + $0x1c0] sm:$0xff]
      %v7258 = vld [vmem:[%s12 + $0x1c8] sm:$0xff]
      %v7259 = vld [vmem:[%s12 + $0x1d0] sm:$0xff]
      %v7260 = vld [vmem:[%s12 + $0x1d8] sm:$0xff]
      %v7261 = vld [vmem:[%s12 + $0x1e0] sm:$0xff]
      %v7262 = vld [vmem:[%s12 + $0x1e8] sm:$0xff]
      %v7263 = vld [vmem:[%s12 + $0x1f0] sm:$0xff]
      %v7264 = vld [vmem:[%s12 + $0x1f8] sm:$0xff]
      %v7265 = vld [vmem:[%s12 + $0x200] sm:$0xff]
      %v7266 = vld [vmem:[%s12 + $0x208] sm:$0xff]
      %v7267 = vld [vmem:[%s12 + $0x210] sm:$0xff]
      %v7268 = vld [vmem:[%s12 + $0x218] sm:$0xff]
      %v7269 = vld [vmem:[%s12 + $0x220] sm:$0xff]
      %v7270 = vld [vmem:[%s12 + $0x228] sm:$0xff]
      %v7271 = vld [vmem:[%s12 + $0x230] sm:$0xff]
      %v7272 = vld [vmem:[%s12 + $0x238] sm:$0xff]
      %v7273 = vld [vmem:[%s12 + $0x240] sm:$0xff]
      %v7274 = vld [vmem:[%s12 + $0x248] sm:$0xff]
      %v7275 = vld [vmem:[%s12 + $0x250] sm:$0xff]
      %v7276 = vld [vmem:[%s12 + $0x258] sm:$0xff]
      %v7277 = vld [vmem:[%s12 + $0x260] sm:$0xff]
      %v7278 = vld [vmem:[%s12 + $0x268] sm:$0xff]
      %v7279 = vld [vmem:[%s12 + $0x270] sm:$0xff]
      %v7280 = vld [vmem:[%s12 + $0x278] sm:$0xff]
      %v7281 = vld [vmem:[%s12 + $0x280] sm:$0xff]
      %v7282 = vld [vmem:[%s12 + $0x288] sm:$0xff]
      %v7283 = vld [vmem:[%s12 + $0x290] sm:$0xff]
      %v7284 = vld [vmem:[%s12 + $0x298] sm:$0xff]
      %v7285 = vld [vmem:[%s12 + $0x2a0] sm:$0xff]
      %v7286 = vld [vmem:[%s12 + $0x2a8] sm:$0xff]
      %v7287 = vld [vmem:[%s12 + $0x2b0] sm:$0xff]
      %v7288 = vld [vmem:[%s12 + $0x2b8] sm:$0xff]
      %v7289 = vld [vmem:[%s12 + $0x2c0] sm:$0xff]
      %v7290 = vld [vmem:[%s12 + $0x2c8] sm:$0xff]
      %v7291 = vld [vmem:[%s12 + $0x2d0] sm:$0xff]
      %v7292 = vld [vmem:[%s12 + $0x2d8] sm:$0xff]
      %v7293 = vld [vmem:[%s12 + $0x2e0] sm:$0xff]
      %v7294 = vld [vmem:[%s12 + $0x2e8] sm:$0xff]
      %v7295 = vld [vmem:[%s12 + $0x2f0] sm:$0xff]
      %v7296 = vld [vmem:[%s12 + $0x2f8] sm:$0xff]
      %v7297 = vld [vmem:[%s12 + $0x300] sm:$0xff]
      %v7298 = vld [vmem:[%s12 + $0x308] sm:$0xff]
      %v7299 = vld [vmem:[%s12 + $0x310] sm:$0xff]
      %v7300 = vld [vmem:[%s12 + $0x318] sm:$0xff]
      %v7301 = vld [vmem:[%s12 + $0x320] sm:$0xff]
      %v7302 = vld [vmem:[%s12 + $0x328] sm:$0xff]
      %v7303 = vld [vmem:[%s12 + $0x330] sm:$0xff]
      %v7304 = vld [vmem:[%s12 + $0x338] sm:$0xff]
      %v7305 = vld [vmem:[%s12 + $0x340] sm:$0xff]
      %v7306 = vld [vmem:[%s12 + $0x348] sm:$0xff]
      %v7307 = vld [vmem:[%s12 + $0x350] sm:$0xff]
      %v7308 = vld [vmem:[%s12 + $0x358] sm:$0xff]
      %v7309 = vld [vmem:[%s12 + $0x360] sm:$0xff]
      %v7310 = vld [vmem:[%s12 + $0x368] sm:$0xff]
      %v7311 = vld [vmem:[%s12 + $0x370] sm:$0xff]
      %v7312 = vld [vmem:[%s12 + $0x378] sm:$0xff]
      %v7313 = vld [vmem:[%s12 + $0x380] sm:$0xff]
      %v7314 = vld [vmem:[%s12 + $0x388] sm:$0xff]
      %v7315 = vld [vmem:[%s12 + $0x390] sm:$0xff]
      %v7316 = vld [vmem:[%s12 + $0x398] sm:$0xff]
      %v7317 = vld [vmem:[%s12 + $0x3a0] sm:$0xff]
      %v7318 = vld [vmem:[%s12 + $0x3a8] sm:$0xff]
      %v7319 = vld [vmem:[%s12 + $0x3b0] sm:$0xff]
      %v7320 = vld [vmem:[%s12 + $0x3b8] sm:$0xff]
      %v7321 = vld [vmem:[%s12 + $0x3c0] sm:$0xff]
      %v7322 = vld [vmem:[%s12 + $0x3c8] sm:$0xff]
      %v7323 = vld [vmem:[%s12 + $0x3d0] sm:$0xff]
      %v7324 = vld [vmem:[%s12 + $0x3d8] sm:$0xff]
      %v7325 = vld [vmem:[%s12 + $0x3e0] sm:$0xff]
      %v7326 = vld [vmem:[%s12 + $0x3e8] sm:$0xff]
      %v7327 = vld [vmem:[%s12 + $0x3f0] sm:$0xff]
      %v7328 = vld [vmem:[%s12 + $0x3f8] sm:$0xff]
      %7330 = vst [vmem:[#allocation1] ss:$9 sm:$0xff] %v7200
      %v7331 = vld [vmem:[#allocation1] sm:$0xff]
      %v7332 = vld [vmem:[#allocation1 + $0x9] sm:$0xff]
      %v7333 = vld [vmem:[#allocation1 + $0x12] sm:$0xff]
      %v7334 = vld [vmem:[#allocation1 + $0x1b] sm:$0xff]
      %v7467 = vunpack.c.l.b16 %v7201
      %v7468 = vunpack.c.h.b16 %v7201
      %v7469 = vunpack.c.l.b16 %v7202
      %v7470 = vunpack.c.h.b16 %v7202
      %v7471 = vunpack.c.l.b16 %v7203
      %v7472 = vunpack.c.h.b16 %v7203
      %v7473 = vunpack.c.l.b16 %v7204
      %v7474 = vunpack.c.h.b16 %v7204
      %v7475 = vunpack.c.l.b16 %v7205
      %v7476 = vunpack.c.h.b16 %v7205
      %v7477 = vunpack.c.l.b16 %v7206
      %v7478 = vunpack.c.h.b16 %v7206
      %v7479 = vunpack.c.l.b16 %v7207
      %v7480 = vunpack.c.h.b16 %v7207
      %v7481 = vunpack.c.l.b16 %v7208
      %v7482 = vunpack.c.h.b16 %v7208
      %v7483 = vunpack.c.l.b16 %v7209
      %v7484 = vunpack.c.h.b16 %v7209
      %v7485 = vunpack.c.l.b16 %v7210
      %v7486 = vunpack.c.h.b16 %v7210
      %v7487 = vunpack.c.l.b16 %v7211
      %v7488 = vunpack.c.h.b16 %v7211
      %v7489 = vunpack.c.l.b16 %v7212
      %v7490 = vunpack.c.h.b16 %v7212
      %v7491 = vunpack.c.l.b16 %v7213
      %v7492 = vunpack.c.h.b16 %v7213
      %v7493 = vunpack.c.l.b16 %v7214
      %v7494 = vunpack.c.h.b16 %v7214
      %v7495 = vunpack.c.l.b16 %v7215
      %v7496 = vunpack.c.h.b16 %v7215
      %v7497 = vunpack.c.l.b16 %v7216
      %v7498 = vunpack.c.h.b16 %v7216
      %v7499 = vunpack.c.l.b16 %v7217
      %v7500 = vunpack.c.h.b16 %v7217
      %v7501 = vunpack.c.l.b16 %v7218
      %v7502 = vunpack.c.h.b16 %v7218
      %v7503 = vunpack.c.l.b16 %v7219
      %v7504 = vunpack.c.h.b16 %v7219
      %v7505 = vunpack.c.l.b16 %v7220
      %v7506 = vunpack.c.h.b16 %v7220
      %v7507 = vunpack.c.l.b16 %v7221
      %v7508 = vunpack.c.h.b16 %v7221
      %v7509 = vunpack.c.l.b16 %v7222
      %v7510 = vunpack.c.h.b16 %v7222
      %v7511 = vunpack.c.l.b16 %v7223
      %v7512 = vunpack.c.h.b16 %v7223
      %v7513 = vunpack.c.l.b16 %v7224
      %v7514 = vunpack.c.h.b16 %v7224
      %v7515 = vunpack.c.l.b16 %v7225
      %v7516 = vunpack.c.h.b16 %v7225
      %v7517 = vunpack.c.l.b16 %v7226
      %v7518 = vunpack.c.h.b16 %v7226
      %v7519 = vunpack.c.l.b16 %v7227
      %v7520 = vunpack.c.h.b16 %v7227
      %v7521 = vunpack.c.l.b16 %v7228
      %v7522 = vunpack.c.h.b16 %v7228
      %v7523 = vunpack.c.l.b16 %v7229
      %v7524 = vunpack.c.h.b16 %v7229
      %v7525 = vunpack.c.l.b16 %v7230
      %v7526 = vunpack.c.h.b16 %v7230
      %v7527 = vunpack.c.l.b16 %v7231
      %v7528 = vunpack.c.h.b16 %v7231
      %v7529 = vunpack.c.l.b16 %v7232
      %v7530 = vunpack.c.h.b16 %v7232
      %v7531 = vunpack.c.l.b16 %v7233
      %v7532 = vunpack.c.h.b16 %v7233
      %v7533 = vunpack.c.l.b16 %v7234
      %v7534 = vunpack.c.h.b16 %v7234
      %v7535 = vunpack.c.l.b16 %v7235
      %v7536 = vunpack.c.h.b16 %v7235
      %v7537 = vunpack.c.l.b16 %v7236
      %v7538 = vunpack.c.h.b16 %v7236
      %v7539 = vunpack.c.l.b16 %v7237
      %v7540 = vunpack.c.h.b16 %v7237
      %v7541 = vunpack.c.l.b16 %v7238
      %v7542 = vunpack.c.h.b16 %v7238
      %v7543 = vunpack.c.l.b16 %v7239
      %v7544 = vunpack.c.h.b16 %v7239
      %v7545 = vunpack.c.l.b16 %v7240
      %v7546 = vunpack.c.h.b16 %v7240
      %v7547 = vunpack.c.l.b16 %v7241
      %v7548 = vunpack.c.h.b16 %v7241
      %v7549 = vunpack.c.l.b16 %v7242
      %v7550 = vunpack.c.h.b16 %v7242
      %v7551 = vunpack.c.l.b16 %v7243
      %v7552 = vunpack.c.h.b16 %v7243
      %v7553 = vunpack.c.l.b16 %v7244
      %v7554 = vunpack.c.h.b16 %v7244
      %v7555 = vunpack.c.l.b16 %v7245
      %v7556 = vunpack.c.h.b16 %v7245
      %v7557 = vunpack.c.l.b16 %v7246
      %v7558 = vunpack.c.h.b16 %v7246
      %v7559 = vunpack.c.l.b16 %v7247
      %v7560 = vunpack.c.h.b16 %v7247
      %v7561 = vunpack.c.l.b16 %v7248
      %v7562 = vunpack.c.h.b16 %v7248
      %v7563 = vunpack.c.l.b16 %v7249
      %v7564 = vunpack.c.h.b16 %v7249
      %v7565 = vunpack.c.l.b16 %v7250
      %v7566 = vunpack.c.h.b16 %v7250
      %v7567 = vunpack.c.l.b16 %v7251
      %v7568 = vunpack.c.h.b16 %v7251
      %v7569 = vunpack.c.l.b16 %v7252
      %v7570 = vunpack.c.h.b16 %v7252
      %v7571 = vunpack.c.l.b16 %v7253
      %v7572 = vunpack.c.h.b16 %v7253
      %v7573 = vunpack.c.l.b16 %v7254
      %v7574 = vunpack.c.h.b16 %v7254
      %v7575 = vunpack.c.l.b16 %v7255
      %v7576 = vunpack.c.h.b16 %v7255
      %v7577 = vunpack.c.l.b16 %v7256
      %v7578 = vunpack.c.h.b16 %v7256
      %v7579 = vunpack.c.l.b16 %v7257
      %v7580 = vunpack.c.h.b16 %v7257
      %v7581 = vunpack.c.l.b16 %v7258
      %v7582 = vunpack.c.h.b16 %v7258
      %v7583 = vunpack.c.l.b16 %v7259
      %v7584 = vunpack.c.h.b16 %v7259
      %v7585 = vunpack.c.l.b16 %v7260
      %v7586 = vunpack.c.h.b16 %v7260
      %v7587 = vunpack.c.l.b16 %v7261
      %v7588 = vunpack.c.h.b16 %v7261
      %v7589 = vunpack.c.l.b16 %v7262
      %v7590 = vunpack.c.h.b16 %v7262
      %v7591 = vunpack.c.l.b16 %v7263
      %v7592 = vunpack.c.h.b16 %v7263
      %v7593 = vunpack.c.l.b16 %v7264
      %v7594 = vunpack.c.h.b16 %v7264
      %v7595 = vunpack.c.l.b16 %v7265
      %v7596 = vunpack.c.h.b16 %v7265
      %v7597 = vunpack.c.l.b16 %v7266
      %v7598 = vunpack.c.h.b16 %v7266
      %v7599 = vunpack.c.l.b16 %v7267
      %v7600 = vunpack.c.h.b16 %v7267
      %v7601 = vunpack.c.l.b16 %v7268
      %v7602 = vunpack.c.h.b16 %v7268
      %v7603 = vunpack.c.l.b16 %v7269
      %v7604 = vunpack.c.h.b16 %v7269
      %v7605 = vunpack.c.l.b16 %v7270
      %v7606 = vunpack.c.h.b16 %v7270
      %v7607 = vunpack.c.l.b16 %v7271
      %v7608 = vunpack.c.h.b16 %v7271
      %v7609 = vunpack.c.l.b16 %v7272
      %v7610 = vunpack.c.h.b16 %v7272
      %v7611 = vunpack.c.l.b16 %v7273
      %v7612 = vunpack.c.h.b16 %v7273
      %v7613 = vunpack.c.l.b16 %v7274
      %v7614 = vunpack.c.h.b16 %v7274
      %v7615 = vunpack.c.l.b16 %v7275
      %v7616 = vunpack.c.h.b16 %v7275
      %v7617 = vunpack.c.l.b16 %v7276
      %v7618 = vunpack.c.h.b16 %v7276
      %v7619 = vunpack.c.l.b16 %v7277
      %v7620 = vunpack.c.h.b16 %v7277
      %v7621 = vunpack.c.l.b16 %v7278
      %v7622 = vunpack.c.h.b16 %v7278
      %v7623 = vunpack.c.l.b16 %v7279
      %v7624 = vunpack.c.h.b16 %v7279
      %v7625 = vunpack.c.l.b16 %v7280
      %v7626 = vunpack.c.h.b16 %v7280
      %v7627 = vunpack.c.l.b16 %v7281
      %v7628 = vunpack.c.h.b16 %v7281
      %v7629 = vunpack.c.l.b16 %v7282
      %v7630 = vunpack.c.h.b16 %v7282
      %v7631 = vunpack.c.l.b16 %v7283
      %v7632 = vunpack.c.h.b16 %v7283
      %v7633 = vunpack.c.l.b16 %v7284
      %v7634 = vunpack.c.h.b16 %v7284
      %v7635 = vunpack.c.l.b16 %v7285
      %v7636 = vunpack.c.h.b16 %v7285
      %v7637 = vunpack.c.l.b16 %v7286
      %v7638 = vunpack.c.h.b16 %v7286
      %v7639 = vunpack.c.l.b16 %v7287
      %v7640 = vunpack.c.h.b16 %v7287
      %v7641 = vunpack.c.l.b16 %v7288
      %v7642 = vunpack.c.h.b16 %v7288
      %v7643 = vunpack.c.l.b16 %v7289
      %v7644 = vunpack.c.h.b16 %v7289
      %v7645 = vunpack.c.l.b16 %v7290
      %v7646 = vunpack.c.h.b16 %v7290
      %v7647 = vunpack.c.l.b16 %v7291
      %v7648 = vunpack.c.h.b16 %v7291
      %v7649 = vunpack.c.l.b16 %v7292
      %v7650 = vunpack.c.h.b16 %v7292
      %v7651 = vunpack.c.l.b16 %v7293
      %v7652 = vunpack.c.h.b16 %v7293
      %v7653 = vunpack.c.l.b16 %v7294
      %v7654 = vunpack.c.h.b16 %v7294
      %v7655 = vunpack.c.l.b16 %v7295
      %v7656 = vunpack.c.h.b16 %v7295
      %v7657 = vunpack.c.l.b16 %v7296
      %v7658 = vunpack.c.h.b16 %v7296
      %v7659 = vunpack.c.l.b16 %v7297
      %v7660 = vunpack.c.h.b16 %v7297
      %v7661 = vunpack.c.l.b16 %v7298
      %v7662 = vunpack.c.h.b16 %v7298
      %v7663 = vunpack.c.l.b16 %v7299
      %v7664 = vunpack.c.h.b16 %v7299
      %v7665 = vunpack.c.l.b16 %v7300
      %v7666 = vunpack.c.h.b16 %v7300
      %v7667 = vunpack.c.l.b16 %v7301
      %v7668 = vunpack.c.h.b16 %v7301
      %v7669 = vunpack.c.l.b16 %v7302
      %v7670 = vunpack.c.h.b16 %v7302
      %v7671 = vunpack.c.l.b16 %v7303
      %v7672 = vunpack.c.h.b16 %v7303
      %v7673 = vunpack.c.l.b16 %v7304
      %v7674 = vunpack.c.h.b16 %v7304
      %v7675 = vunpack.c.l.b16 %v7305
      %v7676 = vunpack.c.h.b16 %v7305
      %v7677 = vunpack.c.l.b16 %v7306
      %v7678 = vunpack.c.h.b16 %v7306
      %v7679 = vunpack.c.l.b16 %v7307
      %v7680 = vunpack.c.h.b16 %v7307
      %v7681 = vunpack.c.l.b16 %v7308
      %v7682 = vunpack.c.h.b16 %v7308
      %v7683 = vunpack.c.l.b16 %v7309
      %v7684 = vunpack.c.h.b16 %v7309
      %v7685 = vunpack.c.l.b16 %v7310
      %v7686 = vunpack.c.h.b16 %v7310
      %v7687 = vunpack.c.l.b16 %v7311
      %v7688 = vunpack.c.h.b16 %v7311
      %v7689 = vunpack.c.l.b16 %v7312
      %v7690 = vunpack.c.h.b16 %v7312
      %v7691 = vunpack.c.l.b16 %v7313
      %v7692 = vunpack.c.h.b16 %v7313
      %v7693 = vunpack.c.l.b16 %v7314
      %v7694 = vunpack.c.h.b16 %v7314
      %v7695 = vunpack.c.l.b16 %v7315
      %v7696 = vunpack.c.h.b16 %v7315
      %v7697 = vunpack.c.l.b16 %v7316
      %v7698 = vunpack.c.h.b16 %v7316
      %v7699 = vunpack.c.l.b16 %v7317
      %v7700 = vunpack.c.h.b16 %v7317
      %v7701 = vunpack.c.l.b16 %v7318
      %v7702 = vunpack.c.h.b16 %v7318
      %v7703 = vunpack.c.l.b16 %v7319
      %v7704 = vunpack.c.h.b16 %v7319
      %v7705 = vunpack.c.l.b16 %v7320
      %v7706 = vunpack.c.h.b16 %v7320
      %v7707 = vunpack.c.l.b16 %v7321
      %v7708 = vunpack.c.h.b16 %v7321
      %v7709 = vunpack.c.l.b16 %v7322
      %v7710 = vunpack.c.h.b16 %v7322
      %v7711 = vunpack.c.l.b16 %v7323
      %v7712 = vunpack.c.h.b16 %v7323
      %v7713 = vunpack.c.l.b16 %v7324
      %v7714 = vunpack.c.h.b16 %v7324
      %v7715 = vunpack.c.l.b16 %v7325
      %v7716 = vunpack.c.h.b16 %v7325
      %v7717 = vunpack.c.l.b16 %v7326
      %v7718 = vunpack.c.h.b16 %v7326
      %v7719 = vunpack.c.l.b16 %v7327
      %v7720 = vunpack.c.h.b16 %v7327
      %v7721 = vunpack.c.l.b16 %v7328
      %v7722 = vunpack.c.h.b16 %v7328
      %v7723 = vpack.c.b16 %v7471, %v7467
      %v7724 = vpack.c.b16 %v7472, %v7468
      %v7725 = vpack.c.b16 %v7473, %v7469
      %v7726 = vpack.c.b16 %v7474, %v7470
      %v7727 = vpack.c.b16 %v7479, %v7475
      %v7728 = vpack.c.b16 %v7480, %v7476
      %v7729 = vpack.c.b16 %v7481, %v7477
      %v7730 = vpack.c.b16 %v7482, %v7478
      %v7731 = vpack.c.b16 %v7487, %v7483
      %v7732 = vpack.c.b16 %v7488, %v7484
      %v7733 = vpack.c.b16 %v7489, %v7485
      %v7734 = vpack.c.b16 %v7490, %v7486
      %v7735 = vpack.c.b16 %v7495, %v7491
      %v7736 = vpack.c.b16 %v7496, %v7492
      %v7737 = vpack.c.b16 %v7497, %v7493
      %v7738 = vpack.c.b16 %v7498, %v7494
      %v7739 = vpack.c.b16 %v7503, %v7499
      %v7740 = vpack.c.b16 %v7504, %v7500
      %v7741 = vpack.c.b16 %v7505, %v7501
      %v7742 = vpack.c.b16 %v7506, %v7502
      %v7743 = vpack.c.b16 %v7511, %v7507
      %v7744 = vpack.c.b16 %v7512, %v7508
      %v7745 = vpack.c.b16 %v7513, %v7509
      %v7746 = vpack.c.b16 %v7514, %v7510
      %v7747 = vpack.c.b16 %v7519, %v7515
      %v7748 = vpack.c.b16 %v7520, %v7516
      %v7749 = vpack.c.b16 %v7521, %v7517
      %v7750 = vpack.c.b16 %v7522, %v7518
      %v7751 = vpack.c.b16 %v7527, %v7523
      %v7752 = vpack.c.b16 %v7528, %v7524
      %v7753 = vpack.c.b16 %v7529, %v7525
      %v7754 = vpack.c.b16 %v7530, %v7526
      %v7755 = vpack.c.b16 %v7535, %v7531
      %v7756 = vpack.c.b16 %v7536, %v7532
      %v7757 = vpack.c.b16 %v7537, %v7533
      %v7758 = vpack.c.b16 %v7538, %v7534
      %v7759 = vpack.c.b16 %v7543, %v7539
      %v7760 = vpack.c.b16 %v7544, %v7540
      %v7761 = vpack.c.b16 %v7545, %v7541
      %v7762 = vpack.c.b16 %v7546, %v7542
      %v7763 = vpack.c.b16 %v7551, %v7547
      %v7764 = vpack.c.b16 %v7552, %v7548
      %v7765 = vpack.c.b16 %v7553, %v7549
      %v7766 = vpack.c.b16 %v7554, %v7550
      %v7767 = vpack.c.b16 %v7559, %v7555
      %v7768 = vpack.c.b16 %v7560, %v7556
      %v7769 = vpack.c.b16 %v7561, %v7557
      %v7770 = vpack.c.b16 %v7562, %v7558
      %v7771 = vpack.c.b16 %v7567, %v7563
      %v7772 = vpack.c.b16 %v7568, %v7564
      %v7773 = vpack.c.b16 %v7569, %v7565
      %v7774 = vpack.c.b16 %v7570, %v7566
      %v7775 = vpack.c.b16 %v7575, %v7571
      %v7776 = vpack.c.b16 %v7576, %v7572
      %v7777 = vpack.c.b16 %v7577, %v7573
      %v7778 = vpack.c.b16 %v7578, %v7574
      %v7779 = vpack.c.b16 %v7583, %v7579
      %v7780 = vpack.c.b16 %v7584, %v7580
      %v7781 = vpack.c.b16 %v7585, %v7581
      %v7782 = vpack.c.b16 %v7586, %v7582
      %v7783 = vpack.c.b16 %v7591, %v7587
      %v7784 = vpack.c.b16 %v7592, %v7588
      %v7785 = vpack.c.b16 %v7593, %v7589
      %v7786 = vpack.c.b16 %v7594, %v7590
      %v7787 = vpack.c.b16 %v7599, %v7595
      %v7788 = vpack.c.b16 %v7600, %v7596
      %v7789 = vpack.c.b16 %v7601, %v7597
      %v7790 = vpack.c.b16 %v7602, %v7598
      %v7791 = vpack.c.b16 %v7607, %v7603
      %v7792 = vpack.c.b16 %v7608, %v7604
      %v7793 = vpack.c.b16 %v7609, %v7605
      %v7794 = vpack.c.b16 %v7610, %v7606
      %v7795 = vpack.c.b16 %v7615, %v7611
      %v7796 = vpack.c.b16 %v7616, %v7612
      %v7797 = vpack.c.b16 %v7617, %v7613
      %v7798 = vpack.c.b16 %v7618, %v7614
      %v7799 = vpack.c.b16 %v7623, %v7619
      %v7800 = vpack.c.b16 %v7624, %v7620
      %v7801 = vpack.c.b16 %v7625, %v7621
      %v7802 = vpack.c.b16 %v7626, %v7622
      %v7803 = vpack.c.b16 %v7631, %v7627
      %v7804 = vpack.c.b16 %v7632, %v7628
      %v7805 = vpack.c.b16 %v7633, %v7629
      %v7806 = vpack.c.b16 %v7634, %v7630
      %v7807 = vpack.c.b16 %v7639, %v7635
      %v7808 = vpack.c.b16 %v7640, %v7636
      %v7809 = vpack.c.b16 %v7641, %v7637
      %v7810 = vpack.c.b16 %v7642, %v7638
      %v7811 = vpack.c.b16 %v7647, %v7643
      %v7812 = vpack.c.b16 %v7648, %v7644
      %v7813 = vpack.c.b16 %v7649, %v7645
      %v7814 = vpack.c.b16 %v7650, %v7646
      %v7815 = vpack.c.b16 %v7655, %v7651
      %v7816 = vpack.c.b16 %v7656, %v7652
      %v7817 = vpack.c.b16 %v7657, %v7653
      %v7818 = vpack.c.b16 %v7658, %v7654
      %v7819 = vpack.c.b16 %v7663, %v7659
      %v7820 = vpack.c.b16 %v7664, %v7660
      %v7821 = vpack.c.b16 %v7665, %v7661
      %v7822 = vpack.c.b16 %v7666, %v7662
      %v7823 = vpack.c.b16 %v7671, %v7667
      %v7824 = vpack.c.b16 %v7672, %v7668
      %v7825 = vpack.c.b16 %v7673, %v7669
      %v7826 = vpack.c.b16 %v7674, %v7670
      %v7827 = vpack.c.b16 %v7679, %v7675
      %v7828 = vpack.c.b16 %v7680, %v7676
      %v7829 = vpack.c.b16 %v7681, %v7677
      %v7830 = vpack.c.b16 %v7682, %v7678
      %v7831 = vpack.c.b16 %v7687, %v7683
      %v7832 = vpack.c.b16 %v7688, %v7684
      %v7833 = vpack.c.b16 %v7689, %v7685
      %v7834 = vpack.c.b16 %v7690, %v7686
      %v7835 = vpack.c.b16 %v7695, %v7691
      %v7836 = vpack.c.b16 %v7696, %v7692
      %v7837 = vpack.c.b16 %v7697, %v7693
      %v7838 = vpack.c.b16 %v7698, %v7694
      %v7839 = vpack.c.b16 %v7703, %v7699
      %v7840 = vpack.c.b16 %v7704, %v7700
      %v7841 = vpack.c.b16 %v7705, %v7701
      %v7842 = vpack.c.b16 %v7706, %v7702
      %v7843 = vpack.c.b16 %v7711, %v7707
      %v7844 = vpack.c.b16 %v7712, %v7708
      %v7845 = vpack.c.b16 %v7713, %v7709
      %v7846 = vpack.c.b16 %v7714, %v7710
      %v7847 = vpack.c.b16 %v7719, %v7715
      %v7848 = vpack.c.b16 %v7720, %v7716
      %v7849 = vpack.c.b16 %v7721, %v7717
      %v7850 = vpack.c.b16 %v7722, %v7718
      %7979 = vmatpush.bf16.msra.mxu0 %v7751
      %7980 = vmatpush.bf16.msra.mxu0 %v7747
      %7981 = vmatpush.bf16.msra.mxu0 %v7743
      %7982 = vmatpush.bf16.msra.mxu0 %v7739
      %7983 = vmatpush.bf16.msra.mxu0 %v7735
      %7984 = vmatpush.bf16.msra.mxu0 %v7731
      %7985 = vmatpush.bf16.msra.mxu0 %v7727
      %7986 = vmatpush.bf16.msra.mxu0 %v7723
      %7987 = vmatmul.bf16.gmra.mxu0 %v7331
      %v7988 = vpop.f32.mrf.mxu0
      %v7989 = vadd.f32 0.0, %v7988
      %v7990 = vpop.f32.mrf.mxu0
      %7991 = vdwg.mxu0
      %7992 = vmatpush.bf16.msra.mxu0 %v7783
      %7993 = vmatpush.bf16.msra.mxu0 %v7779
      %7994 = vmatpush.bf16.msra.mxu0 %v7775
      %7995 = vmatpush.bf16.msra.mxu0 %v7771
      %7996 = vmatpush.bf16.msra.mxu0 %v7767
      %7997 = vmatpush.bf16.msra.mxu0 %v7763
      %7998 = vmatpush.bf16.msra.mxu0 %v7759
      %7999 = vmatpush.bf16.msra.mxu0 %v7755
      %8000 = vmatmul.bf16.gmra.mxu0 %v7332
      %v8001 = vpop.f32.mrf.mxu0
      %v8002 = vadd.f32 %v7989, %v8001
      %v8003 = vpop.f32.mrf.mxu0
      %8004 = vdwg.mxu0
      %8005 = vmatpush.bf16.msra.mxu0 %v7815
      %8006 = vmatpush.bf16.msra.mxu0 %v7811
      %8007 = vmatpush.bf16.msra.mxu0 %v7807
      %8008 = vmatpush.bf16.msra.mxu0 %v7803
      %8009 = vmatpush.bf16.msra.mxu0 %v7799
      %8010 = vmatpush.bf16.msra.mxu0 %v7795
      %8011 = vmatpush.bf16.msra.mxu0 %v7791
      %8012 = vmatpush.bf16.msra.mxu0 %v7787
      %8013 = vmatmul.bf16.gmra.mxu0 %v7333
      %v8014 = vpop.f32.mrf.mxu0
      %v8015 = vadd.f32 %v8002, %v8014
      %v8016 = vpop.f32.mrf.mxu0
      %8017 = vdwg.mxu0
      %8018 = vmatpush.bf16.msra.mxu0 %v7847
      %8019 = vmatpush.bf16.msra.mxu0 %v7843
      %8020 = vmatpush.bf16.msra.mxu0 %v7839
      %8021 = vmatpush.bf16.msra.mxu0 %v7835
      %8022 = vmatpush.bf16.msra.mxu0 %v7831
      %8023 = vmatpush.bf16.msra.mxu0 %v7827
      %8024 = vmatpush.bf16.msra.mxu0 %v7823
      %8025 = vmatpush.bf16.msra.mxu0 %v7819
      %8026 = vmatmul.bf16.gmra.mxu0 %v7334
      %v8027 = vpop.f32.mrf.mxu0
      %v8028 = vadd.f32 %v8015, %v8027
      %v8029 = vpop.f32.mrf.mxu0
      %8030 = vdwg.mxu0
      %8031 = vmatpush.bf16.msra.mxu0 %v7752
      %8032 = vmatpush.bf16.msra.mxu0 %v7748
      %8033 = vmatpush.bf16.msra.mxu0 %v7744
      %8034 = vmatpush.bf16.msra.mxu0 %v7740
      %8035 = vmatpush.bf16.msra.mxu0 %v7736
      %8036 = vmatpush.bf16.msra.mxu0 %v7732
      %8037 = vmatpush.bf16.msra.mxu0 %v7728
      %8038 = vmatpush.bf16.msra.mxu0 %v7724
      %8039 = vmatmul.bf16.gmra.mxu0 %v7331
      %v8040 = vpop.f32.mrf.mxu0
      %v8041 = vadd.f32 0.0, %v8040
      %v8042 = vpop.f32.mrf.mxu0
      %8043 = vdwg.mxu0
      %8044 = vmatpush.bf16.msra.mxu0 %v7784
      %8045 = vmatpush.bf16.msra.mxu0 %v7780
      %8046 = vmatpush.bf16.msra.mxu0 %v7776
      %8047 = vmatpush.bf16.msra.mxu0 %v7772
      %8048 = vmatpush.bf16.msra.mxu0 %v7768
      %8049 = vmatpush.bf16.msra.mxu0 %v7764
      %8050 = vmatpush.bf16.msra.mxu0 %v7760
      %8051 = vmatpush.bf16.msra.mxu0 %v7756
      %8052 = vmatmul.bf16.gmra.mxu0 %v7332
      %v8053 = vpop.f32.mrf.mxu0
      %v8054 = vadd.f32 %v8041, %v8053
      %v8055 = vpop.f32.mrf.mxu0
      %8056 = vdwg.mxu0
      %8057 = vmatpush.bf16.msra.mxu0 %v7816
      %8058 = vmatpush.bf16.msra.mxu0 %v7812
      %8059 = vmatpush.bf16.msra.mxu0 %v7808
      %8060 = vmatpush.bf16.msra.mxu0 %v7804
      %8061 = vmatpush.bf16.msra.mxu0 %v7800
      %8062 = vmatpush.bf16.msra.mxu0 %v7796
      %8063 = vmatpush.bf16.msra.mxu0 %v7792
      %8064 = vmatpush.bf16.msra.mxu0 %v7788
      %8065 = vmatmul.bf16.gmra.mxu0 %v7333
      %v8066 = vpop.f32.mrf.mxu0
      %v8067 = vadd.f32 %v8054, %v8066
      %v8068 = vpop.f32.mrf.mxu0
      %8069 = vdwg.mxu0
      %8070 = vmatpush.bf16.msra.mxu0 %v7848
      %8071 = vmatpush.bf16.msra.mxu0 %v7844
      %8072 = vmatpush.bf16.msra.mxu0 %v7840
      %8073 = vmatpush.bf16.msra.mxu0 %v7836
      %8074 = vmatpush.bf16.msra.mxu0 %v7832
      %8075 = vmatpush.bf16.msra.mxu0 %v7828
      %8076 = vmatpush.bf16.msra.mxu0 %v7824
      %8077 = vmatpush.bf16.msra.mxu0 %v7820
      %8078 = vmatmul.bf16.gmra.mxu0 %v7334
      %v8079 = vpop.f32.mrf.mxu0
      %v8080 = vadd.f32 %v8067, %v8079
      %v8081 = vpop.f32.mrf.mxu0
      %8082 = vdwg.mxu0
      %8083 = vmatpush.bf16.msra.mxu0 %v7753
      %8084 = vmatpush.bf16.msra.mxu0 %v7749
      %8085 = vmatpush.bf16.msra.mxu0 %v7745
      %8086 = vmatpush.bf16.msra.mxu0 %v7741
      %8087 = vmatpush.bf16.msra.mxu0 %v7737
      %8088 = vmatpush.bf16.msra.mxu0 %v7733
      %8089 = vmatpush.bf16.msra.mxu0 %v7729
      %8090 = vmatpush.bf16.msra.mxu0 %v7725
      %8091 = vmatmul.bf16.gmra.mxu0 %v7331
      %v8092 = vpop.f32.mrf.mxu0
      %v8093 = vadd.f32 0.0, %v8092
      %v8094 = vpop.f32.mrf.mxu0
      %8095 = vdwg.mxu0
      %8096 = vmatpush.bf16.msra.mxu0 %v7785
      %8097 = vmatpush.bf16.msra.mxu0 %v7781
      %8098 = vmatpush.bf16.msra.mxu0 %v7777
      %8099 = vmatpush.bf16.msra.mxu0 %v7773
      %8100 = vmatpush.bf16.msra.mxu0 %v7769
      %8101 = vmatpush.bf16.msra.mxu0 %v7765
      %8102 = vmatpush.bf16.msra.mxu0 %v7761
      %8103 = vmatpush.bf16.msra.mxu0 %v7757
      %8104 = vmatmul.bf16.gmra.mxu0 %v7332
      %v8105 = vpop.f32.mrf.mxu0
      %v8106 = vadd.f32 %v8093, %v8105
      %v8107 = vpop.f32.mrf.mxu0
      %8108 = vdwg.mxu0
      %8109 = vmatpush.bf16.msra.mxu0 %v7817
      %8110 = vmatpush.bf16.msra.mxu0 %v7813
      %8111 = vmatpush.bf16.msra.mxu0 %v7809
      %8112 = vmatpush.bf16.msra.mxu0 %v7805
      %8113 = vmatpush.bf16.msra.mxu0 %v7801
      %8114 = vmatpush.bf16.msra.mxu0 %v7797
      %8115 = vmatpush.bf16.msra.mxu0 %v7793
      %8116 = vmatpush.bf16.msra.mxu0 %v7789
      %8117 = vmatmul.bf16.gmra.mxu0 %v7333
      %v8118 = vpop.f32.mrf.mxu0
      %v8119 = vadd.f32 %v8106, %v8118
      %v8120 = vpop.f32.mrf.mxu0
      %8121 = vdwg.mxu0
      %8122 = vmatpush.bf16.msra.mxu0 %v7849
      %8123 = vmatpush.bf16.msra.mxu0 %v7845
      %8124 = vmatpush.bf16.msra.mxu0 %v7841
      %8125 = vmatpush.bf16.msra.mxu0 %v7837
      %8126 = vmatpush.bf16.msra.mxu0 %v7833
      %8127 = vmatpush.bf16.msra.mxu0 %v7829
      %8128 = vmatpush.bf16.msra.mxu0 %v7825
      %8129 = vmatpush.bf16.msra.mxu0 %v7821
      %8130 = vmatmul.bf16.gmra.mxu0 %v7334
      %v8131 = vpop.f32.mrf.mxu0
      %v8132 = vadd.f32 %v8119, %v8131
      %v8133 = vpop.f32.mrf.mxu0
      %8134 = vdwg.mxu0
      %8135 = vmatpush.bf16.msra.mxu0 %v7754
      %8136 = vmatpush.bf16.msra.mxu0 %v7750
      %8137 = vmatpush.bf16.msra.mxu0 %v7746
      %8138 = vmatpush.bf16.msra.mxu0 %v7742
      %8139 = vmatpush.bf16.msra.mxu0 %v7738
      %8140 = vmatpush.bf16.msra.mxu0 %v7734
      %8141 = vmatpush.bf16.msra.mxu0 %v7730
      %8142 = vmatpush.bf16.msra.mxu0 %v7726
      %8143 = vmatmul.bf16.gmra.mxu0 %v7331
      %v8144 = vpop.f32.mrf.mxu0
      %v8145 = vadd.f32 0.0, %v8144
      %v8146 = vpop.f32.mrf.mxu0
      %8147 = vdwg.mxu0
      %8148 = vmatpush.bf16.msra.mxu0 %v7786
      %8149 = vmatpush.bf16.msra.mxu0 %v7782
      %8150 = vmatpush.bf16.msra.mxu0 %v7778
      %8151 = vmatpush.bf16.msra.mxu0 %v7774
      %8152 = vmatpush.bf16.msra.mxu0 %v7770
      %8153 = vmatpush.bf16.msra.mxu0 %v7766
      %8154 = vmatpush.bf16.msra.mxu0 %v7762
      %8155 = vmatpush.bf16.msra.mxu0 %v7758
      %8156 = vmatmul.bf16.gmra.mxu0 %v7332
      %v8157 = vpop.f32.mrf.mxu0
      %v8158 = vadd.f32 %v8145, %v8157
      %v8159 = vpop.f32.mrf.mxu0
      %8160 = vdwg.mxu0
      %8161 = vmatpush.bf16.msra.mxu0 %v7818
      %8162 = vmatpush.bf16.msra.mxu0 %v7814
      %8163 = vmatpush.bf16.msra.mxu0 %v7810
      %8164 = vmatpush.bf16.msra.mxu0 %v7806
      %8165 = vmatpush.bf16.msra.mxu0 %v7802
      %8166 = vmatpush.bf16.msra.mxu0 %v7798
      %8167 = vmatpush.bf16.msra.mxu0 %v7794
      %8168 = vmatpush.bf16.msra.mxu0 %v7790
      %8169 = vmatmul.bf16.gmra.mxu0 %v7333
      %v8170 = vpop.f32.mrf.mxu0
      %v8171 = vadd.f32 %v8158, %v8170
      %v8172 = vpop.f32.mrf.mxu0
      %8173 = vdwg.mxu0
      %8174 = vmatpush.bf16.msra.mxu0 %v7850
      %8175 = vmatpush.bf16.msra.mxu0 %v7846
      %8176 = vmatpush.bf16.msra.mxu0 %v7842
      %8177 = vmatpush.bf16.msra.mxu0 %v7838
      %8178 = vmatpush.bf16.msra.mxu0 %v7834
      %8179 = vmatpush.bf16.msra.mxu0 %v7830
      %8180 = vmatpush.bf16.msra.mxu0 %v7826
      %8181 = vmatpush.bf16.msra.mxu0 %v7822
      %8182 = vmatmul.bf16.gmra.mxu0 %v7334
      %v8183 = vpop.f32.mrf.mxu0
      %v8184 = vadd.f32 %v8171, %v8183
      %v8185 = vpop.f32.mrf.mxu0
      %8186 = vdwg.mxu0
      %v8203 = vunpack.c.l.b16 %v7184
      %v8204 = vunpack.c.h.b16 %v7184
      %v8205 = vunpack.c.l.b16 %v7185
      %v8206 = vunpack.c.h.b16 %v7185
      %v8207 = vunpack.c.l.b16 %v7186
      %v8208 = vunpack.c.h.b16 %v7186
      %v8209 = vunpack.c.l.b16 %v7187
      %v8210 = vunpack.c.h.b16 %v7187
      %v8211 = vunpack.c.l.b16 %v7188
      %v8212 = vunpack.c.h.b16 %v7188
      %v8213 = vunpack.c.l.b16 %v7189
      %v8214 = vunpack.c.h.b16 %v7189
      %v8215 = vunpack.c.l.b16 %v7190
      %v8216 = vunpack.c.h.b16 %v7190
      %v8217 = vunpack.c.l.b16 %v7191
      %v8218 = vunpack.c.h.b16 %v7191
      %v8219 = vunpack.c.l.b16 %v7192
      %v8220 = vunpack.c.h.b16 %v7192
      %v8221 = vunpack.c.l.b16 %v7193
      %v8222 = vunpack.c.h.b16 %v7193
      %v8223 = vunpack.c.l.b16 %v7194
      %v8224 = vunpack.c.h.b16 %v7194
      %v8225 = vunpack.c.l.b16 %v7195
      %v8226 = vunpack.c.h.b16 %v7195
      %v8227 = vunpack.c.l.b16 %v7196
      %v8228 = vunpack.c.h.b16 %v7196
      %v8229 = vunpack.c.l.b16 %v7197
      %v8230 = vunpack.c.h.b16 %v7197
      %v8231 = vunpack.c.l.b16 %v7198
      %v8232 = vunpack.c.h.b16 %v7198
      %v8233 = vunpack.c.l.b16 %v7199
      %v8234 = vunpack.c.h.b16 %v7199
      %v8235 = vpack.c.b16 %v8207, %v8203
      %v8236 = vpack.c.b16 %v8208, %v8204
      %v8237 = vpack.c.b16 %v8209, %v8205
      %v8238 = vpack.c.b16 %v8210, %v8206
      %v8239 = vpack.c.b16 %v8215, %v8211
      %v8240 = vpack.c.b16 %v8216, %v8212
      %v8241 = vpack.c.b16 %v8217, %v8213
      %v8242 = vpack.c.b16 %v8218, %v8214
      %v8243 = vpack.c.b16 %v8223, %v8219
      %v8244 = vpack.c.b16 %v8224, %v8220
      %v8245 = vpack.c.b16 %v8225, %v8221
      %v8246 = vpack.c.b16 %v8226, %v8222
      %v8247 = vpack.c.b16 %v8231, %v8227
      %v8248 = vpack.c.b16 %v8232, %v8228
      %v8249 = vpack.c.b16 %v8233, %v8229
      %v8250 = vpack.c.b16 %v8234, %v8230
      %v8268 = vsel %vm785, %v7183, 0
      %8270 = vmatpush.bf16.msra.mxu0 0
      %8271 = vmatpush.bf16.msra.mxu0 0
      %8272 = vmatpush.bf16.msra.mxu0 0
      %8273 = vmatpush.bf16.msra.mxu0 0
      %8274 = vmatpush.bf16.msra.mxu0 %v8247
      %8275 = vmatpush.bf16.msra.mxu0 %v8243
      %8276 = vmatpush.bf16.msra.mxu0 %v8239
      %8277 = vmatpush.bf16.msra.mxu0 %v8235
      %8278 = vmatmul.bf16.gmra.mxu0 %v8268
      %v8279 = vpop.f32.mrf.mxu0
      %v8280 = vadd.f32 %v8028, %v8279
      %v8281 = vpop.f32.mrf.mxu0
      %8282 = vdwg.mxu0
      %8283 = vmatpush.bf16.msra.mxu0 0
      %8284 = vmatpush.bf16.msra.mxu0 0
      %8285 = vmatpush.bf16.msra.mxu0 0
      %8286 = vmatpush.bf16.msra.mxu0 0
      %8287 = vmatpush.bf16.msra.mxu0 %v8248
      %8288 = vmatpush.bf16.msra.mxu0 %v8244
      %8289 = vmatpush.bf16.msra.mxu0 %v8240
      %8290 = vmatpush.bf16.msra.mxu0 %v8236
      %8291 = vmatmul.bf16.gmra.mxu0 %v8268
      %v8292 = vpop.f32.mrf.mxu0
      %v8293 = vadd.f32 %v8080, %v8292
      %v8294 = vpop.f32.mrf.mxu0
      %8295 = vdwg.mxu0
      %8296 = vmatpush.bf16.msra.mxu0 0
      %8297 = vmatpush.bf16.msra.mxu0 0
      %8298 = vmatpush.bf16.msra.mxu0 0
      %8299 = vmatpush.bf16.msra.mxu0 0
      %8300 = vmatpush.bf16.msra.mxu0 %v8249
      %8301 = vmatpush.bf16.msra.mxu0 %v8245
      %8302 = vmatpush.bf16.msra.mxu0 %v8241
      %8303 = vmatpush.bf16.msra.mxu0 %v8237
      %8304 = vmatmul.bf16.gmra.mxu0 %v8268
      %v8305 = vpop.f32.mrf.mxu0
      %v8306 = vadd.f32 %v8132, %v8305
      %v8307 = vpop.f32.mrf.mxu0
      %8308 = vdwg.mxu0
      %8309 = vmatpush.bf16.msra.mxu0 0
      %8310 = vmatpush.bf16.msra.mxu0 0
      %8311 = vmatpush.bf16.msra.mxu0 0
      %8312 = vmatpush.bf16.msra.mxu0 0
      %8313 = vmatpush.bf16.msra.mxu0 %v8250
      %8314 = vmatpush.bf16.msra.mxu0 %v8246
      %8315 = vmatpush.bf16.msra.mxu0 %v8242
      %8316 = vmatpush.bf16.msra.mxu0 %v8238
      %8317 = vmatmul.bf16.gmra.mxu0 %v8268
      %v8318 = vpop.f32.mrf.mxu0
      %v8319 = vadd.f32 %v8184, %v8318
      %v8320 = vpop.f32.mrf.mxu0
      %8321 = vdwg.mxu0
      %v8322 = vld [vmem:[%s13] sm:$0xf]
      %v8324 = vperm.slane %v8322, 0
      %v8325 = vperm.slane %v8322, 1
      %v8326 = vperm.slane %v8322, 2
      %v8327 = vperm.slane %v8322, 3
      %v8332 = vadd.f32 %v8280, %v8324
      %v8333 = vadd.f32 %v8293, %v8325
      %v8334 = vadd.f32 %v8306, %v8326
      %v8335 = vadd.f32 %v8319, %v8327
      %v8340 = vrot.slane %v8333, 7
      %v8341 = vrot.slane %v8334, 6
      %v8342 = vrot.slane %v8335, 5
      %vm8343 = vcmask 1040384
      %v8344 = vsel %vm8343, %v8332, %v8340
      %vm8345 = vcmask 1042434
      %v8346 = vsel %vm8345, %v8341, %v8342
      %vm8347 = vcmask 1041408
      %v8348 = vsel %vm8347, %v8344, %v8346
      %v8350 = vlaneseq
      %vm8351 = vcmp.ge.s32.totalorder %v8350, 0
      %vm8352 = vcmp.lt.s32.totalorder %v8350, 512
      %vm8353 = vmand %vm8351, %vm8352
      %8354 = vst.msk [vmem:[%s482] sm:$0xf] %vm8353, %v8348
      %p8355 = scmp.lt.s32.totalorder %s25, 1
      %s8356 = scalar_select %p8355, %s25, 1
      %s8357 = smul.addr %s8356, 4
      %s8358 = scalar_lea.vmem %s14, %s8357
      // Predicated region
      $region77: #{tbeo_encoder_pallas.1} parent=75 // pred_check
        %p8359 = pneg %p347
      $region78: #{tbeo_encoder_pallas.1} parent=75 // pred_check_branch
        %8361 = sbr.rel (%p8359) target = $region80
      $region79: #{tbeo_encoder_pallas.1} parent=75 // pred_region
        _
      $region80: #{tbeo_encoder_pallas.1} parent=75 // pred_fallthru
        _
    $region76: #{tbeo_encoder_pallas.1} parent=5 // pred_fallthru
      _
    %p8362 = scmp.le.s32.totalorder 2, %s20
    // Predicated region
    $region81: #{tbeo_encoder_pallas.1} parent=5 // pred_check
      %p8363 = pneg %p8362
    $region82: #{tbeo_encoder_pallas.1} parent=5 // pred_check_branch
      %8365 = sbr.rel (%p8363) target = $region84
    $region83: #{tbeo_encoder_pallas.1} parent=5 // pred_region
      %s8366 = ssub.s32 %s20, 2
      // Predicated region
      $region85: #{tbeo_encoder_pallas.1} parent=83 // pred_check
        %p8367 = pneg %p353
      $region86: #{tbeo_encoder_pallas.1} parent=83 // pred_check_branch
        %8369 = sbr.rel (%p8367) target = $region88
      $region87: #{tbeo_encoder_pallas.1} parent=83 // pred_region
        %p8370 = scmp.lt.s32.totalorder %s26, 1
        %s8371 = scalar_select %p8370, %s26, 1
        %s8372 = smul.addr %s8371, 4
        %s8373 = scalar_lea.vmem %s14, %s8372
      $region88: #{tbeo_encoder_pallas.1} parent=83 // pred_fallthru
        _
    $region84: #{tbeo_encoder_pallas.1} parent=5 // pred_fallthru
      _
  $region6: #{tbeo_encoder_pallas.1} parent=0 // loop_footer
    %s24 = sadd.s32 1, %s20
  $region7: #{tbeo_encoder_pallas.1} parent=0 // loop_footer_branch
    %19 = sbr.rel target = $region3
  $region8: #{tbeo_encoder_pallas.1} parent=0 // loop_exit
    _

</llo_original>
